<compile_context>
chip_gen: v7x
topology: tpu7x:2x2x1
jax: 0.10.0
libtpu: 0.0.40
codegen_flags: <defaults>
</compile_context>

<pallas_src>
import functools
import jax
import jax.numpy as jnp
from jax.experimental import pallas as pl
from jax.experimental.pallas import tpu as pltpu


# ----------------------------- parameter packing (one-time, host) -----------------------------
def _align8(n):
    return (n + 7) // 8 * 8


def _slab_layout(Kt, Cin, c0, c1, V, end, T):
    """Row-offset layout of the single packed-weights slab. All offsets 8-aligned."""
    W = T * V
    entries = [
        ("WcT", Kt * 2 * c0, Cin),   # per-tap conv weights (Align folded), (Kt*2c0, Cin)
        ("bcT", 2 * c0, 1),          # conv bias (Align bias folded)
        ("gammaL", c0, W),           # LayerNorm gamma, pre-tiled to lanes (c0, T*V)
        ("betaL", c0, W),
        ("W1T", c1, c0),             # fc1 weight (out, in)
        ("b1", c1, 1),
        ("W2T", end, c1),            # fc2 weight (out, in)
        ("b2", end, 1),
        ("Pn", W, W),                # block-diagonal segment-mean matrix (per output time step)
    ]
    layout, off = {}, 0
    for name, r, c in entries:
        layout[name] = (off, r, c)
        off += _align8(r)
    rows = _align8(off)
    maxc = max(c for _, _, c in entries)
    cols = max(128, -(-maxc // 128) * 128)
    return layout, rows, cols


def pack_output_block_params(raw, *, Kt, c_in, c0, c1, n_vertex, end_channel, T):
    """Fold Align into the causal conv and pack everything into one lane-padded f32 slab."""
    V, end = n_vertex, end_channel
    W = T * V
    f32 = jnp.float32

    # Causal conv weights in (Kt, 2c0, Cin) orientation (out-features on rows).
    conv_w = raw["conv_w"][:, :, :, 0].astype(f32)            # (2c0, Cin, Kt)
    WcT = jnp.transpose(conv_w, (2, 0, 1))                    # (Kt, 2c0, Cin)

    # Align residual: x_p[t] += align(x)[t + Kt - 1]  -> exact fold into tap Kt-1.
    if c_in > c0:
        A = raw["align_w"][:, :, 0, 0].astype(f32)            # 1x1 conv (c0, Cin)
        a_b = raw["align_b"].astype(f32)
    else:
        A = jnp.eye(c0, c_in, dtype=f32)                      # identity / zero-pad channels
        a_b = jnp.zeros((c0,), f32)
    WcT = WcT.at[Kt - 1, :c0, :].add(A)
    bcT = raw["conv_b"].astype(f32).at[:c0].add(a_b)          # (2c0,)

    # LayerNorm affine, pre-tiled to the lane layout n = t*V + v  ->  gammaL[c, n] = gamma[v, c].
    gammaL = jnp.tile(raw["gamma"].astype(f32).T, (1, T))     # (c0, W)
    betaL = jnp.tile(raw["beta"].astype(f32).T, (1, T))

    # Block-diagonal "mean over my (t)-group" matrix: group = all c0 channels x V vertices.
    t_of_lane = jnp.arange(W) // V
    Pn = (t_of_lane[:, None] == t_of_lane[None, :]).astype(f32) / (c0 * V)   # (W, W)

    vals = {
        "WcT": WcT.reshape(Kt * 2 * c0, c_in),
        "bcT": bcT[:, None],
        "gammaL": gammaL,
        "betaL": betaL,
        "W1T": raw["fc1_w"].astype(f32),
        "b1": raw["fc1_b"].astype(f32)[:, None],
        "W2T": raw["fc2_w"].astype(f32),
        "b2": raw["fc2_b"].astype(f32)[:, None],
        "Pn": Pn,
    }
    layout, rows, cols = _slab_layout(Kt, c_in, c0, c1, V, end, T)
    slab = jnp.zeros((rows, cols), f32)
    for name, v in vals.items():
        off, r, c = layout[name]
        slab = slab.at[off:off + r, :c].set(v)

    dims = dict(Kt=Kt, Cin=c_in, c0=c0, c1=c1, V=V, end=end, T=T)
    return {"slab": slab, "layout": layout, "dims": dims}


# ---------------------------------------- kernel ----------------------------------------
def output_block_kernel(x_ref, w_ref, out_ref, *, layout, Kt, T, V, Cin, c0, c1, end, eps):
    # x_ref:   (Bb, Cin, W)  with W = T*V (positions on the lane axis)
    # w_ref:   (rows, >=128) packed weight slab
    # out_ref: (Bb, end, W)  lane-dense output; only the first T_out*V lanes are valid
    W = T * V
    Bb = x_ref.shape[0]
    hp = jax.lax.Precision.HIGHEST

    def slab(name):
        off, r, c = layout[name]
        return w_ref[off:off + r, 0:c]

    WcT = slab("WcT")          # (Kt*2c0, Cin)
    bcT = slab("bcT")          # (2c0, 1)
    gammaL = slab("gammaL")    # (c0, W)
    betaL = slab("betaL")      # (c0, W)
    W1T = slab("W1T")          # (c1, c0)
    b1 = slab("b1")            # (c1, 1)
    W2T = slab("W2T")          # (end, c1)
    b2 = slab("b2")            # (end, 1)
    Pn = slab("Pn")            # (W, W)

    for b in range(Bb):        # static unroll; Bb is 1 or 2
        xb = x_ref[b]          # (Cin, W)

        # Causal (Kt,1) conv: per-tap lane-shifted windows, accumulated 2-D dots.
        # Lanes >= T_out*V produce garbage (sliced off by the wrapper); everything stays finite.
        acc = jnp.zeros((2 * c0, W), jnp.float32)
        for k in range(Kt):
            if k == 0:
                xk = xb
            else:
                xk = jnp.concatenate(
                    [xb[:, k * V:], jnp.zeros((Cin, k * V), xb.dtype)], axis=1)
            wk = WcT[k * 2 * c0:(k + 1) * 2 * c0, :]                      # (2c0, Cin)
            acc = acc + jnp.dot(wk, xk, preferred_element_type=jnp.float32, precision=hp)
        conv = acc + bcT                                                   # (2c0, W)

        # GLU gate; Align residual is already folded into WcT/bcT.
        gate = conv[:c0, :] * jax.nn.sigmoid(conv[c0:, :])                # (c0, W)

        # LayerNorm over [V, c0] per (batch, t): segment mean/var via block-diagonal Pn (MXU),
        # no lane<->sublane reshapes.
        col_sum = jnp.sum(gate, axis=0, keepdims=True)                    # (1, W)
        mu = jnp.dot(col_sum, Pn, preferred_element_type=jnp.float32, precision=hp)  # (1, W)
        d = gate - mu
        sq_sum = jnp.sum(d * d, axis=0, keepdims=True)                    # (1, W)
        var = jnp.dot(sq_sum, Pn, preferred_element_type=jnp.float32, precision=hp)  # (1, W)
        normed = d * jax.lax.rsqrt(var + eps) * gammaL + betaL            # (c0, W)

        # fc1 -> ReLU -> (dropout = identity in eval) -> fc2
        h = jnp.maximum(
            jnp.dot(W1T, normed, preferred_element_type=jnp.float32, precision=hp) + b1, 0.0)
        o = jnp.dot(W2T, h, preferred_element_type=jnp.float32, precision=hp) + b2   # (end, W)

        out_ref[b] = o.astype(out_ref.dtype)


# ---------------------------------------- wrapper ----------------------------------------
def _default_batch_block(B):
    """grid=(1,) on single-TC v5e/v6e; two balanced steps on dual-TC v7x."""
    try:
        kind = jax.devices()[0].device_kind.lower()
    except Exception:
        kind = ""
    if "v7" in kind and B % 2 == 0 and B >= 2:
        return B // 2
    return B


def output_block_forward(x_nchw, packed, *, batch_block=None, eps=1e-5):
    """x_nchw: (B, C_in, T, V) float32. Returns (B, end_channel, T-Kt+1, V)."""
    dims = packed["dims"]
    Kt, Cin, c0, c1 = dims["Kt"], dims["Cin"], dims["c0"], dims["c1"]
    V, end, T = dims["V"], dims["end"], dims["T"]
    W = T * V
    T_out = T - Kt + 1

    B, Cin_x, T_x, V_x = x_nchw.shape
    assert (Cin_x, T_x, V_x) == (Cin, T, V), (x_nchw.shape, dims)

    if batch_block is None:
        batch_block = _default_batch_block(B)
    assert B % batch_block == 0, "batch_block must divide B"

    slab = packed["slab"]
    rows, cols = slab.shape

    # Free contiguous reshape (no HBM pass) -- the kernel consumes NCHW directly.
    x_flat = x_nchw.reshape(B, Cin, W)

    kernel = functools.partial(output_block_kernel, layout=packed["layout"],
                               Kt=Kt, T=T, V=V, Cin=Cin, c0=c0, c1=c1, end=end, eps=eps)

    out = pl.pallas_call(
        kernel,
        out_shape=jax.ShapeDtypeStruct((B, end, W), jnp.float32),
        grid=(B // batch_block,),
        in_specs=[
            pl.BlockSpec((batch_block, Cin, W), lambda bb: (bb, 0, 0)),
            pl.BlockSpec((rows, cols), lambda bb: (0, 0)),
        ],
        out_specs=pl.BlockSpec((batch_block, end, W), lambda bb: (bb, 0, 0)),
        compiler_params=pltpu.CompilerParams(
            dimension_semantics=("parallel",),
            vmem_limit_bytes=32 * 1024 * 1024),
    )(x_flat, slab)

    # (B, end, T*V) -> (B, end, T, V) is a free reshape; dropping the Kt-1 invalid trailing
    # time steps is a tiny slice on the (already tiny) output.
    return out.reshape(B, end, T, V)[:, :, :T_out, :]


# ----------------------- pure-JAX reference (PyTorch semantics, NCHW) -----------------------
def ref_forward(x, raw, Kt, c_in, c0):
    B, _, T, V = x.shape
    T_out = T - Kt + 1
    # Align
    if c_in > c0:
        x_al = jnp.einsum("bctv,oc->botv", x, raw["align_w"][:, :, 0, 0]) \
               + raw["align_b"][None, :, None, None]
    elif c_in < c0:
        pad = jnp.zeros((B, c0 - c_in, T, V), x.dtype)
        x_al = jnp.concatenate([x, pad], axis=1)
    else:
        x_al = x
    x_in = x_al[:, :, Kt - 1:, :]
    # Causal conv (Kt,1), no padding
    conv = sum(jnp.einsum("bctv,oc->botv", x[:, :, k:k + T_out, :],
                          raw["conv_w"][:, :, k, 0]) for k in range(Kt))
    conv = conv + raw["conv_b"][None, :, None, None]
    x_p = conv[:, :c0]
    x_q = conv[:, -c0:]
    y = (x_p + x_in) * jax.nn.sigmoid(x_q)              # (B, c0, T', V)
    y = jnp.transpose(y, (0, 2, 3, 1))                  # (B, T', V, c0)
    # LayerNorm over [V, c0]
    mu = jnp.mean(y, axis=(2, 3), keepdims=True)
    var = jnp.mean((y - mu) ** 2, axis=(2, 3), keepdims=True)
    y = (y - mu) / jnp.sqrt(var + 1e-5) * raw["gamma"] + raw["beta"]
    # fc1 -> relu -> (dropout identity) -> fc2
    y = jnp.maximum(jnp.einsum("btvc,dc->btvd", y, raw["fc1_w"]) + raw["fc1_b"], 0.0)
    y = jnp.einsum("btvc,dc->btvd", y, raw["fc2_w"]) + raw["fc2_b"]
    return jnp.transpose(y, (0, 3, 1, 2))               # (B, end, T', V)


if __name__ == "__main__":
    # Small config consistent with the module's forward.
    B, Ko = 2, 3
    last_block_channel = 4
    channels = (8, 16)
    end_channel = 2
    n_vertex = 16
    T = 8                      # input time steps; output has T - Ko + 1 = 6
    c_in, c0, c1 = last_block_channel, channels[0], channels[1]

    key = jax.random.PRNGKey(0)
    ks = jax.random.split(key, 12)
    rnd = lambda k, shape: (jax.random.normal(k, shape, jnp.float32) * 0.1)

    # Deterministic "PyTorch-convention" raw parameters.
    raw = {
        "conv_w": rnd(ks[0], (2 * c0, c_in, Ko, 1)),     # Conv2d weight (out,in,Kt,1)
        "conv_b": rnd(ks[1], (2 * c0,)),
        "align_w": rnd(ks[2], (c0, c_in, 1, 1)),         # only used if c_in > c0
        "align_b": rnd(ks[3], (c0,)),
        "gamma": rnd(ks[4], (n_vertex, c0)) + 1.0,       # LayerNorm([V, c0]) affine
        "beta": rnd(ks[5], (n_vertex, c0)),
        "fc1_w": rnd(ks[6], (c1, c0)),                   # Linear weight (out,in)
        "fc1_b": rnd(ks[7], (c1,)),
        "fc2_w": rnd(ks[8], (end_channel, c1)),
        "fc2_b": rnd(ks[9], (end_channel,)),
    }

    # One-time packing: Align fold + weight re-layout + single lane-padded slab.
    packed = pack_output_block_params(raw, Kt=Ko, c_in=c_in, c0=c0, c1=c1,
                                      n_vertex=n_vertex, end_channel=end_channel, T=T)

    x = jax.random.normal(ks[10], (B, c_in, T, n_vertex), jnp.float32)

    out = jax.block_until_ready(output_block_forward(x, packed))

    ref = ref_forward(x, raw, Ko, c_in, c0)
    assert out.shape == (B, end_channel, T - Ko + 1, n_vertex), out.shape
    err = float(jnp.max(jnp.abs(out - ref)))
    assert jnp.allclose(out, ref, atol=1e-4, rtol=1e-4), err

    # Note: nn.Dropout is implemented as identity (eval-mode semantics).
    print("KERNEL_OK")
</pallas_src>

<mosaic_0001>
module attributes {stable_mosaic.version = 11 : i64} {
  func.func @output_block_kernel(%arg0: i32, %arg1: memref<2x4x128xf32, #tpu.memory_space<vmem>>, %arg2: memref<256x128xf32, #tpu.memory_space<vmem>>, %arg3: memref<2x2x128xf32, #tpu.memory_space<vmem>>) attributes {dimension_semantics = [#tpu.dimension_semantics<parallel>], iteration_bounds = array<i64: 1>, scalar_prefetch = 0 : i64, scratch_operands = 0 : i64, tpu.core_type = #tpu.core_type<tc>, window_params = [{transform_indices = @transform_0, window_bounds = array<i64: 2, 4, 128>}, {pipeline_mode = #tpu.pipeline_mode<synchronous>, transform_indices = @transform_1, window_bounds = array<i64: 256, 128>}, {transform_indices = @transform_2, window_bounds = array<i64: 2, 2, 128>}]} {
    %c0 = arith.constant 0 : index
    %c0_0 = arith.constant 0 : index
    %0 = vector.load %arg2[%c0, %c0_0] : memref<256x128xf32, #tpu.memory_space<vmem>>, vector<48x4xf32>
    %c48 = arith.constant 48 : index
    %c0_1 = arith.constant 0 : index
    %1 = vector.load %arg2[%c48, %c0_1] : memref<256x128xf32, #tpu.memory_space<vmem>>, vector<16x1xf32>
    %c64 = arith.constant 64 : index
    %c0_2 = arith.constant 0 : index
    %2 = vector.load %arg2[%c64, %c0_2] : memref<256x128xf32, #tpu.memory_space<vmem>>, vector<8x128xf32>
    %c72 = arith.constant 72 : index
    %c0_3 = arith.constant 0 : index
    %3 = vector.load %arg2[%c72, %c0_3] : memref<256x128xf32, #tpu.memory_space<vmem>>, vector<8x128xf32>
    %c80 = arith.constant 80 : index
    %c0_4 = arith.constant 0 : index
    %4 = vector.load %arg2[%c80, %c0_4] : memref<256x128xf32, #tpu.memory_space<vmem>>, vector<16x8xf32>
    %c96 = arith.constant 96 : index
    %c0_5 = arith.constant 0 : index
    %5 = vector.load %arg2[%c96, %c0_5] : memref<256x128xf32, #tpu.memory_space<vmem>>, vector<16x1xf32>
    %c112 = arith.constant 112 : index
    %c0_6 = arith.constant 0 : index
    %6 = vector.load %arg2[%c112, %c0_6] : memref<256x128xf32, #tpu.memory_space<vmem>>, vector<2x16xf32>
    %c120 = arith.constant 120 : index
    %c0_7 = arith.constant 0 : index
    %7 = vector.load %arg2[%c120, %c0_7] : memref<256x128xf32, #tpu.memory_space<vmem>>, vector<2x1xf32>
    %c128 = arith.constant 128 : index
    %c0_8 = arith.constant 0 : index
    %8 = vector.load %arg2[%c128, %c0_8] : memref<256x128xf32, #tpu.memory_space<vmem>>, vector<128x128xf32>
    %c0_9 = arith.constant 0 : index
    %c0_10 = arith.constant 0 : index
    %c0_11 = arith.constant 0 : index
    %9 = vector.load %arg1[%c0_9, %c0_10, %c0_11] : memref<2x4x128xf32, #tpu.memory_space<vmem>>, vector<1x4x128xf32>
    %10 = vector.shape_cast %9 : vector<1x4x128xf32> to vector<4x128xf32>
    %cst = arith.constant 0.000000e+00 : f32
    %11 = vector.broadcast %cst : f32 to vector<16x128xf32>
    %12 = vector.extract_strided_slice %0 {offsets = [0, 0], sizes = [16, 4], strides = [1, 1]} : vector<48x4xf32> to vector<16x4xf32>
    %cst_12 = arith.constant dense<0.000000e+00> : vector<16x128xf32>
    %13 = tpu.matmul %12, %10, %cst_12 {dimension_numbers = #tpu.dot_dimension_numbers<[1], [0], [0], [1], [0, 0, 1, 1], [], []>, precision = #tpu.contract_precision<fp32>} : vector<16x4xf32>, vector<4x128xf32>, vector<16x128xf32> -> vector<16x128xf32>
    %14 = arith.addf %11, %13 : vector<16x128xf32>
    %15 = vector.extract_strided_slice %10 {offsets = [0, 16], sizes = [4, 112], strides = [1, 1]} : vector<4x128xf32> to vector<4x112xf32>
    %cst_13 = arith.constant 0.000000e+00 : f32
    %16 = vector.broadcast %cst_13 : f32 to vector<4x16xf32>
    %17 = tpu.concatenate %15, %16 in 1 : vector<4x112xf32>, vector<4x16xf32> -> vector<4x128xf32>
    %18 = vector.extract_strided_slice %0 {offsets = [16, 0], sizes = [16, 4], strides = [1, 1]} : vector<48x4xf32> to vector<16x4xf32>
    %cst_14 = arith.constant dense<0.000000e+00> : vector<16x128xf32>
    %19 = tpu.matmul %18, %17, %cst_14 {dimension_numbers = #tpu.dot_dimension_numbers<[1], [0], [0], [1], [0, 0, 1, 1], [], []>, precision = #tpu.contract_precision<fp32>} : vector<16x4xf32>, vector<4x128xf32>, vector<16x128xf32> -> vector<16x128xf32>
    %20 = arith.addf %14, %19 : vector<16x128xf32>
    %21 = vector.extract_strided_slice %10 {offsets = [0, 32], sizes = [4, 96], strides = [1, 1]} : vector<4x128xf32> to vector<4x96xf32>
    %cst_15 = arith.constant 0.000000e+00 : f32
    %22 = vector.broadcast %cst_15 : f32 to vector<4x32xf32>
    %23 = tpu.concatenate %21, %22 in 1 : vector<4x96xf32>, vector<4x32xf32> -> vector<4x128xf32>
    %24 = vector.extract_strided_slice %0 {offsets = [32, 0], sizes = [16, 4], strides = [1, 1]} : vector<48x4xf32> to vector<16x4xf32>
    %cst_16 = arith.constant dense<0.000000e+00> : vector<16x128xf32>
    %25 = tpu.matmul %24, %23, %cst_16 {dimension_numbers = #tpu.dot_dimension_numbers<[1], [0], [0], [1], [0, 0, 1, 1], [], []>, precision = #tpu.contract_precision<fp32>} : vector<16x4xf32>, vector<4x128xf32>, vector<16x128xf32> -> vector<16x128xf32>
    %26 = arith.addf %20, %25 : vector<16x128xf32>
    %27 = vector.broadcast %1 : vector<16x1xf32> to vector<16x128xf32>
    %28 = arith.addf %26, %27 : vector<16x128xf32>
    %29 = vector.extract_strided_slice %28 {offsets = [0, 0], sizes = [8, 128], strides = [1, 1]} : vector<16x128xf32> to vector<8x128xf32>
    %30 = vector.extract_strided_slice %28 {offsets = [8, 0], sizes = [8, 128], strides = [1, 1]} : vector<16x128xf32> to vector<8x128xf32>
    %31 = arith.negf %30 : vector<8x128xf32>
    %32 = math.exp %31 : vector<8x128xf32>
    %cst_17 = arith.constant 1.000000e+00 : f32
    %33 = vector.broadcast %cst_17 : f32 to vector<8x128xf32>
    %34 = arith.addf %33, %32 : vector<8x128xf32>
    %35 = arith.divf %33, %34 : vector<8x128xf32>
    %36 = arith.mulf %29, %35 : vector<8x128xf32>
    %cst_18 = arith.constant dense<0.000000e+00> : vector<128xf32>
    %37 = vector.multi_reduction <add>, %36, %cst_18 [0] : vector<8x128xf32> to vector<128xf32>
    %38 = vector.shape_cast %37 : vector<128xf32> to vector<1x128xf32>
    %cst_19 = arith.constant dense<0.000000e+00> : vector<1x128xf32>
    %39 = tpu.matmul %38, %8, %cst_19 {dimension_numbers = #tpu.dot_dimension_numbers<[1], [0], [0], [1], [0, 0, 1, 1], [], []>, precision = #tpu.contract_precision<fp32>} : vector<1x128xf32>, vector<128x128xf32>, vector<1x128xf32> -> vector<1x128xf32>
    %40 = vector.broadcast %39 : vector<1x128xf32> to vector<8x128xf32>
    %41 = arith.subf %36, %40 : vector<8x128xf32>
    %42 = arith.mulf %41, %41 : vector<8x128xf32>
    %cst_20 = arith.constant dense<0.000000e+00> : vector<128xf32>
    %43 = vector.multi_reduction <add>, %42, %cst_20 [0] : vector<8x128xf32> to vector<128xf32>
    %44 = vector.shape_cast %43 : vector<128xf32> to vector<1x128xf32>
    %cst_21 = arith.constant dense<0.000000e+00> : vector<1x128xf32>
    %45 = tpu.matmul %44, %8, %cst_21 {dimension_numbers = #tpu.dot_dimension_numbers<[1], [0], [0], [1], [0, 0, 1, 1], [], []>, precision = #tpu.contract_precision<fp32>} : vector<1x128xf32>, vector<128x128xf32>, vector<1x128xf32> -> vector<1x128xf32>
    %cst_22 = arith.constant 9.99999974E-6 : f32
    %46 = vector.broadcast %cst_22 : f32 to vector<1x128xf32>
    %47 = arith.addf %45, %46 : vector<1x128xf32>
    %48 = math.rsqrt %47 : vector<1x128xf32>
    %49 = vector.broadcast %48 : vector<1x128xf32> to vector<8x128xf32>
    %50 = arith.mulf %41, %49 : vector<8x128xf32>
    %51 = arith.mulf %50, %2 : vector<8x128xf32>
    %52 = arith.addf %51, %3 : vector<8x128xf32>
    %cst_23 = arith.constant dense<0.000000e+00> : vector<16x128xf32>
    %53 = tpu.matmul %4, %52, %cst_23 {dimension_numbers = #tpu.dot_dimension_numbers<[1], [0], [0], [1], [0, 0, 1, 1], [], []>, precision = #tpu.contract_precision<fp32>} : vector<16x8xf32>, vector<8x128xf32>, vector<16x128xf32> -> vector<16x128xf32>
    %54 = vector.broadcast %5 : vector<16x1xf32> to vector<16x128xf32>
    %55 = arith.addf %53, %54 : vector<16x128xf32>
    %cst_24 = arith.constant 0.000000e+00 : f32
    %56 = vector.broadcast %cst_24 : f32 to vector<16x128xf32>
    %57 = arith.maximumf %55, %56 : vector<16x128xf32>
    %cst_25 = arith.constant dense<0.000000e+00> : vector<2x128xf32>
    %58 = tpu.matmul %6, %57, %cst_25 {dimension_numbers = #tpu.dot_dimension_numbers<[1], [0], [0], [1], [0, 0, 1, 1], [], []>, precision = #tpu.contract_precision<fp32>} : vector<2x16xf32>, vector<16x128xf32>, vector<2x128xf32> -> vector<2x128xf32>
    %59 = vector.broadcast %7 : vector<2x1xf32> to vector<2x128xf32>
    %60 = arith.addf %58, %59 : vector<2x128xf32>
    %c0_26 = arith.constant 0 : index
    %c0_27 = arith.constant 0 : index
    %c0_28 = arith.constant 0 : index
    %61 = vector.load %arg3[%c0_26, %c0_27, %c0_28] : memref<2x2x128xf32, #tpu.memory_space<vmem>>, vector<1x2x128xf32>
    %62 = vector.shape_cast %61 : vector<1x2x128xf32> to vector<2x128xf32>
    %63 = vector.shape_cast %60 : vector<2x128xf32> to vector<1x2x128xf32>
    tpu.vector_store %arg3[%c0_26, %c0_27, %c0_28], %63 {strides = array<i32>} : memref<2x2x128xf32, #tpu.memory_space<vmem>>, vector<1x2x128xf32>,
    %c1 = arith.constant 1 : index
    %c0_29 = arith.constant 0 : index
    %c0_30 = arith.constant 0 : index
    %64 = vector.load %arg1[%c1, %c0_29, %c0_30] : memref<2x4x128xf32, #tpu.memory_space<vmem>>, vector<1x4x128xf32>
    %65 = vector.shape_cast %64 : vector<1x4x128xf32> to vector<4x128xf32>
    %cst_31 = arith.constant 0.000000e+00 : f32
    %66 = vector.broadcast %cst_31 : f32 to vector<16x128xf32>
    %67 = vector.extract_strided_slice %0 {offsets = [0, 0], sizes = [16, 4], strides = [1, 1]} : vector<48x4xf32> to vector<16x4xf32>
    %cst_32 = arith.constant dense<0.000000e+00> : vector<16x128xf32>
    %68 = tpu.matmul %67, %65, %cst_32 {dimension_numbers = #tpu.dot_dimension_numbers<[1], [0], [0], [1], [0, 0, 1, 1], [], []>, precision = #tpu.contract_precision<fp32>} : vector<16x4xf32>, vector<4x128xf32>, vector<16x128xf32> -> vector<16x128xf32>
    %69 = arith.addf %66, %68 : vector<16x128xf32>
    %70 = vector.extract_strided_slice %65 {offsets = [0, 16], sizes = [4, 112], strides = [1, 1]} : vector<4x128xf32> to vector<4x112xf32>
    %cst_33 = arith.constant 0.000000e+00 : f32
    %71 = vector.broadcast %cst_33 : f32 to vector<4x16xf32>
    %72 = tpu.concatenate %70, %71 in 1 : vector<4x112xf32>, vector<4x16xf32> -> vector<4x128xf32>
    %73 = vector.extract_strided_slice %0 {offsets = [16, 0], sizes = [16, 4], strides = [1, 1]} : vector<48x4xf32> to vector<16x4xf32>
    %cst_34 = arith.constant dense<0.000000e+00> : vector<16x128xf32>
    %74 = tpu.matmul %73, %72, %cst_34 {dimension_numbers = #tpu.dot_dimension_numbers<[1], [0], [0], [1], [0, 0, 1, 1], [], []>, precision = #tpu.contract_precision<fp32>} : vector<16x4xf32>, vector<4x128xf32>, vector<16x128xf32> -> vector<16x128xf32>
    %75 = arith.addf %69, %74 : vector<16x128xf32>
    %76 = vector.extract_strided_slice %65 {offsets = [0, 32], sizes = [4, 96], strides = [1, 1]} : vector<4x128xf32> to vector<4x96xf32>
    %cst_35 = arith.constant 0.000000e+00 : f32
    %77 = vector.broadcast %cst_35 : f32 to vector<4x32xf32>
    %78 = tpu.concatenate %76, %77 in 1 : vector<4x96xf32>, vector<4x32xf32> -> vector<4x128xf32>
    %79 = vector.extract_strided_slice %0 {offsets = [32, 0], sizes = [16, 4], strides = [1, 1]} : vector<48x4xf32> to vector<16x4xf32>
    %cst_36 = arith.constant dense<0.000000e+00> : vector<16x128xf32>
    %80 = tpu.matmul %79, %78, %cst_36 {dimension_numbers = #tpu.dot_dimension_numbers<[1], [0], [0], [1], [0, 0, 1, 1], [], []>, precision = #tpu.contract_precision<fp32>} : vector<16x4xf32>, vector<4x128xf32>, vector<16x128xf32> -> vector<16x128xf32>
    %81 = arith.addf %75, %80 : vector<16x128xf32>
    %82 = vector.broadcast %1 : vector<16x1xf32> to vector<16x128xf32>
    %83 = arith.addf %81, %82 : vector<16x128xf32>
    %84 = vector.extract_strided_slice %83 {offsets = [0, 0], sizes = [8, 128], strides = [1, 1]} : vector<16x128xf32> to vector<8x128xf32>
    %85 = vector.extract_strided_slice %83 {offsets = [8, 0], sizes = [8, 128], strides = [1, 1]} : vector<16x128xf32> to vector<8x128xf32>
    %86 = arith.negf %85 : vector<8x128xf32>
    %87 = math.exp %86 : vector<8x128xf32>
    %cst_37 = arith.constant 1.000000e+00 : f32
    %88 = vector.broadcast %cst_37 : f32 to vector<8x128xf32>
    %89 = arith.addf %88, %87 : vector<8x128xf32>
    %90 = arith.divf %88, %89 : vector<8x128xf32>
    %91 = arith.mulf %84, %90 : vector<8x128xf32>
    %cst_38 = arith.constant dense<0.000000e+00> : vector<128xf32>
    %92 = vector.multi_reduction <add>, %91, %cst_38 [0] : vector<8x128xf32> to vector<128xf32>
    %93 = vector.shape_cast %92 : vector<128xf32> to vector<1x128xf32>
    %cst_39 = arith.constant dense<0.000000e+00> : vector<1x128xf32>
    %94 = tpu.matmul %93, %8, %cst_39 {dimension_numbers = #tpu.dot_dimension_numbers<[1], [0], [0], [1], [0, 0, 1, 1], [], []>, precision = #tpu.contract_precision<fp32>} : vector<1x128xf32>, vector<128x128xf32>, vector<1x128xf32> -> vector<1x128xf32>
    %95 = vector.broadcast %94 : vector<1x128xf32> to vector<8x128xf32>
    %96 = arith.subf %91, %95 : vector<8x128xf32>
    %97 = arith.mulf %96, %96 : vector<8x128xf32>
    %cst_40 = arith.constant dense<0.000000e+00> : vector<128xf32>
    %98 = vector.multi_reduction <add>, %97, %cst_40 [0] : vector<8x128xf32> to vector<128xf32>
    %99 = vector.shape_cast %98 : vector<128xf32> to vector<1x128xf32>
    %cst_41 = arith.constant dense<0.000000e+00> : vector<1x128xf32>
    %100 = tpu.matmul %99, %8, %cst_41 {dimension_numbers = #tpu.dot_dimension_numbers<[1], [0], [0], [1], [0, 0, 1, 1], [], []>, precision = #tpu.contract_precision<fp32>} : vector<1x128xf32>, vector<128x128xf32>, vector<1x128xf32> -> vector<1x128xf32>
    %cst_42 = arith.constant 9.99999974E-6 : f32
    %101 = vector.broadcast %cst_42 : f32 to vector<1x128xf32>
    %102 = arith.addf %100, %101 : vector<1x128xf32>
    %103 = math.rsqrt %102 : vector<1x128xf32>
    %104 = vector.broadcast %103 : vector<1x128xf32> to vector<8x128xf32>
    %105 = arith.mulf %96, %104 : vector<8x128xf32>
    %106 = arith.mulf %105, %2 : vector<8x128xf32>
    %107 = arith.addf %106, %3 : vector<8x128xf32>
    %cst_43 = arith.constant dense<0.000000e+00> : vector<16x128xf32>
    %108 = tpu.matmul %4, %107, %cst_43 {dimension_numbers = #tpu.dot_dimension_numbers<[1], [0], [0], [1], [0, 0, 1, 1], [], []>, precision = #tpu.contract_precision<fp32>} : vector<16x8xf32>, vector<8x128xf32>, vector<16x128xf32> -> vector<16x128xf32>
    %109 = vector.broadcast %5 : vector<16x1xf32> to vector<16x128xf32>
    %110 = arith.addf %108, %109 : vector<16x128xf32>
    %cst_44 = arith.constant 0.000000e+00 : f32
    %111 = vector.broadcast %cst_44 : f32 to vector<16x128xf32>
    %112 = arith.maximumf %110, %111 : vector<16x128xf32>
    %cst_45 = arith.constant dense<0.000000e+00> : vector<2x128xf32>
    %113 = tpu.matmul %6, %112, %cst_45 {dimension_numbers = #tpu.dot_dimension_numbers<[1], [0], [0], [1], [0, 0, 1, 1], [], []>, precision = #tpu.contract_precision<fp32>} : vector<2x16xf32>, vector<16x128xf32>, vector<2x128xf32> -> vector<2x128xf32>
    %114 = vector.broadcast %7 : vector<2x1xf32> to vector<2x128xf32>
    %115 = arith.addf %113, %114 : vector<2x128xf32>
    %c1_46 = arith.constant 1 : index
    %c0_47 = arith.constant 0 : index
    %c0_48 = arith.constant 0 : index
    %116 = vector.load %arg3[%c1_46, %c0_47, %c0_48] : memref<2x2x128xf32, #tpu.memory_space<vmem>>, vector<1x2x128xf32>
    %117 = vector.shape_cast %116 : vector<1x2x128xf32> to vector<2x128xf32>
    %118 = vector.shape_cast %115 : vector<2x128xf32> to vector<1x2x128xf32>
    tpu.vector_store %arg3[%c1_46, %c0_47, %c0_48], %118 {strides = array<i32>} : memref<2x2x128xf32, #tpu.memory_space<vmem>>, vector<1x2x128xf32>,
    return
  }
  func.func @transform_0(%arg0: i32) -> (i32, i32, i32) {
    %c0_i32 = arith.constant 0 : i32
    %c0_i32_0 = arith.constant 0 : i32
    %c0_i32_1 = arith.constant 0 : i32
    return %arg0, %c0_i32, %c0_i32_0 : i32, i32, i32
  }
  func.func @transform_1(%arg0: i32) -> (i32, i32) {
    %c0_i32 = arith.constant 0 : i32
    %c0_i32_0 = arith.constant 0 : i32
    %c0_i32_1 = arith.constant 0 : i32
    return %c0_i32, %c0_i32_0 : i32, i32
  }
  func.func @transform_2(%arg0: i32) -> (i32, i32, i32) {
    %c0_i32 = arith.constant 0 : i32
    %c0_i32_0 = arith.constant 0 : i32
    %c0_i32_1 = arith.constant 0 : i32
    return %arg0, %c0_i32, %c0_i32_0 : i32, i32, i32
  }
}

</mosaic_0001>

<llo_original>
// kernel: tpu_custom_call.1
$region0: #{tpu_custom_call.1}
  #allocation0 [shape = 'u32[]', space=smem, size = 0x4, offset = 0x4, fixed_abs, tag = 'smem constant byte address 0x4 - core index']
  #allocation1 [shape = 'u32[144,128]{1,0:T(1,128)}', space=vmem, size = 0x12000, scoped, tag = 'internal scratch']
  %s0 = inlined_call_operand.hbm [shape: f32[2,4,128], index: 0, kind: input, shape index: {}]
  %s1 = inlined_call_operand.hbm [shape: f32[256,128], index: 1, kind: input, shape index: {}]
  %s2 = inlined_call_operand.hbm [shape: f32[2,2,128], index: 2, kind: output, shape index: {}]
  %s3 = sld [smem:[#allocation0]]
  $region26: #{tpu_custom_call.1} parent=0
    _
  %s5 = ssub.s32 1, %s3
  %s6 = scalar_select 0, %s5, %s3
  $region1: #{tpu_custom_call.1} parent=0
    #allocation2 [shape = 'u8[4096]{0}', space=vmem, size = 0x1000, scoped, tag = 'input window, operand 0, single buffered']
    #allocation3 [shape = 's32[1]{0}', space=sflag, size = 0x4, scoped, tag = 'scoped memory for tpu_custom_call.1']
    #allocation4 [shape = 's32[1]{0}', space=sflag, size = 0x4, scoped, tag = 'scoped memory for tpu_custom_call.1']
    #allocation5 [shape = 'u8[131072]{0}', space=vmem, size = 0x20000, scoped, tag = 'input window, operand 1, single buffered']
    #allocation6 [shape = 's32[1]{0}', space=sflag, size = 0x4, scoped, tag = 'scoped memory for tpu_custom_call.1']
    #allocation7 [shape = 'u8[2048]{0}', space=vmem, size = 0x800, scoped, tag = 'output window, operand 0, single buffered']
    %7 = vsyncpa [#allocation3], 0
    %8 = vsyncpa [#allocation6], 0
    %9 = vsyncpa [#allocation4], 0
    // Predicated region
    $region2: #{tpu_custom_call.1} parent=1 // pred_check
      _
    $region3: #{tpu_custom_call.1} parent=1 // pred_check_branch
      %11 = sbr.rel (0) target = $region5
    $region4: #{tpu_custom_call.1} parent=1 // pred_region
      %s13 = ssub.s32 128, 128
      %14 = vsyncadd [#allocation3], %s13
      %s15 = sshll.u32 [#allocation2], 4
      %s16 = int_to_ptr.vmem [resolvable:$true] %s15
      %21 = dma.hbm_to_vmem [thread:$0]  %s0, 128, %s16, [#allocation3], 64, 64, 4
    $region5: #{tpu_custom_call.1} parent=1 // pred_fallthru
      _
    // Predicated region
    $region6: #{tpu_custom_call.1} parent=1 // pred_check
      _
    $region7: #{tpu_custom_call.1} parent=1 // pred_check_branch
      %23 = sbr.rel (0) target = $region9
    $region8: #{tpu_custom_call.1} parent=1 // pred_region
      %s25 = ssub.s32 4096, 4096
      %26 = vsyncadd [#allocation6], %s25
      %s27 = sshll.u32 [#allocation5], 4
      %s28 = int_to_ptr.vmem [resolvable:$true] %s27
      %33 = dma.hbm_to_vmem [thread:$0]  %s1, 4096, %s28, [#allocation6], 128, 128, 8
    $region9: #{tpu_custom_call.1} parent=1 // pred_fallthru
      _
    // Predicated region
    $region10: #{tpu_custom_call.1} parent=1 // pred_check
      _
    $region11: #{tpu_custom_call.1} parent=1 // pred_check_branch
      %35 = sbr.rel (0) target = $region13
    $region12: #{tpu_custom_call.1} parent=1 // pred_region
      %36 = dma.done [#allocation3], 128
    $region13: #{tpu_custom_call.1} parent=1 // pred_fallthru
      _
    // Predicated region
    $region14: #{tpu_custom_call.1} parent=1 // pred_check
      _
    $region15: #{tpu_custom_call.1} parent=1 // pred_check_branch
      %38 = sbr.rel (0) target = $region17
    $region16: #{tpu_custom_call.1} parent=1 // pred_region
      %39 = dma.done [#allocation6], 4096
    $region17: #{tpu_custom_call.1} parent=1 // pred_fallthru
      _
    %v40 = vld [vmem:[#allocation5] sm:$0xff]
    %v41 = vld [vmem:[#allocation5 + $0x8] sm:$0xff]
    %v42 = vld [vmem:[#allocation5 + $0x10] sm:$0xff]
    %v43 = vld [vmem:[#allocation5 + $0x18] sm:$0xff]
    %v44 = vld [vmem:[#allocation5 + $0x20] sm:$0xff]
    %v45 = vld [vmem:[#allocation5 + $0x28] sm:$0xff]
    %v46 = vld [vmem:[#allocation5 + $0x30] sm:$0xff]
    %v47 = vld [vmem:[#allocation5 + $0x38] sm:$0xff]
    %v48 = vld [vmem:[#allocation5 + $0x40] sm:$0xff]
    %v49 = vld [vmem:[#allocation5 + $0x48] sm:$0xff]
    %v50 = vld [vmem:[#allocation5 + $0x50] sm:$0xff]
    %v51 = vld [vmem:[#allocation5 + $0x58] sm:$0xff]
    %v52 = vld [vmem:[#allocation5 + $0x60] sm:$0xff]
    %v53 = vld [vmem:[#allocation5 + $0x68] sm:$0xff]
    %v54 = vld [vmem:[#allocation5 + $0x70] sm:$0x3]
    %v55 = vld [vmem:[#allocation5 + $0x78] sm:$0x3]
    %v56 = vld [vmem:[#allocation5 + $0x80] sm:$0xff]
    %v57 = vld [vmem:[#allocation5 + $0x88] sm:$0xff]
    %v58 = vld [vmem:[#allocation5 + $0x90] sm:$0xff]
    %v59 = vld [vmem:[#allocation5 + $0x98] sm:$0xff]
    %v60 = vld [vmem:[#allocation5 + $0xa0] sm:$0xff]
    %v61 = vld [vmem:[#allocation5 + $0xa8] sm:$0xff]
    %v62 = vld [vmem:[#allocation5 + $0xb0] sm:$0xff]
    %v63 = vld [vmem:[#allocation5 + $0xb8] sm:$0xff]
    %v64 = vld [vmem:[#allocation5 + $0xc0] sm:$0xff]
    %v65 = vld [vmem:[#allocation5 + $0xc8] sm:$0xff]
    %v66 = vld [vmem:[#allocation5 + $0xd0] sm:$0xff]
    %v67 = vld [vmem:[#allocation5 + $0xd8] sm:$0xff]
    %v68 = vld [vmem:[#allocation5 + $0xe0] sm:$0xff]
    %v69 = vld [vmem:[#allocation5 + $0xe8] sm:$0xff]
    %v70 = vld [vmem:[#allocation5 + $0xf0] sm:$0xff]
    %v71 = vld [vmem:[#allocation5 + $0xf8] sm:$0xff]
    %v72 = vld [vmem:[#allocation2] sm:$0xf]
    %74 = vrot.lane.b32.xlu0 %v72, 112
    %v75 = vpop.permute.xlu0 %74
    %vm77 = vcmask 916480
    %v78 = vsel %vm77, %v75, 0.0
    %vm79 = vcmask 31744
    %v81 = vsel %vm79, %v42, 0
    %v84 = vsel %vm79, %v43, 0
    %vm86 = vcmask 1043456
    %v88 = vsel %vm86, %v78, 0
    %90 = vmatprep.subr.mxu0 0.0
    %v91 = vand.u32 %v88, 4294901760
    %92 = vmatpush1.msra.mxu0 %v91
    %93 = vmatprep.subr.mxu0 0.0
    %94 = vmatpush1.msra.mxu0 0.0
    %95 = vmatprep.subr.mxu0 0.0
    %96 = vmatpush1.msra.mxu0 0.0
    %97 = vmatprep.subr.mxu0 0.0
    %98 = vmatpush1.msra.mxu0 0.0
    %99 = vmatprep.subr.mxu0 0.0
    %100 = vmatpush1.msra.mxu0 0.0
    %101 = vmatprep.subr.mxu0 0.0
    %102 = vmatpush1.msra.mxu0 0.0
    %103 = vmatprep.subr.mxu0 0.0
    %104 = vmatpush1.msra.mxu0 0.0
    %105 = vmatprep.subr.mxu0 0.0
    %106 = vmatpush1.msra.mxu0 0.0
    %107 = vmatprep.subr.mxu0 0.0
    %108 = vmatpush1.msra.mxu0 0.0
    %109 = vmatprep.subr.mxu0 0.0
    %110 = vmatpush1.msra.mxu0 0.0
    %111 = vmatprep.subr.mxu0 0.0
    %112 = vmatpush1.msra.mxu0 0.0
    %113 = vmatprep.subr.mxu0 0.0
    %114 = vmatpush1.msra.mxu0 0.0
    %115 = vmatprep.subr.mxu0 0.0
    %116 = vmatpush1.msra.mxu0 0.0
    %117 = vmatprep.subr.mxu0 0.0
    %118 = vmatpush1.msra.mxu0 0.0
    %119 = vmatprep.subr.mxu0 0.0
    %120 = vmatpush1.msra.mxu0 0.0
    %121 = vmatprep.subr.mxu0 0.0
    %122 = vmatpush1.msra.mxu0 0.0
    %123 = vmatprep.subr.mxu0 0.0
    %124 = vmatpush1.msra.mxu0 0.0
    %125 = vmatprep.subr.mxu0 0.0
    %126 = vmatpush1.msra.mxu0 0.0
    %127 = vmatprep.subr.mxu0 0.0
    %128 = vmatpush1.msra.mxu0 0.0
    %129 = vmatprep.subr.mxu0 0.0
    %130 = vmatpush1.msra.mxu0 0.0
    %131 = vmatprep.subr.mxu0 0.0
    %132 = vmatpush1.msra.mxu0 0.0
    %133 = vmatprep.subr.mxu0 0.0
    %134 = vmatpush1.msra.mxu0 0.0
    %135 = vmatprep.subr.mxu0 0.0
    %136 = vmatpush1.msra.mxu0 0.0
    %137 = vmatprep.subr.mxu0 0.0
    %138 = vmatpush1.msra.mxu0 0.0
    %139 = vmatprep.subr.mxu0 0.0
    %140 = vmatpush1.msra.mxu0 0.0
    %141 = vmatprep.subr.mxu0 0.0
    %142 = vmatpush1.msra.mxu0 0.0
    %143 = vmatprep.subr.mxu0 0.0
    %144 = vmatpush1.msra.mxu0 0.0
    %145 = vmatprep.subr.mxu0 0.0
    %146 = vmatpush1.msra.mxu0 0.0
    %147 = vmatprep.subr.mxu0 0.0
    %148 = vmatpush1.msra.mxu0 0.0
    %149 = vmatprep.subr.mxu0 0.0
    %150 = vmatpush1.msra.mxu0 0.0
    %151 = vmatprep.subr.mxu0 0.0
    %152 = vmatpush1.msra.mxu0 0.0
    %153 = vmatprep.subr.mxu0 0.0
    %154 = vmatpush1.msra.mxu0 0.0
    %155 = vmatprep.mubr.f32.mxu0 0.0
    %v156 = vand.u32 %v81, 4294901760
    %v157 = vsub.f32 %v81, %v156
    %v158 = vand.u32 %v157, 4294901760
    %v159 = vsub.f32 %v157, %v158
    %v160 = vand.u32 %v159, 4294901760
    %161 = vmatmul.mubr.f32.gmra.mrb[0].mxu0 %v160
    %v162 = vpop.f32.mrb[0].mxu0
    %v163 = vadd.f32 0.0, %v162
    %v164 = vpop.f32.mrb[0].mxu0
    %165 = vmatprep.mubr.f32.mxu0 0.0
    %v166 = vand.u32 %v84, 4294901760
    %v167 = vsub.f32 %v84, %v166
    %v168 = vand.u32 %v167, 4294901760
    %v169 = vsub.f32 %v167, %v168
    %v170 = vand.u32 %v169, 4294901760
    %171 = vmatmul.mubr.f32.gmra.mrb[0].mxu0 %v170
    %v172 = vpop.f32.mrb[0].mxu0
    %v173 = vadd.f32 0.0, %v172
    %v174 = vpop.f32.mrb[0].mxu0
    %175 = vdwg.mxu0
    %176 = vmatprep.subr.mxu0 0.0
    %v177 = vand.u32 %v88, 4294901760
    %v178 = vsub.f32 %v88, %v177
    %v179 = vand.u32 %v178, 4294901760
    %v180 = vsub.f32 %v178, %v179
    %v181 = vand.u32 %v180, 4294901760
    %182 = vmatpush1.msra.mxu0 %v181
    %183 = vmatprep.subr.mxu0 0.0
    %184 = vmatpush1.msra.mxu0 0.0
    %185 = vmatprep.subr.mxu0 0.0
    %186 = vmatpush1.msra.mxu0 0.0
    %187 = vmatprep.subr.mxu0 0.0
    %188 = vmatpush1.msra.mxu0 0.0
    %189 = vmatprep.subr.mxu0 0.0
    %190 = vmatpush1.msra.mxu0 0.0
    %191 = vmatprep.subr.mxu0 0.0
    %192 = vmatpush1.msra.mxu0 0.0
    %193 = vmatprep.subr.mxu0 0.0
    %194 = vmatpush1.msra.mxu0 0.0
    %195 = vmatprep.subr.mxu0 0.0
    %196 = vmatpush1.msra.mxu0 0.0
    %197 = vmatprep.subr.mxu0 0.0
    %198 = vmatpush1.msra.mxu0 0.0
    %199 = vmatprep.subr.mxu0 0.0
    %200 = vmatpush1.msra.mxu0 0.0
    %201 = vmatprep.subr.mxu0 0.0
    %202 = vmatpush1.msra.mxu0 0.0
    %203 = vmatprep.subr.mxu0 0.0
    %204 = vmatpush1.msra.mxu0 0.0
    %205 = vmatprep.subr.mxu0 0.0
    %206 = vmatpush1.msra.mxu0 0.0
    %207 = vmatprep.subr.mxu0 0.0
    %208 = vmatpush1.msra.mxu0 0.0
    %209 = vmatprep.subr.mxu0 0.0
    %210 = vmatpush1.msra.mxu0 0.0
    %211 = vmatprep.subr.mxu0 0.0
    %212 = vmatpush1.msra.mxu0 0.0
    %213 = vmatprep.subr.mxu0 0.0
    %214 = vmatpush1.msra.mxu0 0.0
    %215 = vmatprep.subr.mxu0 0.0
    %216 = vmatpush1.msra.mxu0 0.0
    %217 = vmatprep.subr.mxu0 0.0
    %218 = vmatpush1.msra.mxu0 0.0
    %219 = vmatprep.subr.mxu0 0.0
    %220 = vmatpush1.msra.mxu0 0.0
    %221 = vmatprep.subr.mxu0 0.0
    %222 = vmatpush1.msra.mxu0 0.0
    %223 = vmatprep.subr.mxu0 0.0
    %224 = vmatpush1.msra.mxu0 0.0
    %225 = vmatprep.subr.mxu0 0.0
    %226 = vmatpush1.msra.mxu0 0.0
    %227 = vmatprep.subr.mxu0 0.0
    %228 = vmatpush1.msra.mxu0 0.0
    %229 = vmatprep.subr.mxu0 0.0
    %230 = vmatpush1.msra.mxu0 0.0
    %231 = vmatprep.subr.mxu0 0.0
    %232 = vmatpush1.msra.mxu0 0.0
    %233 = vmatprep.subr.mxu0 0.0
    %234 = vmatpush1.msra.mxu0 0.0
    %235 = vmatprep.subr.mxu0 0.0
    %236 = vmatpush1.msra.mxu0 0.0
    %237 = vmatprep.subr.mxu0 0.0
    %238 = vmatpush1.msra.mxu0 0.0
    %239 = vmatprep.subr.mxu0 0.0
    %240 = vmatpush1.msra.mxu0 0.0
    %241 = vmatprep.subr.mxu0 0.0
    %242 = vmatpush1.msra.mxu0 0.0
    %243 = vmatprep.subr.mxu0 0.0
    %244 = vmatpush1.msra.mxu0 0.0
    %245 = vmatprep.mubr.f32.mxu0 0.0
    %v246 = vand.u32 %v81, 4294901760
    %247 = vmatmul.mubr.f32.gmra.mrb[0].mxu0 %v246
    %v248 = vpop.f32.mrb[0].mxu0
    %v249 = vadd.f32 %v163, %v248
    %v250 = vpop.f32.mrb[0].mxu0
    %251 = vmatprep.mubr.f32.mxu0 0.0
    %v252 = vand.u32 %v84, 4294901760
    %253 = vmatmul.mubr.f32.gmra.mrb[0].mxu0 %v252
    %v254 = vpop.f32.mrb[0].mxu0
    %v255 = vadd.f32 %v173, %v254
    %v256 = vpop.f32.mrb[0].mxu0
    %257 = vdwg.mxu0
    %258 = vmatprep.subr.mxu0 0.0
    %v259 = vand.u32 %v88, 4294901760
    %v260 = vsub.f32 %v88, %v259
    %261 = vmatpush1.msra.mxu0 %v260
    %262 = vmatprep.subr.mxu0 0.0
    %263 = vmatpush1.msra.mxu0 0.0
    %264 = vmatprep.subr.mxu0 0.0
    %265 = vmatpush1.msra.mxu0 0.0
    %266 = vmatprep.subr.mxu0 0.0
    %267 = vmatpush1.msra.mxu0 0.0
    %268 = vmatprep.subr.mxu0 0.0
    %269 = vmatpush1.msra.mxu0 0.0
    %270 = vmatprep.subr.mxu0 0.0
    %271 = vmatpush1.msra.mxu0 0.0
    %272 = vmatprep.subr.mxu0 0.0
    %273 = vmatpush1.msra.mxu0 0.0
    %274 = vmatprep.subr.mxu0 0.0
    %275 = vmatpush1.msra.mxu0 0.0
    %276 = vmatprep.subr.mxu0 0.0
    %277 = vmatpush1.msra.mxu0 0.0
    %278 = vmatprep.subr.mxu0 0.0
    %279 = vmatpush1.msra.mxu0 0.0
    %280 = vmatprep.subr.mxu0 0.0
    %281 = vmatpush1.msra.mxu0 0.0
    %282 = vmatprep.subr.mxu0 0.0
    %283 = vmatpush1.msra.mxu0 0.0
    %284 = vmatprep.subr.mxu0 0.0
    %285 = vmatpush1.msra.mxu0 0.0
    %286 = vmatprep.subr.mxu0 0.0
    %287 = vmatpush1.msra.mxu0 0.0
    %288 = vmatprep.subr.mxu0 0.0
    %289 = vmatpush1.msra.mxu0 0.0
    %290 = vmatprep.subr.mxu0 0.0
    %291 = vmatpush1.msra.mxu0 0.0
    %292 = vmatprep.subr.mxu0 0.0
    %293 = vmatpush1.msra.mxu0 0.0
    %294 = vmatprep.subr.mxu0 0.0
    %295 = vmatpush1.msra.mxu0 0.0
    %296 = vmatprep.subr.mxu0 0.0
    %297 = vmatpush1.msra.mxu0 0.0
    %298 = vmatprep.subr.mxu0 0.0
    %299 = vmatpush1.msra.mxu0 0.0
    %300 = vmatprep.subr.mxu0 0.0
    %301 = vmatpush1.msra.mxu0 0.0
    %302 = vmatprep.subr.mxu0 0.0
    %303 = vmatpush1.msra.mxu0 0.0
    %304 = vmatprep.subr.mxu0 0.0
    %305 = vmatpush1.msra.mxu0 0.0
    %306 = vmatprep.subr.mxu0 0.0
    %307 = vmatpush1.msra.mxu0 0.0
    %308 = vmatprep.subr.mxu0 0.0
    %309 = vmatpush1.msra.mxu0 0.0
    %310 = vmatprep.subr.mxu0 0.0
    %311 = vmatpush1.msra.mxu0 0.0
    %312 = vmatprep.subr.mxu0 0.0
    %313 = vmatpush1.msra.mxu0 0.0
    %314 = vmatprep.subr.mxu0 0.0
    %315 = vmatpush1.msra.mxu0 0.0
    %316 = vmatprep.subr.mxu0 0.0
    %317 = vmatpush1.msra.mxu0 0.0
    %318 = vmatprep.subr.mxu0 0.0
    %319 = vmatpush1.msra.mxu0 0.0
    %320 = vmatprep.subr.mxu0 0.0
    %321 = vmatpush1.msra.mxu0 0.0
    %322 = vmatprep.subr.mxu0 0.0
    %323 = vmatpush1.msra.mxu0 0.0
    %324 = vmatprep.mubr.f32.mxu0 0.0
    %v325 = vand.u32 %v81, 4294901760
    %v326 = vsub.f32 %v81, %v325
    %327 = vmatmul.mubr.f32.gmra.mrb[0].mxu0 %v326
    %v328 = vpop.f32.mrb[0].mxu0
    %v329 = vadd.f32 %v249, %v328
    %v330 = vpop.f32.mrb[0].mxu0
    %331 = vmatprep.mubr.f32.mxu0 0.0
    %v332 = vand.u32 %v84, 4294901760
    %v333 = vsub.f32 %v84, %v332
    %334 = vmatmul.mubr.f32.gmra.mrb[0].mxu0 %v333
    %v335 = vpop.f32.mrb[0].mxu0
    %v336 = vadd.f32 %v255, %v335
    %v337 = vpop.f32.mrb[0].mxu0
    %338 = vdwg.mxu0
    %339 = vmatprep.subr.mxu0 0.0
    %v340 = vand.u32 %v88, 4294901760
    %341 = vmatpush1.msra.mxu0 %v340
    %342 = vmatprep.subr.mxu0 0.0
    %343 = vmatpush1.msra.mxu0 0.0
    %344 = vmatprep.subr.mxu0 0.0
    %345 = vmatpush1.msra.mxu0 0.0
    %346 = vmatprep.subr.mxu0 0.0
    %347 = vmatpush1.msra.mxu0 0.0
    %348 = vmatprep.subr.mxu0 0.0
    %349 = vmatpush1.msra.mxu0 0.0
    %350 = vmatprep.subr.mxu0 0.0
    %351 = vmatpush1.msra.mxu0 0.0
    %352 = vmatprep.subr.mxu0 0.0
    %353 = vmatpush1.msra.mxu0 0.0
    %354 = vmatprep.subr.mxu0 0.0
    %355 = vmatpush1.msra.mxu0 0.0
    %356 = vmatprep.subr.mxu0 0.0
    %357 = vmatpush1.msra.mxu0 0.0
    %358 = vmatprep.subr.mxu0 0.0
    %359 = vmatpush1.msra.mxu0 0.0
    %360 = vmatprep.subr.mxu0 0.0
    %361 = vmatpush1.msra.mxu0 0.0
    %362 = vmatprep.subr.mxu0 0.0
    %363 = vmatpush1.msra.mxu0 0.0
    %364 = vmatprep.subr.mxu0 0.0
    %365 = vmatpush1.msra.mxu0 0.0
    %366 = vmatprep.subr.mxu0 0.0
    %367 = vmatpush1.msra.mxu0 0.0
    %368 = vmatprep.subr.mxu0 0.0
    %369 = vmatpush1.msra.mxu0 0.0
    %370 = vmatprep.subr.mxu0 0.0
    %371 = vmatpush1.msra.mxu0 0.0
    %372 = vmatprep.subr.mxu0 0.0
    %373 = vmatpush1.msra.mxu0 0.0
    %374 = vmatprep.subr.mxu0 0.0
    %375 = vmatpush1.msra.mxu0 0.0
    %376 = vmatprep.subr.mxu0 0.0
    %377 = vmatpush1.msra.mxu0 0.0
    %378 = vmatprep.subr.mxu0 0.0
    %379 = vmatpush1.msra.mxu0 0.0
    %380 = vmatprep.subr.mxu0 0.0
    %381 = vmatpush1.msra.mxu0 0.0
    %382 = vmatprep.subr.mxu0 0.0
    %383 = vmatpush1.msra.mxu0 0.0
    %384 = vmatprep.subr.mxu0 0.0
    %385 = vmatpush1.msra.mxu0 0.0
    %386 = vmatprep.subr.mxu0 0.0
    %387 = vmatpush1.msra.mxu0 0.0
    %388 = vmatprep.subr.mxu0 0.0
    %389 = vmatpush1.msra.mxu0 0.0
    %390 = vmatprep.subr.mxu0 0.0
    %391 = vmatpush1.msra.mxu0 0.0
    %392 = vmatprep.subr.mxu0 0.0
    %393 = vmatpush1.msra.mxu0 0.0
    %394 = vmatprep.subr.mxu0 0.0
    %395 = vmatpush1.msra.mxu0 0.0
    %396 = vmatprep.subr.mxu0 0.0
    %397 = vmatpush1.msra.mxu0 0.0
    %398 = vmatprep.subr.mxu0 0.0
    %399 = vmatpush1.msra.mxu0 0.0
    %400 = vmatprep.subr.mxu0 0.0
    %401 = vmatpush1.msra.mxu0 0.0
    %402 = vmatprep.subr.mxu0 0.0
    %403 = vmatpush1.msra.mxu0 0.0
    %404 = vmatprep.mubr.f32.mxu0 0.0
    %v405 = vand.u32 %v81, 4294901760
    %v406 = vsub.f32 %v81, %v405
    %v407 = vand.u32 %v406, 4294901760
    %408 = vmatmul.mubr.f32.gmra.mrb[0].mxu0 %v407
    %v409 = vpop.f32.mrb[0].mxu0
    %v410 = vadd.f32 %v329, %v409
    %v411 = vpop.f32.mrb[0].mxu0
    %412 = vmatprep.mubr.f32.mxu0 0.0
    %v413 = vand.u32 %v84, 4294901760
    %v414 = vsub.f32 %v84, %v413
    %v415 = vand.u32 %v414, 4294901760
    %416 = vmatmul.mubr.f32.gmra.mrb[0].mxu0 %v415
    %v417 = vpop.f32.mrb[0].mxu0
    %v418 = vadd.f32 %v336, %v417
    %v419 = vpop.f32.mrb[0].mxu0
    %420 = vdwg.mxu0
    %421 = vmatprep.subr.mxu0 0.0
    %v422 = vand.u32 %v88, 4294901760
    %v423 = vsub.f32 %v88, %v422
    %v424 = vand.u32 %v423, 4294901760
    %425 = vmatpush1.msra.mxu0 %v424
    %426 = vmatprep.subr.mxu0 0.0
    %427 = vmatpush1.msra.mxu0 0.0
    %428 = vmatprep.subr.mxu0 0.0
    %429 = vmatpush1.msra.mxu0 0.0
    %430 = vmatprep.subr.mxu0 0.0
    %431 = vmatpush1.msra.mxu0 0.0
    %432 = vmatprep.subr.mxu0 0.0
    %433 = vmatpush1.msra.mxu0 0.0
    %434 = vmatprep.subr.mxu0 0.0
    %435 = vmatpush1.msra.mxu0 0.0
    %436 = vmatprep.subr.mxu0 0.0
    %437 = vmatpush1.msra.mxu0 0.0
    %438 = vmatprep.subr.mxu0 0.0
    %439 = vmatpush1.msra.mxu0 0.0
    %440 = vmatprep.subr.mxu0 0.0
    %441 = vmatpush1.msra.mxu0 0.0
    %442 = vmatprep.subr.mxu0 0.0
    %443 = vmatpush1.msra.mxu0 0.0
    %444 = vmatprep.subr.mxu0 0.0
    %445 = vmatpush1.msra.mxu0 0.0
    %446 = vmatprep.subr.mxu0 0.0
    %447 = vmatpush1.msra.mxu0 0.0
    %448 = vmatprep.subr.mxu0 0.0
    %449 = vmatpush1.msra.mxu0 0.0
    %450 = vmatprep.subr.mxu0 0.0
    %451 = vmatpush1.msra.mxu0 0.0
    %452 = vmatprep.subr.mxu0 0.0
    %453 = vmatpush1.msra.mxu0 0.0
    %454 = vmatprep.subr.mxu0 0.0
    %455 = vmatpush1.msra.mxu0 0.0
    %456 = vmatprep.subr.mxu0 0.0
    %457 = vmatpush1.msra.mxu0 0.0
    %458 = vmatprep.subr.mxu0 0.0
    %459 = vmatpush1.msra.mxu0 0.0
    %460 = vmatprep.subr.mxu0 0.0
    %461 = vmatpush1.msra.mxu0 0.0
    %462 = vmatprep.subr.mxu0 0.0
    %463 = vmatpush1.msra.mxu0 0.0
    %464 = vmatprep.subr.mxu0 0.0
    %465 = vmatpush1.msra.mxu0 0.0
    %466 = vmatprep.subr.mxu0 0.0
    %467 = vmatpush1.msra.mxu0 0.0
    %468 = vmatprep.subr.mxu0 0.0
    %469 = vmatpush1.msra.mxu0 0.0
    %470 = vmatprep.subr.mxu0 0.0
    %471 = vmatpush1.msra.mxu0 0.0
    %472 = vmatprep.subr.mxu0 0.0
    %473 = vmatpush1.msra.mxu0 0.0
    %474 = vmatprep.subr.mxu0 0.0
    %475 = vmatpush1.msra.mxu0 0.0
    %476 = vmatprep.subr.mxu0 0.0
    %477 = vmatpush1.msra.mxu0 0.0
    %478 = vmatprep.subr.mxu0 0.0
    %479 = vmatpush1.msra.mxu0 0.0
    %480 = vmatprep.subr.mxu0 0.0
    %481 = vmatpush1.msra.mxu0 0.0
    %482 = vmatprep.subr.mxu0 0.0
    %483 = vmatpush1.msra.mxu0 0.0
    %484 = vmatprep.subr.mxu0 0.0
    %485 = vmatpush1.msra.mxu0 0.0
    %486 = vmatprep.subr.mxu0 0.0
    %487 = vmatpush1.msra.mxu0 0.0
    %488 = vmatprep.mubr.f32.mxu0 0.0
    %v489 = vand.u32 %v81, 4294901760
    %490 = vmatmul.mubr.f32.gmra.mrb[0].mxu0 %v489
    %v491 = vpop.f32.mrb[0].mxu0
    %v492 = vadd.f32 %v410, %v491
    %v493 = vpop.f32.mrb[0].mxu0
    %494 = vmatprep.mubr.f32.mxu0 0.0
    %v495 = vand.u32 %v84, 4294901760
    %496 = vmatmul.mubr.f32.gmra.mrb[0].mxu0 %v495
    %v497 = vpop.f32.mrb[0].mxu0
    %v498 = vadd.f32 %v418, %v497
    %v499 = vpop.f32.mrb[0].mxu0
    %500 = vdwg.mxu0
    %501 = vmatprep.subr.mxu0 0.0
    %v502 = vand.u32 %v88, 4294901760
    %503 = vmatpush1.msra.mxu0 %v502
    %504 = vmatprep.subr.mxu0 0.0
    %505 = vmatpush1.msra.mxu0 0.0
    %506 = vmatprep.subr.mxu0 0.0
    %507 = vmatpush1.msra.mxu0 0.0
    %508 = vmatprep.subr.mxu0 0.0
    %509 = vmatpush1.msra.mxu0 0.0
    %510 = vmatprep.subr.mxu0 0.0
    %511 = vmatpush1.msra.mxu0 0.0
    %512 = vmatprep.subr.mxu0 0.0
    %513 = vmatpush1.msra.mxu0 0.0
    %514 = vmatprep.subr.mxu0 0.0
    %515 = vmatpush1.msra.mxu0 0.0
    %516 = vmatprep.subr.mxu0 0.0
    %517 = vmatpush1.msra.mxu0 0.0
    %518 = vmatprep.subr.mxu0 0.0
    %519 = vmatpush1.msra.mxu0 0.0
    %520 = vmatprep.subr.mxu0 0.0
    %521 = vmatpush1.msra.mxu0 0.0
    %522 = vmatprep.subr.mxu0 0.0
    %523 = vmatpush1.msra.mxu0 0.0
    %524 = vmatprep.subr.mxu0 0.0
    %525 = vmatpush1.msra.mxu0 0.0
    %526 = vmatprep.subr.mxu0 0.0
    %527 = vmatpush1.msra.mxu0 0.0
    %528 = vmatprep.subr.mxu0 0.0
    %529 = vmatpush1.msra.mxu0 0.0
    %530 = vmatprep.subr.mxu0 0.0
    %531 = vmatpush1.msra.mxu0 0.0
    %532 = vmatprep.subr.mxu0 0.0
    %533 = vmatpush1.msra.mxu0 0.0
    %534 = vmatprep.subr.mxu0 0.0
    %535 = vmatpush1.msra.mxu0 0.0
    %536 = vmatprep.subr.mxu0 0.0
    %537 = vmatpush1.msra.mxu0 0.0
    %538 = vmatprep.subr.mxu0 0.0
    %539 = vmatpush1.msra.mxu0 0.0
    %540 = vmatprep.subr.mxu0 0.0
    %541 = vmatpush1.msra.mxu0 0.0
    %542 = vmatprep.subr.mxu0 0.0
    %543 = vmatpush1.msra.mxu0 0.0
    %544 = vmatprep.subr.mxu0 0.0
    %545 = vmatpush1.msra.mxu0 0.0
    %546 = vmatprep.subr.mxu0 0.0
    %547 = vmatpush1.msra.mxu0 0.0
    %548 = vmatprep.subr.mxu0 0.0
    %549 = vmatpush1.msra.mxu0 0.0
    %550 = vmatprep.subr.mxu0 0.0
    %551 = vmatpush1.msra.mxu0 0.0
    %552 = vmatprep.subr.mxu0 0.0
    %553 = vmatpush1.msra.mxu0 0.0
    %554 = vmatprep.subr.mxu0 0.0
    %555 = vmatpush1.msra.mxu0 0.0
    %556 = vmatprep.subr.mxu0 0.0
    %557 = vmatpush1.msra.mxu0 0.0
    %558 = vmatprep.subr.mxu0 0.0
    %559 = vmatpush1.msra.mxu0 0.0
    %560 = vmatprep.subr.mxu0 0.0
    %561 = vmatpush1.msra.mxu0 0.0
    %562 = vmatprep.subr.mxu0 0.0
    %563 = vmatpush1.msra.mxu0 0.0
    %564 = vmatprep.subr.mxu0 0.0
    %565 = vmatpush1.msra.mxu0 0.0
    %566 = vmatprep.mubr.f32.mxu0 0.0
    %v567 = vand.u32 %v81, 4294901760
    %568 = vmatmul.mubr.f32.gmra.mrb[0].mxu0 %v567
    %v569 = vpop.f32.mrb[0].mxu0
    %v570 = vadd.f32 %v492, %v569
    %v571 = vpop.f32.mrb[0].mxu0
    %572 = vmatprep.mubr.f32.mxu0 0.0
    %v573 = vand.u32 %v84, 4294901760
    %574 = vmatmul.mubr.f32.gmra.mrb[0].mxu0 %v573
    %v575 = vpop.f32.mrb[0].mxu0
    %v576 = vadd.f32 %v498, %v575
    %v577 = vpop.f32.mrb[0].mxu0
    %578 = vdwg.mxu0
    %v580 = vsel %vm79, %v40, 0
    %v583 = vsel %vm79, %v41, 0
    %v585 = vsel %vm86, %v72, 0
    %587 = vmatprep.subr.mxu0 0.0
    %v588 = vand.u32 %v585, 4294901760
    %589 = vmatpush1.msra.mxu0 %v588
    %590 = vmatprep.subr.mxu0 0.0
    %591 = vmatpush1.msra.mxu0 0.0
    %592 = vmatprep.subr.mxu0 0.0
    %593 = vmatpush1.msra.mxu0 0.0
    %594 = vmatprep.subr.mxu0 0.0
    %595 = vmatpush1.msra.mxu0 0.0
    %596 = vmatprep.subr.mxu0 0.0
    %597 = vmatpush1.msra.mxu0 0.0
    %598 = vmatprep.subr.mxu0 0.0
    %599 = vmatpush1.msra.mxu0 0.0
    %600 = vmatprep.subr.mxu0 0.0
    %601 = vmatpush1.msra.mxu0 0.0
    %602 = vmatprep.subr.mxu0 0.0
    %603 = vmatpush1.msra.mxu0 0.0
    %604 = vmatprep.subr.mxu0 0.0
    %605 = vmatpush1.msra.mxu0 0.0
    %606 = vmatprep.subr.mxu0 0.0
    %607 = vmatpush1.msra.mxu0 0.0
    %608 = vmatprep.subr.mxu0 0.0
    %609 = vmatpush1.msra.mxu0 0.0
    %610 = vmatprep.subr.mxu0 0.0
    %611 = vmatpush1.msra.mxu0 0.0
    %612 = vmatprep.subr.mxu0 0.0
    %613 = vmatpush1.msra.mxu0 0.0
    %614 = vmatprep.subr.mxu0 0.0
    %615 = vmatpush1.msra.mxu0 0.0
    %616 = vmatprep.subr.mxu0 0.0
    %617 = vmatpush1.msra.mxu0 0.0
    %618 = vmatprep.subr.mxu0 0.0
    %619 = vmatpush1.msra.mxu0 0.0
    %620 = vmatprep.subr.mxu0 0.0
    %621 = vmatpush1.msra.mxu0 0.0
    %622 = vmatprep.subr.mxu0 0.0
    %623 = vmatpush1.msra.mxu0 0.0
    %624 = vmatprep.subr.mxu0 0.0
    %625 = vmatpush1.msra.mxu0 0.0
    %626 = vmatprep.subr.mxu0 0.0
    %627 = vmatpush1.msra.mxu0 0.0
    %628 = vmatprep.subr.mxu0 0.0
    %629 = vmatpush1.msra.mxu0 0.0
    %630 = vmatprep.subr.mxu0 0.0
    %631 = vmatpush1.msra.mxu0 0.0
    %632 = vmatprep.subr.mxu0 0.0
    %633 = vmatpush1.msra.mxu0 0.0
    %634 = vmatprep.subr.mxu0 0.0
    %635 = vmatpush1.msra.mxu0 0.0
    %636 = vmatprep.subr.mxu0 0.0
    %637 = vmatpush1.msra.mxu0 0.0
    %638 = vmatprep.subr.mxu0 0.0
    %639 = vmatpush1.msra.mxu0 0.0
    %640 = vmatprep.subr.mxu0 0.0
    %641 = vmatpush1.msra.mxu0 0.0
    %642 = vmatprep.subr.mxu0 0.0
    %643 = vmatpush1.msra.mxu0 0.0
    %644 = vmatprep.subr.mxu0 0.0
    %645 = vmatpush1.msra.mxu0 0.0
    %646 = vmatprep.subr.mxu0 0.0
    %647 = vmatpush1.msra.mxu0 0.0
    %648 = vmatprep.subr.mxu0 0.0
    %649 = vmatpush1.msra.mxu0 0.0
    %650 = vmatprep.subr.mxu0 0.0
    %651 = vmatpush1.msra.mxu0 0.0
    %652 = vmatprep.mubr.f32.mxu0 0.0
    %v653 = vand.u32 %v580, 4294901760
    %v654 = vsub.f32 %v580, %v653
    %v655 = vand.u32 %v654, 4294901760
    %v656 = vsub.f32 %v654, %v655
    %v657 = vand.u32 %v656, 4294901760
    %658 = vmatmul.mubr.f32.gmra.mrb[0].mxu0 %v657
    %v659 = vpop.f32.mrb[0].mxu0
    %v660 = vadd.f32 %v570, %v659
    %v661 = vpop.f32.mrb[0].mxu0
    %662 = vmatprep.mubr.f32.mxu0 0.0
    %v663 = vand.u32 %v583, 4294901760
    %v664 = vsub.f32 %v583, %v663
    %v665 = vand.u32 %v664, 4294901760
    %v666 = vsub.f32 %v664, %v665
    %v667 = vand.u32 %v666, 4294901760
    %668 = vmatmul.mubr.f32.gmra.mrb[0].mxu0 %v667
    %v669 = vpop.f32.mrb[0].mxu0
    %v670 = vadd.f32 %v576, %v669
    %v671 = vpop.f32.mrb[0].mxu0
    %672 = vdwg.mxu0
    %673 = vmatprep.subr.mxu0 0.0
    %v674 = vand.u32 %v585, 4294901760
    %v675 = vsub.f32 %v585, %v674
    %v676 = vand.u32 %v675, 4294901760
    %v677 = vsub.f32 %v675, %v676
    %v678 = vand.u32 %v677, 4294901760
    %679 = vmatpush1.msra.mxu0 %v678
    %680 = vmatprep.subr.mxu0 0.0
    %681 = vmatpush1.msra.mxu0 0.0
    %682 = vmatprep.subr.mxu0 0.0
    %683 = vmatpush1.msra.mxu0 0.0
    %684 = vmatprep.subr.mxu0 0.0
    %685 = vmatpush1.msra.mxu0 0.0
    %686 = vmatprep.subr.mxu0 0.0
    %687 = vmatpush1.msra.mxu0 0.0
    %688 = vmatprep.subr.mxu0 0.0
    %689 = vmatpush1.msra.mxu0 0.0
    %690 = vmatprep.subr.mxu0 0.0
    %691 = vmatpush1.msra.mxu0 0.0
    %692 = vmatprep.subr.mxu0 0.0
    %693 = vmatpush1.msra.mxu0 0.0
    %694 = vmatprep.subr.mxu0 0.0
    %695 = vmatpush1.msra.mxu0 0.0
    %696 = vmatprep.subr.mxu0 0.0
    %697 = vmatpush1.msra.mxu0 0.0
    %698 = vmatprep.subr.mxu0 0.0
    %699 = vmatpush1.msra.mxu0 0.0
    %700 = vmatprep.subr.mxu0 0.0
    %701 = vmatpush1.msra.mxu0 0.0
    %702 = vmatprep.subr.mxu0 0.0
    %703 = vmatpush1.msra.mxu0 0.0
    %704 = vmatprep.subr.mxu0 0.0
    %705 = vmatpush1.msra.mxu0 0.0
    %706 = vmatprep.subr.mxu0 0.0
    %707 = vmatpush1.msra.mxu0 0.0
    %708 = vmatprep.subr.mxu0 0.0
    %709 = vmatpush1.msra.mxu0 0.0
    %710 = vmatprep.subr.mxu0 0.0
    %711 = vmatpush1.msra.mxu0 0.0
    %712 = vmatprep.subr.mxu0 0.0
    %713 = vmatpush1.msra.mxu0 0.0
    %714 = vmatprep.subr.mxu0 0.0
    %715 = vmatpush1.msra.mxu0 0.0
    %716 = vmatprep.subr.mxu0 0.0
    %717 = vmatpush1.msra.mxu0 0.0
    %718 = vmatprep.subr.mxu0 0.0
    %719 = vmatpush1.msra.mxu0 0.0
    %720 = vmatprep.subr.mxu0 0.0
    %721 = vmatpush1.msra.mxu0 0.0
    %722 = vmatprep.subr.mxu0 0.0
    %723 = vmatpush1.msra.mxu0 0.0
    %724 = vmatprep.subr.mxu0 0.0
    %725 = vmatpush1.msra.mxu0 0.0
    %726 = vmatprep.subr.mxu0 0.0
    %727 = vmatpush1.msra.mxu0 0.0
    %728 = vmatprep.subr.mxu0 0.0
    %729 = vmatpush1.msra.mxu0 0.0
    %730 = vmatprep.subr.mxu0 0.0
    %731 = vmatpush1.msra.mxu0 0.0
    %732 = vmatprep.subr.mxu0 0.0
    %733 = vmatpush1.msra.mxu0 0.0
    %734 = vmatprep.subr.mxu0 0.0
    %735 = vmatpush1.msra.mxu0 0.0
    %736 = vmatprep.subr.mxu0 0.0
    %737 = vmatpush1.msra.mxu0 0.0
    %738 = vmatprep.subr.mxu0 0.0
    %739 = vmatpush1.msra.mxu0 0.0
    %740 = vmatprep.subr.mxu0 0.0
    %741 = vmatpush1.msra.mxu0 0.0
    %742 = vmatprep.mubr.f32.mxu0 0.0
    %v743 = vand.u32 %v580, 4294901760
    %744 = vmatmul.mubr.f32.gmra.mrb[0].mxu0 %v743
    %v745 = vpop.f32.mrb[0].mxu0
    %v746 = vadd.f32 %v660, %v745
    %v747 = vpop.f32.mrb[0].mxu0
    %748 = vmatprep.mubr.f32.mxu0 0.0
    %v749 = vand.u32 %v583, 4294901760
    %750 = vmatmul.mubr.f32.gmra.mrb[0].mxu0 %v749
    %v751 = vpop.f32.mrb[0].mxu0
    %v752 = vadd.f32 %v670, %v751
    %v753 = vpop.f32.mrb[0].mxu0
    %754 = vdwg.mxu0
    %755 = vmatprep.subr.mxu0 0.0
    %v756 = vand.u32 %v585, 4294901760
    %v757 = vsub.f32 %v585, %v756
    %758 = vmatpush1.msra.mxu0 %v757
    %759 = vmatprep.subr.mxu0 0.0
    %760 = vmatpush1.msra.mxu0 0.0
    %761 = vmatprep.subr.mxu0 0.0
    %762 = vmatpush1.msra.mxu0 0.0
    %763 = vmatprep.subr.mxu0 0.0
    %764 = vmatpush1.msra.mxu0 0.0
    %765 = vmatprep.subr.mxu0 0.0
    %766 = vmatpush1.msra.mxu0 0.0
    %767 = vmatprep.subr.mxu0 0.0
    %768 = vmatpush1.msra.mxu0 0.0
    %769 = vmatprep.subr.mxu0 0.0
    %770 = vmatpush1.msra.mxu0 0.0
    %771 = vmatprep.subr.mxu0 0.0
    %772 = vmatpush1.msra.mxu0 0.0
    %773 = vmatprep.subr.mxu0 0.0
    %774 = vmatpush1.msra.mxu0 0.0
    %775 = vmatprep.subr.mxu0 0.0
    %776 = vmatpush1.msra.mxu0 0.0
    %777 = vmatprep.subr.mxu0 0.0
    %778 = vmatpush1.msra.mxu0 0.0
    %779 = vmatprep.subr.mxu0 0.0
    %780 = vmatpush1.msra.mxu0 0.0
    %781 = vmatprep.subr.mxu0 0.0
    %782 = vmatpush1.msra.mxu0 0.0
    %783 = vmatprep.subr.mxu0 0.0
    %784 = vmatpush1.msra.mxu0 0.0
    %785 = vmatprep.subr.mxu0 0.0
    %786 = vmatpush1.msra.mxu0 0.0
    %787 = vmatprep.subr.mxu0 0.0
    %788 = vmatpush1.msra.mxu0 0.0
    %789 = vmatprep.subr.mxu0 0.0
    %790 = vmatpush1.msra.mxu0 0.0
    %791 = vmatprep.subr.mxu0 0.0
    %792 = vmatpush1.msra.mxu0 0.0
    %793 = vmatprep.subr.mxu0 0.0
    %794 = vmatpush1.msra.mxu0 0.0
    %795 = vmatprep.subr.mxu0 0.0
    %796 = vmatpush1.msra.mxu0 0.0
    %797 = vmatprep.subr.mxu0 0.0
    %798 = vmatpush1.msra.mxu0 0.0
    %799 = vmatprep.subr.mxu0 0.0
    %800 = vmatpush1.msra.mxu0 0.0
    %801 = vmatprep.subr.mxu0 0.0
    %802 = vmatpush1.msra.mxu0 0.0
    %803 = vmatprep.subr.mxu0 0.0
    %804 = vmatpush1.msra.mxu0 0.0
    %805 = vmatprep.subr.mxu0 0.0
    %806 = vmatpush1.msra.mxu0 0.0
    %807 = vmatprep.subr.mxu0 0.0
    %808 = vmatpush1.msra.mxu0 0.0
    %809 = vmatprep.subr.mxu0 0.0
    %810 = vmatpush1.msra.mxu0 0.0
    %811 = vmatprep.subr.mxu0 0.0
    %812 = vmatpush1.msra.mxu0 0.0
    %813 = vmatprep.subr.mxu0 0.0
    %814 = vmatpush1.msra.mxu0 0.0
    %815 = vmatprep.subr.mxu0 0.0
    %816 = vmatpush1.msra.mxu0 0.0
    %817 = vmatprep.subr.mxu0 0.0
    %818 = vmatpush1.msra.mxu0 0.0
    %819 = vmatprep.subr.mxu0 0.0
    %820 = vmatpush1.msra.mxu0 0.0
    %821 = vmatprep.mubr.f32.mxu0 0.0
    %v822 = vand.u32 %v580, 4294901760
    %v823 = vsub.f32 %v580, %v822
    %824 = vmatmul.mubr.f32.gmra.mrb[0].mxu0 %v823
    %v825 = vpop.f32.mrb[0].mxu0
    %v826 = vadd.f32 %v746, %v825
    %v827 = vpop.f32.mrb[0].mxu0
    %828 = vmatprep.mubr.f32.mxu0 0.0
    %v829 = vand.u32 %v583, 4294901760
    %v830 = vsub.f32 %v583, %v829
    %831 = vmatmul.mubr.f32.gmra.mrb[0].mxu0 %v830
    %v832 = vpop.f32.mrb[0].mxu0
    %v833 = vadd.f32 %v752, %v832
    %v834 = vpop.f32.mrb[0].mxu0
    %835 = vdwg.mxu0
    %836 = vmatprep.subr.mxu0 0.0
    %v837 = vand.u32 %v585, 4294901760
    %838 = vmatpush1.msra.mxu0 %v837
    %839 = vmatprep.subr.mxu0 0.0
    %840 = vmatpush1.msra.mxu0 0.0
    %841 = vmatprep.subr.mxu0 0.0
    %842 = vmatpush1.msra.mxu0 0.0
    %843 = vmatprep.subr.mxu0 0.0
    %844 = vmatpush1.msra.mxu0 0.0
    %845 = vmatprep.subr.mxu0 0.0
    %846 = vmatpush1.msra.mxu0 0.0
    %847 = vmatprep.subr.mxu0 0.0
    %848 = vmatpush1.msra.mxu0 0.0
    %849 = vmatprep.subr.mxu0 0.0
    %850 = vmatpush1.msra.mxu0 0.0
    %851 = vmatprep.subr.mxu0 0.0
    %852 = vmatpush1.msra.mxu0 0.0
    %853 = vmatprep.subr.mxu0 0.0
    %854 = vmatpush1.msra.mxu0 0.0
    %855 = vmatprep.subr.mxu0 0.0
    %856 = vmatpush1.msra.mxu0 0.0
    %857 = vmatprep.subr.mxu0 0.0
    %858 = vmatpush1.msra.mxu0 0.0
    %859 = vmatprep.subr.mxu0 0.0
    %860 = vmatpush1.msra.mxu0 0.0
    %861 = vmatprep.subr.mxu0 0.0
    %862 = vmatpush1.msra.mxu0 0.0
    %863 = vmatprep.subr.mxu0 0.0
    %864 = vmatpush1.msra.mxu0 0.0
    %865 = vmatprep.subr.mxu0 0.0
    %866 = vmatpush1.msra.mxu0 0.0
    %867 = vmatprep.subr.mxu0 0.0
    %868 = vmatpush1.msra.mxu0 0.0
    %869 = vmatprep.subr.mxu0 0.0
    %870 = vmatpush1.msra.mxu0 0.0
    %871 = vmatprep.subr.mxu0 0.0
    %872 = vmatpush1.msra.mxu0 0.0
    %873 = vmatprep.subr.mxu0 0.0
    %874 = vmatpush1.msra.mxu0 0.0
    %875 = vmatprep.subr.mxu0 0.0
    %876 = vmatpush1.msra.mxu0 0.0
    %877 = vmatprep.subr.mxu0 0.0
    %878 = vmatpush1.msra.mxu0 0.0
    %879 = vmatprep.subr.mxu0 0.0
    %880 = vmatpush1.msra.mxu0 0.0
    %881 = vmatprep.subr.mxu0 0.0
    %882 = vmatpush1.msra.mxu0 0.0
    %883 = vmatprep.subr.mxu0 0.0
    %884 = vmatpush1.msra.mxu0 0.0
    %885 = vmatprep.subr.mxu0 0.0
    %886 = vmatpush1.msra.mxu0 0.0
    %887 = vmatprep.subr.mxu0 0.0
    %888 = vmatpush1.msra.mxu0 0.0
    %889 = vmatprep.subr.mxu0 0.0
    %890 = vmatpush1.msra.mxu0 0.0
    %891 = vmatprep.subr.mxu0 0.0
    %892 = vmatpush1.msra.mxu0 0.0
    %893 = vmatprep.subr.mxu0 0.0
    %894 = vmatpush1.msra.mxu0 0.0
    %895 = vmatprep.subr.mxu0 0.0
    %896 = vmatpush1.msra.mxu0 0.0
    %897 = vmatprep.subr.mxu0 0.0
    %898 = vmatpush1.msra.mxu0 0.0
    %899 = vmatprep.subr.mxu0 0.0
    %900 = vmatpush1.msra.mxu0 0.0
    %901 = vmatprep.mubr.f32.mxu0 0.0
    %v902 = vand.u32 %v580, 4294901760
    %v903 = vsub.f32 %v580, %v902
    %v904 = vand.u32 %v903, 4294901760
    %905 = vmatmul.mubr.f32.gmra.mrb[0].mxu0 %v904
    %v906 = vpop.f32.mrb[0].mxu0
    %v907 = vadd.f32 %v826, %v906
    %v908 = vpop.f32.mrb[0].mxu0
    %909 = vmatprep.mubr.f32.mxu0 0.0
    %v910 = vand.u32 %v583, 4294901760
    %v911 = vsub.f32 %v583, %v910
    %v912 = vand.u32 %v911, 4294901760
    %913 = vmatmul.mubr.f32.gmra.mrb[0].mxu0 %v912
    %v914 = vpop.f32.mrb[0].mxu0
    %v915 = vadd.f32 %v833, %v914
    %v916 = vpop.f32.mrb[0].mxu0
    %917 = vdwg.mxu0
    %918 = vmatprep.subr.mxu0 0.0
    %v919 = vand.u32 %v585, 4294901760
    %v920 = vsub.f32 %v585, %v919
    %v921 = vand.u32 %v920, 4294901760
    %922 = vmatpush1.msra.mxu0 %v921
    %923 = vmatprep.subr.mxu0 0.0
    %924 = vmatpush1.msra.mxu0 0.0
    %925 = vmatprep.subr.mxu0 0.0
    %926 = vmatpush1.msra.mxu0 0.0
    %927 = vmatprep.subr.mxu0 0.0
    %928 = vmatpush1.msra.mxu0 0.0
    %929 = vmatprep.subr.mxu0 0.0
    %930 = vmatpush1.msra.mxu0 0.0
    %931 = vmatprep.subr.mxu0 0.0
    %932 = vmatpush1.msra.mxu0 0.0
    %933 = vmatprep.subr.mxu0 0.0
    %934 = vmatpush1.msra.mxu0 0.0
    %935 = vmatprep.subr.mxu0 0.0
    %936 = vmatpush1.msra.mxu0 0.0
    %937 = vmatprep.subr.mxu0 0.0
    %938 = vmatpush1.msra.mxu0 0.0
    %939 = vmatprep.subr.mxu0 0.0
    %940 = vmatpush1.msra.mxu0 0.0
    %941 = vmatprep.subr.mxu0 0.0
    %942 = vmatpush1.msra.mxu0 0.0
    %943 = vmatprep.subr.mxu0 0.0
    %944 = vmatpush1.msra.mxu0 0.0
    %945 = vmatprep.subr.mxu0 0.0
    %946 = vmatpush1.msra.mxu0 0.0
    %947 = vmatprep.subr.mxu0 0.0
    %948 = vmatpush1.msra.mxu0 0.0
    %949 = vmatprep.subr.mxu0 0.0
    %950 = vmatpush1.msra.mxu0 0.0
    %951 = vmatprep.subr.mxu0 0.0
    %952 = vmatpush1.msra.mxu0 0.0
    %953 = vmatprep.subr.mxu0 0.0
    %954 = vmatpush1.msra.mxu0 0.0
    %955 = vmatprep.subr.mxu0 0.0
    %956 = vmatpush1.msra.mxu0 0.0
    %957 = vmatprep.subr.mxu0 0.0
    %958 = vmatpush1.msra.mxu0 0.0
    %959 = vmatprep.subr.mxu0 0.0
    %960 = vmatpush1.msra.mxu0 0.0
    %961 = vmatprep.subr.mxu0 0.0
    %962 = vmatpush1.msra.mxu0 0.0
    %963 = vmatprep.subr.mxu0 0.0
    %964 = vmatpush1.msra.mxu0 0.0
    %965 = vmatprep.subr.mxu0 0.0
    %966 = vmatpush1.msra.mxu0 0.0
    %967 = vmatprep.subr.mxu0 0.0
    %968 = vmatpush1.msra.mxu0 0.0
    %969 = vmatprep.subr.mxu0 0.0
    %970 = vmatpush1.msra.mxu0 0.0
    %971 = vmatprep.subr.mxu0 0.0
    %972 = vmatpush1.msra.mxu0 0.0
    %973 = vmatprep.subr.mxu0 0.0
    %974 = vmatpush1.msra.mxu0 0.0
    %975 = vmatprep.subr.mxu0 0.0
    %976 = vmatpush1.msra.mxu0 0.0
    %977 = vmatprep.subr.mxu0 0.0
    %978 = vmatpush1.msra.mxu0 0.0
    %979 = vmatprep.subr.mxu0 0.0
    %980 = vmatpush1.msra.mxu0 0.0
    %981 = vmatprep.subr.mxu0 0.0
    %982 = vmatpush1.msra.mxu0 0.0
    %983 = vmatprep.subr.mxu0 0.0
    %984 = vmatpush1.msra.mxu0 0.0
    %985 = vmatprep.mubr.f32.mxu0 0.0
    %v986 = vand.u32 %v580, 4294901760
    %987 = vmatmul.mubr.f32.gmra.mrb[0].mxu0 %v986
    %v988 = vpop.f32.mrb[0].mxu0
    %v989 = vadd.f32 %v907, %v988
    %v990 = vpop.f32.mrb[0].mxu0
    %991 = vmatprep.mubr.f32.mxu0 0.0
    %v992 = vand.u32 %v583, 4294901760
    %993 = vmatmul.mubr.f32.gmra.mrb[0].mxu0 %v992
    %v994 = vpop.f32.mrb[0].mxu0
    %v995 = vadd.f32 %v915, %v994
    %v996 = vpop.f32.mrb[0].mxu0
    %997 = vdwg.mxu0
    %998 = vmatprep.subr.mxu0 0.0
    %v999 = vand.u32 %v585, 4294901760
    %1000 = vmatpush1.msra.mxu0 %v999
    %1001 = vmatprep.subr.mxu0 0.0
    %1002 = vmatpush1.msra.mxu0 0.0
    %1003 = vmatprep.subr.mxu0 0.0
    %1004 = vmatpush1.msra.mxu0 0.0
    %1005 = vmatprep.subr.mxu0 0.0
    %1006 = vmatpush1.msra.mxu0 0.0
    %1007 = vmatprep.subr.mxu0 0.0
    %1008 = vmatpush1.msra.mxu0 0.0
    %1009 = vmatprep.subr.mxu0 0.0
    %1010 = vmatpush1.msra.mxu0 0.0
    %1011 = vmatprep.subr.mxu0 0.0
    %1012 = vmatpush1.msra.mxu0 0.0
    %1013 = vmatprep.subr.mxu0 0.0
    %1014 = vmatpush1.msra.mxu0 0.0
    %1015 = vmatprep.subr.mxu0 0.0
    %1016 = vmatpush1.msra.mxu0 0.0
    %1017 = vmatprep.subr.mxu0 0.0
    %1018 = vmatpush1.msra.mxu0 0.0
    %1019 = vmatprep.subr.mxu0 0.0
    %1020 = vmatpush1.msra.mxu0 0.0
    %1021 = vmatprep.subr.mxu0 0.0
    %1022 = vmatpush1.msra.mxu0 0.0
    %1023 = vmatprep.subr.mxu0 0.0
    %1024 = vmatpush1.msra.mxu0 0.0
    %1025 = vmatprep.subr.mxu0 0.0
    %1026 = vmatpush1.msra.mxu0 0.0
    %1027 = vmatprep.subr.mxu0 0.0
    %1028 = vmatpush1.msra.mxu0 0.0
    %1029 = vmatprep.subr.mxu0 0.0
    %1030 = vmatpush1.msra.mxu0 0.0
    %1031 = vmatprep.subr.mxu0 0.0
    %1032 = vmatpush1.msra.mxu0 0.0
    %1033 = vmatprep.subr.mxu0 0.0
    %1034 = vmatpush1.msra.mxu0 0.0
    %1035 = vmatprep.subr.mxu0 0.0
    %1036 = vmatpush1.msra.mxu0 0.0
    %1037 = vmatprep.subr.mxu0 0.0
    %1038 = vmatpush1.msra.mxu0 0.0
    %1039 = vmatprep.subr.mxu0 0.0
    %1040 = vmatpush1.msra.mxu0 0.0
    %1041 = vmatprep.subr.mxu0 0.0
    %1042 = vmatpush1.msra.mxu0 0.0
    %1043 = vmatprep.subr.mxu0 0.0
    %1044 = vmatpush1.msra.mxu0 0.0
    %1045 = vmatprep.subr.mxu0 0.0
    %1046 = vmatpush1.msra.mxu0 0.0
    %1047 = vmatprep.subr.mxu0 0.0
    %1048 = vmatpush1.msra.mxu0 0.0
    %1049 = vmatprep.subr.mxu0 0.0
    %1050 = vmatpush1.msra.mxu0 0.0
    %1051 = vmatprep.subr.mxu0 0.0
    %1052 = vmatpush1.msra.mxu0 0.0
    %1053 = vmatprep.subr.mxu0 0.0
    %1054 = vmatpush1.msra.mxu0 0.0
    %1055 = vmatprep.subr.mxu0 0.0
    %1056 = vmatpush1.msra.mxu0 0.0
    %1057 = vmatprep.subr.mxu0 0.0
    %1058 = vmatpush1.msra.mxu0 0.0
    %1059 = vmatprep.subr.mxu0 0.0
    %1060 = vmatpush1.msra.mxu0 0.0
    %1061 = vmatprep.subr.mxu0 0.0
    %1062 = vmatpush1.msra.mxu0 0.0
    %1063 = vmatprep.mubr.f32.mxu0 0.0
    %v1064 = vand.u32 %v580, 4294901760
    %1065 = vmatmul.mubr.f32.gmra.mrb[0].mxu0 %v1064
    %v1066 = vpop.f32.mrb[0].mxu0
    %v1067 = vadd.f32 %v989, %v1066
    %v1068 = vpop.f32.mrb[0].mxu0
    %1069 = vmatprep.mubr.f32.mxu0 0.0
    %v1070 = vand.u32 %v583, 4294901760
    %1071 = vmatmul.mubr.f32.gmra.mrb[0].mxu0 %v1070
    %v1072 = vpop.f32.mrb[0].mxu0
    %v1073 = vadd.f32 %v995, %v1072
    %v1074 = vpop.f32.mrb[0].mxu0
    %1075 = vdwg.mxu0
    %1076 = vrot.lane.b32.xlu0 %v72, 96
    %v1077 = vpop.permute.xlu0 %1076
    %vm1079 = vcmask 785408
    %v1080 = vsel %vm1079, %v1077, 0.0
    %v1082 = vsel %vm79, %v44, 0
    %v1085 = vsel %vm79, %v45, 0
    %v1088 = vsel %vm86, %v1080, 0
    %1090 = vmatprep.subr.mxu0 0.0
    %v1091 = vand.u32 %v1088, 4294901760
    %1092 = vmatpush1.msra.mxu0 %v1091
    %1093 = vmatprep.subr.mxu0 0.0
    %1094 = vmatpush1.msra.mxu0 0.0
    %1095 = vmatprep.subr.mxu0 0.0
    %1096 = vmatpush1.msra.mxu0 0.0
    %1097 = vmatprep.subr.mxu0 0.0
    %1098 = vmatpush1.msra.mxu0 0.0
    %1099 = vmatprep.subr.mxu0 0.0
    %1100 = vmatpush1.msra.mxu0 0.0
    %1101 = vmatprep.subr.mxu0 0.0
    %1102 = vmatpush1.msra.mxu0 0.0
    %1103 = vmatprep.subr.mxu0 0.0
    %1104 = vmatpush1.msra.mxu0 0.0
    %1105 = vmatprep.subr.mxu0 0.0
    %1106 = vmatpush1.msra.mxu0 0.0
    %1107 = vmatprep.subr.mxu0 0.0
    %1108 = vmatpush1.msra.mxu0 0.0
    %1109 = vmatprep.subr.mxu0 0.0
    %1110 = vmatpush1.msra.mxu0 0.0
    %1111 = vmatprep.subr.mxu0 0.0
    %1112 = vmatpush1.msra.mxu0 0.0
    %1113 = vmatprep.subr.mxu0 0.0
    %1114 = vmatpush1.msra.mxu0 0.0
    %1115 = vmatprep.subr.mxu0 0.0
    %1116 = vmatpush1.msra.mxu0 0.0
    %1117 = vmatprep.subr.mxu0 0.0
    %1118 = vmatpush1.msra.mxu0 0.0
    %1119 = vmatprep.subr.mxu0 0.0
    %1120 = vmatpush1.msra.mxu0 0.0
    %1121 = vmatprep.subr.mxu0 0.0
    %1122 = vmatpush1.msra.mxu0 0.0
    %1123 = vmatprep.subr.mxu0 0.0
    %1124 = vmatpush1.msra.mxu0 0.0
    %1125 = vmatprep.subr.mxu0 0.0
    %1126 = vmatpush1.msra.mxu0 0.0
    %1127 = vmatprep.subr.mxu0 0.0
    %1128 = vmatpush1.msra.mxu0 0.0
    %1129 = vmatprep.subr.mxu0 0.0
    %1130 = vmatpush1.msra.mxu0 0.0
    %1131 = vmatprep.subr.mxu0 0.0
    %1132 = vmatpush1.msra.mxu0 0.0
    %1133 = vmatprep.subr.mxu0 0.0
    %1134 = vmatpush1.msra.mxu0 0.0
    %1135 = vmatprep.subr.mxu0 0.0
    %1136 = vmatpush1.msra.mxu0 0.0
    %1137 = vmatprep.subr.mxu0 0.0
    %1138 = vmatpush1.msra.mxu0 0.0
    %1139 = vmatprep.subr.mxu0 0.0
    %1140 = vmatpush1.msra.mxu0 0.0
    %1141 = vmatprep.subr.mxu0 0.0
    %1142 = vmatpush1.msra.mxu0 0.0
    %1143 = vmatprep.subr.mxu0 0.0
    %1144 = vmatpush1.msra.mxu0 0.0
    %1145 = vmatprep.subr.mxu0 0.0
    %1146 = vmatpush1.msra.mxu0 0.0
    %1147 = vmatprep.subr.mxu0 0.0
    %1148 = vmatpush1.msra.mxu0 0.0
    %1149 = vmatprep.subr.mxu0 0.0
    %1150 = vmatpush1.msra.mxu0 0.0
    %1151 = vmatprep.subr.mxu0 0.0
    %1152 = vmatpush1.msra.mxu0 0.0
    %1153 = vmatprep.subr.mxu0 0.0
    %1154 = vmatpush1.msra.mxu0 0.0
    %1155 = vmatprep.mubr.f32.mxu0 0.0
    %v1156 = vand.u32 %v1082, 4294901760
    %v1157 = vsub.f32 %v1082, %v1156
    %v1158 = vand.u32 %v1157, 4294901760
    %v1159 = vsub.f32 %v1157, %v1158
    %v1160 = vand.u32 %v1159, 4294901760
    %1161 = vmatmul.mubr.f32.gmra.mrb[0].mxu0 %v1160
    %v1162 = vpop.f32.mrb[0].mxu0
    %v1163 = vadd.f32 0.0, %v1162
    %v1164 = vpop.f32.mrb[0].mxu0
    %1165 = vmatprep.mubr.f32.mxu0 0.0
    %v1166 = vand.u32 %v1085, 4294901760
    %v1167 = vsub.f32 %v1085, %v1166
    %v1168 = vand.u32 %v1167, 4294901760
    %v1169 = vsub.f32 %v1167, %v1168
    %v1170 = vand.u32 %v1169, 4294901760
    %1171 = vmatmul.mubr.f32.gmra.mrb[0].mxu0 %v1170
    %v1172 = vpop.f32.mrb[0].mxu0
    %v1173 = vadd.f32 0.0, %v1172
    %v1174 = vpop.f32.mrb[0].mxu0
    %1175 = vdwg.mxu0
    %1176 = vmatprep.subr.mxu0 0.0
    %v1177 = vand.u32 %v1088, 4294901760
    %v1178 = vsub.f32 %v1088, %v1177
    %v1179 = vand.u32 %v1178, 4294901760
    %v1180 = vsub.f32 %v1178, %v1179
    %v1181 = vand.u32 %v1180, 4294901760
    %1182 = vmatpush1.msra.mxu0 %v1181
    %1183 = vmatprep.subr.mxu0 0.0
    %1184 = vmatpush1.msra.mxu0 0.0
    %1185 = vmatprep.subr.mxu0 0.0
    %1186 = vmatpush1.msra.mxu0 0.0
    %1187 = vmatprep.subr.mxu0 0.0
    %1188 = vmatpush1.msra.mxu0 0.0
    %1189 = vmatprep.subr.mxu0 0.0
    %1190 = vmatpush1.msra.mxu0 0.0
    %1191 = vmatprep.subr.mxu0 0.0
    %1192 = vmatpush1.msra.mxu0 0.0
    %1193 = vmatprep.subr.mxu0 0.0
    %1194 = vmatpush1.msra.mxu0 0.0
    %1195 = vmatprep.subr.mxu0 0.0
    %1196 = vmatpush1.msra.mxu0 0.0
    %1197 = vmatprep.subr.mxu0 0.0
    %1198 = vmatpush1.msra.mxu0 0.0
    %1199 = vmatprep.subr.mxu0 0.0
    %1200 = vmatpush1.msra.mxu0 0.0
    %1201 = vmatprep.subr.mxu0 0.0
    %1202 = vmatpush1.msra.mxu0 0.0
    %1203 = vmatprep.subr.mxu0 0.0
    %1204 = vmatpush1.msra.mxu0 0.0
    %1205 = vmatprep.subr.mxu0 0.0
    %1206 = vmatpush1.msra.mxu0 0.0
    %1207 = vmatprep.subr.mxu0 0.0
    %1208 = vmatpush1.msra.mxu0 0.0
    %1209 = vmatprep.subr.mxu0 0.0
    %1210 = vmatpush1.msra.mxu0 0.0
    %1211 = vmatprep.subr.mxu0 0.0
    %1212 = vmatpush1.msra.mxu0 0.0
    %1213 = vmatprep.subr.mxu0 0.0
    %1214 = vmatpush1.msra.mxu0 0.0
    %1215 = vmatprep.subr.mxu0 0.0
    %1216 = vmatpush1.msra.mxu0 0.0
    %1217 = vmatprep.subr.mxu0 0.0
    %1218 = vmatpush1.msra.mxu0 0.0
    %1219 = vmatprep.subr.mxu0 0.0
    %1220 = vmatpush1.msra.mxu0 0.0
    %1221 = vmatprep.subr.mxu0 0.0
    %1222 = vmatpush1.msra.mxu0 0.0
    %1223 = vmatprep.subr.mxu0 0.0
    %1224 = vmatpush1.msra.mxu0 0.0
    %1225 = vmatprep.subr.mxu0 0.0
    %1226 = vmatpush1.msra.mxu0 0.0
    %1227 = vmatprep.subr.mxu0 0.0
    %1228 = vmatpush1.msra.mxu0 0.0
    %1229 = vmatprep.subr.mxu0 0.0
    %1230 = vmatpush1.msra.mxu0 0.0
    %1231 = vmatprep.subr.mxu0 0.0
    %1232 = vmatpush1.msra.mxu0 0.0
    %1233 = vmatprep.subr.mxu0 0.0
    %1234 = vmatpush1.msra.mxu0 0.0
    %1235 = vmatprep.subr.mxu0 0.0
    %1236 = vmatpush1.msra.mxu0 0.0
    %1237 = vmatprep.subr.mxu0 0.0
    %1238 = vmatpush1.msra.mxu0 0.0
    %1239 = vmatprep.subr.mxu0 0.0
    %1240 = vmatpush1.msra.mxu0 0.0
    %1241 = vmatprep.subr.mxu0 0.0
    %1242 = vmatpush1.msra.mxu0 0.0
    %1243 = vmatprep.subr.mxu0 0.0
    %1244 = vmatpush1.msra.mxu0 0.0
    %1245 = vmatprep.mubr.f32.mxu0 0.0
    %v1246 = vand.u32 %v1082, 4294901760
    %1247 = vmatmul.mubr.f32.gmra.mrb[0].mxu0 %v1246
    %v1248 = vpop.f32.mrb[0].mxu0
    %v1249 = vadd.f32 %v1163, %v1248
    %v1250 = vpop.f32.mrb[0].mxu0
    %1251 = vmatprep.mubr.f32.mxu0 0.0
    %v1252 = vand.u32 %v1085, 4294901760
    %1253 = vmatmul.mubr.f32.gmra.mrb[0].mxu0 %v1252
    %v1254 = vpop.f32.mrb[0].mxu0
    %v1255 = vadd.f32 %v1173, %v1254
    %v1256 = vpop.f32.mrb[0].mxu0
    %1257 = vdwg.mxu0
    %1258 = vmatprep.subr.mxu0 0.0
    %v1259 = vand.u32 %v1088, 4294901760
    %v1260 = vsub.f32 %v1088, %v1259
    %1261 = vmatpush1.msra.mxu0 %v1260
    %1262 = vmatprep.subr.mxu0 0.0
    %1263 = vmatpush1.msra.mxu0 0.0
    %1264 = vmatprep.subr.mxu0 0.0
    %1265 = vmatpush1.msra.mxu0 0.0
    %1266 = vmatprep.subr.mxu0 0.0
    %1267 = vmatpush1.msra.mxu0 0.0
    %1268 = vmatprep.subr.mxu0 0.0
    %1269 = vmatpush1.msra.mxu0 0.0
    %1270 = vmatprep.subr.mxu0 0.0
    %1271 = vmatpush1.msra.mxu0 0.0
    %1272 = vmatprep.subr.mxu0 0.0
    %1273 = vmatpush1.msra.mxu0 0.0
    %1274 = vmatprep.subr.mxu0 0.0
    %1275 = vmatpush1.msra.mxu0 0.0
    %1276 = vmatprep.subr.mxu0 0.0
    %1277 = vmatpush1.msra.mxu0 0.0
    %1278 = vmatprep.subr.mxu0 0.0
    %1279 = vmatpush1.msra.mxu0 0.0
    %1280 = vmatprep.subr.mxu0 0.0
    %1281 = vmatpush1.msra.mxu0 0.0
    %1282 = vmatprep.subr.mxu0 0.0
    %1283 = vmatpush1.msra.mxu0 0.0
    %1284 = vmatprep.subr.mxu0 0.0
    %1285 = vmatpush1.msra.mxu0 0.0
    %1286 = vmatprep.subr.mxu0 0.0
    %1287 = vmatpush1.msra.mxu0 0.0
    %1288 = vmatprep.subr.mxu0 0.0
    %1289 = vmatpush1.msra.mxu0 0.0
    %1290 = vmatprep.subr.mxu0 0.0
    %1291 = vmatpush1.msra.mxu0 0.0
    %1292 = vmatprep.subr.mxu0 0.0
    %1293 = vmatpush1.msra.mxu0 0.0
    %1294 = vmatprep.subr.mxu0 0.0
    %1295 = vmatpush1.msra.mxu0 0.0
    %1296 = vmatprep.subr.mxu0 0.0
    %1297 = vmatpush1.msra.mxu0 0.0
    %1298 = vmatprep.subr.mxu0 0.0
    %1299 = vmatpush1.msra.mxu0 0.0
    %1300 = vmatprep.subr.mxu0 0.0
    %1301 = vmatpush1.msra.mxu0 0.0
    %1302 = vmatprep.subr.mxu0 0.0
    %1303 = vmatpush1.msra.mxu0 0.0
    %1304 = vmatprep.subr.mxu0 0.0
    %1305 = vmatpush1.msra.mxu0 0.0
    %1306 = vmatprep.subr.mxu0 0.0
    %1307 = vmatpush1.msra.mxu0 0.0
    %1308 = vmatprep.subr.mxu0 0.0
    %1309 = vmatpush1.msra.mxu0 0.0
    %1310 = vmatprep.subr.mxu0 0.0
    %1311 = vmatpush1.msra.mxu0 0.0
    %1312 = vmatprep.subr.mxu0 0.0
    %1313 = vmatpush1.msra.mxu0 0.0
    %1314 = vmatprep.subr.mxu0 0.0
    %1315 = vmatpush1.msra.mxu0 0.0
    %1316 = vmatprep.subr.mxu0 0.0
    %1317 = vmatpush1.msra.mxu0 0.0
    %1318 = vmatprep.subr.mxu0 0.0
    %1319 = vmatpush1.msra.mxu0 0.0
    %1320 = vmatprep.subr.mxu0 0.0
    %1321 = vmatpush1.msra.mxu0 0.0
    %1322 = vmatprep.subr.mxu0 0.0
    %1323 = vmatpush1.msra.mxu0 0.0
    %1324 = vmatprep.mubr.f32.mxu0 0.0
    %v1325 = vand.u32 %v1082, 4294901760
    %v1326 = vsub.f32 %v1082, %v1325
    %1327 = vmatmul.mubr.f32.gmra.mrb[0].mxu0 %v1326
    %v1328 = vpop.f32.mrb[0].mxu0
    %v1329 = vadd.f32 %v1249, %v1328
    %v1330 = vpop.f32.mrb[0].mxu0
    %1331 = vmatprep.mubr.f32.mxu0 0.0
    %v1332 = vand.u32 %v1085, 4294901760
    %v1333 = vsub.f32 %v1085, %v1332
    %1334 = vmatmul.mubr.f32.gmra.mrb[0].mxu0 %v1333
    %v1335 = vpop.f32.mrb[0].mxu0
    %v1336 = vadd.f32 %v1255, %v1335
    %v1337 = vpop.f32.mrb[0].mxu0
    %1338 = vdwg.mxu0
    %1339 = vmatprep.subr.mxu0 0.0
    %v1340 = vand.u32 %v1088, 4294901760
    %1341 = vmatpush1.msra.mxu0 %v1340
    %1342 = vmatprep.subr.mxu0 0.0
    %1343 = vmatpush1.msra.mxu0 0.0
    %1344 = vmatprep.subr.mxu0 0.0
    %1345 = vmatpush1.msra.mxu0 0.0
    %1346 = vmatprep.subr.mxu0 0.0
    %1347 = vmatpush1.msra.mxu0 0.0
    %1348 = vmatprep.subr.mxu0 0.0
    %1349 = vmatpush1.msra.mxu0 0.0
    %1350 = vmatprep.subr.mxu0 0.0
    %1351 = vmatpush1.msra.mxu0 0.0
    %1352 = vmatprep.subr.mxu0 0.0
    %1353 = vmatpush1.msra.mxu0 0.0
    %1354 = vmatprep.subr.mxu0 0.0
    %1355 = vmatpush1.msra.mxu0 0.0
    %1356 = vmatprep.subr.mxu0 0.0
    %1357 = vmatpush1.msra.mxu0 0.0
    %1358 = vmatprep.subr.mxu0 0.0
    %1359 = vmatpush1.msra.mxu0 0.0
    %1360 = vmatprep.subr.mxu0 0.0
    %1361 = vmatpush1.msra.mxu0 0.0
    %1362 = vmatprep.subr.mxu0 0.0
    %1363 = vmatpush1.msra.mxu0 0.0
    %1364 = vmatprep.subr.mxu0 0.0
    %1365 = vmatpush1.msra.mxu0 0.0
    %1366 = vmatprep.subr.mxu0 0.0
    %1367 = vmatpush1.msra.mxu0 0.0
    %1368 = vmatprep.subr.mxu0 0.0
    %1369 = vmatpush1.msra.mxu0 0.0
    %1370 = vmatprep.subr.mxu0 0.0
    %1371 = vmatpush1.msra.mxu0 0.0
    %1372 = vmatprep.subr.mxu0 0.0
    %1373 = vmatpush1.msra.mxu0 0.0
    %1374 = vmatprep.subr.mxu0 0.0
    %1375 = vmatpush1.msra.mxu0 0.0
    %1376 = vmatprep.subr.mxu0 0.0
    %1377 = vmatpush1.msra.mxu0 0.0
    %1378 = vmatprep.subr.mxu0 0.0
    %1379 = vmatpush1.msra.mxu0 0.0
    %1380 = vmatprep.subr.mxu0 0.0
    %1381 = vmatpush1.msra.mxu0 0.0
    %1382 = vmatprep.subr.mxu0 0.0
    %1383 = vmatpush1.msra.mxu0 0.0
    %1384 = vmatprep.subr.mxu0 0.0
    %1385 = vmatpush1.msra.mxu0 0.0
    %1386 = vmatprep.subr.mxu0 0.0
    %1387 = vmatpush1.msra.mxu0 0.0
    %1388 = vmatprep.subr.mxu0 0.0
    %1389 = vmatpush1.msra.mxu0 0.0
    %1390 = vmatprep.subr.mxu0 0.0
    %1391 = vmatpush1.msra.mxu0 0.0
    %1392 = vmatprep.subr.mxu0 0.0
    %1393 = vmatpush1.msra.mxu0 0.0
    %1394 = vmatprep.subr.mxu0 0.0
    %1395 = vmatpush1.msra.mxu0 0.0
    %1396 = vmatprep.subr.mxu0 0.0
    %1397 = vmatpush1.msra.mxu0 0.0
    %1398 = vmatprep.subr.mxu0 0.0
    %1399 = vmatpush1.msra.mxu0 0.0
    %1400 = vmatprep.subr.mxu0 0.0
    %1401 = vmatpush1.msra.mxu0 0.0
    %1402 = vmatprep.subr.mxu0 0.0
    %1403 = vmatpush1.msra.mxu0 0.0
    %1404 = vmatprep.mubr.f32.mxu0 0.0
    %v1405 = vand.u32 %v1082, 4294901760
    %v1406 = vsub.f32 %v1082, %v1405
    %v1407 = vand.u32 %v1406, 4294901760
    %1408 = vmatmul.mubr.f32.gmra.mrb[0].mxu0 %v1407
    %v1409 = vpop.f32.mrb[0].mxu0
    %v1410 = vadd.f32 %v1329, %v1409
    %v1411 = vpop.f32.mrb[0].mxu0
    %1412 = vmatprep.mubr.f32.mxu0 0.0
    %v1413 = vand.u32 %v1085, 4294901760
    %v1414 = vsub.f32 %v1085, %v1413
    %v1415 = vand.u32 %v1414, 4294901760
    %1416 = vmatmul.mubr.f32.gmra.mrb[0].mxu0 %v1415
    %v1417 = vpop.f32.mrb[0].mxu0
    %v1418 = vadd.f32 %v1336, %v1417
    %v1419 = vpop.f32.mrb[0].mxu0
    %1420 = vdwg.mxu0
    %1421 = vmatprep.subr.mxu0 0.0
    %v1422 = vand.u32 %v1088, 4294901760
    %v1423 = vsub.f32 %v1088, %v1422
    %v1424 = vand.u32 %v1423, 4294901760
    %1425 = vmatpush1.msra.mxu0 %v1424
    %1426 = vmatprep.subr.mxu0 0.0
    %1427 = vmatpush1.msra.mxu0 0.0
    %1428 = vmatprep.subr.mxu0 0.0
    %1429 = vmatpush1.msra.mxu0 0.0
    %1430 = vmatprep.subr.mxu0 0.0
    %1431 = vmatpush1.msra.mxu0 0.0
    %1432 = vmatprep.subr.mxu0 0.0
    %1433 = vmatpush1.msra.mxu0 0.0
    %1434 = vmatprep.subr.mxu0 0.0
    %1435 = vmatpush1.msra.mxu0 0.0
    %1436 = vmatprep.subr.mxu0 0.0
    %1437 = vmatpush1.msra.mxu0 0.0
    %1438 = vmatprep.subr.mxu0 0.0
    %1439 = vmatpush1.msra.mxu0 0.0
    %1440 = vmatprep.subr.mxu0 0.0
    %1441 = vmatpush1.msra.mxu0 0.0
    %1442 = vmatprep.subr.mxu0 0.0
    %1443 = vmatpush1.msra.mxu0 0.0
    %1444 = vmatprep.subr.mxu0 0.0
    %1445 = vmatpush1.msra.mxu0 0.0
    %1446 = vmatprep.subr.mxu0 0.0
    %1447 = vmatpush1.msra.mxu0 0.0
    %1448 = vmatprep.subr.mxu0 0.0
    %1449 = vmatpush1.msra.mxu0 0.0
    %1450 = vmatprep.subr.mxu0 0.0
    %1451 = vmatpush1.msra.mxu0 0.0
    %1452 = vmatprep.subr.mxu0 0.0
    %1453 = vmatpush1.msra.mxu0 0.0
    %1454 = vmatprep.subr.mxu0 0.0
    %1455 = vmatpush1.msra.mxu0 0.0
    %1456 = vmatprep.subr.mxu0 0.0
    %1457 = vmatpush1.msra.mxu0 0.0
    %1458 = vmatprep.subr.mxu0 0.0
    %1459 = vmatpush1.msra.mxu0 0.0
    %1460 = vmatprep.subr.mxu0 0.0
    %1461 = vmatpush1.msra.mxu0 0.0
    %1462 = vmatprep.subr.mxu0 0.0
    %1463 = vmatpush1.msra.mxu0 0.0
    %1464 = vmatprep.subr.mxu0 0.0
    %1465 = vmatpush1.msra.mxu0 0.0
    %1466 = vmatprep.subr.mxu0 0.0
    %1467 = vmatpush1.msra.mxu0 0.0
    %1468 = vmatprep.subr.mxu0 0.0
    %1469 = vmatpush1.msra.mxu0 0.0
    %1470 = vmatprep.subr.mxu0 0.0
    %1471 = vmatpush1.msra.mxu0 0.0
    %1472 = vmatprep.subr.mxu0 0.0
    %1473 = vmatpush1.msra.mxu0 0.0
    %1474 = vmatprep.subr.mxu0 0.0
    %1475 = vmatpush1.msra.mxu0 0.0
    %1476 = vmatprep.subr.mxu0 0.0
    %1477 = vmatpush1.msra.mxu0 0.0
    %1478 = vmatprep.subr.mxu0 0.0
    %1479 = vmatpush1.msra.mxu0 0.0
    %1480 = vmatprep.subr.mxu0 0.0
    %1481 = vmatpush1.msra.mxu0 0.0
    %1482 = vmatprep.subr.mxu0 0.0
    %1483 = vmatpush1.msra.mxu0 0.0
    %1484 = vmatprep.subr.mxu0 0.0
    %1485 = vmatpush1.msra.mxu0 0.0
    %1486 = vmatprep.subr.mxu0 0.0
    %1487 = vmatpush1.msra.mxu0 0.0
    %1488 = vmatprep.mubr.f32.mxu0 0.0
    %v1489 = vand.u32 %v1082, 4294901760
    %1490 = vmatmul.mubr.f32.gmra.mrb[0].mxu0 %v1489
    %v1491 = vpop.f32.mrb[0].mxu0
    %v1492 = vadd.f32 %v1410, %v1491
    %v1493 = vpop.f32.mrb[0].mxu0
    %1494 = vmatprep.mubr.f32.mxu0 0.0
    %v1495 = vand.u32 %v1085, 4294901760
    %1496 = vmatmul.mubr.f32.gmra.mrb[0].mxu0 %v1495
    %v1497 = vpop.f32.mrb[0].mxu0
    %v1498 = vadd.f32 %v1418, %v1497
    %v1499 = vpop.f32.mrb[0].mxu0
    %1500 = vdwg.mxu0
    %1501 = vmatprep.subr.mxu0 0.0
    %v1502 = vand.u32 %v1088, 4294901760
    %1503 = vmatpush1.msra.mxu0 %v1502
    %1504 = vmatprep.subr.mxu0 0.0
    %1505 = vmatpush1.msra.mxu0 0.0
    %1506 = vmatprep.subr.mxu0 0.0
    %1507 = vmatpush1.msra.mxu0 0.0
    %1508 = vmatprep.subr.mxu0 0.0
    %1509 = vmatpush1.msra.mxu0 0.0
    %1510 = vmatprep.subr.mxu0 0.0
    %1511 = vmatpush1.msra.mxu0 0.0
    %1512 = vmatprep.subr.mxu0 0.0
    %1513 = vmatpush1.msra.mxu0 0.0
    %1514 = vmatprep.subr.mxu0 0.0
    %1515 = vmatpush1.msra.mxu0 0.0
    %1516 = vmatprep.subr.mxu0 0.0
    %1517 = vmatpush1.msra.mxu0 0.0
    %1518 = vmatprep.subr.mxu0 0.0
    %1519 = vmatpush1.msra.mxu0 0.0
    %1520 = vmatprep.subr.mxu0 0.0
    %1521 = vmatpush1.msra.mxu0 0.0
    %1522 = vmatprep.subr.mxu0 0.0
    %1523 = vmatpush1.msra.mxu0 0.0
    %1524 = vmatprep.subr.mxu0 0.0
    %1525 = vmatpush1.msra.mxu0 0.0
    %1526 = vmatprep.subr.mxu0 0.0
    %1527 = vmatpush1.msra.mxu0 0.0
    %1528 = vmatprep.subr.mxu0 0.0
    %1529 = vmatpush1.msra.mxu0 0.0
    %1530 = vmatprep.subr.mxu0 0.0
    %1531 = vmatpush1.msra.mxu0 0.0
    %1532 = vmatprep.subr.mxu0 0.0
    %1533 = vmatpush1.msra.mxu0 0.0
    %1534 = vmatprep.subr.mxu0 0.0
    %1535 = vmatpush1.msra.mxu0 0.0
    %1536 = vmatprep.subr.mxu0 0.0
    %1537 = vmatpush1.msra.mxu0 0.0
    %1538 = vmatprep.subr.mxu0 0.0
    %1539 = vmatpush1.msra.mxu0 0.0
    %1540 = vmatprep.subr.mxu0 0.0
    %1541 = vmatpush1.msra.mxu0 0.0
    %1542 = vmatprep.subr.mxu0 0.0
    %1543 = vmatpush1.msra.mxu0 0.0
    %1544 = vmatprep.subr.mxu0 0.0
    %1545 = vmatpush1.msra.mxu0 0.0
    %1546 = vmatprep.subr.mxu0 0.0
    %1547 = vmatpush1.msra.mxu0 0.0
    %1548 = vmatprep.subr.mxu0 0.0
    %1549 = vmatpush1.msra.mxu0 0.0
    %1550 = vmatprep.subr.mxu0 0.0
    %1551 = vmatpush1.msra.mxu0 0.0
    %1552 = vmatprep.subr.mxu0 0.0
    %1553 = vmatpush1.msra.mxu0 0.0
    %1554 = vmatprep.subr.mxu0 0.0
    %1555 = vmatpush1.msra.mxu0 0.0
    %1556 = vmatprep.subr.mxu0 0.0
    %1557 = vmatpush1.msra.mxu0 0.0
    %1558 = vmatprep.subr.mxu0 0.0
    %1559 = vmatpush1.msra.mxu0 0.0
    %1560 = vmatprep.subr.mxu0 0.0
    %1561 = vmatpush1.msra.mxu0 0.0
    %1562 = vmatprep.subr.mxu0 0.0
    %1563 = vmatpush1.msra.mxu0 0.0
    %1564 = vmatprep.subr.mxu0 0.0
    %1565 = vmatpush1.msra.mxu0 0.0
    %1566 = vmatprep.mubr.f32.mxu0 0.0
    %v1567 = vand.u32 %v1082, 4294901760
    %1568 = vmatmul.mubr.f32.gmra.mrb[0].mxu0 %v1567
    %v1569 = vpop.f32.mrb[0].mxu0
    %v1570 = vadd.f32 %v1492, %v1569
    %v1571 = vpop.f32.mrb[0].mxu0
    %1572 = vmatprep.mubr.f32.mxu0 0.0
    %v1573 = vand.u32 %v1085, 4294901760
    %1574 = vmatmul.mubr.f32.gmra.mrb[0].mxu0 %v1573
    %v1575 = vpop.f32.mrb[0].mxu0
    %v1576 = vadd.f32 %v1498, %v1575
    %v1577 = vpop.f32.mrb[0].mxu0
    %1578 = vdwg.mxu0
    %v1579 = vadd.f32 %v1067, %v1570
    %v1580 = vadd.f32 %v1073, %v1576
    %1582 = vset.pattern.permute.xlu0 0
    %1583 = vperm.xlu0 %1582, %v46
    %v1584 = vpop.permute.xlu0 %1583
    %1587 = vset.pattern.permute.xlu0 0
    %1588 = vperm.xlu0 %1587, %v47
    %v1589 = vpop.permute.xlu0 %1588
    %v1591 = vadd.f32 %v1579, %v1584
    %v1592 = vadd.f32 %v1580, %v1589
    %v1593 = vxor.u32 %v1592, 2147483648
    %v1594 = vmul.f32 %v1593, 1.442695
    %v1595 = vpow.pop %v1594
    %v1596 = vadd.f32 %v1595, 1.0
    %v1597 = vrcp.pop %v1596
    %v1598 = vmul.f32 1.0, %v1597
    %v1599 = vmul.f32 %v1591, %v1598
    %v1600 = vrot.slane %v1599, 4
    %v1601 = vadd.f32 %v1599, %v1600
    %v1602 = vrot.slane %v1601, 2
    %v1603 = vadd.f32 %v1601, %v1602
    %v1604 = vrot.slane %v1603, 1
    %v1605 = vadd.f32 %v1603, %v1604
    %1606 = vmatprep.subr.mxu0 0.0
    %v1607 = vand.u32 %v56, 4294901760
    %1608 = vmatpush1.msra.mxu0 %v1607
    %1609 = vmatprep.subr.mxu0 0.0
    %v1610 = vand.u32 %v57, 4294901760
    %1611 = vmatpush1.msra.mxu0 %v1610
    %1612 = vmatprep.subr.mxu0 0.0
    %v1613 = vand.u32 %v58, 4294901760
    %1614 = vmatpush1.msra.mxu0 %v1613
    %1615 = vmatprep.subr.mxu0 0.0
    %v1616 = vand.u32 %v59, 4294901760
    %1617 = vmatpush1.msra.mxu0 %v1616
    %1618 = vmatprep.subr.mxu0 0.0
    %v1619 = vand.u32 %v60, 4294901760
    %1620 = vmatpush1.msra.mxu0 %v1619
    %1621 = vmatprep.subr.mxu0 0.0
    %v1622 = vand.u32 %v61, 4294901760
    %1623 = vmatpush1.msra.mxu0 %v1622
    %1624 = vmatprep.subr.mxu0 0.0
    %v1625 = vand.u32 %v62, 4294901760
    %1626 = vmatpush1.msra.mxu0 %v1625
    %1627 = vmatprep.subr.mxu0 0.0
    %v1628 = vand.u32 %v63, 4294901760
    %1629 = vmatpush1.msra.mxu0 %v1628
    %1630 = vmatprep.subr.mxu0 0.0
    %v1631 = vand.u32 %v64, 4294901760
    %1632 = vmatpush1.msra.mxu0 %v1631
    %1633 = vmatprep.subr.mxu0 0.0
    %v1634 = vand.u32 %v65, 4294901760
    %1635 = vmatpush1.msra.mxu0 %v1634
    %1636 = vmatprep.subr.mxu0 0.0
    %v1637 = vand.u32 %v66, 4294901760
    %1638 = vmatpush1.msra.mxu0 %v1637
    %1639 = vmatprep.subr.mxu0 0.0
    %v1640 = vand.u32 %v67, 4294901760
    %1641 = vmatpush1.msra.mxu0 %v1640
    %1642 = vmatprep.subr.mxu0 0.0
    %v1643 = vand.u32 %v68, 4294901760
    %1644 = vmatpush1.msra.mxu0 %v1643
    %1645 = vmatprep.subr.mxu0 0.0
    %v1646 = vand.u32 %v69, 4294901760
    %1647 = vmatpush1.msra.mxu0 %v1646
    %1648 = vmatprep.subr.mxu0 0.0
    %v1649 = vand.u32 %v70, 4294901760
    %1650 = vmatpush1.msra.mxu0 %v1649
    %1651 = vmatprep.subr.mxu0 0.0
    %v1652 = vand.u32 %v71, 4294901760
    %1653 = vmatpush1.msra.mxu0 %v1652
    %1654 = vmatprep.subr.mxu0 0.0
    %1655 = vmatpush1.msra.mxu0 0.0
    %1656 = vmatprep.subr.mxu0 0.0
    %1657 = vmatpush1.msra.mxu0 0.0
    %1658 = vmatprep.subr.mxu0 0.0
    %1659 = vmatpush1.msra.mxu0 0.0
    %1660 = vmatprep.subr.mxu0 0.0
    %1661 = vmatpush1.msra.mxu0 0.0
    %1662 = vmatprep.subr.mxu0 0.0
    %1663 = vmatpush1.msra.mxu0 0.0
    %1664 = vmatprep.subr.mxu0 0.0
    %1665 = vmatpush1.msra.mxu0 0.0
    %1666 = vmatprep.subr.mxu0 0.0
    %1667 = vmatpush1.msra.mxu0 0.0
    %1668 = vmatprep.subr.mxu0 0.0
    %1669 = vmatpush1.msra.mxu0 0.0
    %1670 = vmatprep.subr.mxu0 0.0
    %1671 = vmatpush1.msra.mxu0 0.0
    %1672 = vmatprep.subr.mxu0 0.0
    %1673 = vmatpush1.msra.mxu0 0.0
    %1674 = vmatprep.subr.mxu0 0.0
    %1675 = vmatpush1.msra.mxu0 0.0
    %1676 = vmatprep.subr.mxu0 0.0
    %1677 = vmatpush1.msra.mxu0 0.0
    %1678 = vmatprep.subr.mxu0 0.0
    %1679 = vmatpush1.msra.mxu0 0.0
    %1680 = vmatprep.subr.mxu0 0.0
    %1681 = vmatpush1.msra.mxu0 0.0
    %1682 = vmatprep.subr.mxu0 0.0
    %1683 = vmatpush1.msra.mxu0 0.0
    %1684 = vmatprep.subr.mxu0 0.0
    %1685 = vmatpush1.msra.mxu0 0.0
    %1686 = vmatprep.mubr.f32.mxu0 0.0
    %v1687 = vand.u32 %v1605, 4294901760
    %v1688 = vsub.f32 %v1605, %v1687
    %v1689 = vand.u32 %v1688, 4294901760
    %v1690 = vsub.f32 %v1688, %v1689
    %v1691 = vand.u32 %v1690, 4294901760
    %1692 = vmatmul.mubr.f32.gmra.mrb[0].mxu0 %v1691
    %v1693 = vpop.f32.mrb[0].mxu0
    %v1694 = vadd.f32 0.0, %v1693
    %v1695 = vpop.f32.mrb[0].mxu0
    %1696 = vdwg.mxu0
    %1697 = vmatprep.subr.mxu0 0.0
    %v1698 = vand.u32 %v56, 4294901760
    %v1699 = vsub.f32 %v56, %v1698
    %v1700 = vand.u32 %v1699, 4294901760
    %v1701 = vsub.f32 %v1699, %v1700
    %v1702 = vand.u32 %v1701, 4294901760
    %1703 = vmatpush1.msra.mxu0 %v1702
    %1704 = vmatprep.subr.mxu0 0.0
    %v1705 = vand.u32 %v57, 4294901760
    %v1706 = vsub.f32 %v57, %v1705
    %v1707 = vand.u32 %v1706, 4294901760
    %v1708 = vsub.f32 %v1706, %v1707
    %v1709 = vand.u32 %v1708, 4294901760
    %1710 = vmatpush1.msra.mxu0 %v1709
    %1711 = vmatprep.subr.mxu0 0.0
    %v1712 = vand.u32 %v58, 4294901760
    %v1713 = vsub.f32 %v58, %v1712
    %v1714 = vand.u32 %v1713, 4294901760
    %v1715 = vsub.f32 %v1713, %v1714
    %v1716 = vand.u32 %v1715, 4294901760
    %1717 = vmatpush1.msra.mxu0 %v1716
    %1718 = vmatprep.subr.mxu0 0.0
    %v1719 = vand.u32 %v59, 4294901760
    %v1720 = vsub.f32 %v59, %v1719
    %v1721 = vand.u32 %v1720, 4294901760
    %v1722 = vsub.f32 %v1720, %v1721
    %v1723 = vand.u32 %v1722, 4294901760
    %1724 = vmatpush1.msra.mxu0 %v1723
    %1725 = vmatprep.subr.mxu0 0.0
    %v1726 = vand.u32 %v60, 4294901760
    %v1727 = vsub.f32 %v60, %v1726
    %v1728 = vand.u32 %v1727, 4294901760
    %v1729 = vsub.f32 %v1727, %v1728
    %v1730 = vand.u32 %v1729, 4294901760
    %1731 = vmatpush1.msra.mxu0 %v1730
    %1732 = vmatprep.subr.mxu0 0.0
    %v1733 = vand.u32 %v61, 4294901760
    %v1734 = vsub.f32 %v61, %v1733
    %v1735 = vand.u32 %v1734, 4294901760
    %v1736 = vsub.f32 %v1734, %v1735
    %v1737 = vand.u32 %v1736, 4294901760
    %1738 = vmatpush1.msra.mxu0 %v1737
    %1739 = vmatprep.subr.mxu0 0.0
    %v1740 = vand.u32 %v62, 4294901760
    %v1741 = vsub.f32 %v62, %v1740
    %v1742 = vand.u32 %v1741, 4294901760
    %v1743 = vsub.f32 %v1741, %v1742
    %v1744 = vand.u32 %v1743, 4294901760
    %1745 = vmatpush1.msra.mxu0 %v1744
    %1746 = vmatprep.subr.mxu0 0.0
    %v1747 = vand.u32 %v63, 4294901760
    %v1748 = vsub.f32 %v63, %v1747
    %v1749 = vand.u32 %v1748, 4294901760
    %v1750 = vsub.f32 %v1748, %v1749
    %v1751 = vand.u32 %v1750, 4294901760
    %1752 = vmatpush1.msra.mxu0 %v1751
    %1753 = vmatprep.subr.mxu0 0.0
    %v1754 = vand.u32 %v64, 4294901760
    %v1755 = vsub.f32 %v64, %v1754
    %v1756 = vand.u32 %v1755, 4294901760
    %v1757 = vsub.f32 %v1755, %v1756
    %v1758 = vand.u32 %v1757, 4294901760
    %1759 = vmatpush1.msra.mxu0 %v1758
    %1760 = vmatprep.subr.mxu0 0.0
    %v1761 = vand.u32 %v65, 4294901760
    %v1762 = vsub.f32 %v65, %v1761
    %v1763 = vand.u32 %v1762, 4294901760
    %v1764 = vsub.f32 %v1762, %v1763
    %v1765 = vand.u32 %v1764, 4294901760
    %1766 = vmatpush1.msra.mxu0 %v1765
    %1767 = vmatprep.subr.mxu0 0.0
    %v1768 = vand.u32 %v66, 4294901760
    %v1769 = vsub.f32 %v66, %v1768
    %v1770 = vand.u32 %v1769, 4294901760
    %v1771 = vsub.f32 %v1769, %v1770
    %v1772 = vand.u32 %v1771, 4294901760
    %1773 = vmatpush1.msra.mxu0 %v1772
    %1774 = vmatprep.subr.mxu0 0.0
    %v1775 = vand.u32 %v67, 4294901760
    %v1776 = vsub.f32 %v67, %v1775
    %v1777 = vand.u32 %v1776, 4294901760
    %v1778 = vsub.f32 %v1776, %v1777
    %v1779 = vand.u32 %v1778, 4294901760
    %1780 = vmatpush1.msra.mxu0 %v1779
    %1781 = vmatprep.subr.mxu0 0.0
    %v1782 = vand.u32 %v68, 4294901760
    %v1783 = vsub.f32 %v68, %v1782
    %v1784 = vand.u32 %v1783, 4294901760
    %v1785 = vsub.f32 %v1783, %v1784
    %v1786 = vand.u32 %v1785, 4294901760
    %1787 = vmatpush1.msra.mxu0 %v1786
    %1788 = vmatprep.subr.mxu0 0.0
    %v1789 = vand.u32 %v69, 4294901760
    %v1790 = vsub.f32 %v69, %v1789
    %v1791 = vand.u32 %v1790, 4294901760
    %v1792 = vsub.f32 %v1790, %v1791
    %v1793 = vand.u32 %v1792, 4294901760
    %1794 = vmatpush1.msra.mxu0 %v1793
    %1795 = vmatprep.subr.mxu0 0.0
    %v1796 = vand.u32 %v70, 4294901760
    %v1797 = vsub.f32 %v70, %v1796
    %v1798 = vand.u32 %v1797, 4294901760
    %v1799 = vsub.f32 %v1797, %v1798
    %v1800 = vand.u32 %v1799, 4294901760
    %1801 = vmatpush1.msra.mxu0 %v1800
    %1802 = vmatprep.subr.mxu0 0.0
    %v1803 = vand.u32 %v71, 4294901760
    %v1804 = vsub.f32 %v71, %v1803
    %v1805 = vand.u32 %v1804, 4294901760
    %v1806 = vsub.f32 %v1804, %v1805
    %v1807 = vand.u32 %v1806, 4294901760
    %1808 = vmatpush1.msra.mxu0 %v1807
    %1809 = vmatprep.subr.mxu0 0.0
    %1810 = vmatpush1.msra.mxu0 0.0
    %1811 = vmatprep.subr.mxu0 0.0
    %1812 = vmatpush1.msra.mxu0 0.0
    %1813 = vmatprep.subr.mxu0 0.0
    %1814 = vmatpush1.msra.mxu0 0.0
    %1815 = vmatprep.subr.mxu0 0.0
    %1816 = vmatpush1.msra.mxu0 0.0
    %1817 = vmatprep.subr.mxu0 0.0
    %1818 = vmatpush1.msra.mxu0 0.0
    %1819 = vmatprep.subr.mxu0 0.0
    %1820 = vmatpush1.msra.mxu0 0.0
    %1821 = vmatprep.subr.mxu0 0.0
    %1822 = vmatpush1.msra.mxu0 0.0
    %1823 = vmatprep.subr.mxu0 0.0
    %1824 = vmatpush1.msra.mxu0 0.0
    %1825 = vmatprep.subr.mxu0 0.0
    %1826 = vmatpush1.msra.mxu0 0.0
    %1827 = vmatprep.subr.mxu0 0.0
    %1828 = vmatpush1.msra.mxu0 0.0
    %1829 = vmatprep.subr.mxu0 0.0
    %1830 = vmatpush1.msra.mxu0 0.0
    %1831 = vmatprep.subr.mxu0 0.0
    %1832 = vmatpush1.msra.mxu0 0.0
    %1833 = vmatprep.subr.mxu0 0.0
    %1834 = vmatpush1.msra.mxu0 0.0
    %1835 = vmatprep.subr.mxu0 0.0
    %1836 = vmatpush1.msra.mxu0 0.0
    %1837 = vmatprep.subr.mxu0 0.0
    %1838 = vmatpush1.msra.mxu0 0.0
    %1839 = vmatprep.subr.mxu0 0.0
    %1840 = vmatpush1.msra.mxu0 0.0
    %1841 = vmatprep.mubr.f32.mxu0 0.0
    %v1842 = vand.u32 %v1605, 4294901760
    %1843 = vmatmul.mubr.f32.gmra.mrb[0].mxu0 %v1842
    %v1844 = vpop.f32.mrb[0].mxu0
    %v1845 = vadd.f32 %v1694, %v1844
    %v1846 = vpop.f32.mrb[0].mxu0
    %1847 = vdwg.mxu0
    %1848 = vmatprep.subr.mxu0 0.0
    %v1849 = vand.u32 %v56, 4294901760
    %v1850 = vsub.f32 %v56, %v1849
    %1851 = vmatpush1.msra.mxu0 %v1850
    %1852 = vmatprep.subr.mxu0 0.0
    %v1853 = vand.u32 %v57, 4294901760
    %v1854 = vsub.f32 %v57, %v1853
    %1855 = vmatpush1.msra.mxu0 %v1854
    %1856 = vmatprep.subr.mxu0 0.0
    %v1857 = vand.u32 %v58, 4294901760
    %v1858 = vsub.f32 %v58, %v1857
    %1859 = vmatpush1.msra.mxu0 %v1858
    %1860 = vmatprep.subr.mxu0 0.0
    %v1861 = vand.u32 %v59, 4294901760
    %v1862 = vsub.f32 %v59, %v1861
    %1863 = vmatpush1.msra.mxu0 %v1862
    %1864 = vmatprep.subr.mxu0 0.0
    %v1865 = vand.u32 %v60, 4294901760
    %v1866 = vsub.f32 %v60, %v1865
    %1867 = vmatpush1.msra.mxu0 %v1866
    %1868 = vmatprep.subr.mxu0 0.0
    %v1869 = vand.u32 %v61, 4294901760
    %v1870 = vsub.f32 %v61, %v1869
    %1871 = vmatpush1.msra.mxu0 %v1870
    %1872 = vmatprep.subr.mxu0 0.0
    %v1873 = vand.u32 %v62, 4294901760
    %v1874 = vsub.f32 %v62, %v1873
    %1875 = vmatpush1.msra.mxu0 %v1874
    %1876 = vmatprep.subr.mxu0 0.0
    %v1877 = vand.u32 %v63, 4294901760
    %v1878 = vsub.f32 %v63, %v1877
    %1879 = vmatpush1.msra.mxu0 %v1878
    %1880 = vmatprep.subr.mxu0 0.0
    %v1881 = vand.u32 %v64, 4294901760
    %v1882 = vsub.f32 %v64, %v1881
    %1883 = vmatpush1.msra.mxu0 %v1882
    %1884 = vmatprep.subr.mxu0 0.0
    %v1885 = vand.u32 %v65, 4294901760
    %v1886 = vsub.f32 %v65, %v1885
    %1887 = vmatpush1.msra.mxu0 %v1886
    %1888 = vmatprep.subr.mxu0 0.0
    %v1889 = vand.u32 %v66, 4294901760
    %v1890 = vsub.f32 %v66, %v1889
    %1891 = vmatpush1.msra.mxu0 %v1890
    %1892 = vmatprep.subr.mxu0 0.0
    %v1893 = vand.u32 %v67, 4294901760
    %v1894 = vsub.f32 %v67, %v1893
    %1895 = vmatpush1.msra.mxu0 %v1894
    %1896 = vmatprep.subr.mxu0 0.0
    %v1897 = vand.u32 %v68, 4294901760
    %v1898 = vsub.f32 %v68, %v1897
    %1899 = vmatpush1.msra.mxu0 %v1898
    %1900 = vmatprep.subr.mxu0 0.0
    %v1901 = vand.u32 %v69, 4294901760
    %v1902 = vsub.f32 %v69, %v1901
    %1903 = vmatpush1.msra.mxu0 %v1902
    %1904 = vmatprep.subr.mxu0 0.0
    %v1905 = vand.u32 %v70, 4294901760
    %v1906 = vsub.f32 %v70, %v1905
    %1907 = vmatpush1.msra.mxu0 %v1906
    %1908 = vmatprep.subr.mxu0 0.0
    %v1909 = vand.u32 %v71, 4294901760
    %v1910 = vsub.f32 %v71, %v1909
    %1911 = vmatpush1.msra.mxu0 %v1910
    %1912 = vmatprep.subr.mxu0 0.0
    %1913 = vmatpush1.msra.mxu0 0.0
    %1914 = vmatprep.subr.mxu0 0.0
    %1915 = vmatpush1.msra.mxu0 0.0
    %1916 = vmatprep.subr.mxu0 0.0
    %1917 = vmatpush1.msra.mxu0 0.0
    %1918 = vmatprep.subr.mxu0 0.0
    %1919 = vmatpush1.msra.mxu0 0.0
    %1920 = vmatprep.subr.mxu0 0.0
    %1921 = vmatpush1.msra.mxu0 0.0
    %1922 = vmatprep.subr.mxu0 0.0
    %1923 = vmatpush1.msra.mxu0 0.0
    %1924 = vmatprep.subr.mxu0 0.0
    %1925 = vmatpush1.msra.mxu0 0.0
    %1926 = vmatprep.subr.mxu0 0.0
    %1927 = vmatpush1.msra.mxu0 0.0
    %1928 = vmatprep.subr.mxu0 0.0
    %1929 = vmatpush1.msra.mxu0 0.0
    %1930 = vmatprep.subr.mxu0 0.0
    %1931 = vmatpush1.msra.mxu0 0.0
    %1932 = vmatprep.subr.mxu0 0.0
    %1933 = vmatpush1.msra.mxu0 0.0
    %1934 = vmatprep.subr.mxu0 0.0
    %1935 = vmatpush1.msra.mxu0 0.0
    %1936 = vmatprep.subr.mxu0 0.0
    %1937 = vmatpush1.msra.mxu0 0.0
    %1938 = vmatprep.subr.mxu0 0.0
    %1939 = vmatpush1.msra.mxu0 0.0
    %1940 = vmatprep.subr.mxu0 0.0
    %1941 = vmatpush1.msra.mxu0 0.0
    %1942 = vmatprep.subr.mxu0 0.0
    %1943 = vmatpush1.msra.mxu0 0.0
    %1944 = vmatprep.mubr.f32.mxu0 0.0
    %v1945 = vand.u32 %v1605, 4294901760
    %v1946 = vsub.f32 %v1605, %v1945
    %1947 = vmatmul.mubr.f32.gmra.mrb[0].mxu0 %v1946
    %v1948 = vpop.f32.mrb[0].mxu0
    %v1949 = vadd.f32 %v1845, %v1948
    %v1950 = vpop.f32.mrb[0].mxu0
    %1951 = vdwg.mxu0
    %1952 = vmatprep.subr.mxu0 0.0
    %v1953 = vand.u32 %v56, 4294901760
    %1954 = vmatpush1.msra.mxu0 %v1953
    %1955 = vmatprep.subr.mxu0 0.0
    %v1956 = vand.u32 %v57, 4294901760
    %1957 = vmatpush1.msra.mxu0 %v1956
    %1958 = vmatprep.subr.mxu0 0.0
    %v1959 = vand.u32 %v58, 4294901760
    %1960 = vmatpush1.msra.mxu0 %v1959
    %1961 = vmatprep.subr.mxu0 0.0
    %v1962 = vand.u32 %v59, 4294901760
    %1963 = vmatpush1.msra.mxu0 %v1962
    %1964 = vmatprep.subr.mxu0 0.0
    %v1965 = vand.u32 %v60, 4294901760
    %1966 = vmatpush1.msra.mxu0 %v1965
    %1967 = vmatprep.subr.mxu0 0.0
    %v1968 = vand.u32 %v61, 4294901760
    %1969 = vmatpush1.msra.mxu0 %v1968
    %1970 = vmatprep.subr.mxu0 0.0
    %v1971 = vand.u32 %v62, 4294901760
    %1972 = vmatpush1.msra.mxu0 %v1971
    %1973 = vmatprep.subr.mxu0 0.0
    %v1974 = vand.u32 %v63, 4294901760
    %1975 = vmatpush1.msra.mxu0 %v1974
    %1976 = vmatprep.subr.mxu0 0.0
    %v1977 = vand.u32 %v64, 4294901760
    %1978 = vmatpush1.msra.mxu0 %v1977
    %1979 = vmatprep.subr.mxu0 0.0
    %v1980 = vand.u32 %v65, 4294901760
    %1981 = vmatpush1.msra.mxu0 %v1980
    %1982 = vmatprep.subr.mxu0 0.0
    %v1983 = vand.u32 %v66, 4294901760
    %1984 = vmatpush1.msra.mxu0 %v1983
    %1985 = vmatprep.subr.mxu0 0.0
    %v1986 = vand.u32 %v67, 4294901760
    %1987 = vmatpush1.msra.mxu0 %v1986
    %1988 = vmatprep.subr.mxu0 0.0
    %v1989 = vand.u32 %v68, 4294901760
    %1990 = vmatpush1.msra.mxu0 %v1989
    %1991 = vmatprep.subr.mxu0 0.0
    %v1992 = vand.u32 %v69, 4294901760
    %1993 = vmatpush1.msra.mxu0 %v1992
    %1994 = vmatprep.subr.mxu0 0.0
    %v1995 = vand.u32 %v70, 4294901760
    %1996 = vmatpush1.msra.mxu0 %v1995
    %1997 = vmatprep.subr.mxu0 0.0
    %v1998 = vand.u32 %v71, 4294901760
    %1999 = vmatpush1.msra.mxu0 %v1998
    %2000 = vmatprep.subr.mxu0 0.0
    %2001 = vmatpush1.msra.mxu0 0.0
    %2002 = vmatprep.subr.mxu0 0.0
    %2003 = vmatpush1.msra.mxu0 0.0
    %2004 = vmatprep.subr.mxu0 0.0
    %2005 = vmatpush1.msra.mxu0 0.0
    %2006 = vmatprep.subr.mxu0 0.0
    %2007 = vmatpush1.msra.mxu0 0.0
    %2008 = vmatprep.subr.mxu0 0.0
    %2009 = vmatpush1.msra.mxu0 0.0
    %2010 = vmatprep.subr.mxu0 0.0
    %2011 = vmatpush1.msra.mxu0 0.0
    %2012 = vmatprep.subr.mxu0 0.0
    %2013 = vmatpush1.msra.mxu0 0.0
    %2014 = vmatprep.subr.mxu0 0.0
    %2015 = vmatpush1.msra.mxu0 0.0
    %2016 = vmatprep.subr.mxu0 0.0
    %2017 = vmatpush1.msra.mxu0 0.0
    %2018 = vmatprep.subr.mxu0 0.0
    %2019 = vmatpush1.msra.mxu0 0.0
    %2020 = vmatprep.subr.mxu0 0.0
    %2021 = vmatpush1.msra.mxu0 0.0
    %2022 = vmatprep.subr.mxu0 0.0
    %2023 = vmatpush1.msra.mxu0 0.0
    %2024 = vmatprep.subr.mxu0 0.0
    %2025 = vmatpush1.msra.mxu0 0.0
    %2026 = vmatprep.subr.mxu0 0.0
    %2027 = vmatpush1.msra.mxu0 0.0
    %2028 = vmatprep.subr.mxu0 0.0
    %2029 = vmatpush1.msra.mxu0 0.0
    %2030 = vmatprep.subr.mxu0 0.0
    %2031 = vmatpush1.msra.mxu0 0.0
    %2032 = vmatprep.mubr.f32.mxu0 0.0
    %v2033 = vand.u32 %v1605, 4294901760
    %v2034 = vsub.f32 %v1605, %v2033
    %v2035 = vand.u32 %v2034, 4294901760
    %2036 = vmatmul.mubr.f32.gmra.mrb[0].mxu0 %v2035
    %v2037 = vpop.f32.mrb[0].mxu0
    %v2038 = vadd.f32 %v1949, %v2037
    %v2039 = vpop.f32.mrb[0].mxu0
    %2040 = vdwg.mxu0
    %2041 = vmatprep.subr.mxu0 0.0
    %v2042 = vand.u32 %v56, 4294901760
    %v2043 = vsub.f32 %v56, %v2042
    %v2044 = vand.u32 %v2043, 4294901760
    %2045 = vmatpush1.msra.mxu0 %v2044
    %2046 = vmatprep.subr.mxu0 0.0
    %v2047 = vand.u32 %v57, 4294901760
    %v2048 = vsub.f32 %v57, %v2047
    %v2049 = vand.u32 %v2048, 4294901760
    %2050 = vmatpush1.msra.mxu0 %v2049
    %2051 = vmatprep.subr.mxu0 0.0
    %v2052 = vand.u32 %v58, 4294901760
    %v2053 = vsub.f32 %v58, %v2052
    %v2054 = vand.u32 %v2053, 4294901760
    %2055 = vmatpush1.msra.mxu0 %v2054
    %2056 = vmatprep.subr.mxu0 0.0
    %v2057 = vand.u32 %v59, 4294901760
    %v2058 = vsub.f32 %v59, %v2057
    %v2059 = vand.u32 %v2058, 4294901760
    %2060 = vmatpush1.msra.mxu0 %v2059
    %2061 = vmatprep.subr.mxu0 0.0
    %v2062 = vand.u32 %v60, 4294901760
    %v2063 = vsub.f32 %v60, %v2062
    %v2064 = vand.u32 %v2063, 4294901760
    %2065 = vmatpush1.msra.mxu0 %v2064
    %2066 = vmatprep.subr.mxu0 0.0
    %v2067 = vand.u32 %v61, 4294901760
    %v2068 = vsub.f32 %v61, %v2067
    %v2069 = vand.u32 %v2068, 4294901760
    %2070 = vmatpush1.msra.mxu0 %v2069
    %2071 = vmatprep.subr.mxu0 0.0
    %v2072 = vand.u32 %v62, 4294901760
    %v2073 = vsub.f32 %v62, %v2072
    %v2074 = vand.u32 %v2073, 4294901760
    %2075 = vmatpush1.msra.mxu0 %v2074
    %2076 = vmatprep.subr.mxu0 0.0
    %v2077 = vand.u32 %v63, 4294901760
    %v2078 = vsub.f32 %v63, %v2077
    %v2079 = vand.u32 %v2078, 4294901760
    %2080 = vmatpush1.msra.mxu0 %v2079
    %2081 = vmatprep.subr.mxu0 0.0
    %v2082 = vand.u32 %v64, 4294901760
    %v2083 = vsub.f32 %v64, %v2082
    %v2084 = vand.u32 %v2083, 4294901760
    %2085 = vmatpush1.msra.mxu0 %v2084
    %2086 = vmatprep.subr.mxu0 0.0
    %v2087 = vand.u32 %v65, 4294901760
    %v2088 = vsub.f32 %v65, %v2087
    %v2089 = vand.u32 %v2088, 4294901760
    %2090 = vmatpush1.msra.mxu0 %v2089
    %2091 = vmatprep.subr.mxu0 0.0
    %v2092 = vand.u32 %v66, 4294901760
    %v2093 = vsub.f32 %v66, %v2092
    %v2094 = vand.u32 %v2093, 4294901760
    %2095 = vmatpush1.msra.mxu0 %v2094
    %2096 = vmatprep.subr.mxu0 0.0
    %v2097 = vand.u32 %v67, 4294901760
    %v2098 = vsub.f32 %v67, %v2097
    %v2099 = vand.u32 %v2098, 4294901760
    %2100 = vmatpush1.msra.mxu0 %v2099
    %2101 = vmatprep.subr.mxu0 0.0
    %v2102 = vand.u32 %v68, 4294901760
    %v2103 = vsub.f32 %v68, %v2102
    %v2104 = vand.u32 %v2103, 4294901760
    %2105 = vmatpush1.msra.mxu0 %v2104
    %2106 = vmatprep.subr.mxu0 0.0
    %v2107 = vand.u32 %v69, 4294901760
    %v2108 = vsub.f32 %v69, %v2107
    %v2109 = vand.u32 %v2108, 4294901760
    %2110 = vmatpush1.msra.mxu0 %v2109
    %2111 = vmatprep.subr.mxu0 0.0
    %v2112 = vand.u32 %v70, 4294901760
    %v2113 = vsub.f32 %v70, %v2112
    %v2114 = vand.u32 %v2113, 4294901760
    %2115 = vmatpush1.msra.mxu0 %v2114
    %2116 = vmatprep.subr.mxu0 0.0
    %v2117 = vand.u32 %v71, 4294901760
    %v2118 = vsub.f32 %v71, %v2117
    %v2119 = vand.u32 %v2118, 4294901760
    %2120 = vmatpush1.msra.mxu0 %v2119
    %2121 = vmatprep.subr.mxu0 0.0
    %2122 = vmatpush1.msra.mxu0 0.0
    %2123 = vmatprep.subr.mxu0 0.0
    %2124 = vmatpush1.msra.mxu0 0.0
    %2125 = vmatprep.subr.mxu0 0.0
    %2126 = vmatpush1.msra.mxu0 0.0
    %2127 = vmatprep.subr.mxu0 0.0
    %2128 = vmatpush1.msra.mxu0 0.0
    %2129 = vmatprep.subr.mxu0 0.0
    %2130 = vmatpush1.msra.mxu0 0.0
    %2131 = vmatprep.subr.mxu0 0.0
    %2132 = vmatpush1.msra.mxu0 0.0
    %2133 = vmatprep.subr.mxu0 0.0
    %2134 = vmatpush1.msra.mxu0 0.0
    %2135 = vmatprep.subr.mxu0 0.0
    %2136 = vmatpush1.msra.mxu0 0.0
    %2137 = vmatprep.subr.mxu0 0.0
    %2138 = vmatpush1.msra.mxu0 0.0
    %2139 = vmatprep.subr.mxu0 0.0
    %2140 = vmatpush1.msra.mxu0 0.0
    %2141 = vmatprep.subr.mxu0 0.0
    %2142 = vmatpush1.msra.mxu0 0.0
    %2143 = vmatprep.subr.mxu0 0.0
    %2144 = vmatpush1.msra.mxu0 0.0
    %2145 = vmatprep.subr.mxu0 0.0
    %2146 = vmatpush1.msra.mxu0 0.0
    %2147 = vmatprep.subr.mxu0 0.0
    %2148 = vmatpush1.msra.mxu0 0.0
    %2149 = vmatprep.subr.mxu0 0.0
    %2150 = vmatpush1.msra.mxu0 0.0
    %2151 = vmatprep.subr.mxu0 0.0
    %2152 = vmatpush1.msra.mxu0 0.0
    %2153 = vmatprep.mubr.f32.mxu0 0.0
    %v2154 = vand.u32 %v1605, 4294901760
    %2155 = vmatmul.mubr.f32.gmra.mrb[0].mxu0 %v2154
    %v2156 = vpop.f32.mrb[0].mxu0
    %v2157 = vadd.f32 %v2038, %v2156
    %v2158 = vpop.f32.mrb[0].mxu0
    %2159 = vdwg.mxu0
    %2160 = vmatprep.subr.mxu0 0.0
    %v2161 = vand.u32 %v56, 4294901760
    %2162 = vmatpush1.msra.mxu0 %v2161
    %2163 = vmatprep.subr.mxu0 0.0
    %v2164 = vand.u32 %v57, 4294901760
    %2165 = vmatpush1.msra.mxu0 %v2164
    %2166 = vmatprep.subr.mxu0 0.0
    %v2167 = vand.u32 %v58, 4294901760
    %2168 = vmatpush1.msra.mxu0 %v2167
    %2169 = vmatprep.subr.mxu0 0.0
    %v2170 = vand.u32 %v59, 4294901760
    %2171 = vmatpush1.msra.mxu0 %v2170
    %2172 = vmatprep.subr.mxu0 0.0
    %v2173 = vand.u32 %v60, 4294901760
    %2174 = vmatpush1.msra.mxu0 %v2173
    %2175 = vmatprep.subr.mxu0 0.0
    %v2176 = vand.u32 %v61, 4294901760
    %2177 = vmatpush1.msra.mxu0 %v2176
    %2178 = vmatprep.subr.mxu0 0.0
    %v2179 = vand.u32 %v62, 4294901760
    %2180 = vmatpush1.msra.mxu0 %v2179
    %2181 = vmatprep.subr.mxu0 0.0
    %v2182 = vand.u32 %v63, 4294901760
    %2183 = vmatpush1.msra.mxu0 %v2182
    %2184 = vmatprep.subr.mxu0 0.0
    %v2185 = vand.u32 %v64, 4294901760
    %2186 = vmatpush1.msra.mxu0 %v2185
    %2187 = vmatprep.subr.mxu0 0.0
    %v2188 = vand.u32 %v65, 4294901760
    %2189 = vmatpush1.msra.mxu0 %v2188
    %2190 = vmatprep.subr.mxu0 0.0
    %v2191 = vand.u32 %v66, 4294901760
    %2192 = vmatpush1.msra.mxu0 %v2191
    %2193 = vmatprep.subr.mxu0 0.0
    %v2194 = vand.u32 %v67, 4294901760
    %2195 = vmatpush1.msra.mxu0 %v2194
    %2196 = vmatprep.subr.mxu0 0.0
    %v2197 = vand.u32 %v68, 4294901760
    %2198 = vmatpush1.msra.mxu0 %v2197
    %2199 = vmatprep.subr.mxu0 0.0
    %v2200 = vand.u32 %v69, 4294901760
    %2201 = vmatpush1.msra.mxu0 %v2200
    %2202 = vmatprep.subr.mxu0 0.0
    %v2203 = vand.u32 %v70, 4294901760
    %2204 = vmatpush1.msra.mxu0 %v2203
    %2205 = vmatprep.subr.mxu0 0.0
    %v2206 = vand.u32 %v71, 4294901760
    %2207 = vmatpush1.msra.mxu0 %v2206
    %2208 = vmatprep.subr.mxu0 0.0
    %2209 = vmatpush1.msra.mxu0 0.0
    %2210 = vmatprep.subr.mxu0 0.0
    %2211 = vmatpush1.msra.mxu0 0.0
    %2212 = vmatprep.subr.mxu0 0.0
    %2213 = vmatpush1.msra.mxu0 0.0
    %2214 = vmatprep.subr.mxu0 0.0
    %2215 = vmatpush1.msra.mxu0 0.0
    %2216 = vmatprep.subr.mxu0 0.0
    %2217 = vmatpush1.msra.mxu0 0.0
    %2218 = vmatprep.subr.mxu0 0.0
    %2219 = vmatpush1.msra.mxu0 0.0
    %2220 = vmatprep.subr.mxu0 0.0
    %2221 = vmatpush1.msra.mxu0 0.0
    %2222 = vmatprep.subr.mxu0 0.0
    %2223 = vmatpush1.msra.mxu0 0.0
    %2224 = vmatprep.subr.mxu0 0.0
    %2225 = vmatpush1.msra.mxu0 0.0
    %2226 = vmatprep.subr.mxu0 0.0
    %2227 = vmatpush1.msra.mxu0 0.0
    %2228 = vmatprep.subr.mxu0 0.0
    %2229 = vmatpush1.msra.mxu0 0.0
    %2230 = vmatprep.subr.mxu0 0.0
    %2231 = vmatpush1.msra.mxu0 0.0
    %2232 = vmatprep.subr.mxu0 0.0
    %2233 = vmatpush1.msra.mxu0 0.0
    %2234 = vmatprep.subr.mxu0 0.0
    %2235 = vmatpush1.msra.mxu0 0.0
    %2236 = vmatprep.subr.mxu0 0.0
    %2237 = vmatpush1.msra.mxu0 0.0
    %2238 = vmatprep.subr.mxu0 0.0
    %2239 = vmatpush1.msra.mxu0 0.0
    %2240 = vmatprep.mubr.f32.mxu0 0.0
    %v2241 = vand.u32 %v1605, 4294901760
    %2242 = vmatmul.mubr.f32.gmra.mrb[0].mxu0 %v2241
    %v2243 = vpop.f32.mrb[0].mxu0
    %v2244 = vadd.f32 %v2157, %v2243
    %v2245 = vpop.f32.mrb[0].mxu0
    %2246 = vdwg.mxu0
    %v2247 = vlaneseq
    %v2248 = vshrl.u32 %v2247, 7
    %v2249 = vsub.s32 0, %v2248
    %v2250 = vrot.slane %v2244, %v2249
    %v2251 = vsub.f32 %v1599, %v2250
    %v2252 = vmul.f32 %v2251, %v2251
    %v2253 = vrot.slane %v2252, 4
    %v2254 = vadd.f32 %v2252, %v2253
    %v2255 = vrot.slane %v2254, 2
    %v2256 = vadd.f32 %v2254, %v2255
    %v2257 = vrot.slane %v2256, 1
    %v2258 = vadd.f32 %v2256, %v2257
    %2259 = vmatprep.subr.mxu0 0.0
    %v2260 = vand.u32 %v56, 4294901760
    %2261 = vmatpush1.msra.mxu0 %v2260
    %2262 = vmatprep.subr.mxu0 0.0
    %v2263 = vand.u32 %v57, 4294901760
    %2264 = vmatpush1.msra.mxu0 %v2263
    %2265 = vmatprep.subr.mxu0 0.0
    %v2266 = vand.u32 %v58, 4294901760
    %2267 = vmatpush1.msra.mxu0 %v2266
    %2268 = vmatprep.subr.mxu0 0.0
    %v2269 = vand.u32 %v59, 4294901760
    %2270 = vmatpush1.msra.mxu0 %v2269
    %2271 = vmatprep.subr.mxu0 0.0
    %v2272 = vand.u32 %v60, 4294901760
    %2273 = vmatpush1.msra.mxu0 %v2272
    %2274 = vmatprep.subr.mxu0 0.0
    %v2275 = vand.u32 %v61, 4294901760
    %2276 = vmatpush1.msra.mxu0 %v2275
    %2277 = vmatprep.subr.mxu0 0.0
    %v2278 = vand.u32 %v62, 4294901760
    %2279 = vmatpush1.msra.mxu0 %v2278
    %2280 = vmatprep.subr.mxu0 0.0
    %v2281 = vand.u32 %v63, 4294901760
    %2282 = vmatpush1.msra.mxu0 %v2281
    %2283 = vmatprep.subr.mxu0 0.0
    %v2284 = vand.u32 %v64, 4294901760
    %2285 = vmatpush1.msra.mxu0 %v2284
    %2286 = vmatprep.subr.mxu0 0.0
    %v2287 = vand.u32 %v65, 4294901760
    %2288 = vmatpush1.msra.mxu0 %v2287
    %2289 = vmatprep.subr.mxu0 0.0
    %v2290 = vand.u32 %v66, 4294901760
    %2291 = vmatpush1.msra.mxu0 %v2290
    %2292 = vmatprep.subr.mxu0 0.0
    %v2293 = vand.u32 %v67, 4294901760
    %2294 = vmatpush1.msra.mxu0 %v2293
    %2295 = vmatprep.subr.mxu0 0.0
    %v2296 = vand.u32 %v68, 4294901760
    %2297 = vmatpush1.msra.mxu0 %v2296
    %2298 = vmatprep.subr.mxu0 0.0
    %v2299 = vand.u32 %v69, 4294901760
    %2300 = vmatpush1.msra.mxu0 %v2299
    %2301 = vmatprep.subr.mxu0 0.0
    %v2302 = vand.u32 %v70, 4294901760
    %2303 = vmatpush1.msra.mxu0 %v2302
    %2304 = vmatprep.subr.mxu0 0.0
    %v2305 = vand.u32 %v71, 4294901760
    %2306 = vmatpush1.msra.mxu0 %v2305
    %2307 = vmatprep.subr.mxu0 0.0
    %2308 = vmatpush1.msra.mxu0 0.0
    %2309 = vmatprep.subr.mxu0 0.0
    %2310 = vmatpush1.msra.mxu0 0.0
    %2311 = vmatprep.subr.mxu0 0.0
    %2312 = vmatpush1.msra.mxu0 0.0
    %2313 = vmatprep.subr.mxu0 0.0
    %2314 = vmatpush1.msra.mxu0 0.0
    %2315 = vmatprep.subr.mxu0 0.0
    %2316 = vmatpush1.msra.mxu0 0.0
    %2317 = vmatprep.subr.mxu0 0.0
    %2318 = vmatpush1.msra.mxu0 0.0
    %2319 = vmatprep.subr.mxu0 0.0
    %2320 = vmatpush1.msra.mxu0 0.0
    %2321 = vmatprep.subr.mxu0 0.0
    %2322 = vmatpush1.msra.mxu0 0.0
    %2323 = vmatprep.subr.mxu0 0.0
    %2324 = vmatpush1.msra.mxu0 0.0
    %2325 = vmatprep.subr.mxu0 0.0
    %2326 = vmatpush1.msra.mxu0 0.0
    %2327 = vmatprep.subr.mxu0 0.0
    %2328 = vmatpush1.msra.mxu0 0.0
    %2329 = vmatprep.subr.mxu0 0.0
    %2330 = vmatpush1.msra.mxu0 0.0
    %2331 = vmatprep.subr.mxu0 0.0
    %2332 = vmatpush1.msra.mxu0 0.0
    %2333 = vmatprep.subr.mxu0 0.0
    %2334 = vmatpush1.msra.mxu0 0.0
    %2335 = vmatprep.subr.mxu0 0.0
    %2336 = vmatpush1.msra.mxu0 0.0
    %2337 = vmatprep.subr.mxu0 0.0
    %2338 = vmatpush1.msra.mxu0 0.0
    %2339 = vmatprep.mubr.f32.mxu0 0.0
    %v2340 = vand.u32 %v2258, 4294901760
    %v2341 = vsub.f32 %v2258, %v2340
    %v2342 = vand.u32 %v2341, 4294901760
    %v2343 = vsub.f32 %v2341, %v2342
    %v2344 = vand.u32 %v2343, 4294901760
    %2345 = vmatmul.mubr.f32.gmra.mrb[0].mxu0 %v2344
    %v2346 = vpop.f32.mrb[0].mxu0
    %v2347 = vadd.f32 1e-05, %v2346
    %v2348 = vpop.f32.mrb[0].mxu0
    %2349 = vdwg.mxu0
    %2350 = vmatprep.subr.mxu0 0.0
    %v2351 = vand.u32 %v56, 4294901760
    %v2352 = vsub.f32 %v56, %v2351
    %v2353 = vand.u32 %v2352, 4294901760
    %v2354 = vsub.f32 %v2352, %v2353
    %v2355 = vand.u32 %v2354, 4294901760
    %2356 = vmatpush1.msra.mxu0 %v2355
    %2357 = vmatprep.subr.mxu0 0.0
    %v2358 = vand.u32 %v57, 4294901760
    %v2359 = vsub.f32 %v57, %v2358
    %v2360 = vand.u32 %v2359, 4294901760
    %v2361 = vsub.f32 %v2359, %v2360
    %v2362 = vand.u32 %v2361, 4294901760
    %2363 = vmatpush1.msra.mxu0 %v2362
    %2364 = vmatprep.subr.mxu0 0.0
    %v2365 = vand.u32 %v58, 4294901760
    %v2366 = vsub.f32 %v58, %v2365
    %v2367 = vand.u32 %v2366, 4294901760
    %v2368 = vsub.f32 %v2366, %v2367
    %v2369 = vand.u32 %v2368, 4294901760
    %2370 = vmatpush1.msra.mxu0 %v2369
    %2371 = vmatprep.subr.mxu0 0.0
    %v2372 = vand.u32 %v59, 4294901760
    %v2373 = vsub.f32 %v59, %v2372
    %v2374 = vand.u32 %v2373, 4294901760
    %v2375 = vsub.f32 %v2373, %v2374
    %v2376 = vand.u32 %v2375, 4294901760
    %2377 = vmatpush1.msra.mxu0 %v2376
    %2378 = vmatprep.subr.mxu0 0.0
    %v2379 = vand.u32 %v60, 4294901760
    %v2380 = vsub.f32 %v60, %v2379
    %v2381 = vand.u32 %v2380, 4294901760
    %v2382 = vsub.f32 %v2380, %v2381
    %v2383 = vand.u32 %v2382, 4294901760
    %2384 = vmatpush1.msra.mxu0 %v2383
    %2385 = vmatprep.subr.mxu0 0.0
    %v2386 = vand.u32 %v61, 4294901760
    %v2387 = vsub.f32 %v61, %v2386
    %v2388 = vand.u32 %v2387, 4294901760
    %v2389 = vsub.f32 %v2387, %v2388
    %v2390 = vand.u32 %v2389, 4294901760
    %2391 = vmatpush1.msra.mxu0 %v2390
    %2392 = vmatprep.subr.mxu0 0.0
    %v2393 = vand.u32 %v62, 4294901760
    %v2394 = vsub.f32 %v62, %v2393
    %v2395 = vand.u32 %v2394, 4294901760
    %v2396 = vsub.f32 %v2394, %v2395
    %v2397 = vand.u32 %v2396, 4294901760
    %2398 = vmatpush1.msra.mxu0 %v2397
    %2399 = vmatprep.subr.mxu0 0.0
    %v2400 = vand.u32 %v63, 4294901760
    %v2401 = vsub.f32 %v63, %v2400
    %v2402 = vand.u32 %v2401, 4294901760
    %v2403 = vsub.f32 %v2401, %v2402
    %v2404 = vand.u32 %v2403, 4294901760
    %2405 = vmatpush1.msra.mxu0 %v2404
    %2406 = vmatprep.subr.mxu0 0.0
    %v2407 = vand.u32 %v64, 4294901760
    %v2408 = vsub.f32 %v64, %v2407
    %v2409 = vand.u32 %v2408, 4294901760
    %v2410 = vsub.f32 %v2408, %v2409
    %v2411 = vand.u32 %v2410, 4294901760
    %2412 = vmatpush1.msra.mxu0 %v2411
    %2413 = vmatprep.subr.mxu0 0.0
    %v2414 = vand.u32 %v65, 4294901760
    %v2415 = vsub.f32 %v65, %v2414
    %v2416 = vand.u32 %v2415, 4294901760
    %v2417 = vsub.f32 %v2415, %v2416
    %v2418 = vand.u32 %v2417, 4294901760
    %2419 = vmatpush1.msra.mxu0 %v2418
    %2420 = vmatprep.subr.mxu0 0.0
    %v2421 = vand.u32 %v66, 4294901760
    %v2422 = vsub.f32 %v66, %v2421
    %v2423 = vand.u32 %v2422, 4294901760
    %v2424 = vsub.f32 %v2422, %v2423
    %v2425 = vand.u32 %v2424, 4294901760
    %2426 = vmatpush1.msra.mxu0 %v2425
    %2427 = vmatprep.subr.mxu0 0.0
    %v2428 = vand.u32 %v67, 4294901760
    %v2429 = vsub.f32 %v67, %v2428
    %v2430 = vand.u32 %v2429, 4294901760
    %v2431 = vsub.f32 %v2429, %v2430
    %v2432 = vand.u32 %v2431, 4294901760
    %2433 = vmatpush1.msra.mxu0 %v2432
    %2434 = vmatprep.subr.mxu0 0.0
    %v2435 = vand.u32 %v68, 4294901760
    %v2436 = vsub.f32 %v68, %v2435
    %v2437 = vand.u32 %v2436, 4294901760
    %v2438 = vsub.f32 %v2436, %v2437
    %v2439 = vand.u32 %v2438, 4294901760
    %2440 = vmatpush1.msra.mxu0 %v2439
    %2441 = vmatprep.subr.mxu0 0.0
    %v2442 = vand.u32 %v69, 4294901760
    %v2443 = vsub.f32 %v69, %v2442
    %v2444 = vand.u32 %v2443, 4294901760
    %v2445 = vsub.f32 %v2443, %v2444
    %v2446 = vand.u32 %v2445, 4294901760
    %2447 = vmatpush1.msra.mxu0 %v2446
    %2448 = vmatprep.subr.mxu0 0.0
    %v2449 = vand.u32 %v70, 4294901760
    %v2450 = vsub.f32 %v70, %v2449
    %v2451 = vand.u32 %v2450, 4294901760
    %v2452 = vsub.f32 %v2450, %v2451
    %v2453 = vand.u32 %v2452, 4294901760
    %2454 = vmatpush1.msra.mxu0 %v2453
    %2455 = vmatprep.subr.mxu0 0.0
    %v2456 = vand.u32 %v71, 4294901760
    %v2457 = vsub.f32 %v71, %v2456
    %v2458 = vand.u32 %v2457, 4294901760
    %v2459 = vsub.f32 %v2457, %v2458
    %v2460 = vand.u32 %v2459, 4294901760
    %2461 = vmatpush1.msra.mxu0 %v2460
    %2462 = vmatprep.subr.mxu0 0.0
    %2463 = vmatpush1.msra.mxu0 0.0
    %2464 = vmatprep.subr.mxu0 0.0
    %2465 = vmatpush1.msra.mxu0 0.0
    %2466 = vmatprep.subr.mxu0 0.0
    %2467 = vmatpush1.msra.mxu0 0.0
    %2468 = vmatprep.subr.mxu0 0.0
    %2469 = vmatpush1.msra.mxu0 0.0
    %2470 = vmatprep.subr.mxu0 0.0
    %2471 = vmatpush1.msra.mxu0 0.0
    %2472 = vmatprep.subr.mxu0 0.0
    %2473 = vmatpush1.msra.mxu0 0.0
    %2474 = vmatprep.subr.mxu0 0.0
    %2475 = vmatpush1.msra.mxu0 0.0
    %2476 = vmatprep.subr.mxu0 0.0
    %2477 = vmatpush1.msra.mxu0 0.0
    %2478 = vmatprep.subr.mxu0 0.0
    %2479 = vmatpush1.msra.mxu0 0.0
    %2480 = vmatprep.subr.mxu0 0.0
    %2481 = vmatpush1.msra.mxu0 0.0
    %2482 = vmatprep.subr.mxu0 0.0
    %2483 = vmatpush1.msra.mxu0 0.0
    %2484 = vmatprep.subr.mxu0 0.0
    %2485 = vmatpush1.msra.mxu0 0.0
    %2486 = vmatprep.subr.mxu0 0.0
    %2487 = vmatpush1.msra.mxu0 0.0
    %2488 = vmatprep.subr.mxu0 0.0
    %2489 = vmatpush1.msra.mxu0 0.0
    %2490 = vmatprep.subr.mxu0 0.0
    %2491 = vmatpush1.msra.mxu0 0.0
    %2492 = vmatprep.subr.mxu0 0.0
    %2493 = vmatpush1.msra.mxu0 0.0
    %2494 = vmatprep.mubr.f32.mxu0 0.0
    %v2495 = vand.u32 %v2258, 4294901760
    %2496 = vmatmul.mubr.f32.gmra.mrb[0].mxu0 %v2495
    %v2497 = vpop.f32.mrb[0].mxu0
    %v2498 = vadd.f32 %v2347, %v2497
    %v2499 = vpop.f32.mrb[0].mxu0
    %2500 = vdwg.mxu0
    %2501 = vmatprep.subr.mxu0 0.0
    %v2502 = vand.u32 %v56, 4294901760
    %v2503 = vsub.f32 %v56, %v2502
    %2504 = vmatpush1.msra.mxu0 %v2503
    %2505 = vmatprep.subr.mxu0 0.0
    %v2506 = vand.u32 %v57, 4294901760
    %v2507 = vsub.f32 %v57, %v2506
    %2508 = vmatpush1.msra.mxu0 %v2507
    %2509 = vmatprep.subr.mxu0 0.0
    %v2510 = vand.u32 %v58, 4294901760
    %v2511 = vsub.f32 %v58, %v2510
    %2512 = vmatpush1.msra.mxu0 %v2511
    %2513 = vmatprep.subr.mxu0 0.0
    %v2514 = vand.u32 %v59, 4294901760
    %v2515 = vsub.f32 %v59, %v2514
    %2516 = vmatpush1.msra.mxu0 %v2515
    %2517 = vmatprep.subr.mxu0 0.0
    %v2518 = vand.u32 %v60, 4294901760
    %v2519 = vsub.f32 %v60, %v2518
    %2520 = vmatpush1.msra.mxu0 %v2519
    %2521 = vmatprep.subr.mxu0 0.0
    %v2522 = vand.u32 %v61, 4294901760
    %v2523 = vsub.f32 %v61, %v2522
    %2524 = vmatpush1.msra.mxu0 %v2523
    %2525 = vmatprep.subr.mxu0 0.0
    %v2526 = vand.u32 %v62, 4294901760
    %v2527 = vsub.f32 %v62, %v2526
    %2528 = vmatpush1.msra.mxu0 %v2527
    %2529 = vmatprep.subr.mxu0 0.0
    %v2530 = vand.u32 %v63, 4294901760
    %v2531 = vsub.f32 %v63, %v2530
    %2532 = vmatpush1.msra.mxu0 %v2531
    %2533 = vmatprep.subr.mxu0 0.0
    %v2534 = vand.u32 %v64, 4294901760
    %v2535 = vsub.f32 %v64, %v2534
    %2536 = vmatpush1.msra.mxu0 %v2535
    %2537 = vmatprep.subr.mxu0 0.0
    %v2538 = vand.u32 %v65, 4294901760
    %v2539 = vsub.f32 %v65, %v2538
    %2540 = vmatpush1.msra.mxu0 %v2539
    %2541 = vmatprep.subr.mxu0 0.0
    %v2542 = vand.u32 %v66, 4294901760
    %v2543 = vsub.f32 %v66, %v2542
    %2544 = vmatpush1.msra.mxu0 %v2543
    %2545 = vmatprep.subr.mxu0 0.0
    %v2546 = vand.u32 %v67, 4294901760
    %v2547 = vsub.f32 %v67, %v2546
    %2548 = vmatpush1.msra.mxu0 %v2547
    %2549 = vmatprep.subr.mxu0 0.0
    %v2550 = vand.u32 %v68, 4294901760
    %v2551 = vsub.f32 %v68, %v2550
    %2552 = vmatpush1.msra.mxu0 %v2551
    %2553 = vmatprep.subr.mxu0 0.0
    %v2554 = vand.u32 %v69, 4294901760
    %v2555 = vsub.f32 %v69, %v2554
    %2556 = vmatpush1.msra.mxu0 %v2555
    %2557 = vmatprep.subr.mxu0 0.0
    %v2558 = vand.u32 %v70, 4294901760
    %v2559 = vsub.f32 %v70, %v2558
    %2560 = vmatpush1.msra.mxu0 %v2559
    %2561 = vmatprep.subr.mxu0 0.0
    %v2562 = vand.u32 %v71, 4294901760
    %v2563 = vsub.f32 %v71, %v2562
    %2564 = vmatpush1.msra.mxu0 %v2563
    %2565 = vmatprep.subr.mxu0 0.0
    %2566 = vmatpush1.msra.mxu0 0.0
    %2567 = vmatprep.subr.mxu0 0.0
    %2568 = vmatpush1.msra.mxu0 0.0
    %2569 = vmatprep.subr.mxu0 0.0
    %2570 = vmatpush1.msra.mxu0 0.0
    %2571 = vmatprep.subr.mxu0 0.0
    %2572 = vmatpush1.msra.mxu0 0.0
    %2573 = vmatprep.subr.mxu0 0.0
    %2574 = vmatpush1.msra.mxu0 0.0
    %2575 = vmatprep.subr.mxu0 0.0
    %2576 = vmatpush1.msra.mxu0 0.0
    %2577 = vmatprep.subr.mxu0 0.0
    %2578 = vmatpush1.msra.mxu0 0.0
    %2579 = vmatprep.subr.mxu0 0.0
    %2580 = vmatpush1.msra.mxu0 0.0
    %2581 = vmatprep.subr.mxu0 0.0
    %2582 = vmatpush1.msra.mxu0 0.0
    %2583 = vmatprep.subr.mxu0 0.0
    %2584 = vmatpush1.msra.mxu0 0.0
    %2585 = vmatprep.subr.mxu0 0.0
    %2586 = vmatpush1.msra.mxu0 0.0
    %2587 = vmatprep.subr.mxu0 0.0
    %2588 = vmatpush1.msra.mxu0 0.0
    %2589 = vmatprep.subr.mxu0 0.0
    %2590 = vmatpush1.msra.mxu0 0.0
    %2591 = vmatprep.subr.mxu0 0.0
    %2592 = vmatpush1.msra.mxu0 0.0
    %2593 = vmatprep.subr.mxu0 0.0
    %2594 = vmatpush1.msra.mxu0 0.0
    %2595 = vmatprep.subr.mxu0 0.0
    %2596 = vmatpush1.msra.mxu0 0.0
    %2597 = vmatprep.mubr.f32.mxu0 0.0
    %v2598 = vand.u32 %v2258, 4294901760
    %v2599 = vsub.f32 %v2258, %v2598
    %2600 = vmatmul.mubr.f32.gmra.mrb[0].mxu0 %v2599
    %v2601 = vpop.f32.mrb[0].mxu0
    %v2602 = vadd.f32 %v2498, %v2601
    %v2603 = vpop.f32.mrb[0].mxu0
    %2604 = vdwg.mxu0
    %2605 = vmatprep.subr.mxu0 0.0
    %v2606 = vand.u32 %v56, 4294901760
    %2607 = vmatpush1.msra.mxu0 %v2606
    %2608 = vmatprep.subr.mxu0 0.0
    %v2609 = vand.u32 %v57, 4294901760
    %2610 = vmatpush1.msra.mxu0 %v2609
    %2611 = vmatprep.subr.mxu0 0.0
    %v2612 = vand.u32 %v58, 4294901760
    %2613 = vmatpush1.msra.mxu0 %v2612
    %2614 = vmatprep.subr.mxu0 0.0
    %v2615 = vand.u32 %v59, 4294901760
    %2616 = vmatpush1.msra.mxu0 %v2615
    %2617 = vmatprep.subr.mxu0 0.0
    %v2618 = vand.u32 %v60, 4294901760
    %2619 = vmatpush1.msra.mxu0 %v2618
    %2620 = vmatprep.subr.mxu0 0.0
    %v2621 = vand.u32 %v61, 4294901760
    %2622 = vmatpush1.msra.mxu0 %v2621
    %2623 = vmatprep.subr.mxu0 0.0
    %v2624 = vand.u32 %v62, 4294901760
    %2625 = vmatpush1.msra.mxu0 %v2624
    %2626 = vmatprep.subr.mxu0 0.0
    %v2627 = vand.u32 %v63, 4294901760
    %2628 = vmatpush1.msra.mxu0 %v2627
    %2629 = vmatprep.subr.mxu0 0.0
    %v2630 = vand.u32 %v64, 4294901760
    %2631 = vmatpush1.msra.mxu0 %v2630
    %2632 = vmatprep.subr.mxu0 0.0
    %v2633 = vand.u32 %v65, 4294901760
    %2634 = vmatpush1.msra.mxu0 %v2633
    %2635 = vmatprep.subr.mxu0 0.0
    %v2636 = vand.u32 %v66, 4294901760
    %2637 = vmatpush1.msra.mxu0 %v2636
    %2638 = vmatprep.subr.mxu0 0.0
    %v2639 = vand.u32 %v67, 4294901760
    %2640 = vmatpush1.msra.mxu0 %v2639
    %2641 = vmatprep.subr.mxu0 0.0
    %v2642 = vand.u32 %v68, 4294901760
    %2643 = vmatpush1.msra.mxu0 %v2642
    %2644 = vmatprep.subr.mxu0 0.0
    %v2645 = vand.u32 %v69, 4294901760
    %2646 = vmatpush1.msra.mxu0 %v2645
    %2647 = vmatprep.subr.mxu0 0.0
    %v2648 = vand.u32 %v70, 4294901760
    %2649 = vmatpush1.msra.mxu0 %v2648
    %2650 = vmatprep.subr.mxu0 0.0
    %v2651 = vand.u32 %v71, 4294901760
    %2652 = vmatpush1.msra.mxu0 %v2651
    %2653 = vmatprep.subr.mxu0 0.0
    %2654 = vmatpush1.msra.mxu0 0.0
    %2655 = vmatprep.subr.mxu0 0.0
    %2656 = vmatpush1.msra.mxu0 0.0
    %2657 = vmatprep.subr.mxu0 0.0
    %2658 = vmatpush1.msra.mxu0 0.0
    %2659 = vmatprep.subr.mxu0 0.0
    %2660 = vmatpush1.msra.mxu0 0.0
    %2661 = vmatprep.subr.mxu0 0.0
    %2662 = vmatpush1.msra.mxu0 0.0
    %2663 = vmatprep.subr.mxu0 0.0
    %2664 = vmatpush1.msra.mxu0 0.0
    %2665 = vmatprep.subr.mxu0 0.0
    %2666 = vmatpush1.msra.mxu0 0.0
    %2667 = vmatprep.subr.mxu0 0.0
    %2668 = vmatpush1.msra.mxu0 0.0
    %2669 = vmatprep.subr.mxu0 0.0
    %2670 = vmatpush1.msra.mxu0 0.0
    %2671 = vmatprep.subr.mxu0 0.0
    %2672 = vmatpush1.msra.mxu0 0.0
    %2673 = vmatprep.subr.mxu0 0.0
    %2674 = vmatpush1.msra.mxu0 0.0
    %2675 = vmatprep.subr.mxu0 0.0
    %2676 = vmatpush1.msra.mxu0 0.0
    %2677 = vmatprep.subr.mxu0 0.0
    %2678 = vmatpush1.msra.mxu0 0.0
    %2679 = vmatprep.subr.mxu0 0.0
    %2680 = vmatpush1.msra.mxu0 0.0
    %2681 = vmatprep.subr.mxu0 0.0
    %2682 = vmatpush1.msra.mxu0 0.0
    %2683 = vmatprep.subr.mxu0 0.0
    %2684 = vmatpush1.msra.mxu0 0.0
    %2685 = vmatprep.mubr.f32.mxu0 0.0
    %v2686 = vand.u32 %v2258, 4294901760
    %v2687 = vsub.f32 %v2258, %v2686
    %v2688 = vand.u32 %v2687, 4294901760
    %2689 = vmatmul.mubr.f32.gmra.mrb[0].mxu0 %v2688
    %v2690 = vpop.f32.mrb[0].mxu0
    %v2691 = vadd.f32 %v2602, %v2690
    %v2692 = vpop.f32.mrb[0].mxu0
    %2693 = vdwg.mxu0
    %2694 = vmatprep.subr.mxu0 0.0
    %v2695 = vand.u32 %v56, 4294901760
    %v2696 = vsub.f32 %v56, %v2695
    %v2697 = vand.u32 %v2696, 4294901760
    %2698 = vmatpush1.msra.mxu0 %v2697
    %2699 = vmatprep.subr.mxu0 0.0
    %v2700 = vand.u32 %v57, 4294901760
    %v2701 = vsub.f32 %v57, %v2700
    %v2702 = vand.u32 %v2701, 4294901760
    %2703 = vmatpush1.msra.mxu0 %v2702
    %2704 = vmatprep.subr.mxu0 0.0
    %v2705 = vand.u32 %v58, 4294901760
    %v2706 = vsub.f32 %v58, %v2705
    %v2707 = vand.u32 %v2706, 4294901760
    %2708 = vmatpush1.msra.mxu0 %v2707
    %2709 = vmatprep.subr.mxu0 0.0
    %v2710 = vand.u32 %v59, 4294901760
    %v2711 = vsub.f32 %v59, %v2710
    %v2712 = vand.u32 %v2711, 4294901760
    %2713 = vmatpush1.msra.mxu0 %v2712
    %2714 = vmatprep.subr.mxu0 0.0
    %v2715 = vand.u32 %v60, 4294901760
    %v2716 = vsub.f32 %v60, %v2715
    %v2717 = vand.u32 %v2716, 4294901760
    %2718 = vmatpush1.msra.mxu0 %v2717
    %2719 = vmatprep.subr.mxu0 0.0
    %v2720 = vand.u32 %v61, 4294901760
    %v2721 = vsub.f32 %v61, %v2720
    %v2722 = vand.u32 %v2721, 4294901760
    %2723 = vmatpush1.msra.mxu0 %v2722
    %2724 = vmatprep.subr.mxu0 0.0
    %v2725 = vand.u32 %v62, 4294901760
    %v2726 = vsub.f32 %v62, %v2725
    %v2727 = vand.u32 %v2726, 4294901760
    %2728 = vmatpush1.msra.mxu0 %v2727
    %2729 = vmatprep.subr.mxu0 0.0
    %v2730 = vand.u32 %v63, 4294901760
    %v2731 = vsub.f32 %v63, %v2730
    %v2732 = vand.u32 %v2731, 4294901760
    %2733 = vmatpush1.msra.mxu0 %v2732
    %2734 = vmatprep.subr.mxu0 0.0
    %v2735 = vand.u32 %v64, 4294901760
    %v2736 = vsub.f32 %v64, %v2735
    %v2737 = vand.u32 %v2736, 4294901760
    %2738 = vmatpush1.msra.mxu0 %v2737
    %2739 = vmatprep.subr.mxu0 0.0
    %v2740 = vand.u32 %v65, 4294901760
    %v2741 = vsub.f32 %v65, %v2740
    %v2742 = vand.u32 %v2741, 4294901760
    %2743 = vmatpush1.msra.mxu0 %v2742
    %2744 = vmatprep.subr.mxu0 0.0
    %v2745 = vand.u32 %v66, 4294901760
    %v2746 = vsub.f32 %v66, %v2745
    %v2747 = vand.u32 %v2746, 4294901760
    %2748 = vmatpush1.msra.mxu0 %v2747
    %2749 = vmatprep.subr.mxu0 0.0
    %v2750 = vand.u32 %v67, 4294901760
    %v2751 = vsub.f32 %v67, %v2750
    %v2752 = vand.u32 %v2751, 4294901760
    %2753 = vmatpush1.msra.mxu0 %v2752
    %2754 = vmatprep.subr.mxu0 0.0
    %v2755 = vand.u32 %v68, 4294901760
    %v2756 = vsub.f32 %v68, %v2755
    %v2757 = vand.u32 %v2756, 4294901760
    %2758 = vmatpush1.msra.mxu0 %v2757
    %2759 = vmatprep.subr.mxu0 0.0
    %v2760 = vand.u32 %v69, 4294901760
    %v2761 = vsub.f32 %v69, %v2760
    %v2762 = vand.u32 %v2761, 4294901760
    %2763 = vmatpush1.msra.mxu0 %v2762
    %2764 = vmatprep.subr.mxu0 0.0
    %v2765 = vand.u32 %v70, 4294901760
    %v2766 = vsub.f32 %v70, %v2765
    %v2767 = vand.u32 %v2766, 4294901760
    %2768 = vmatpush1.msra.mxu0 %v2767
    %2769 = vmatprep.subr.mxu0 0.0
    %v2770 = vand.u32 %v71, 4294901760
    %v2771 = vsub.f32 %v71, %v2770
    %v2772 = vand.u32 %v2771, 4294901760
    %2773 = vmatpush1.msra.mxu0 %v2772
    %2774 = vmatprep.subr.mxu0 0.0
    %2775 = vmatpush1.msra.mxu0 0.0
    %2776 = vmatprep.subr.mxu0 0.0
    %2777 = vmatpush1.msra.mxu0 0.0
    %2778 = vmatprep.subr.mxu0 0.0
    %2779 = vmatpush1.msra.mxu0 0.0
    %2780 = vmatprep.subr.mxu0 0.0
    %2781 = vmatpush1.msra.mxu0 0.0
    %2782 = vmatprep.subr.mxu0 0.0
    %2783 = vmatpush1.msra.mxu0 0.0
    %2784 = vmatprep.subr.mxu0 0.0
    %2785 = vmatpush1.msra.mxu0 0.0
    %2786 = vmatprep.subr.mxu0 0.0
    %2787 = vmatpush1.msra.mxu0 0.0
    %2788 = vmatprep.subr.mxu0 0.0
    %2789 = vmatpush1.msra.mxu0 0.0
    %2790 = vmatprep.subr.mxu0 0.0
    %2791 = vmatpush1.msra.mxu0 0.0
    %2792 = vmatprep.subr.mxu0 0.0
    %2793 = vmatpush1.msra.mxu0 0.0
    %2794 = vmatprep.subr.mxu0 0.0
    %2795 = vmatpush1.msra.mxu0 0.0
    %2796 = vmatprep.subr.mxu0 0.0
    %2797 = vmatpush1.msra.mxu0 0.0
    %2798 = vmatprep.subr.mxu0 0.0
    %2799 = vmatpush1.msra.mxu0 0.0
    %2800 = vmatprep.subr.mxu0 0.0
    %2801 = vmatpush1.msra.mxu0 0.0
    %2802 = vmatprep.subr.mxu0 0.0
    %2803 = vmatpush1.msra.mxu0 0.0
    %2804 = vmatprep.subr.mxu0 0.0
    %2805 = vmatpush1.msra.mxu0 0.0
    %2806 = vmatprep.mubr.f32.mxu0 0.0
    %v2807 = vand.u32 %v2258, 4294901760
    %2808 = vmatmul.mubr.f32.gmra.mrb[0].mxu0 %v2807
    %v2809 = vpop.f32.mrb[0].mxu0
    %v2810 = vadd.f32 %v2691, %v2809
    %v2811 = vpop.f32.mrb[0].mxu0
    %2812 = vdwg.mxu0
    %2813 = vmatprep.subr.mxu0 0.0
    %v2814 = vand.u32 %v56, 4294901760
    %2815 = vmatpush1.msra.mxu0 %v2814
    %2816 = vmatprep.subr.mxu0 0.0
    %v2817 = vand.u32 %v57, 4294901760
    %2818 = vmatpush1.msra.mxu0 %v2817
    %2819 = vmatprep.subr.mxu0 0.0
    %v2820 = vand.u32 %v58, 4294901760
    %2821 = vmatpush1.msra.mxu0 %v2820
    %2822 = vmatprep.subr.mxu0 0.0
    %v2823 = vand.u32 %v59, 4294901760
    %2824 = vmatpush1.msra.mxu0 %v2823
    %2825 = vmatprep.subr.mxu0 0.0
    %v2826 = vand.u32 %v60, 4294901760
    %2827 = vmatpush1.msra.mxu0 %v2826
    %2828 = vmatprep.subr.mxu0 0.0
    %v2829 = vand.u32 %v61, 4294901760
    %2830 = vmatpush1.msra.mxu0 %v2829
    %2831 = vmatprep.subr.mxu0 0.0
    %v2832 = vand.u32 %v62, 4294901760
    %2833 = vmatpush1.msra.mxu0 %v2832
    %2834 = vmatprep.subr.mxu0 0.0
    %v2835 = vand.u32 %v63, 4294901760
    %2836 = vmatpush1.msra.mxu0 %v2835
    %2837 = vmatprep.subr.mxu0 0.0
    %v2838 = vand.u32 %v64, 4294901760
    %2839 = vmatpush1.msra.mxu0 %v2838
    %2840 = vmatprep.subr.mxu0 0.0
    %v2841 = vand.u32 %v65, 4294901760
    %2842 = vmatpush1.msra.mxu0 %v2841
    %2843 = vmatprep.subr.mxu0 0.0
    %v2844 = vand.u32 %v66, 4294901760
    %2845 = vmatpush1.msra.mxu0 %v2844
    %2846 = vmatprep.subr.mxu0 0.0
    %v2847 = vand.u32 %v67, 4294901760
    %2848 = vmatpush1.msra.mxu0 %v2847
    %2849 = vmatprep.subr.mxu0 0.0
    %v2850 = vand.u32 %v68, 4294901760
    %2851 = vmatpush1.msra.mxu0 %v2850
    %2852 = vmatprep.subr.mxu0 0.0
    %v2853 = vand.u32 %v69, 4294901760
    %2854 = vmatpush1.msra.mxu0 %v2853
    %2855 = vmatprep.subr.mxu0 0.0
    %v2856 = vand.u32 %v70, 4294901760
    %2857 = vmatpush1.msra.mxu0 %v2856
    %2858 = vmatprep.subr.mxu0 0.0
    %v2859 = vand.u32 %v71, 4294901760
    %2860 = vmatpush1.msra.mxu0 %v2859
    %2861 = vmatprep.subr.mxu0 0.0
    %2862 = vmatpush1.msra.mxu0 0.0
    %2863 = vmatprep.subr.mxu0 0.0
    %2864 = vmatpush1.msra.mxu0 0.0
    %2865 = vmatprep.subr.mxu0 0.0
    %2866 = vmatpush1.msra.mxu0 0.0
    %2867 = vmatprep.subr.mxu0 0.0
    %2868 = vmatpush1.msra.mxu0 0.0
    %2869 = vmatprep.subr.mxu0 0.0
    %2870 = vmatpush1.msra.mxu0 0.0
    %2871 = vmatprep.subr.mxu0 0.0
    %2872 = vmatpush1.msra.mxu0 0.0
    %2873 = vmatprep.subr.mxu0 0.0
    %2874 = vmatpush1.msra.mxu0 0.0
    %2875 = vmatprep.subr.mxu0 0.0
    %2876 = vmatpush1.msra.mxu0 0.0
    %2877 = vmatprep.subr.mxu0 0.0
    %2878 = vmatpush1.msra.mxu0 0.0
    %2879 = vmatprep.subr.mxu0 0.0
    %2880 = vmatpush1.msra.mxu0 0.0
    %2881 = vmatprep.subr.mxu0 0.0
    %2882 = vmatpush1.msra.mxu0 0.0
    %2883 = vmatprep.subr.mxu0 0.0
    %2884 = vmatpush1.msra.mxu0 0.0
    %2885 = vmatprep.subr.mxu0 0.0
    %2886 = vmatpush1.msra.mxu0 0.0
    %2887 = vmatprep.subr.mxu0 0.0
    %2888 = vmatpush1.msra.mxu0 0.0
    %2889 = vmatprep.subr.mxu0 0.0
    %2890 = vmatpush1.msra.mxu0 0.0
    %2891 = vmatprep.subr.mxu0 0.0
    %2892 = vmatpush1.msra.mxu0 0.0
    %2893 = vmatprep.mubr.f32.mxu0 0.0
    %v2894 = vand.u32 %v2258, 4294901760
    %2895 = vmatmul.mubr.f32.gmra.mrb[0].mxu0 %v2894
    %v2896 = vpop.f32.mrb[0].mxu0
    %v2897 = vadd.f32 %v2810, %v2896
    %v2898 = vpop.f32.mrb[0].mxu0
    %2899 = vdwg.mxu0
    %v2900 = vrsqrt.pop %v2897
    %v2901 = vlaneseq
    %v2902 = vshrl.u32 %v2901, 7
    %v2903 = vsub.s32 0, %v2902
    %v2904 = vrot.slane %v2900, %v2903
    %v2905 = vmul.f32 %v2251, %v2904
    %v2906 = vmul.f32 %v2905, %v48
    %v2907 = vadd.f32 %v2906, %v49
    %2909 = vset.pattern.permute.xlu0 0
    %2910 = vperm.xlu0 %2909, %v52
    %v2911 = vpop.permute.xlu0 %2910
    %2914 = vset.pattern.permute.xlu0 0
    %2915 = vperm.xlu0 %2914, %v53
    %v2916 = vpop.permute.xlu0 %2915
    %vm2918 = vcmask 64512
    %v2920 = vsel %vm2918, %v50, 0
    %v2923 = vsel %vm2918, %v51, 0
    %2925 = vmatprep.subr.mxu0 0.0
    %v2926 = vand.u32 %v2907, 4294901760
    %2927 = vmatpush1.msra.mxu0 %v2926
    %2928 = vmatprep.subr.mxu0 0.0
    %2929 = vmatpush1.msra.mxu0 0.0
    %2930 = vmatprep.subr.mxu0 0.0
    %2931 = vmatpush1.msra.mxu0 0.0
    %2932 = vmatprep.subr.mxu0 0.0
    %2933 = vmatpush1.msra.mxu0 0.0
    %2934 = vmatprep.subr.mxu0 0.0
    %2935 = vmatpush1.msra.mxu0 0.0
    %2936 = vmatprep.subr.mxu0 0.0
    %2937 = vmatpush1.msra.mxu0 0.0
    %2938 = vmatprep.subr.mxu0 0.0
    %2939 = vmatpush1.msra.mxu0 0.0
    %2940 = vmatprep.subr.mxu0 0.0
    %2941 = vmatpush1.msra.mxu0 0.0
    %2942 = vmatprep.subr.mxu0 0.0
    %2943 = vmatpush1.msra.mxu0 0.0
    %2944 = vmatprep.subr.mxu0 0.0
    %2945 = vmatpush1.msra.mxu0 0.0
    %2946 = vmatprep.subr.mxu0 0.0
    %2947 = vmatpush1.msra.mxu0 0.0
    %2948 = vmatprep.subr.mxu0 0.0
    %2949 = vmatpush1.msra.mxu0 0.0
    %2950 = vmatprep.subr.mxu0 0.0
    %2951 = vmatpush1.msra.mxu0 0.0
    %2952 = vmatprep.subr.mxu0 0.0
    %2953 = vmatpush1.msra.mxu0 0.0
    %2954 = vmatprep.subr.mxu0 0.0
    %2955 = vmatpush1.msra.mxu0 0.0
    %2956 = vmatprep.subr.mxu0 0.0
    %2957 = vmatpush1.msra.mxu0 0.0
    %2958 = vmatprep.subr.mxu0 0.0
    %2959 = vmatpush1.msra.mxu0 0.0
    %2960 = vmatprep.subr.mxu0 0.0
    %2961 = vmatpush1.msra.mxu0 0.0
    %2962 = vmatprep.subr.mxu0 0.0
    %2963 = vmatpush1.msra.mxu0 0.0
    %2964 = vmatprep.subr.mxu0 0.0
    %2965 = vmatpush1.msra.mxu0 0.0
    %2966 = vmatprep.subr.mxu0 0.0
    %2967 = vmatpush1.msra.mxu0 0.0
    %2968 = vmatprep.subr.mxu0 0.0
    %2969 = vmatpush1.msra.mxu0 0.0
    %2970 = vmatprep.subr.mxu0 0.0
    %2971 = vmatpush1.msra.mxu0 0.0
    %2972 = vmatprep.subr.mxu0 0.0
    %2973 = vmatpush1.msra.mxu0 0.0
    %2974 = vmatprep.subr.mxu0 0.0
    %2975 = vmatpush1.msra.mxu0 0.0
    %2976 = vmatprep.subr.mxu0 0.0
    %2977 = vmatpush1.msra.mxu0 0.0
    %2978 = vmatprep.subr.mxu0 0.0
    %2979 = vmatpush1.msra.mxu0 0.0
    %2980 = vmatprep.subr.mxu0 0.0
    %2981 = vmatpush1.msra.mxu0 0.0
    %2982 = vmatprep.subr.mxu0 0.0
    %2983 = vmatpush1.msra.mxu0 0.0
    %2984 = vmatprep.subr.mxu0 0.0
    %2985 = vmatpush1.msra.mxu0 0.0
    %2986 = vmatprep.subr.mxu0 0.0
    %2987 = vmatpush1.msra.mxu0 0.0
    %2988 = vmatprep.subr.mxu0 0.0
    %2989 = vmatpush1.msra.mxu0 0.0
    %2990 = vmatprep.mubr.f32.mxu0 0.0
    %v2991 = vand.u32 %v2920, 4294901760
    %v2992 = vsub.f32 %v2920, %v2991
    %v2993 = vand.u32 %v2992, 4294901760
    %v2994 = vsub.f32 %v2992, %v2993
    %v2995 = vand.u32 %v2994, 4294901760
    %2996 = vmatmul.mubr.f32.gmra.mrb[0].mxu0 %v2995
    %v2997 = vpop.f32.mrb[0].mxu0
    %v2998 = vadd.f32 %v2911, %v2997
    %v2999 = vpop.f32.mrb[0].mxu0
    %3000 = vmatprep.mubr.f32.mxu0 0.0
    %v3001 = vand.u32 %v2923, 4294901760
    %v3002 = vsub.f32 %v2923, %v3001
    %v3003 = vand.u32 %v3002, 4294901760
    %v3004 = vsub.f32 %v3002, %v3003
    %v3005 = vand.u32 %v3004, 4294901760
    %3006 = vmatmul.mubr.f32.gmra.mrb[0].mxu0 %v3005
    %v3007 = vpop.f32.mrb[0].mxu0
    %v3008 = vadd.f32 %v2916, %v3007
    %v3009 = vpop.f32.mrb[0].mxu0
    %3010 = vdwg.mxu0
    %3011 = vmatprep.subr.mxu0 0.0
    %v3012 = vand.u32 %v2907, 4294901760
    %v3013 = vsub.f32 %v2907, %v3012
    %v3014 = vand.u32 %v3013, 4294901760
    %v3015 = vsub.f32 %v3013, %v3014
    %v3016 = vand.u32 %v3015, 4294901760
    %3017 = vmatpush1.msra.mxu0 %v3016
    %3018 = vmatprep.subr.mxu0 0.0
    %3019 = vmatpush1.msra.mxu0 0.0
    %3020 = vmatprep.subr.mxu0 0.0
    %3021 = vmatpush1.msra.mxu0 0.0
    %3022 = vmatprep.subr.mxu0 0.0
    %3023 = vmatpush1.msra.mxu0 0.0
    %3024 = vmatprep.subr.mxu0 0.0
    %3025 = vmatpush1.msra.mxu0 0.0
    %3026 = vmatprep.subr.mxu0 0.0
    %3027 = vmatpush1.msra.mxu0 0.0
    %3028 = vmatprep.subr.mxu0 0.0
    %3029 = vmatpush1.msra.mxu0 0.0
    %3030 = vmatprep.subr.mxu0 0.0
    %3031 = vmatpush1.msra.mxu0 0.0
    %3032 = vmatprep.subr.mxu0 0.0
    %3033 = vmatpush1.msra.mxu0 0.0
    %3034 = vmatprep.subr.mxu0 0.0
    %3035 = vmatpush1.msra.mxu0 0.0
    %3036 = vmatprep.subr.mxu0 0.0
    %3037 = vmatpush1.msra.mxu0 0.0
    %3038 = vmatprep.subr.mxu0 0.0
    %3039 = vmatpush1.msra.mxu0 0.0
    %3040 = vmatprep.subr.mxu0 0.0
    %3041 = vmatpush1.msra.mxu0 0.0
    %3042 = vmatprep.subr.mxu0 0.0
    %3043 = vmatpush1.msra.mxu0 0.0
    %3044 = vmatprep.subr.mxu0 0.0
    %3045 = vmatpush1.msra.mxu0 0.0
    %3046 = vmatprep.subr.mxu0 0.0
    %3047 = vmatpush1.msra.mxu0 0.0
    %3048 = vmatprep.subr.mxu0 0.0
    %3049 = vmatpush1.msra.mxu0 0.0
    %3050 = vmatprep.subr.mxu0 0.0
    %3051 = vmatpush1.msra.mxu0 0.0
    %3052 = vmatprep.subr.mxu0 0.0
    %3053 = vmatpush1.msra.mxu0 0.0
    %3054 = vmatprep.subr.mxu0 0.0
    %3055 = vmatpush1.msra.mxu0 0.0
    %3056 = vmatprep.subr.mxu0 0.0
    %3057 = vmatpush1.msra.mxu0 0.0
    %3058 = vmatprep.subr.mxu0 0.0
    %3059 = vmatpush1.msra.mxu0 0.0
    %3060 = vmatprep.subr.mxu0 0.0
    %3061 = vmatpush1.msra.mxu0 0.0
    %3062 = vmatprep.subr.mxu0 0.0
    %3063 = vmatpush1.msra.mxu0 0.0
    %3064 = vmatprep.subr.mxu0 0.0
    %3065 = vmatpush1.msra.mxu0 0.0
    %3066 = vmatprep.subr.mxu0 0.0
    %3067 = vmatpush1.msra.mxu0 0.0
    %3068 = vmatprep.subr.mxu0 0.0
    %3069 = vmatpush1.msra.mxu0 0.0
    %3070 = vmatprep.subr.mxu0 0.0
    %3071 = vmatpush1.msra.mxu0 0.0
    %3072 = vmatprep.subr.mxu0 0.0
    %3073 = vmatpush1.msra.mxu0 0.0
    %3074 = vmatprep.subr.mxu0 0.0
    %3075 = vmatpush1.msra.mxu0 0.0
    %3076 = vmatprep.subr.mxu0 0.0
    %3077 = vmatpush1.msra.mxu0 0.0
    %3078 = vmatprep.subr.mxu0 0.0
    %3079 = vmatpush1.msra.mxu0 0.0
    %3080 = vmatprep.mubr.f32.mxu0 0.0
    %v3081 = vand.u32 %v2920, 4294901760
    %3082 = vmatmul.mubr.f32.gmra.mrb[0].mxu0 %v3081
    %v3083 = vpop.f32.mrb[0].mxu0
    %v3084 = vadd.f32 %v2998, %v3083
    %v3085 = vpop.f32.mrb[0].mxu0
    %3086 = vmatprep.mubr.f32.mxu0 0.0
    %v3087 = vand.u32 %v2923, 4294901760
    %3088 = vmatmul.mubr.f32.gmra.mrb[0].mxu0 %v3087
    %v3089 = vpop.f32.mrb[0].mxu0
    %v3090 = vadd.f32 %v3008, %v3089
    %v3091 = vpop.f32.mrb[0].mxu0
    %3092 = vdwg.mxu0
    %3093 = vmatprep.subr.mxu0 0.0
    %v3094 = vand.u32 %v2907, 4294901760
    %v3095 = vsub.f32 %v2907, %v3094
    %3096 = vmatpush1.msra.mxu0 %v3095
    %3097 = vmatprep.subr.mxu0 0.0
    %3098 = vmatpush1.msra.mxu0 0.0
    %3099 = vmatprep.subr.mxu0 0.0
    %3100 = vmatpush1.msra.mxu0 0.0
    %3101 = vmatprep.subr.mxu0 0.0
    %3102 = vmatpush1.msra.mxu0 0.0
    %3103 = vmatprep.subr.mxu0 0.0
    %3104 = vmatpush1.msra.mxu0 0.0
    %3105 = vmatprep.subr.mxu0 0.0
    %3106 = vmatpush1.msra.mxu0 0.0
    %3107 = vmatprep.subr.mxu0 0.0
    %3108 = vmatpush1.msra.mxu0 0.0
    %3109 = vmatprep.subr.mxu0 0.0
    %3110 = vmatpush1.msra.mxu0 0.0
    %3111 = vmatprep.subr.mxu0 0.0
    %3112 = vmatpush1.msra.mxu0 0.0
    %3113 = vmatprep.subr.mxu0 0.0
    %3114 = vmatpush1.msra.mxu0 0.0
    %3115 = vmatprep.subr.mxu0 0.0
    %3116 = vmatpush1.msra.mxu0 0.0
    %3117 = vmatprep.subr.mxu0 0.0
    %3118 = vmatpush1.msra.mxu0 0.0
    %3119 = vmatprep.subr.mxu0 0.0
    %3120 = vmatpush1.msra.mxu0 0.0
    %3121 = vmatprep.subr.mxu0 0.0
    %3122 = vmatpush1.msra.mxu0 0.0
    %3123 = vmatprep.subr.mxu0 0.0
    %3124 = vmatpush1.msra.mxu0 0.0
    %3125 = vmatprep.subr.mxu0 0.0
    %3126 = vmatpush1.msra.mxu0 0.0
    %3127 = vmatprep.subr.mxu0 0.0
    %3128 = vmatpush1.msra.mxu0 0.0
    %3129 = vmatprep.subr.mxu0 0.0
    %3130 = vmatpush1.msra.mxu0 0.0
    %3131 = vmatprep.subr.mxu0 0.0
    %3132 = vmatpush1.msra.mxu0 0.0
    %3133 = vmatprep.subr.mxu0 0.0
    %3134 = vmatpush1.msra.mxu0 0.0
    %3135 = vmatprep.subr.mxu0 0.0
    %3136 = vmatpush1.msra.mxu0 0.0
    %3137 = vmatprep.subr.mxu0 0.0
    %3138 = vmatpush1.msra.mxu0 0.0
    %3139 = vmatprep.subr.mxu0 0.0
    %3140 = vmatpush1.msra.mxu0 0.0
    %3141 = vmatprep.subr.mxu0 0.0
    %3142 = vmatpush1.msra.mxu0 0.0
    %3143 = vmatprep.subr.mxu0 0.0
    %3144 = vmatpush1.msra.mxu0 0.0
    %3145 = vmatprep.subr.mxu0 0.0
    %3146 = vmatpush1.msra.mxu0 0.0
    %3147 = vmatprep.subr.mxu0 0.0
    %3148 = vmatpush1.msra.mxu0 0.0
    %3149 = vmatprep.subr.mxu0 0.0
    %3150 = vmatpush1.msra.mxu0 0.0
    %3151 = vmatprep.subr.mxu0 0.0
    %3152 = vmatpush1.msra.mxu0 0.0
    %3153 = vmatprep.subr.mxu0 0.0
    %3154 = vmatpush1.msra.mxu0 0.0
    %3155 = vmatprep.subr.mxu0 0.0
    %3156 = vmatpush1.msra.mxu0 0.0
    %3157 = vmatprep.subr.mxu0 0.0
    %3158 = vmatpush1.msra.mxu0 0.0
    %3159 = vmatprep.mubr.f32.mxu0 0.0
    %v3160 = vand.u32 %v2920, 4294901760
    %v3161 = vsub.f32 %v2920, %v3160
    %3162 = vmatmul.mubr.f32.gmra.mrb[0].mxu0 %v3161
    %v3163 = vpop.f32.mrb[0].mxu0
    %v3164 = vadd.f32 %v3084, %v3163
    %v3165 = vpop.f32.mrb[0].mxu0
    %3166 = vmatprep.mubr.f32.mxu0 0.0
    %v3167 = vand.u32 %v2923, 4294901760
    %v3168 = vsub.f32 %v2923, %v3167
    %3169 = vmatmul.mubr.f32.gmra.mrb[0].mxu0 %v3168
    %v3170 = vpop.f32.mrb[0].mxu0
    %v3171 = vadd.f32 %v3090, %v3170
    %v3172 = vpop.f32.mrb[0].mxu0
    %3173 = vdwg.mxu0
    %3174 = vmatprep.subr.mxu0 0.0
    %v3175 = vand.u32 %v2907, 4294901760
    %3176 = vmatpush1.msra.mxu0 %v3175
    %3177 = vmatprep.subr.mxu0 0.0
    %3178 = vmatpush1.msra.mxu0 0.0
    %3179 = vmatprep.subr.mxu0 0.0
    %3180 = vmatpush1.msra.mxu0 0.0
    %3181 = vmatprep.subr.mxu0 0.0
    %3182 = vmatpush1.msra.mxu0 0.0
    %3183 = vmatprep.subr.mxu0 0.0
    %3184 = vmatpush1.msra.mxu0 0.0
    %3185 = vmatprep.subr.mxu0 0.0
    %3186 = vmatpush1.msra.mxu0 0.0
    %3187 = vmatprep.subr.mxu0 0.0
    %3188 = vmatpush1.msra.mxu0 0.0
    %3189 = vmatprep.subr.mxu0 0.0
    %3190 = vmatpush1.msra.mxu0 0.0
    %3191 = vmatprep.subr.mxu0 0.0
    %3192 = vmatpush1.msra.mxu0 0.0
    %3193 = vmatprep.subr.mxu0 0.0
    %3194 = vmatpush1.msra.mxu0 0.0
    %3195 = vmatprep.subr.mxu0 0.0
    %3196 = vmatpush1.msra.mxu0 0.0
    %3197 = vmatprep.subr.mxu0 0.0
    %3198 = vmatpush1.msra.mxu0 0.0
    %3199 = vmatprep.subr.mxu0 0.0
    %3200 = vmatpush1.msra.mxu0 0.0
    %3201 = vmatprep.subr.mxu0 0.0
    %3202 = vmatpush1.msra.mxu0 0.0
    %3203 = vmatprep.subr.mxu0 0.0
    %3204 = vmatpush1.msra.mxu0 0.0
    %3205 = vmatprep.subr.mxu0 0.0
    %3206 = vmatpush1.msra.mxu0 0.0
    %3207 = vmatprep.subr.mxu0 0.0
    %3208 = vmatpush1.msra.mxu0 0.0
    %3209 = vmatprep.subr.mxu0 0.0
    %3210 = vmatpush1.msra.mxu0 0.0
    %3211 = vmatprep.subr.mxu0 0.0
    %3212 = vmatpush1.msra.mxu0 0.0
    %3213 = vmatprep.subr.mxu0 0.0
    %3214 = vmatpush1.msra.mxu0 0.0
    %3215 = vmatprep.subr.mxu0 0.0
    %3216 = vmatpush1.msra.mxu0 0.0
    %3217 = vmatprep.subr.mxu0 0.0
    %3218 = vmatpush1.msra.mxu0 0.0
    %3219 = vmatprep.subr.mxu0 0.0
    %3220 = vmatpush1.msra.mxu0 0.0
    %3221 = vmatprep.subr.mxu0 0.0
    %3222 = vmatpush1.msra.mxu0 0.0
    %3223 = vmatprep.subr.mxu0 0.0
    %3224 = vmatpush1.msra.mxu0 0.0
    %3225 = vmatprep.subr.mxu0 0.0
    %3226 = vmatpush1.msra.mxu0 0.0
    %3227 = vmatprep.subr.mxu0 0.0
    %3228 = vmatpush1.msra.mxu0 0.0
    %3229 = vmatprep.subr.mxu0 0.0
    %3230 = vmatpush1.msra.mxu0 0.0
    %3231 = vmatprep.subr.mxu0 0.0
    %3232 = vmatpush1.msra.mxu0 0.0
    %3233 = vmatprep.subr.mxu0 0.0
    %3234 = vmatpush1.msra.mxu0 0.0
    %3235 = vmatprep.subr.mxu0 0.0
    %3236 = vmatpush1.msra.mxu0 0.0
    %3237 = vmatprep.subr.mxu0 0.0
    %3238 = vmatpush1.msra.mxu0 0.0
    %3239 = vmatprep.mubr.f32.mxu0 0.0
    %v3240 = vand.u32 %v2920, 4294901760
    %v3241 = vsub.f32 %v2920, %v3240
    %v3242 = vand.u32 %v3241, 4294901760
    %3243 = vmatmul.mubr.f32.gmra.mrb[0].mxu0 %v3242
    %v3244 = vpop.f32.mrb[0].mxu0
    %v3245 = vadd.f32 %v3164, %v3244
    %v3246 = vpop.f32.mrb[0].mxu0
    %3247 = vmatprep.mubr.f32.mxu0 0.0
    %v3248 = vand.u32 %v2923, 4294901760
    %v3249 = vsub.f32 %v2923, %v3248
    %v3250 = vand.u32 %v3249, 4294901760
    %3251 = vmatmul.mubr.f32.gmra.mrb[0].mxu0 %v3250
    %v3252 = vpop.f32.mrb[0].mxu0
    %v3253 = vadd.f32 %v3171, %v3252
    %v3254 = vpop.f32.mrb[0].mxu0
    %3255 = vdwg.mxu0
    %3256 = vmatprep.subr.mxu0 0.0
    %v3257 = vand.u32 %v2907, 4294901760
    %v3258 = vsub.f32 %v2907, %v3257
    %v3259 = vand.u32 %v3258, 4294901760
    %3260 = vmatpush1.msra.mxu0 %v3259
    %3261 = vmatprep.subr.mxu0 0.0
    %3262 = vmatpush1.msra.mxu0 0.0
    %3263 = vmatprep.subr.mxu0 0.0
    %3264 = vmatpush1.msra.mxu0 0.0
    %3265 = vmatprep.subr.mxu0 0.0
    %3266 = vmatpush1.msra.mxu0 0.0
    %3267 = vmatprep.subr.mxu0 0.0
    %3268 = vmatpush1.msra.mxu0 0.0
    %3269 = vmatprep.subr.mxu0 0.0
    %3270 = vmatpush1.msra.mxu0 0.0
    %3271 = vmatprep.subr.mxu0 0.0
    %3272 = vmatpush1.msra.mxu0 0.0
    %3273 = vmatprep.subr.mxu0 0.0
    %3274 = vmatpush1.msra.mxu0 0.0
    %3275 = vmatprep.subr.mxu0 0.0
    %3276 = vmatpush1.msra.mxu0 0.0
    %3277 = vmatprep.subr.mxu0 0.0
    %3278 = vmatpush1.msra.mxu0 0.0
    %3279 = vmatprep.subr.mxu0 0.0
    %3280 = vmatpush1.msra.mxu0 0.0
    %3281 = vmatprep.subr.mxu0 0.0
    %3282 = vmatpush1.msra.mxu0 0.0
    %3283 = vmatprep.subr.mxu0 0.0
    %3284 = vmatpush1.msra.mxu0 0.0
    %3285 = vmatprep.subr.mxu0 0.0
    %3286 = vmatpush1.msra.mxu0 0.0
    %3287 = vmatprep.subr.mxu0 0.0
    %3288 = vmatpush1.msra.mxu0 0.0
    %3289 = vmatprep.subr.mxu0 0.0
    %3290 = vmatpush1.msra.mxu0 0.0
    %3291 = vmatprep.subr.mxu0 0.0
    %3292 = vmatpush1.msra.mxu0 0.0
    %3293 = vmatprep.subr.mxu0 0.0
    %3294 = vmatpush1.msra.mxu0 0.0
    %3295 = vmatprep.subr.mxu0 0.0
    %3296 = vmatpush1.msra.mxu0 0.0
    %3297 = vmatprep.subr.mxu0 0.0
    %3298 = vmatpush1.msra.mxu0 0.0
    %3299 = vmatprep.subr.mxu0 0.0
    %3300 = vmatpush1.msra.mxu0 0.0
    %3301 = vmatprep.subr.mxu0 0.0
    %3302 = vmatpush1.msra.mxu0 0.0
    %3303 = vmatprep.subr.mxu0 0.0
    %3304 = vmatpush1.msra.mxu0 0.0
    %3305 = vmatprep.subr.mxu0 0.0
    %3306 = vmatpush1.msra.mxu0 0.0
    %3307 = vmatprep.subr.mxu0 0.0
    %3308 = vmatpush1.msra.mxu0 0.0
    %3309 = vmatprep.subr.mxu0 0.0
    %3310 = vmatpush1.msra.mxu0 0.0
    %3311 = vmatprep.subr.mxu0 0.0
    %3312 = vmatpush1.msra.mxu0 0.0
    %3313 = vmatprep.subr.mxu0 0.0
    %3314 = vmatpush1.msra.mxu0 0.0
    %3315 = vmatprep.subr.mxu0 0.0
    %3316 = vmatpush1.msra.mxu0 0.0
    %3317 = vmatprep.subr.mxu0 0.0
    %3318 = vmatpush1.msra.mxu0 0.0
    %3319 = vmatprep.subr.mxu0 0.0
    %3320 = vmatpush1.msra.mxu0 0.0
    %3321 = vmatprep.subr.mxu0 0.0
    %3322 = vmatpush1.msra.mxu0 0.0
    %3323 = vmatprep.mubr.f32.mxu0 0.0
    %v3324 = vand.u32 %v2920, 4294901760
    %3325 = vmatmul.mubr.f32.gmra.mrb[0].mxu0 %v3324
    %v3326 = vpop.f32.mrb[0].mxu0
    %v3327 = vadd.f32 %v3245, %v3326
    %v3328 = vpop.f32.mrb[0].mxu0
    %3329 = vmatprep.mubr.f32.mxu0 0.0
    %v3330 = vand.u32 %v2923, 4294901760
    %3331 = vmatmul.mubr.f32.gmra.mrb[0].mxu0 %v3330
    %v3332 = vpop.f32.mrb[0].mxu0
    %v3333 = vadd.f32 %v3253, %v3332
    %v3334 = vpop.f32.mrb[0].mxu0
    %3335 = vdwg.mxu0
    %3336 = vmatprep.subr.mxu0 0.0
    %v3337 = vand.u32 %v2907, 4294901760
    %3338 = vmatpush1.msra.mxu0 %v3337
    %3339 = vmatprep.subr.mxu0 0.0
    %3340 = vmatpush1.msra.mxu0 0.0
    %3341 = vmatprep.subr.mxu0 0.0
    %3342 = vmatpush1.msra.mxu0 0.0
    %3343 = vmatprep.subr.mxu0 0.0
    %3344 = vmatpush1.msra.mxu0 0.0
    %3345 = vmatprep.subr.mxu0 0.0
    %3346 = vmatpush1.msra.mxu0 0.0
    %3347 = vmatprep.subr.mxu0 0.0
    %3348 = vmatpush1.msra.mxu0 0.0
    %3349 = vmatprep.subr.mxu0 0.0
    %3350 = vmatpush1.msra.mxu0 0.0
    %3351 = vmatprep.subr.mxu0 0.0
    %3352 = vmatpush1.msra.mxu0 0.0
    %3353 = vmatprep.subr.mxu0 0.0
    %3354 = vmatpush1.msra.mxu0 0.0
    %3355 = vmatprep.subr.mxu0 0.0
    %3356 = vmatpush1.msra.mxu0 0.0
    %3357 = vmatprep.subr.mxu0 0.0
    %3358 = vmatpush1.msra.mxu0 0.0
    %3359 = vmatprep.subr.mxu0 0.0
    %3360 = vmatpush1.msra.mxu0 0.0
    %3361 = vmatprep.subr.mxu0 0.0
    %3362 = vmatpush1.msra.mxu0 0.0
    %3363 = vmatprep.subr.mxu0 0.0
    %3364 = vmatpush1.msra.mxu0 0.0
    %3365 = vmatprep.subr.mxu0 0.0
    %3366 = vmatpush1.msra.mxu0 0.0
    %3367 = vmatprep.subr.mxu0 0.0
    %3368 = vmatpush1.msra.mxu0 0.0
    %3369 = vmatprep.subr.mxu0 0.0
    %3370 = vmatpush1.msra.mxu0 0.0
    %3371 = vmatprep.subr.mxu0 0.0
    %3372 = vmatpush1.msra.mxu0 0.0
    %3373 = vmatprep.subr.mxu0 0.0
    %3374 = vmatpush1.msra.mxu0 0.0
    %3375 = vmatprep.subr.mxu0 0.0
    %3376 = vmatpush1.msra.mxu0 0.0
    %3377 = vmatprep.subr.mxu0 0.0
    %3378 = vmatpush1.msra.mxu0 0.0
    %3379 = vmatprep.subr.mxu0 0.0
    %3380 = vmatpush1.msra.mxu0 0.0
    %3381 = vmatprep.subr.mxu0 0.0
    %3382 = vmatpush1.msra.mxu0 0.0
    %3383 = vmatprep.subr.mxu0 0.0
    %3384 = vmatpush1.msra.mxu0 0.0
    %3385 = vmatprep.subr.mxu0 0.0
    %3386 = vmatpush1.msra.mxu0 0.0
    %3387 = vmatprep.subr.mxu0 0.0
    %3388 = vmatpush1.msra.mxu0 0.0
    %3389 = vmatprep.subr.mxu0 0.0
    %3390 = vmatpush1.msra.mxu0 0.0
    %3391 = vmatprep.subr.mxu0 0.0
    %3392 = vmatpush1.msra.mxu0 0.0
    %3393 = vmatprep.subr.mxu0 0.0
    %3394 = vmatpush1.msra.mxu0 0.0
    %3395 = vmatprep.subr.mxu0 0.0
    %3396 = vmatpush1.msra.mxu0 0.0
    %3397 = vmatprep.subr.mxu0 0.0
    %3398 = vmatpush1.msra.mxu0 0.0
    %3399 = vmatprep.subr.mxu0 0.0
    %3400 = vmatpush1.msra.mxu0 0.0
    %3401 = vmatprep.mubr.f32.mxu0 0.0
    %v3402 = vand.u32 %v2920, 4294901760
    %3403 = vmatmul.mubr.f32.gmra.mrb[0].mxu0 %v3402
    %v3404 = vpop.f32.mrb[0].mxu0
    %v3405 = vadd.f32 %v3327, %v3404
    %v3406 = vpop.f32.mrb[0].mxu0
    %3407 = vmatprep.mubr.f32.mxu0 0.0
    %v3408 = vand.u32 %v2923, 4294901760
    %3409 = vmatmul.mubr.f32.gmra.mrb[0].mxu0 %v3408
    %v3410 = vpop.f32.mrb[0].mxu0
    %v3411 = vadd.f32 %v3333, %v3410
    %v3412 = vpop.f32.mrb[0].mxu0
    %3413 = vdwg.mxu0
    %v3414 = vmax.f32 %v3405, 0.0
    %v3415 = vmax.f32 %v3411, 0.0
    %3417 = vset.pattern.permute.xlu0 0
    %3418 = vperm.xlu0 %3417, %v55
    %v3419 = vpop.permute.xlu0 %3418
    %vm3421 = vcmask 130048
    %v3423 = vsel %vm3421, %v54, 0
    %3425 = vmatprep.subr.mxu0 0.0
    %v3426 = vand.u32 %v3414, 4294901760
    %3427 = vmatpush1.msra.mxu0 %v3426
    %3428 = vmatprep.subr.mxu0 0.0
    %v3429 = vand.u32 %v3415, 4294901760
    %3430 = vmatpush1.msra.mxu0 %v3429
    %3431 = vmatprep.subr.mxu0 0.0
    %3432 = vmatpush1.msra.mxu0 0.0
    %3433 = vmatprep.subr.mxu0 0.0
    %3434 = vmatpush1.msra.mxu0 0.0
    %3435 = vmatprep.subr.mxu0 0.0
    %3436 = vmatpush1.msra.mxu0 0.0
    %3437 = vmatprep.subr.mxu0 0.0
    %3438 = vmatpush1.msra.mxu0 0.0
    %3439 = vmatprep.subr.mxu0 0.0
    %3440 = vmatpush1.msra.mxu0 0.0
    %3441 = vmatprep.subr.mxu0 0.0
    %3442 = vmatpush1.msra.mxu0 0.0
    %3443 = vmatprep.subr.mxu0 0.0
    %3444 = vmatpush1.msra.mxu0 0.0
    %3445 = vmatprep.subr.mxu0 0.0
    %3446 = vmatpush1.msra.mxu0 0.0
    %3447 = vmatprep.subr.mxu0 0.0
    %3448 = vmatpush1.msra.mxu0 0.0
    %3449 = vmatprep.subr.mxu0 0.0
    %3450 = vmatpush1.msra.mxu0 0.0
    %3451 = vmatprep.subr.mxu0 0.0
    %3452 = vmatpush1.msra.mxu0 0.0
    %3453 = vmatprep.subr.mxu0 0.0
    %3454 = vmatpush1.msra.mxu0 0.0
    %3455 = vmatprep.subr.mxu0 0.0
    %3456 = vmatpush1.msra.mxu0 0.0
    %3457 = vmatprep.subr.mxu0 0.0
    %3458 = vmatpush1.msra.mxu0 0.0
    %3459 = vmatprep.subr.mxu0 0.0
    %3460 = vmatpush1.msra.mxu0 0.0
    %3461 = vmatprep.subr.mxu0 0.0
    %3462 = vmatpush1.msra.mxu0 0.0
    %3463 = vmatprep.subr.mxu0 0.0
    %3464 = vmatpush1.msra.mxu0 0.0
    %3465 = vmatprep.subr.mxu0 0.0
    %3466 = vmatpush1.msra.mxu0 0.0
    %3467 = vmatprep.subr.mxu0 0.0
    %3468 = vmatpush1.msra.mxu0 0.0
    %3469 = vmatprep.subr.mxu0 0.0
    %3470 = vmatpush1.msra.mxu0 0.0
    %3471 = vmatprep.subr.mxu0 0.0
    %3472 = vmatpush1.msra.mxu0 0.0
    %3473 = vmatprep.subr.mxu0 0.0
    %3474 = vmatpush1.msra.mxu0 0.0
    %3475 = vmatprep.subr.mxu0 0.0
    %3476 = vmatpush1.msra.mxu0 0.0
    %3477 = vmatprep.subr.mxu0 0.0
    %3478 = vmatpush1.msra.mxu0 0.0
    %3479 = vmatprep.subr.mxu0 0.0
    %3480 = vmatpush1.msra.mxu0 0.0
    %3481 = vmatprep.subr.mxu0 0.0
    %3482 = vmatpush1.msra.mxu0 0.0
    %3483 = vmatprep.subr.mxu0 0.0
    %3484 = vmatpush1.msra.mxu0 0.0
    %3485 = vmatprep.subr.mxu0 0.0
    %3486 = vmatpush1.msra.mxu0 0.0
    %3487 = vmatprep.subr.mxu0 0.0
    %3488 = vmatpush1.msra.mxu0 0.0
    %3489 = vmatprep.subr.mxu0 0.0
    %3490 = vmatpush1.msra.mxu0 0.0
    %3491 = vmatprep.mubr.f32.mxu0 0.0
    %v3492 = vand.u32 %v3423, 4294901760
    %v3493 = vsub.f32 %v3423, %v3492
    %v3494 = vand.u32 %v3493, 4294901760
    %v3495 = vsub.f32 %v3493, %v3494
    %v3496 = vand.u32 %v3495, 4294901760
    %3497 = vmatmul.mubr.f32.gmra.mrb[0].mxu0 %v3496
    %v3498 = vpop.f32.mrb[0].mxu0
    %v3499 = vadd.f32 %v3419, %v3498
    %v3500 = vpop.f32.mrb[0].mxu0
    %3501 = vdwg.mxu0
    %3502 = vmatprep.subr.mxu0 0.0
    %v3503 = vand.u32 %v3414, 4294901760
    %v3504 = vsub.f32 %v3414, %v3503
    %v3505 = vand.u32 %v3504, 4294901760
    %v3506 = vsub.f32 %v3504, %v3505
    %v3507 = vand.u32 %v3506, 4294901760
    %3508 = vmatpush1.msra.mxu0 %v3507
    %3509 = vmatprep.subr.mxu0 0.0
    %v3510 = vand.u32 %v3415, 4294901760
    %v3511 = vsub.f32 %v3415, %v3510
    %v3512 = vand.u32 %v3511, 4294901760
    %v3513 = vsub.f32 %v3511, %v3512
    %v3514 = vand.u32 %v3513, 4294901760
    %3515 = vmatpush1.msra.mxu0 %v3514
    %3516 = vmatprep.subr.mxu0 0.0
    %3517 = vmatpush1.msra.mxu0 0.0
    %3518 = vmatprep.subr.mxu0 0.0
    %3519 = vmatpush1.msra.mxu0 0.0
    %3520 = vmatprep.subr.mxu0 0.0
    %3521 = vmatpush1.msra.mxu0 0.0
    %3522 = vmatprep.subr.mxu0 0.0
    %3523 = vmatpush1.msra.mxu0 0.0
    %3524 = vmatprep.subr.mxu0 0.0
    %3525 = vmatpush1.msra.mxu0 0.0
    %3526 = vmatprep.subr.mxu0 0.0
    %3527 = vmatpush1.msra.mxu0 0.0
    %3528 = vmatprep.subr.mxu0 0.0
    %3529 = vmatpush1.msra.mxu0 0.0
    %3530 = vmatprep.subr.mxu0 0.0
    %3531 = vmatpush1.msra.mxu0 0.0
    %3532 = vmatprep.subr.mxu0 0.0
    %3533 = vmatpush1.msra.mxu0 0.0
    %3534 = vmatprep.subr.mxu0 0.0
    %3535 = vmatpush1.msra.mxu0 0.0
    %3536 = vmatprep.subr.mxu0 0.0
    %3537 = vmatpush1.msra.mxu0 0.0
    %3538 = vmatprep.subr.mxu0 0.0
    %3539 = vmatpush1.msra.mxu0 0.0
    %3540 = vmatprep.subr.mxu0 0.0
    %3541 = vmatpush1.msra.mxu0 0.0
    %3542 = vmatprep.subr.mxu0 0.0
    %3543 = vmatpush1.msra.mxu0 0.0
    %3544 = vmatprep.subr.mxu0 0.0
    %3545 = vmatpush1.msra.mxu0 0.0
    %3546 = vmatprep.subr.mxu0 0.0
    %3547 = vmatpush1.msra.mxu0 0.0
    %3548 = vmatprep.subr.mxu0 0.0
    %3549 = vmatpush1.msra.mxu0 0.0
    %3550 = vmatprep.subr.mxu0 0.0
    %3551 = vmatpush1.msra.mxu0 0.0
    %3552 = vmatprep.subr.mxu0 0.0
    %3553 = vmatpush1.msra.mxu0 0.0
    %3554 = vmatprep.subr.mxu0 0.0
    %3555 = vmatpush1.msra.mxu0 0.0
    %3556 = vmatprep.subr.mxu0 0.0
    %3557 = vmatpush1.msra.mxu0 0.0
    %3558 = vmatprep.subr.mxu0 0.0
    %3559 = vmatpush1.msra.mxu0 0.0
    %3560 = vmatprep.subr.mxu0 0.0
    %3561 = vmatpush1.msra.mxu0 0.0
    %3562 = vmatprep.subr.mxu0 0.0
    %3563 = vmatpush1.msra.mxu0 0.0
    %3564 = vmatprep.subr.mxu0 0.0
    %3565 = vmatpush1.msra.mxu0 0.0
    %3566 = vmatprep.subr.mxu0 0.0
    %3567 = vmatpush1.msra.mxu0 0.0
    %3568 = vmatprep.subr.mxu0 0.0
    %3569 = vmatpush1.msra.mxu0 0.0
    %3570 = vmatprep.subr.mxu0 0.0
    %3571 = vmatpush1.msra.mxu0 0.0
    %3572 = vmatprep.subr.mxu0 0.0
    %3573 = vmatpush1.msra.mxu0 0.0
    %3574 = vmatprep.subr.mxu0 0.0
    %3575 = vmatpush1.msra.mxu0 0.0
    %3576 = vmatprep.mubr.f32.mxu0 0.0
    %v3577 = vand.u32 %v3423, 4294901760
    %3578 = vmatmul.mubr.f32.gmra.mrb[0].mxu0 %v3577
    %v3579 = vpop.f32.mrb[0].mxu0
    %v3580 = vadd.f32 %v3499, %v3579
    %v3581 = vpop.f32.mrb[0].mxu0
    %3582 = vdwg.mxu0
    %3583 = vmatprep.subr.mxu0 0.0
    %v3584 = vand.u32 %v3414, 4294901760
    %v3585 = vsub.f32 %v3414, %v3584
    %3586 = vmatpush1.msra.mxu0 %v3585
    %3587 = vmatprep.subr.mxu0 0.0
    %v3588 = vand.u32 %v3415, 4294901760
    %v3589 = vsub.f32 %v3415, %v3588
    %3590 = vmatpush1.msra.mxu0 %v3589
    %3591 = vmatprep.subr.mxu0 0.0
    %3592 = vmatpush1.msra.mxu0 0.0
    %3593 = vmatprep.subr.mxu0 0.0
    %3594 = vmatpush1.msra.mxu0 0.0
    %3595 = vmatprep.subr.mxu0 0.0
    %3596 = vmatpush1.msra.mxu0 0.0
    %3597 = vmatprep.subr.mxu0 0.0
    %3598 = vmatpush1.msra.mxu0 0.0
    %3599 = vmatprep.subr.mxu0 0.0
    %3600 = vmatpush1.msra.mxu0 0.0
    %3601 = vmatprep.subr.mxu0 0.0
    %3602 = vmatpush1.msra.mxu0 0.0
    %3603 = vmatprep.subr.mxu0 0.0
    %3604 = vmatpush1.msra.mxu0 0.0
    %3605 = vmatprep.subr.mxu0 0.0
    %3606 = vmatpush1.msra.mxu0 0.0
    %3607 = vmatprep.subr.mxu0 0.0
    %3608 = vmatpush1.msra.mxu0 0.0
    %3609 = vmatprep.subr.mxu0 0.0
    %3610 = vmatpush1.msra.mxu0 0.0
    %3611 = vmatprep.subr.mxu0 0.0
    %3612 = vmatpush1.msra.mxu0 0.0
    %3613 = vmatprep.subr.mxu0 0.0
    %3614 = vmatpush1.msra.mxu0 0.0
    %3615 = vmatprep.subr.mxu0 0.0
    %3616 = vmatpush1.msra.mxu0 0.0
    %3617 = vmatprep.subr.mxu0 0.0
    %3618 = vmatpush1.msra.mxu0 0.0
    %3619 = vmatprep.subr.mxu0 0.0
    %3620 = vmatpush1.msra.mxu0 0.0
    %3621 = vmatprep.subr.mxu0 0.0
    %3622 = vmatpush1.msra.mxu0 0.0
    %3623 = vmatprep.subr.mxu0 0.0
    %3624 = vmatpush1.msra.mxu0 0.0
    %3625 = vmatprep.subr.mxu0 0.0
    %3626 = vmatpush1.msra.mxu0 0.0
    %3627 = vmatprep.subr.mxu0 0.0
    %3628 = vmatpush1.msra.mxu0 0.0
    %3629 = vmatprep.subr.mxu0 0.0
    %3630 = vmatpush1.msra.mxu0 0.0
    %3631 = vmatprep.subr.mxu0 0.0
    %3632 = vmatpush1.msra.mxu0 0.0
    %3633 = vmatprep.subr.mxu0 0.0
    %3634 = vmatpush1.msra.mxu0 0.0
    %3635 = vmatprep.subr.mxu0 0.0
    %3636 = vmatpush1.msra.mxu0 0.0
    %3637 = vmatprep.subr.mxu0 0.0
    %3638 = vmatpush1.msra.mxu0 0.0
    %3639 = vmatprep.subr.mxu0 0.0
    %3640 = vmatpush1.msra.mxu0 0.0
    %3641 = vmatprep.subr.mxu0 0.0
    %3642 = vmatpush1.msra.mxu0 0.0
    %3643 = vmatprep.subr.mxu0 0.0
    %3644 = vmatpush1.msra.mxu0 0.0
    %3645 = vmatprep.subr.mxu0 0.0
    %3646 = vmatpush1.msra.mxu0 0.0
    %3647 = vmatprep.subr.mxu0 0.0
    %3648 = vmatpush1.msra.mxu0 0.0
    %3649 = vmatprep.subr.mxu0 0.0
    %3650 = vmatpush1.msra.mxu0 0.0
    %3651 = vmatprep.mubr.f32.mxu0 0.0
    %v3652 = vand.u32 %v3423, 4294901760
    %v3653 = vsub.f32 %v3423, %v3652
    %3654 = vmatmul.mubr.f32.gmra.mrb[0].mxu0 %v3653
    %v3655 = vpop.f32.mrb[0].mxu0
    %v3656 = vadd.f32 %v3580, %v3655
    %v3657 = vpop.f32.mrb[0].mxu0
    %3658 = vdwg.mxu0
    %3659 = vmatprep.subr.mxu0 0.0
    %v3660 = vand.u32 %v3414, 4294901760
    %3661 = vmatpush1.msra.mxu0 %v3660
    %3662 = vmatprep.subr.mxu0 0.0
    %v3663 = vand.u32 %v3415, 4294901760
    %3664 = vmatpush1.msra.mxu0 %v3663
    %3665 = vmatprep.subr.mxu0 0.0
    %3666 = vmatpush1.msra.mxu0 0.0
    %3667 = vmatprep.subr.mxu0 0.0
    %3668 = vmatpush1.msra.mxu0 0.0
    %3669 = vmatprep.subr.mxu0 0.0
    %3670 = vmatpush1.msra.mxu0 0.0
    %3671 = vmatprep.subr.mxu0 0.0
    %3672 = vmatpush1.msra.mxu0 0.0
    %3673 = vmatprep.subr.mxu0 0.0
    %3674 = vmatpush1.msra.mxu0 0.0
    %3675 = vmatprep.subr.mxu0 0.0
    %3676 = vmatpush1.msra.mxu0 0.0
    %3677 = vmatprep.subr.mxu0 0.0
    %3678 = vmatpush1.msra.mxu0 0.0
    %3679 = vmatprep.subr.mxu0 0.0
    %3680 = vmatpush1.msra.mxu0 0.0
    %3681 = vmatprep.subr.mxu0 0.0
    %3682 = vmatpush1.msra.mxu0 0.0
    %3683 = vmatprep.subr.mxu0 0.0
    %3684 = vmatpush1.msra.mxu0 0.0
    %3685 = vmatprep.subr.mxu0 0.0
    %3686 = vmatpush1.msra.mxu0 0.0
    %3687 = vmatprep.subr.mxu0 0.0
    %3688 = vmatpush1.msra.mxu0 0.0
    %3689 = vmatprep.subr.mxu0 0.0
    %3690 = vmatpush1.msra.mxu0 0.0
    %3691 = vmatprep.subr.mxu0 0.0
    %3692 = vmatpush1.msra.mxu0 0.0
    %3693 = vmatprep.subr.mxu0 0.0
    %3694 = vmatpush1.msra.mxu0 0.0
    %3695 = vmatprep.subr.mxu0 0.0
    %3696 = vmatpush1.msra.mxu0 0.0
    %3697 = vmatprep.subr.mxu0 0.0
    %3698 = vmatpush1.msra.mxu0 0.0
    %3699 = vmatprep.subr.mxu0 0.0
    %3700 = vmatpush1.msra.mxu0 0.0
    %3701 = vmatprep.subr.mxu0 0.0
    %3702 = vmatpush1.msra.mxu0 0.0
    %3703 = vmatprep.subr.mxu0 0.0
    %3704 = vmatpush1.msra.mxu0 0.0
    %3705 = vmatprep.subr.mxu0 0.0
    %3706 = vmatpush1.msra.mxu0 0.0
    %3707 = vmatprep.subr.mxu0 0.0
    %3708 = vmatpush1.msra.mxu0 0.0
    %3709 = vmatprep.subr.mxu0 0.0
    %3710 = vmatpush1.msra.mxu0 0.0
    %3711 = vmatprep.subr.mxu0 0.0
    %3712 = vmatpush1.msra.mxu0 0.0
    %3713 = vmatprep.subr.mxu0 0.0
    %3714 = vmatpush1.msra.mxu0 0.0
    %3715 = vmatprep.subr.mxu0 0.0
    %3716 = vmatpush1.msra.mxu0 0.0
    %3717 = vmatprep.subr.mxu0 0.0
    %3718 = vmatpush1.msra.mxu0 0.0
    %3719 = vmatprep.subr.mxu0 0.0
    %3720 = vmatpush1.msra.mxu0 0.0
    %3721 = vmatprep.subr.mxu0 0.0
    %3722 = vmatpush1.msra.mxu0 0.0
    %3723 = vmatprep.subr.mxu0 0.0
    %3724 = vmatpush1.msra.mxu0 0.0
    %3725 = vmatprep.mubr.f32.mxu0 0.0
    %v3726 = vand.u32 %v3423, 4294901760
    %v3727 = vsub.f32 %v3423, %v3726
    %v3728 = vand.u32 %v3727, 4294901760
    %3729 = vmatmul.mubr.f32.gmra.mrb[0].mxu0 %v3728
    %v3730 = vpop.f32.mrb[0].mxu0
    %v3731 = vadd.f32 %v3656, %v3730
    %v3732 = vpop.f32.mrb[0].mxu0
    %3733 = vdwg.mxu0
    %3734 = vmatprep.subr.mxu0 0.0
    %v3735 = vand.u32 %v3414, 4294901760
    %v3736 = vsub.f32 %v3414, %v3735
    %v3737 = vand.u32 %v3736, 4294901760
    %3738 = vmatpush1.msra.mxu0 %v3737
    %3739 = vmatprep.subr.mxu0 0.0
    %v3740 = vand.u32 %v3415, 4294901760
    %v3741 = vsub.f32 %v3415, %v3740
    %v3742 = vand.u32 %v3741, 4294901760
    %3743 = vmatpush1.msra.mxu0 %v3742
    %3744 = vmatprep.subr.mxu0 0.0
    %3745 = vmatpush1.msra.mxu0 0.0
    %3746 = vmatprep.subr.mxu0 0.0
    %3747 = vmatpush1.msra.mxu0 0.0
    %3748 = vmatprep.subr.mxu0 0.0
    %3749 = vmatpush1.msra.mxu0 0.0
    %3750 = vmatprep.subr.mxu0 0.0
    %3751 = vmatpush1.msra.mxu0 0.0
    %3752 = vmatprep.subr.mxu0 0.0
    %3753 = vmatpush1.msra.mxu0 0.0
    %3754 = vmatprep.subr.mxu0 0.0
    %3755 = vmatpush1.msra.mxu0 0.0
    %3756 = vmatprep.subr.mxu0 0.0
    %3757 = vmatpush1.msra.mxu0 0.0
    %3758 = vmatprep.subr.mxu0 0.0
    %3759 = vmatpush1.msra.mxu0 0.0
    %3760 = vmatprep.subr.mxu0 0.0
    %3761 = vmatpush1.msra.mxu0 0.0
    %3762 = vmatprep.subr.mxu0 0.0
    %3763 = vmatpush1.msra.mxu0 0.0
    %3764 = vmatprep.subr.mxu0 0.0
    %3765 = vmatpush1.msra.mxu0 0.0
    %3766 = vmatprep.subr.mxu0 0.0
    %3767 = vmatpush1.msra.mxu0 0.0
    %3768 = vmatprep.subr.mxu0 0.0
    %3769 = vmatpush1.msra.mxu0 0.0
    %3770 = vmatprep.subr.mxu0 0.0
    %3771 = vmatpush1.msra.mxu0 0.0
    %3772 = vmatprep.subr.mxu0 0.0
    %3773 = vmatpush1.msra.mxu0 0.0
    %3774 = vmatprep.subr.mxu0 0.0
    %3775 = vmatpush1.msra.mxu0 0.0
    %3776 = vmatprep.subr.mxu0 0.0
    %3777 = vmatpush1.msra.mxu0 0.0
    %3778 = vmatprep.subr.mxu0 0.0
    %3779 = vmatpush1.msra.mxu0 0.0
    %3780 = vmatprep.subr.mxu0 0.0
    %3781 = vmatpush1.msra.mxu0 0.0
    %3782 = vmatprep.subr.mxu0 0.0
    %3783 = vmatpush1.msra.mxu0 0.0
    %3784 = vmatprep.subr.mxu0 0.0
    %3785 = vmatpush1.msra.mxu0 0.0
    %3786 = vmatprep.subr.mxu0 0.0
    %3787 = vmatpush1.msra.mxu0 0.0
    %3788 = vmatprep.subr.mxu0 0.0
    %3789 = vmatpush1.msra.mxu0 0.0
    %3790 = vmatprep.subr.mxu0 0.0
    %3791 = vmatpush1.msra.mxu0 0.0
    %3792 = vmatprep.subr.mxu0 0.0
    %3793 = vmatpush1.msra.mxu0 0.0
    %3794 = vmatprep.subr.mxu0 0.0
    %3795 = vmatpush1.msra.mxu0 0.0
    %3796 = vmatprep.subr.mxu0 0.0
    %3797 = vmatpush1.msra.mxu0 0.0
    %3798 = vmatprep.subr.mxu0 0.0
    %3799 = vmatpush1.msra.mxu0 0.0
    %3800 = vmatprep.subr.mxu0 0.0
    %3801 = vmatpush1.msra.mxu0 0.0
    %3802 = vmatprep.subr.mxu0 0.0
    %3803 = vmatpush1.msra.mxu0 0.0
    %3804 = vmatprep.mubr.f32.mxu0 0.0
    %v3805 = vand.u32 %v3423, 4294901760
    %3806 = vmatmul.mubr.f32.gmra.mrb[0].mxu0 %v3805
    %v3807 = vpop.f32.mrb[0].mxu0
    %v3808 = vadd.f32 %v3731, %v3807
    %v3809 = vpop.f32.mrb[0].mxu0
    %3810 = vdwg.mxu0
    %3811 = vmatprep.subr.mxu0 0.0
    %v3812 = vand.u32 %v3414, 4294901760
    %3813 = vmatpush1.msra.mxu0 %v3812
    %3814 = vmatprep.subr.mxu0 0.0
    %v3815 = vand.u32 %v3415, 4294901760
    %3816 = vmatpush1.msra.mxu0 %v3815
    %3817 = vmatprep.subr.mxu0 0.0
    %3818 = vmatpush1.msra.mxu0 0.0
    %3819 = vmatprep.subr.mxu0 0.0
    %3820 = vmatpush1.msra.mxu0 0.0
    %3821 = vmatprep.subr.mxu0 0.0
    %3822 = vmatpush1.msra.mxu0 0.0
    %3823 = vmatprep.subr.mxu0 0.0
    %3824 = vmatpush1.msra.mxu0 0.0
    %3825 = vmatprep.subr.mxu0 0.0
    %3826 = vmatpush1.msra.mxu0 0.0
    %3827 = vmatprep.subr.mxu0 0.0
    %3828 = vmatpush1.msra.mxu0 0.0
    %3829 = vmatprep.subr.mxu0 0.0
    %3830 = vmatpush1.msra.mxu0 0.0
    %3831 = vmatprep.subr.mxu0 0.0
    %3832 = vmatpush1.msra.mxu0 0.0
    %3833 = vmatprep.subr.mxu0 0.0
    %3834 = vmatpush1.msra.mxu0 0.0
    %3835 = vmatprep.subr.mxu0 0.0
    %3836 = vmatpush1.msra.mxu0 0.0
    %3837 = vmatprep.subr.mxu0 0.0
    %3838 = vmatpush1.msra.mxu0 0.0
    %3839 = vmatprep.subr.mxu0 0.0
    %3840 = vmatpush1.msra.mxu0 0.0
    %3841 = vmatprep.subr.mxu0 0.0
    %3842 = vmatpush1.msra.mxu0 0.0
    %3843 = vmatprep.subr.mxu0 0.0
    %3844 = vmatpush1.msra.mxu0 0.0
    %3845 = vmatprep.subr.mxu0 0.0
    %3846 = vmatpush1.msra.mxu0 0.0
    %3847 = vmatprep.subr.mxu0 0.0
    %3848 = vmatpush1.msra.mxu0 0.0
    %3849 = vmatprep.subr.mxu0 0.0
    %3850 = vmatpush1.msra.mxu0 0.0
    %3851 = vmatprep.subr.mxu0 0.0
    %3852 = vmatpush1.msra.mxu0 0.0
    %3853 = vmatprep.subr.mxu0 0.0
    %3854 = vmatpush1.msra.mxu0 0.0
    %3855 = vmatprep.subr.mxu0 0.0
    %3856 = vmatpush1.msra.mxu0 0.0
    %3857 = vmatprep.subr.mxu0 0.0
    %3858 = vmatpush1.msra.mxu0 0.0
    %3859 = vmatprep.subr.mxu0 0.0
    %3860 = vmatpush1.msra.mxu0 0.0
    %3861 = vmatprep.subr.mxu0 0.0
    %3862 = vmatpush1.msra.mxu0 0.0
    %3863 = vmatprep.subr.mxu0 0.0
    %3864 = vmatpush1.msra.mxu0 0.0
    %3865 = vmatprep.subr.mxu0 0.0
    %3866 = vmatpush1.msra.mxu0 0.0
    %3867 = vmatprep.subr.mxu0 0.0
    %3868 = vmatpush1.msra.mxu0 0.0
    %3869 = vmatprep.subr.mxu0 0.0
    %3870 = vmatpush1.msra.mxu0 0.0
    %3871 = vmatprep.subr.mxu0 0.0
    %3872 = vmatpush1.msra.mxu0 0.0
    %3873 = vmatprep.subr.mxu0 0.0
    %3874 = vmatpush1.msra.mxu0 0.0
    %3875 = vmatprep.subr.mxu0 0.0
    %3876 = vmatpush1.msra.mxu0 0.0
    %3877 = vmatprep.mubr.f32.mxu0 0.0
    %v3878 = vand.u32 %v3423, 4294901760
    %3879 = vmatmul.mubr.f32.gmra.mrb[0].mxu0 %v3878
    %v3880 = vpop.f32.mrb[0].mxu0
    %v3881 = vadd.f32 %v3808, %v3880
    %v3882 = vpop.f32.mrb[0].mxu0
    %3883 = vdwg.mxu0
    %3884 = vst [vmem:[#allocation7] sm:$0x3] %v3881
    %s3885 = scalar_lea.vmem [#allocation2], 4
    %v3886 = vld [vmem:[%s3885] sm:$0xf]
    %3888 = vrot.lane.b32.xlu0 %v3886, 112
    %v3889 = vpop.permute.xlu0 %3888
    %v3891 = vsel %vm77, %v3889, 0.0
    %v3893 = vsel %vm86, %v3891, 0
    %3895 = vmatprep.subr.mxu0 0.0
    %v3896 = vand.u32 %v3893, 4294901760
    %3897 = vmatpush1.msra.mxu0 %v3896
    %3898 = vmatprep.subr.mxu0 0.0
    %3899 = vmatpush1.msra.mxu0 0.0
    %3900 = vmatprep.subr.mxu0 0.0
    %3901 = vmatpush1.msra.mxu0 0.0
    %3902 = vmatprep.subr.mxu0 0.0
    %3903 = vmatpush1.msra.mxu0 0.0
    %3904 = vmatprep.subr.mxu0 0.0
    %3905 = vmatpush1.msra.mxu0 0.0
    %3906 = vmatprep.subr.mxu0 0.0
    %3907 = vmatpush1.msra.mxu0 0.0
    %3908 = vmatprep.subr.mxu0 0.0
    %3909 = vmatpush1.msra.mxu0 0.0
    %3910 = vmatprep.subr.mxu0 0.0
    %3911 = vmatpush1.msra.mxu0 0.0
    %3912 = vmatprep.subr.mxu0 0.0
    %3913 = vmatpush1.msra.mxu0 0.0
    %3914 = vmatprep.subr.mxu0 0.0
    %3915 = vmatpush1.msra.mxu0 0.0
    %3916 = vmatprep.subr.mxu0 0.0
    %3917 = vmatpush1.msra.mxu0 0.0
    %3918 = vmatprep.subr.mxu0 0.0
    %3919 = vmatpush1.msra.mxu0 0.0
    %3920 = vmatprep.subr.mxu0 0.0
    %3921 = vmatpush1.msra.mxu0 0.0
    %3922 = vmatprep.subr.mxu0 0.0
    %3923 = vmatpush1.msra.mxu0 0.0
    %3924 = vmatprep.subr.mxu0 0.0
    %3925 = vmatpush1.msra.mxu0 0.0
    %3926 = vmatprep.subr.mxu0 0.0
    %3927 = vmatpush1.msra.mxu0 0.0
    %3928 = vmatprep.subr.mxu0 0.0
    %3929 = vmatpush1.msra.mxu0 0.0
    %3930 = vmatprep.subr.mxu0 0.0
    %3931 = vmatpush1.msra.mxu0 0.0
    %3932 = vmatprep.subr.mxu0 0.0
    %3933 = vmatpush1.msra.mxu0 0.0
    %3934 = vmatprep.subr.mxu0 0.0
    %3935 = vmatpush1.msra.mxu0 0.0
    %3936 = vmatprep.subr.mxu0 0.0
    %3937 = vmatpush1.msra.mxu0 0.0
    %3938 = vmatprep.subr.mxu0 0.0
    %3939 = vmatpush1.msra.mxu0 0.0
    %3940 = vmatprep.subr.mxu0 0.0
    %3941 = vmatpush1.msra.mxu0 0.0
    %3942 = vmatprep.subr.mxu0 0.0
    %3943 = vmatpush1.msra.mxu0 0.0
    %3944 = vmatprep.subr.mxu0 0.0
    %3945 = vmatpush1.msra.mxu0 0.0
    %3946 = vmatprep.subr.mxu0 0.0
    %3947 = vmatpush1.msra.mxu0 0.0
    %3948 = vmatprep.subr.mxu0 0.0
    %3949 = vmatpush1.msra.mxu0 0.0
    %3950 = vmatprep.subr.mxu0 0.0
    %3951 = vmatpush1.msra.mxu0 0.0
    %3952 = vmatprep.subr.mxu0 0.0
    %3953 = vmatpush1.msra.mxu0 0.0
    %3954 = vmatprep.subr.mxu0 0.0
    %3955 = vmatpush1.msra.mxu0 0.0
    %3956 = vmatprep.subr.mxu0 0.0
    %3957 = vmatpush1.msra.mxu0 0.0
    %3958 = vmatprep.subr.mxu0 0.0
    %3959 = vmatpush1.msra.mxu0 0.0
    %3960 = vmatprep.mubr.f32.mxu0 0.0
    %v3961 = vand.u32 %v81, 4294901760
    %v3962 = vsub.f32 %v81, %v3961
    %v3963 = vand.u32 %v3962, 4294901760
    %v3964 = vsub.f32 %v3962, %v3963
    %v3965 = vand.u32 %v3964, 4294901760
    %3966 = vmatmul.mubr.f32.gmra.mrb[0].mxu0 %v3965
    %v3967 = vpop.f32.mrb[0].mxu0
    %v3968 = vadd.f32 0.0, %v3967
    %v3969 = vpop.f32.mrb[0].mxu0
    %3970 = vmatprep.mubr.f32.mxu0 0.0
    %v3971 = vand.u32 %v84, 4294901760
    %v3972 = vsub.f32 %v84, %v3971
    %v3973 = vand.u32 %v3972, 4294901760
    %v3974 = vsub.f32 %v3972, %v3973
    %v3975 = vand.u32 %v3974, 4294901760
    %3976 = vmatmul.mubr.f32.gmra.mrb[0].mxu0 %v3975
    %v3977 = vpop.f32.mrb[0].mxu0
    %v3978 = vadd.f32 0.0, %v3977
    %v3979 = vpop.f32.mrb[0].mxu0
    %3980 = vdwg.mxu0
    %3981 = vmatprep.subr.mxu0 0.0
    %v3982 = vand.u32 %v3893, 4294901760
    %v3983 = vsub.f32 %v3893, %v3982
    %v3984 = vand.u32 %v3983, 4294901760
    %v3985 = vsub.f32 %v3983, %v3984
    %v3986 = vand.u32 %v3985, 4294901760
    %3987 = vmatpush1.msra.mxu0 %v3986
    %3988 = vmatprep.subr.mxu0 0.0
    %3989 = vmatpush1.msra.mxu0 0.0
    %3990 = vmatprep.subr.mxu0 0.0
    %3991 = vmatpush1.msra.mxu0 0.0
    %3992 = vmatprep.subr.mxu0 0.0
    %3993 = vmatpush1.msra.mxu0 0.0
    %3994 = vmatprep.subr.mxu0 0.0
    %3995 = vmatpush1.msra.mxu0 0.0
    %3996 = vmatprep.subr.mxu0 0.0
    %3997 = vmatpush1.msra.mxu0 0.0
    %3998 = vmatprep.subr.mxu0 0.0
    %3999 = vmatpush1.msra.mxu0 0.0
    %4000 = vmatprep.subr.mxu0 0.0
    %4001 = vmatpush1.msra.mxu0 0.0
    %4002 = vmatprep.subr.mxu0 0.0
    %4003 = vmatpush1.msra.mxu0 0.0
    %4004 = vmatprep.subr.mxu0 0.0
    %4005 = vmatpush1.msra.mxu0 0.0
    %4006 = vmatprep.subr.mxu0 0.0
    %4007 = vmatpush1.msra.mxu0 0.0
    %4008 = vmatprep.subr.mxu0 0.0
    %4009 = vmatpush1.msra.mxu0 0.0
    %4010 = vmatprep.subr.mxu0 0.0
    %4011 = vmatpush1.msra.mxu0 0.0
    %4012 = vmatprep.subr.mxu0 0.0
    %4013 = vmatpush1.msra.mxu0 0.0
    %4014 = vmatprep.subr.mxu0 0.0
    %4015 = vmatpush1.msra.mxu0 0.0
    %4016 = vmatprep.subr.mxu0 0.0
    %4017 = vmatpush1.msra.mxu0 0.0
    %4018 = vmatprep.subr.mxu0 0.0
    %4019 = vmatpush1.msra.mxu0 0.0
    %4020 = vmatprep.subr.mxu0 0.0
    %4021 = vmatpush1.msra.mxu0 0.0
    %4022 = vmatprep.subr.mxu0 0.0
    %4023 = vmatpush1.msra.mxu0 0.0
    %4024 = vmatprep.subr.mxu0 0.0
    %4025 = vmatpush1.msra.mxu0 0.0
    %4026 = vmatprep.subr.mxu0 0.0
    %4027 = vmatpush1.msra.mxu0 0.0
    %4028 = vmatprep.subr.mxu0 0.0
    %4029 = vmatpush1.msra.mxu0 0.0
    %4030 = vmatprep.subr.mxu0 0.0
    %4031 = vmatpush1.msra.mxu0 0.0
    %4032 = vmatprep.subr.mxu0 0.0
    %4033 = vmatpush1.msra.mxu0 0.0
    %4034 = vmatprep.subr.mxu0 0.0
    %4035 = vmatpush1.msra.mxu0 0.0
    %4036 = vmatprep.subr.mxu0 0.0
    %4037 = vmatpush1.msra.mxu0 0.0
    %4038 = vmatprep.subr.mxu0 0.0
    %4039 = vmatpush1.msra.mxu0 0.0
    %4040 = vmatprep.subr.mxu0 0.0
    %4041 = vmatpush1.msra.mxu0 0.0
    %4042 = vmatprep.subr.mxu0 0.0
    %4043 = vmatpush1.msra.mxu0 0.0
    %4044 = vmatprep.subr.mxu0 0.0
    %4045 = vmatpush1.msra.mxu0 0.0
    %4046 = vmatprep.subr.mxu0 0.0
    %4047 = vmatpush1.msra.mxu0 0.0
    %4048 = vmatprep.subr.mxu0 0.0
    %4049 = vmatpush1.msra.mxu0 0.0
    %4050 = vmatprep.mubr.f32.mxu0 0.0
    %v4051 = vand.u32 %v81, 4294901760
    %4052 = vmatmul.mubr.f32.gmra.mrb[0].mxu0 %v4051
    %v4053 = vpop.f32.mrb[0].mxu0
    %v4054 = vadd.f32 %v3968, %v4053
    %v4055 = vpop.f32.mrb[0].mxu0
    %4056 = vmatprep.mubr.f32.mxu0 0.0
    %v4057 = vand.u32 %v84, 4294901760
    %4058 = vmatmul.mubr.f32.gmra.mrb[0].mxu0 %v4057
    %v4059 = vpop.f32.mrb[0].mxu0
    %v4060 = vadd.f32 %v3978, %v4059
    %v4061 = vpop.f32.mrb[0].mxu0
    %4062 = vdwg.mxu0
    %4063 = vmatprep.subr.mxu0 0.0
    %v4064 = vand.u32 %v3893, 4294901760
    %v4065 = vsub.f32 %v3893, %v4064
    %4066 = vmatpush1.msra.mxu0 %v4065
    %4067 = vmatprep.subr.mxu0 0.0
    %4068 = vmatpush1.msra.mxu0 0.0
    %4069 = vmatprep.subr.mxu0 0.0
    %4070 = vmatpush1.msra.mxu0 0.0
    %4071 = vmatprep.subr.mxu0 0.0
    %4072 = vmatpush1.msra.mxu0 0.0
    %4073 = vmatprep.subr.mxu0 0.0
    %4074 = vmatpush1.msra.mxu0 0.0
    %4075 = vmatprep.subr.mxu0 0.0
    %4076 = vmatpush1.msra.mxu0 0.0
    %4077 = vmatprep.subr.mxu0 0.0
    %4078 = vmatpush1.msra.mxu0 0.0
    %4079 = vmatprep.subr.mxu0 0.0
    %4080 = vmatpush1.msra.mxu0 0.0
    %4081 = vmatprep.subr.mxu0 0.0
    %4082 = vmatpush1.msra.mxu0 0.0
    %4083 = vmatprep.subr.mxu0 0.0
    %4084 = vmatpush1.msra.mxu0 0.0
    %4085 = vmatprep.subr.mxu0 0.0
    %4086 = vmatpush1.msra.mxu0 0.0
    %4087 = vmatprep.subr.mxu0 0.0
    %4088 = vmatpush1.msra.mxu0 0.0
    %4089 = vmatprep.subr.mxu0 0.0
    %4090 = vmatpush1.msra.mxu0 0.0
    %4091 = vmatprep.subr.mxu0 0.0
    %4092 = vmatpush1.msra.mxu0 0.0
    %4093 = vmatprep.subr.mxu0 0.0
    %4094 = vmatpush1.msra.mxu0 0.0
    %4095 = vmatprep.subr.mxu0 0.0
    %4096 = vmatpush1.msra.mxu0 0.0
    %4097 = vmatprep.subr.mxu0 0.0
    %4098 = vmatpush1.msra.mxu0 0.0
    %4099 = vmatprep.subr.mxu0 0.0
    %4100 = vmatpush1.msra.mxu0 0.0
    %4101 = vmatprep.subr.mxu0 0.0
    %4102 = vmatpush1.msra.mxu0 0.0
    %4103 = vmatprep.subr.mxu0 0.0
    %4104 = vmatpush1.msra.mxu0 0.0
    %4105 = vmatprep.subr.mxu0 0.0
    %4106 = vmatpush1.msra.mxu0 0.0
    %4107 = vmatprep.subr.mxu0 0.0
    %4108 = vmatpush1.msra.mxu0 0.0
    %4109 = vmatprep.subr.mxu0 0.0
    %4110 = vmatpush1.msra.mxu0 0.0
    %4111 = vmatprep.subr.mxu0 0.0
    %4112 = vmatpush1.msra.mxu0 0.0
    %4113 = vmatprep.subr.mxu0 0.0
    %4114 = vmatpush1.msra.mxu0 0.0
    %4115 = vmatprep.subr.mxu0 0.0
    %4116 = vmatpush1.msra.mxu0 0.0
    %4117 = vmatprep.subr.mxu0 0.0
    %4118 = vmatpush1.msra.mxu0 0.0
    %4119 = vmatprep.subr.mxu0 0.0
    %4120 = vmatpush1.msra.mxu0 0.0
    %4121 = vmatprep.subr.mxu0 0.0
    %4122 = vmatpush1.msra.mxu0 0.0
    %4123 = vmatprep.subr.mxu0 0.0
    %4124 = vmatpush1.msra.mxu0 0.0
    %4125 = vmatprep.subr.mxu0 0.0
    %4126 = vmatpush1.msra.mxu0 0.0
    %4127 = vmatprep.subr.mxu0 0.0
    %4128 = vmatpush1.msra.mxu0 0.0
    %4129 = vmatprep.mubr.f32.mxu0 0.0
    %v4130 = vand.u32 %v81, 4294901760
    %v4131 = vsub.f32 %v81, %v4130
    %4132 = vmatmul.mubr.f32.gmra.mrb[0].mxu0 %v4131
    %v4133 = vpop.f32.mrb[0].mxu0
    %v4134 = vadd.f32 %v4054, %v4133
    %v4135 = vpop.f32.mrb[0].mxu0
    %4136 = vmatprep.mubr.f32.mxu0 0.0
    %v4137 = vand.u32 %v84, 4294901760
    %v4138 = vsub.f32 %v84, %v4137
    %4139 = vmatmul.mubr.f32.gmra.mrb[0].mxu0 %v4138
    %v4140 = vpop.f32.mrb[0].mxu0
    %v4141 = vadd.f32 %v4060, %v4140
    %v4142 = vpop.f32.mrb[0].mxu0
    %4143 = vdwg.mxu0
    %4144 = vmatprep.subr.mxu0 0.0
    %v4145 = vand.u32 %v3893, 4294901760
    %4146 = vmatpush1.msra.mxu0 %v4145
    %4147 = vmatprep.subr.mxu0 0.0
    %4148 = vmatpush1.msra.mxu0 0.0
    %4149 = vmatprep.subr.mxu0 0.0
    %4150 = vmatpush1.msra.mxu0 0.0
    %4151 = vmatprep.subr.mxu0 0.0
    %4152 = vmatpush1.msra.mxu0 0.0
    %4153 = vmatprep.subr.mxu0 0.0
    %4154 = vmatpush1.msra.mxu0 0.0
    %4155 = vmatprep.subr.mxu0 0.0
    %4156 = vmatpush1.msra.mxu0 0.0
    %4157 = vmatprep.subr.mxu0 0.0
    %4158 = vmatpush1.msra.mxu0 0.0
    %4159 = vmatprep.subr.mxu0 0.0
    %4160 = vmatpush1.msra.mxu0 0.0
    %4161 = vmatprep.subr.mxu0 0.0
    %4162 = vmatpush1.msra.mxu0 0.0
    %4163 = vmatprep.subr.mxu0 0.0
    %4164 = vmatpush1.msra.mxu0 0.0
    %4165 = vmatprep.subr.mxu0 0.0
    %4166 = vmatpush1.msra.mxu0 0.0
    %4167 = vmatprep.subr.mxu0 0.0
    %4168 = vmatpush1.msra.mxu0 0.0
    %4169 = vmatprep.subr.mxu0 0.0
    %4170 = vmatpush1.msra.mxu0 0.0
    %4171 = vmatprep.subr.mxu0 0.0
    %4172 = vmatpush1.msra.mxu0 0.0
    %4173 = vmatprep.subr.mxu0 0.0
    %4174 = vmatpush1.msra.mxu0 0.0
    %4175 = vmatprep.subr.mxu0 0.0
    %4176 = vmatpush1.msra.mxu0 0.0
    %4177 = vmatprep.subr.mxu0 0.0
    %4178 = vmatpush1.msra.mxu0 0.0
    %4179 = vmatprep.subr.mxu0 0.0
    %4180 = vmatpush1.msra.mxu0 0.0
    %4181 = vmatprep.subr.mxu0 0.0
    %4182 = vmatpush1.msra.mxu0 0.0
    %4183 = vmatprep.subr.mxu0 0.0
    %4184 = vmatpush1.msra.mxu0 0.0
    %4185 = vmatprep.subr.mxu0 0.0
    %4186 = vmatpush1.msra.mxu0 0.0
    %4187 = vmatprep.subr.mxu0 0.0
    %4188 = vmatpush1.msra.mxu0 0.0
    %4189 = vmatprep.subr.mxu0 0.0
    %4190 = vmatpush1.msra.mxu0 0.0
    %4191 = vmatprep.subr.mxu0 0.0
    %4192 = vmatpush1.msra.mxu0 0.0
    %4193 = vmatprep.subr.mxu0 0.0
    %4194 = vmatpush1.msra.mxu0 0.0
    %4195 = vmatprep.subr.mxu0 0.0
    %4196 = vmatpush1.msra.mxu0 0.0
    %4197 = vmatprep.subr.mxu0 0.0
    %4198 = vmatpush1.msra.mxu0 0.0
    %4199 = vmatprep.subr.mxu0 0.0
    %4200 = vmatpush1.msra.mxu0 0.0
    %4201 = vmatprep.subr.mxu0 0.0
    %4202 = vmatpush1.msra.mxu0 0.0
    %4203 = vmatprep.subr.mxu0 0.0
    %4204 = vmatpush1.msra.mxu0 0.0
    %4205 = vmatprep.subr.mxu0 0.0
    %4206 = vmatpush1.msra.mxu0 0.0
    %4207 = vmatprep.subr.mxu0 0.0
    %4208 = vmatpush1.msra.mxu0 0.0
    %4209 = vmatprep.mubr.f32.mxu0 0.0
    %v4210 = vand.u32 %v81, 4294901760
    %v4211 = vsub.f32 %v81, %v4210
    %v4212 = vand.u32 %v4211, 4294901760
    %4213 = vmatmul.mubr.f32.gmra.mrb[0].mxu0 %v4212
    %v4214 = vpop.f32.mrb[0].mxu0
    %v4215 = vadd.f32 %v4134, %v4214
    %v4216 = vpop.f32.mrb[0].mxu0
    %4217 = vmatprep.mubr.f32.mxu0 0.0
    %v4218 = vand.u32 %v84, 4294901760
    %v4219 = vsub.f32 %v84, %v4218
    %v4220 = vand.u32 %v4219, 4294901760
    %4221 = vmatmul.mubr.f32.gmra.mrb[0].mxu0 %v4220
    %v4222 = vpop.f32.mrb[0].mxu0
    %v4223 = vadd.f32 %v4141, %v4222
    %v4224 = vpop.f32.mrb[0].mxu0
    %4225 = vdwg.mxu0
    %4226 = vmatprep.subr.mxu0 0.0
    %v4227 = vand.u32 %v3893, 4294901760
    %v4228 = vsub.f32 %v3893, %v4227
    %v4229 = vand.u32 %v4228, 4294901760
    %4230 = vmatpush1.msra.mxu0 %v4229
    %4231 = vmatprep.subr.mxu0 0.0
    %4232 = vmatpush1.msra.mxu0 0.0
    %4233 = vmatprep.subr.mxu0 0.0
    %4234 = vmatpush1.msra.mxu0 0.0
    %4235 = vmatprep.subr.mxu0 0.0
    %4236 = vmatpush1.msra.mxu0 0.0
    %4237 = vmatprep.subr.mxu0 0.0
    %4238 = vmatpush1.msra.mxu0 0.0
    %4239 = vmatprep.subr.mxu0 0.0
    %4240 = vmatpush1.msra.mxu0 0.0
    %4241 = vmatprep.subr.mxu0 0.0
    %4242 = vmatpush1.msra.mxu0 0.0
    %4243 = vmatprep.subr.mxu0 0.0
    %4244 = vmatpush1.msra.mxu0 0.0
    %4245 = vmatprep.subr.mxu0 0.0
    %4246 = vmatpush1.msra.mxu0 0.0
    %4247 = vmatprep.subr.mxu0 0.0
    %4248 = vmatpush1.msra.mxu0 0.0
    %4249 = vmatprep.subr.mxu0 0.0
    %4250 = vmatpush1.msra.mxu0 0.0
    %4251 = vmatprep.subr.mxu0 0.0
    %4252 = vmatpush1.msra.mxu0 0.0
    %4253 = vmatprep.subr.mxu0 0.0
    %4254 = vmatpush1.msra.mxu0 0.0
    %4255 = vmatprep.subr.mxu0 0.0
    %4256 = vmatpush1.msra.mxu0 0.0
    %4257 = vmatprep.subr.mxu0 0.0
    %4258 = vmatpush1.msra.mxu0 0.0
    %4259 = vmatprep.subr.mxu0 0.0
    %4260 = vmatpush1.msra.mxu0 0.0
    %4261 = vmatprep.subr.mxu0 0.0
    %4262 = vmatpush1.msra.mxu0 0.0
    %4263 = vmatprep.subr.mxu0 0.0
    %4264 = vmatpush1.msra.mxu0 0.0
    %4265 = vmatprep.subr.mxu0 0.0
    %4266 = vmatpush1.msra.mxu0 0.0
    %4267 = vmatprep.subr.mxu0 0.0
    %4268 = vmatpush1.msra.mxu0 0.0
    %4269 = vmatprep.subr.mxu0 0.0
    %4270 = vmatpush1.msra.mxu0 0.0
    %4271 = vmatprep.subr.mxu0 0.0
    %4272 = vmatpush1.msra.mxu0 0.0
    %4273 = vmatprep.subr.mxu0 0.0
    %4274 = vmatpush1.msra.mxu0 0.0
    %4275 = vmatprep.subr.mxu0 0.0
    %4276 = vmatpush1.msra.mxu0 0.0
    %4277 = vmatprep.subr.mxu0 0.0
    %4278 = vmatpush1.msra.mxu0 0.0
    %4279 = vmatprep.subr.mxu0 0.0
    %4280 = vmatpush1.msra.mxu0 0.0
    %4281 = vmatprep.subr.mxu0 0.0
    %4282 = vmatpush1.msra.mxu0 0.0
    %4283 = vmatprep.subr.mxu0 0.0
    %4284 = vmatpush1.msra.mxu0 0.0
    %4285 = vmatprep.subr.mxu0 0.0
    %4286 = vmatpush1.msra.mxu0 0.0
    %4287 = vmatprep.subr.mxu0 0.0
    %4288 = vmatpush1.msra.mxu0 0.0
    %4289 = vmatprep.subr.mxu0 0.0
    %4290 = vmatpush1.msra.mxu0 0.0
    %4291 = vmatprep.subr.mxu0 0.0
    %4292 = vmatpush1.msra.mxu0 0.0
    %4293 = vmatprep.mubr.f32.mxu0 0.0
    %v4294 = vand.u32 %v81, 4294901760
    %4295 = vmatmul.mubr.f32.gmra.mrb[0].mxu0 %v4294
    %v4296 = vpop.f32.mrb[0].mxu0
    %v4297 = vadd.f32 %v4215, %v4296
    %v4298 = vpop.f32.mrb[0].mxu0
    %4299 = vmatprep.mubr.f32.mxu0 0.0
    %v4300 = vand.u32 %v84, 4294901760
    %4301 = vmatmul.mubr.f32.gmra.mrb[0].mxu0 %v4300
    %v4302 = vpop.f32.mrb[0].mxu0
    %v4303 = vadd.f32 %v4223, %v4302
    %v4304 = vpop.f32.mrb[0].mxu0
    %4305 = vdwg.mxu0
    %4306 = vmatprep.subr.mxu0 0.0
    %v4307 = vand.u32 %v3893, 4294901760
    %4308 = vmatpush1.msra.mxu0 %v4307
    %4309 = vmatprep.subr.mxu0 0.0
    %4310 = vmatpush1.msra.mxu0 0.0
    %4311 = vmatprep.subr.mxu0 0.0
    %4312 = vmatpush1.msra.mxu0 0.0
    %4313 = vmatprep.subr.mxu0 0.0
    %4314 = vmatpush1.msra.mxu0 0.0
    %4315 = vmatprep.subr.mxu0 0.0
    %4316 = vmatpush1.msra.mxu0 0.0
    %4317 = vmatprep.subr.mxu0 0.0
    %4318 = vmatpush1.msra.mxu0 0.0
    %4319 = vmatprep.subr.mxu0 0.0
    %4320 = vmatpush1.msra.mxu0 0.0
    %4321 = vmatprep.subr.mxu0 0.0
    %4322 = vmatpush1.msra.mxu0 0.0
    %4323 = vmatprep.subr.mxu0 0.0
    %4324 = vmatpush1.msra.mxu0 0.0
    %4325 = vmatprep.subr.mxu0 0.0
    %4326 = vmatpush1.msra.mxu0 0.0
    %4327 = vmatprep.subr.mxu0 0.0
    %4328 = vmatpush1.msra.mxu0 0.0
    %4329 = vmatprep.subr.mxu0 0.0
    %4330 = vmatpush1.msra.mxu0 0.0
    %4331 = vmatprep.subr.mxu0 0.0
    %4332 = vmatpush1.msra.mxu0 0.0
    %4333 = vmatprep.subr.mxu0 0.0
    %4334 = vmatpush1.msra.mxu0 0.0
    %4335 = vmatprep.subr.mxu0 0.0
    %4336 = vmatpush1.msra.mxu0 0.0
    %4337 = vmatprep.subr.mxu0 0.0
    %4338 = vmatpush1.msra.mxu0 0.0
    %4339 = vmatprep.subr.mxu0 0.0
    %4340 = vmatpush1.msra.mxu0 0.0
    %4341 = vmatprep.subr.mxu0 0.0
    %4342 = vmatpush1.msra.mxu0 0.0
    %4343 = vmatprep.subr.mxu0 0.0
    %4344 = vmatpush1.msra.mxu0 0.0
    %4345 = vmatprep.subr.mxu0 0.0
    %4346 = vmatpush1.msra.mxu0 0.0
    %4347 = vmatprep.subr.mxu0 0.0
    %4348 = vmatpush1.msra.mxu0 0.0
    %4349 = vmatprep.subr.mxu0 0.0
    %4350 = vmatpush1.msra.mxu0 0.0
    %4351 = vmatprep.subr.mxu0 0.0
    %4352 = vmatpush1.msra.mxu0 0.0
    %4353 = vmatprep.subr.mxu0 0.0
    %4354 = vmatpush1.msra.mxu0 0.0
    %4355 = vmatprep.subr.mxu0 0.0
    %4356 = vmatpush1.msra.mxu0 0.0
    %4357 = vmatprep.subr.mxu0 0.0
    %4358 = vmatpush1.msra.mxu0 0.0
    %4359 = vmatprep.subr.mxu0 0.0
    %4360 = vmatpush1.msra.mxu0 0.0
    %4361 = vmatprep.subr.mxu0 0.0
    %4362 = vmatpush1.msra.mxu0 0.0
    %4363 = vmatprep.subr.mxu0 0.0
    %4364 = vmatpush1.msra.mxu0 0.0
    %4365 = vmatprep.subr.mxu0 0.0
    %4366 = vmatpush1.msra.mxu0 0.0
    %4367 = vmatprep.subr.mxu0 0.0
    %4368 = vmatpush1.msra.mxu0 0.0
    %4369 = vmatprep.subr.mxu0 0.0
    %4370 = vmatpush1.msra.mxu0 0.0
    %4371 = vmatprep.mubr.f32.mxu0 0.0
    %v4372 = vand.u32 %v81, 4294901760
    %4373 = vmatmul.mubr.f32.gmra.mrb[0].mxu0 %v4372
    %v4374 = vpop.f32.mrb[0].mxu0
    %v4375 = vadd.f32 %v4297, %v4374
    %v4376 = vpop.f32.mrb[0].mxu0
    %4377 = vmatprep.mubr.f32.mxu0 0.0
    %v4378 = vand.u32 %v84, 4294901760
    %4379 = vmatmul.mubr.f32.gmra.mrb[0].mxu0 %v4378
    %v4380 = vpop.f32.mrb[0].mxu0
    %v4381 = vadd.f32 %v4303, %v4380
    %v4382 = vpop.f32.mrb[0].mxu0
    %4383 = vdwg.mxu0
    %v4384 = vsel %vm86, %v3886, 0
    %4386 = vmatprep.subr.mxu0 0.0
    %v4387 = vand.u32 %v4384, 4294901760
    %4388 = vmatpush1.msra.mxu0 %v4387
    %4389 = vmatprep.subr.mxu0 0.0
    %4390 = vmatpush1.msra.mxu0 0.0
    %4391 = vmatprep.subr.mxu0 0.0
    %4392 = vmatpush1.msra.mxu0 0.0
    %4393 = vmatprep.subr.mxu0 0.0
    %4394 = vmatpush1.msra.mxu0 0.0
    %4395 = vmatprep.subr.mxu0 0.0
    %4396 = vmatpush1.msra.mxu0 0.0
    %4397 = vmatprep.subr.mxu0 0.0
    %4398 = vmatpush1.msra.mxu0 0.0
    %4399 = vmatprep.subr.mxu0 0.0
    %4400 = vmatpush1.msra.mxu0 0.0
    %4401 = vmatprep.subr.mxu0 0.0
    %4402 = vmatpush1.msra.mxu0 0.0
    %4403 = vmatprep.subr.mxu0 0.0
    %4404 = vmatpush1.msra.mxu0 0.0
    %4405 = vmatprep.subr.mxu0 0.0
    %4406 = vmatpush1.msra.mxu0 0.0
    %4407 = vmatprep.subr.mxu0 0.0
    %4408 = vmatpush1.msra.mxu0 0.0
    %4409 = vmatprep.subr.mxu0 0.0
    %4410 = vmatpush1.msra.mxu0 0.0
    %4411 = vmatprep.subr.mxu0 0.0
    %4412 = vmatpush1.msra.mxu0 0.0
    %4413 = vmatprep.subr.mxu0 0.0
    %4414 = vmatpush1.msra.mxu0 0.0
    %4415 = vmatprep.subr.mxu0 0.0
    %4416 = vmatpush1.msra.mxu0 0.0
    %4417 = vmatprep.subr.mxu0 0.0
    %4418 = vmatpush1.msra.mxu0 0.0
    %4419 = vmatprep.subr.mxu0 0.0
    %4420 = vmatpush1.msra.mxu0 0.0
    %4421 = vmatprep.subr.mxu0 0.0
    %4422 = vmatpush1.msra.mxu0 0.0
    %4423 = vmatprep.subr.mxu0 0.0
    %4424 = vmatpush1.msra.mxu0 0.0
    %4425 = vmatprep.subr.mxu0 0.0
    %4426 = vmatpush1.msra.mxu0 0.0
    %4427 = vmatprep.subr.mxu0 0.0
    %4428 = vmatpush1.msra.mxu0 0.0
    %4429 = vmatprep.subr.mxu0 0.0
    %4430 = vmatpush1.msra.mxu0 0.0
    %4431 = vmatprep.subr.mxu0 0.0
    %4432 = vmatpush1.msra.mxu0 0.0
    %4433 = vmatprep.subr.mxu0 0.0
    %4434 = vmatpush1.msra.mxu0 0.0
    %4435 = vmatprep.subr.mxu0 0.0
    %4436 = vmatpush1.msra.mxu0 0.0
    %4437 = vmatprep.subr.mxu0 0.0
    %4438 = vmatpush1.msra.mxu0 0.0
    %4439 = vmatprep.subr.mxu0 0.0
    %4440 = vmatpush1.msra.mxu0 0.0
    %4441 = vmatprep.subr.mxu0 0.0
    %4442 = vmatpush1.msra.mxu0 0.0
    %4443 = vmatprep.subr.mxu0 0.0
    %4444 = vmatpush1.msra.mxu0 0.0
    %4445 = vmatprep.subr.mxu0 0.0
    %4446 = vmatpush1.msra.mxu0 0.0
    %4447 = vmatprep.subr.mxu0 0.0
    %4448 = vmatpush1.msra.mxu0 0.0
    %4449 = vmatprep.subr.mxu0 0.0
    %4450 = vmatpush1.msra.mxu0 0.0
    %4451 = vmatprep.mubr.f32.mxu0 0.0
    %v4452 = vand.u32 %v580, 4294901760
    %v4453 = vsub.f32 %v580, %v4452
    %v4454 = vand.u32 %v4453, 4294901760
    %v4455 = vsub.f32 %v4453, %v4454
    %v4456 = vand.u32 %v4455, 4294901760
    %4457 = vmatmul.mubr.f32.gmra.mrb[0].mxu0 %v4456
    %v4458 = vpop.f32.mrb[0].mxu0
    %v4459 = vadd.f32 %v4375, %v4458
    %v4460 = vpop.f32.mrb[0].mxu0
    %4461 = vmatprep.mubr.f32.mxu0 0.0
    %v4462 = vand.u32 %v583, 4294901760
    %v4463 = vsub.f32 %v583, %v4462
    %v4464 = vand.u32 %v4463, 4294901760
    %v4465 = vsub.f32 %v4463, %v4464
    %v4466 = vand.u32 %v4465, 4294901760
    %4467 = vmatmul.mubr.f32.gmra.mrb[0].mxu0 %v4466
    %v4468 = vpop.f32.mrb[0].mxu0
    %v4469 = vadd.f32 %v4381, %v4468
    %v4470 = vpop.f32.mrb[0].mxu0
    %4471 = vdwg.mxu0
    %4472 = vmatprep.subr.mxu0 0.0
    %v4473 = vand.u32 %v4384, 4294901760
    %v4474 = vsub.f32 %v4384, %v4473
    %v4475 = vand.u32 %v4474, 4294901760
    %v4476 = vsub.f32 %v4474, %v4475
    %v4477 = vand.u32 %v4476, 4294901760
    %4478 = vmatpush1.msra.mxu0 %v4477
    %4479 = vmatprep.subr.mxu0 0.0
    %4480 = vmatpush1.msra.mxu0 0.0
    %4481 = vmatprep.subr.mxu0 0.0
    %4482 = vmatpush1.msra.mxu0 0.0
    %4483 = vmatprep.subr.mxu0 0.0
    %4484 = vmatpush1.msra.mxu0 0.0
    %4485 = vmatprep.subr.mxu0 0.0
    %4486 = vmatpush1.msra.mxu0 0.0
    %4487 = vmatprep.subr.mxu0 0.0
    %4488 = vmatpush1.msra.mxu0 0.0
    %4489 = vmatprep.subr.mxu0 0.0
    %4490 = vmatpush1.msra.mxu0 0.0
    %4491 = vmatprep.subr.mxu0 0.0
    %4492 = vmatpush1.msra.mxu0 0.0
    %4493 = vmatprep.subr.mxu0 0.0
    %4494 = vmatpush1.msra.mxu0 0.0
    %4495 = vmatprep.subr.mxu0 0.0
    %4496 = vmatpush1.msra.mxu0 0.0
    %4497 = vmatprep.subr.mxu0 0.0
    %4498 = vmatpush1.msra.mxu0 0.0
    %4499 = vmatprep.subr.mxu0 0.0
    %4500 = vmatpush1.msra.mxu0 0.0
    %4501 = vmatprep.subr.mxu0 0.0
    %4502 = vmatpush1.msra.mxu0 0.0
    %4503 = vmatprep.subr.mxu0 0.0
    %4504 = vmatpush1.msra.mxu0 0.0
    %4505 = vmatprep.subr.mxu0 0.0
    %4506 = vmatpush1.msra.mxu0 0.0
    %4507 = vmatprep.subr.mxu0 0.0
    %4508 = vmatpush1.msra.mxu0 0.0
    %4509 = vmatprep.subr.mxu0 0.0
    %4510 = vmatpush1.msra.mxu0 0.0
    %4511 = vmatprep.subr.mxu0 0.0
    %4512 = vmatpush1.msra.mxu0 0.0
    %4513 = vmatprep.subr.mxu0 0.0
    %4514 = vmatpush1.msra.mxu0 0.0
    %4515 = vmatprep.subr.mxu0 0.0
    %4516 = vmatpush1.msra.mxu0 0.0
    %4517 = vmatprep.subr.mxu0 0.0
    %4518 = vmatpush1.msra.mxu0 0.0
    %4519 = vmatprep.subr.mxu0 0.0
    %4520 = vmatpush1.msra.mxu0 0.0
    %4521 = vmatprep.subr.mxu0 0.0
    %4522 = vmatpush1.msra.mxu0 0.0
    %4523 = vmatprep.subr.mxu0 0.0
    %4524 = vmatpush1.msra.mxu0 0.0
    %4525 = vmatprep.subr.mxu0 0.0
    %4526 = vmatpush1.msra.mxu0 0.0
    %4527 = vmatprep.subr.mxu0 0.0
    %4528 = vmatpush1.msra.mxu0 0.0
    %4529 = vmatprep.subr.mxu0 0.0
    %4530 = vmatpush1.msra.mxu0 0.0
    %4531 = vmatprep.subr.mxu0 0.0
    %4532 = vmatpush1.msra.mxu0 0.0
    %4533 = vmatprep.subr.mxu0 0.0
    %4534 = vmatpush1.msra.mxu0 0.0
    %4535 = vmatprep.subr.mxu0 0.0
    %4536 = vmatpush1.msra.mxu0 0.0
    %4537 = vmatprep.subr.mxu0 0.0
    %4538 = vmatpush1.msra.mxu0 0.0
    %4539 = vmatprep.subr.mxu0 0.0
    %4540 = vmatpush1.msra.mxu0 0.0
    %4541 = vmatprep.mubr.f32.mxu0 0.0
    %v4542 = vand.u32 %v580, 4294901760
    %4543 = vmatmul.mubr.f32.gmra.mrb[0].mxu0 %v4542
    %v4544 = vpop.f32.mrb[0].mxu0
    %v4545 = vadd.f32 %v4459, %v4544
    %v4546 = vpop.f32.mrb[0].mxu0
    %4547 = vmatprep.mubr.f32.mxu0 0.0
    %v4548 = vand.u32 %v583, 4294901760
    %4549 = vmatmul.mubr.f32.gmra.mrb[0].mxu0 %v4548
    %v4550 = vpop.f32.mrb[0].mxu0
    %v4551 = vadd.f32 %v4469, %v4550
    %v4552 = vpop.f32.mrb[0].mxu0
    %4553 = vdwg.mxu0
    %4554 = vmatprep.subr.mxu0 0.0
    %v4555 = vand.u32 %v4384, 4294901760
    %v4556 = vsub.f32 %v4384, %v4555
    %4557 = vmatpush1.msra.mxu0 %v4556
    %4558 = vmatprep.subr.mxu0 0.0
    %4559 = vmatpush1.msra.mxu0 0.0
    %4560 = vmatprep.subr.mxu0 0.0
    %4561 = vmatpush1.msra.mxu0 0.0
    %4562 = vmatprep.subr.mxu0 0.0
    %4563 = vmatpush1.msra.mxu0 0.0
    %4564 = vmatprep.subr.mxu0 0.0
    %4565 = vmatpush1.msra.mxu0 0.0
    %4566 = vmatprep.subr.mxu0 0.0
    %4567 = vmatpush1.msra.mxu0 0.0
    %4568 = vmatprep.subr.mxu0 0.0
    %4569 = vmatpush1.msra.mxu0 0.0
    %4570 = vmatprep.subr.mxu0 0.0
    %4571 = vmatpush1.msra.mxu0 0.0
    %4572 = vmatprep.subr.mxu0 0.0
    %4573 = vmatpush1.msra.mxu0 0.0
    %4574 = vmatprep.subr.mxu0 0.0
    %4575 = vmatpush1.msra.mxu0 0.0
    %4576 = vmatprep.subr.mxu0 0.0
    %4577 = vmatpush1.msra.mxu0 0.0
    %4578 = vmatprep.subr.mxu0 0.0
    %4579 = vmatpush1.msra.mxu0 0.0
    %4580 = vmatprep.subr.mxu0 0.0
    %4581 = vmatpush1.msra.mxu0 0.0
    %4582 = vmatprep.subr.mxu0 0.0
    %4583 = vmatpush1.msra.mxu0 0.0
    %4584 = vmatprep.subr.mxu0 0.0
    %4585 = vmatpush1.msra.mxu0 0.0
    %4586 = vmatprep.subr.mxu0 0.0
    %4587 = vmatpush1.msra.mxu0 0.0
    %4588 = vmatprep.subr.mxu0 0.0
    %4589 = vmatpush1.msra.mxu0 0.0
    %4590 = vmatprep.subr.mxu0 0.0
    %4591 = vmatpush1.msra.mxu0 0.0
    %4592 = vmatprep.subr.mxu0 0.0
    %4593 = vmatpush1.msra.mxu0 0.0
    %4594 = vmatprep.subr.mxu0 0.0
    %4595 = vmatpush1.msra.mxu0 0.0
    %4596 = vmatprep.subr.mxu0 0.0
    %4597 = vmatpush1.msra.mxu0 0.0
    %4598 = vmatprep.subr.mxu0 0.0
    %4599 = vmatpush1.msra.mxu0 0.0
    %4600 = vmatprep.subr.mxu0 0.0
    %4601 = vmatpush1.msra.mxu0 0.0
    %4602 = vmatprep.subr.mxu0 0.0
    %4603 = vmatpush1.msra.mxu0 0.0
    %4604 = vmatprep.subr.mxu0 0.0
    %4605 = vmatpush1.msra.mxu0 0.0
    %4606 = vmatprep.subr.mxu0 0.0
    %4607 = vmatpush1.msra.mxu0 0.0
    %4608 = vmatprep.subr.mxu0 0.0
    %4609 = vmatpush1.msra.mxu0 0.0
    %4610 = vmatprep.subr.mxu0 0.0
    %4611 = vmatpush1.msra.mxu0 0.0
    %4612 = vmatprep.subr.mxu0 0.0
    %4613 = vmatpush1.msra.mxu0 0.0
    %4614 = vmatprep.subr.mxu0 0.0
    %4615 = vmatpush1.msra.mxu0 0.0
    %4616 = vmatprep.subr.mxu0 0.0
    %4617 = vmatpush1.msra.mxu0 0.0
    %4618 = vmatprep.subr.mxu0 0.0
    %4619 = vmatpush1.msra.mxu0 0.0
    %4620 = vmatprep.mubr.f32.mxu0 0.0
    %v4621 = vand.u32 %v580, 4294901760
    %v4622 = vsub.f32 %v580, %v4621
    %4623 = vmatmul.mubr.f32.gmra.mrb[0].mxu0 %v4622
    %v4624 = vpop.f32.mrb[0].mxu0
    %v4625 = vadd.f32 %v4545, %v4624
    %v4626 = vpop.f32.mrb[0].mxu0
    %4627 = vmatprep.mubr.f32.mxu0 0.0
    %v4628 = vand.u32 %v583, 4294901760
    %v4629 = vsub.f32 %v583, %v4628
    %4630 = vmatmul.mubr.f32.gmra.mrb[0].mxu0 %v4629
    %v4631 = vpop.f32.mrb[0].mxu0
    %v4632 = vadd.f32 %v4551, %v4631
    %v4633 = vpop.f32.mrb[0].mxu0
    %4634 = vdwg.mxu0
    %4635 = vmatprep.subr.mxu0 0.0
    %v4636 = vand.u32 %v4384, 4294901760
    %4637 = vmatpush1.msra.mxu0 %v4636
    %4638 = vmatprep.subr.mxu0 0.0
    %4639 = vmatpush1.msra.mxu0 0.0
    %4640 = vmatprep.subr.mxu0 0.0
    %4641 = vmatpush1.msra.mxu0 0.0
    %4642 = vmatprep.subr.mxu0 0.0
    %4643 = vmatpush1.msra.mxu0 0.0
    %4644 = vmatprep.subr.mxu0 0.0
    %4645 = vmatpush1.msra.mxu0 0.0
    %4646 = vmatprep.subr.mxu0 0.0
    %4647 = vmatpush1.msra.mxu0 0.0
    %4648 = vmatprep.subr.mxu0 0.0
    %4649 = vmatpush1.msra.mxu0 0.0
    %4650 = vmatprep.subr.mxu0 0.0
    %4651 = vmatpush1.msra.mxu0 0.0
    %4652 = vmatprep.subr.mxu0 0.0
    %4653 = vmatpush1.msra.mxu0 0.0
    %4654 = vmatprep.subr.mxu0 0.0
    %4655 = vmatpush1.msra.mxu0 0.0
    %4656 = vmatprep.subr.mxu0 0.0
    %4657 = vmatpush1.msra.mxu0 0.0
    %4658 = vmatprep.subr.mxu0 0.0
    %4659 = vmatpush1.msra.mxu0 0.0
    %4660 = vmatprep.subr.mxu0 0.0
    %4661 = vmatpush1.msra.mxu0 0.0
    %4662 = vmatprep.subr.mxu0 0.0
    %4663 = vmatpush1.msra.mxu0 0.0
    %4664 = vmatprep.subr.mxu0 0.0
    %4665 = vmatpush1.msra.mxu0 0.0
    %4666 = vmatprep.subr.mxu0 0.0
    %4667 = vmatpush1.msra.mxu0 0.0
    %4668 = vmatprep.subr.mxu0 0.0
    %4669 = vmatpush1.msra.mxu0 0.0
    %4670 = vmatprep.subr.mxu0 0.0
    %4671 = vmatpush1.msra.mxu0 0.0
    %4672 = vmatprep.subr.mxu0 0.0
    %4673 = vmatpush1.msra.mxu0 0.0
    %4674 = vmatprep.subr.mxu0 0.0
    %4675 = vmatpush1.msra.mxu0 0.0
    %4676 = vmatprep.subr.mxu0 0.0
    %4677 = vmatpush1.msra.mxu0 0.0
    %4678 = vmatprep.subr.mxu0 0.0
    %4679 = vmatpush1.msra.mxu0 0.0
    %4680 = vmatprep.subr.mxu0 0.0
    %4681 = vmatpush1.msra.mxu0 0.0
    %4682 = vmatprep.subr.mxu0 0.0
    %4683 = vmatpush1.msra.mxu0 0.0
    %4684 = vmatprep.subr.mxu0 0.0
    %4685 = vmatpush1.msra.mxu0 0.0
    %4686 = vmatprep.subr.mxu0 0.0
    %4687 = vmatpush1.msra.mxu0 0.0
    %4688 = vmatprep.subr.mxu0 0.0
    %4689 = vmatpush1.msra.mxu0 0.0
    %4690 = vmatprep.subr.mxu0 0.0
    %4691 = vmatpush1.msra.mxu0 0.0
    %4692 = vmatprep.subr.mxu0 0.0
    %4693 = vmatpush1.msra.mxu0 0.0
    %4694 = vmatprep.subr.mxu0 0.0
    %4695 = vmatpush1.msra.mxu0 0.0
    %4696 = vmatprep.subr.mxu0 0.0
    %4697 = vmatpush1.msra.mxu0 0.0
    %4698 = vmatprep.subr.mxu0 0.0
    %4699 = vmatpush1.msra.mxu0 0.0
    %4700 = vmatprep.mubr.f32.mxu0 0.0
    %v4701 = vand.u32 %v580, 4294901760
    %v4702 = vsub.f32 %v580, %v4701
    %v4703 = vand.u32 %v4702, 4294901760
    %4704 = vmatmul.mubr.f32.gmra.mrb[0].mxu0 %v4703
    %v4705 = vpop.f32.mrb[0].mxu0
    %v4706 = vadd.f32 %v4625, %v4705
    %v4707 = vpop.f32.mrb[0].mxu0
    %4708 = vmatprep.mubr.f32.mxu0 0.0
    %v4709 = vand.u32 %v583, 4294901760
    %v4710 = vsub.f32 %v583, %v4709
    %v4711 = vand.u32 %v4710, 4294901760
    %4712 = vmatmul.mubr.f32.gmra.mrb[0].mxu0 %v4711
    %v4713 = vpop.f32.mrb[0].mxu0
    %v4714 = vadd.f32 %v4632, %v4713
    %v4715 = vpop.f32.mrb[0].mxu0
    %4716 = vdwg.mxu0
    %4717 = vmatprep.subr.mxu0 0.0
    %v4718 = vand.u32 %v4384, 4294901760
    %v4719 = vsub.f32 %v4384, %v4718
    %v4720 = vand.u32 %v4719, 4294901760
    %4721 = vmatpush1.msra.mxu0 %v4720
    %4722 = vmatprep.subr.mxu0 0.0
    %4723 = vmatpush1.msra.mxu0 0.0
    %4724 = vmatprep.subr.mxu0 0.0
    %4725 = vmatpush1.msra.mxu0 0.0
    %4726 = vmatprep.subr.mxu0 0.0
    %4727 = vmatpush1.msra.mxu0 0.0
    %4728 = vmatprep.subr.mxu0 0.0
    %4729 = vmatpush1.msra.mxu0 0.0
    %4730 = vmatprep.subr.mxu0 0.0
    %4731 = vmatpush1.msra.mxu0 0.0
    %4732 = vmatprep.subr.mxu0 0.0
    %4733 = vmatpush1.msra.mxu0 0.0
    %4734 = vmatprep.subr.mxu0 0.0
    %4735 = vmatpush1.msra.mxu0 0.0
    %4736 = vmatprep.subr.mxu0 0.0
    %4737 = vmatpush1.msra.mxu0 0.0
    %4738 = vmatprep.subr.mxu0 0.0
    %4739 = vmatpush1.msra.mxu0 0.0
    %4740 = vmatprep.subr.mxu0 0.0
    %4741 = vmatpush1.msra.mxu0 0.0
    %4742 = vmatprep.subr.mxu0 0.0
    %4743 = vmatpush1.msra.mxu0 0.0
    %4744 = vmatprep.subr.mxu0 0.0
    %4745 = vmatpush1.msra.mxu0 0.0
    %4746 = vmatprep.subr.mxu0 0.0
    %4747 = vmatpush1.msra.mxu0 0.0
    %4748 = vmatprep.subr.mxu0 0.0
    %4749 = vmatpush1.msra.mxu0 0.0
    %4750 = vmatprep.subr.mxu0 0.0
    %4751 = vmatpush1.msra.mxu0 0.0
    %4752 = vmatprep.subr.mxu0 0.0
    %4753 = vmatpush1.msra.mxu0 0.0
    %4754 = vmatprep.subr.mxu0 0.0
    %4755 = vmatpush1.msra.mxu0 0.0
    %4756 = vmatprep.subr.mxu0 0.0
    %4757 = vmatpush1.msra.mxu0 0.0
    %4758 = vmatprep.subr.mxu0 0.0
    %4759 = vmatpush1.msra.mxu0 0.0
    %4760 = vmatprep.subr.mxu0 0.0
    %4761 = vmatpush1.msra.mxu0 0.0
    %4762 = vmatprep.subr.mxu0 0.0
    %4763 = vmatpush1.msra.mxu0 0.0
    %4764 = vmatprep.subr.mxu0 0.0
    %4765 = vmatpush1.msra.mxu0 0.0
    %4766 = vmatprep.subr.mxu0 0.0
    %4767 = vmatpush1.msra.mxu0 0.0
    %4768 = vmatprep.subr.mxu0 0.0
    %4769 = vmatpush1.msra.mxu0 0.0
    %4770 = vmatprep.subr.mxu0 0.0
    %4771 = vmatpush1.msra.mxu0 0.0
    %4772 = vmatprep.subr.mxu0 0.0
    %4773 = vmatpush1.msra.mxu0 0.0
    %4774 = vmatprep.subr.mxu0 0.0
    %4775 = vmatpush1.msra.mxu0 0.0
    %4776 = vmatprep.subr.mxu0 0.0
    %4777 = vmatpush1.msra.mxu0 0.0
    %4778 = vmatprep.subr.mxu0 0.0
    %4779 = vmatpush1.msra.mxu0 0.0
    %4780 = vmatprep.subr.mxu0 0.0
    %4781 = vmatpush1.msra.mxu0 0.0
    %4782 = vmatprep.subr.mxu0 0.0
    %4783 = vmatpush1.msra.mxu0 0.0
    %4784 = vmatprep.mubr.f32.mxu0 0.0
    %v4785 = vand.u32 %v580, 4294901760
    %4786 = vmatmul.mubr.f32.gmra.mrb[0].mxu0 %v4785
    %v4787 = vpop.f32.mrb[0].mxu0
    %v4788 = vadd.f32 %v4706, %v4787
    %v4789 = vpop.f32.mrb[0].mxu0
    %4790 = vmatprep.mubr.f32.mxu0 0.0
    %v4791 = vand.u32 %v583, 4294901760
    %4792 = vmatmul.mubr.f32.gmra.mrb[0].mxu0 %v4791
    %v4793 = vpop.f32.mrb[0].mxu0
    %v4794 = vadd.f32 %v4714, %v4793
    %v4795 = vpop.f32.mrb[0].mxu0
    %4796 = vdwg.mxu0
    %4797 = vmatprep.subr.mxu0 0.0
    %v4798 = vand.u32 %v4384, 4294901760
    %4799 = vmatpush1.msra.mxu0 %v4798
    %4800 = vmatprep.subr.mxu0 0.0
    %4801 = vmatpush1.msra.mxu0 0.0
    %4802 = vmatprep.subr.mxu0 0.0
    %4803 = vmatpush1.msra.mxu0 0.0
    %4804 = vmatprep.subr.mxu0 0.0
    %4805 = vmatpush1.msra.mxu0 0.0
    %4806 = vmatprep.subr.mxu0 0.0
    %4807 = vmatpush1.msra.mxu0 0.0
    %4808 = vmatprep.subr.mxu0 0.0
    %4809 = vmatpush1.msra.mxu0 0.0
    %4810 = vmatprep.subr.mxu0 0.0
    %4811 = vmatpush1.msra.mxu0 0.0
    %4812 = vmatprep.subr.mxu0 0.0
    %4813 = vmatpush1.msra.mxu0 0.0
    %4814 = vmatprep.subr.mxu0 0.0
    %4815 = vmatpush1.msra.mxu0 0.0
    %4816 = vmatprep.subr.mxu0 0.0
    %4817 = vmatpush1.msra.mxu0 0.0
    %4818 = vmatprep.subr.mxu0 0.0
    %4819 = vmatpush1.msra.mxu0 0.0
    %4820 = vmatprep.subr.mxu0 0.0
    %4821 = vmatpush1.msra.mxu0 0.0
    %4822 = vmatprep.subr.mxu0 0.0
    %4823 = vmatpush1.msra.mxu0 0.0
    %4824 = vmatprep.subr.mxu0 0.0
    %4825 = vmatpush1.msra.mxu0 0.0
    %4826 = vmatprep.subr.mxu0 0.0
    %4827 = vmatpush1.msra.mxu0 0.0
    %4828 = vmatprep.subr.mxu0 0.0
    %4829 = vmatpush1.msra.mxu0 0.0
    %4830 = vmatprep.subr.mxu0 0.0
    %4831 = vmatpush1.msra.mxu0 0.0
    %4832 = vmatprep.subr.mxu0 0.0
    %4833 = vmatpush1.msra.mxu0 0.0
    %4834 = vmatprep.subr.mxu0 0.0
    %4835 = vmatpush1.msra.mxu0 0.0
    %4836 = vmatprep.subr.mxu0 0.0
    %4837 = vmatpush1.msra.mxu0 0.0
    %4838 = vmatprep.subr.mxu0 0.0
    %4839 = vmatpush1.msra.mxu0 0.0
    %4840 = vmatprep.subr.mxu0 0.0
    %4841 = vmatpush1.msra.mxu0 0.0
    %4842 = vmatprep.subr.mxu0 0.0
    %4843 = vmatpush1.msra.mxu0 0.0
    %4844 = vmatprep.subr.mxu0 0.0
    %4845 = vmatpush1.msra.mxu0 0.0
    %4846 = vmatprep.subr.mxu0 0.0
    %4847 = vmatpush1.msra.mxu0 0.0
    %4848 = vmatprep.subr.mxu0 0.0
    %4849 = vmatpush1.msra.mxu0 0.0
    %4850 = vmatprep.subr.mxu0 0.0
    %4851 = vmatpush1.msra.mxu0 0.0
    %4852 = vmatprep.subr.mxu0 0.0
    %4853 = vmatpush1.msra.mxu0 0.0
    %4854 = vmatprep.subr.mxu0 0.0
    %4855 = vmatpush1.msra.mxu0 0.0
    %4856 = vmatprep.subr.mxu0 0.0
    %4857 = vmatpush1.msra.mxu0 0.0
    %4858 = vmatprep.subr.mxu0 0.0
    %4859 = vmatpush1.msra.mxu0 0.0
    %4860 = vmatprep.subr.mxu0 0.0
    %4861 = vmatpush1.msra.mxu0 0.0
    %4862 = vmatprep.mubr.f32.mxu0 0.0
    %v4863 = vand.u32 %v580, 4294901760
    %4864 = vmatmul.mubr.f32.gmra.mrb[0].mxu0 %v4863
    %v4865 = vpop.f32.mrb[0].mxu0
    %v4866 = vadd.f32 %v4788, %v4865
    %v4867 = vpop.f32.mrb[0].mxu0
    %4868 = vmatprep.mubr.f32.mxu0 0.0
    %v4869 = vand.u32 %v583, 4294901760
    %4870 = vmatmul.mubr.f32.gmra.mrb[0].mxu0 %v4869
    %v4871 = vpop.f32.mrb[0].mxu0
    %v4872 = vadd.f32 %v4794, %v4871
    %v4873 = vpop.f32.mrb[0].mxu0
    %4874 = vdwg.mxu0
    %4875 = vrot.lane.b32.xlu0 %v3886, 96
    %v4876 = vpop.permute.xlu0 %4875
    %v4878 = vsel %vm1079, %v4876, 0.0
    %v4880 = vsel %vm86, %v4878, 0
    %4882 = vmatprep.subr.mxu0 0.0
    %v4883 = vand.u32 %v4880, 4294901760
    %4884 = vmatpush1.msra.mxu0 %v4883
    %4885 = vmatprep.subr.mxu0 0.0
    %4886 = vmatpush1.msra.mxu0 0.0
    %4887 = vmatprep.subr.mxu0 0.0
    %4888 = vmatpush1.msra.mxu0 0.0
    %4889 = vmatprep.subr.mxu0 0.0
    %4890 = vmatpush1.msra.mxu0 0.0
    %4891 = vmatprep.subr.mxu0 0.0
    %4892 = vmatpush1.msra.mxu0 0.0
    %4893 = vmatprep.subr.mxu0 0.0
    %4894 = vmatpush1.msra.mxu0 0.0
    %4895 = vmatprep.subr.mxu0 0.0
    %4896 = vmatpush1.msra.mxu0 0.0
    %4897 = vmatprep.subr.mxu0 0.0
    %4898 = vmatpush1.msra.mxu0 0.0
    %4899 = vmatprep.subr.mxu0 0.0
    %4900 = vmatpush1.msra.mxu0 0.0
    %4901 = vmatprep.subr.mxu0 0.0
    %4902 = vmatpush1.msra.mxu0 0.0
    %4903 = vmatprep.subr.mxu0 0.0
    %4904 = vmatpush1.msra.mxu0 0.0
    %4905 = vmatprep.subr.mxu0 0.0
    %4906 = vmatpush1.msra.mxu0 0.0
    %4907 = vmatprep.subr.mxu0 0.0
    %4908 = vmatpush1.msra.mxu0 0.0
    %4909 = vmatprep.subr.mxu0 0.0
    %4910 = vmatpush1.msra.mxu0 0.0
    %4911 = vmatprep.subr.mxu0 0.0
    %4912 = vmatpush1.msra.mxu0 0.0
    %4913 = vmatprep.subr.mxu0 0.0
    %4914 = vmatpush1.msra.mxu0 0.0
    %4915 = vmatprep.subr.mxu0 0.0
    %4916 = vmatpush1.msra.mxu0 0.0
    %4917 = vmatprep.subr.mxu0 0.0
    %4918 = vmatpush1.msra.mxu0 0.0
    %4919 = vmatprep.subr.mxu0 0.0
    %4920 = vmatpush1.msra.mxu0 0.0
    %4921 = vmatprep.subr.mxu0 0.0
    %4922 = vmatpush1.msra.mxu0 0.0
    %4923 = vmatprep.subr.mxu0 0.0
    %4924 = vmatpush1.msra.mxu0 0.0
    %4925 = vmatprep.subr.mxu0 0.0
    %4926 = vmatpush1.msra.mxu0 0.0
    %4927 = vmatprep.subr.mxu0 0.0
    %4928 = vmatpush1.msra.mxu0 0.0
    %4929 = vmatprep.subr.mxu0 0.0
    %4930 = vmatpush1.msra.mxu0 0.0
    %4931 = vmatprep.subr.mxu0 0.0
    %4932 = vmatpush1.msra.mxu0 0.0
    %4933 = vmatprep.subr.mxu0 0.0
    %4934 = vmatpush1.msra.mxu0 0.0
    %4935 = vmatprep.subr.mxu0 0.0
    %4936 = vmatpush1.msra.mxu0 0.0
    %4937 = vmatprep.subr.mxu0 0.0
    %4938 = vmatpush1.msra.mxu0 0.0
    %4939 = vmatprep.subr.mxu0 0.0
    %4940 = vmatpush1.msra.mxu0 0.0
    %4941 = vmatprep.subr.mxu0 0.0
    %4942 = vmatpush1.msra.mxu0 0.0
    %4943 = vmatprep.subr.mxu0 0.0
    %4944 = vmatpush1.msra.mxu0 0.0
    %4945 = vmatprep.subr.mxu0 0.0
    %4946 = vmatpush1.msra.mxu0 0.0
    %4947 = vmatprep.mubr.f32.mxu0 0.0
    %v4948 = vand.u32 %v1082, 4294901760
    %v4949 = vsub.f32 %v1082, %v4948
    %v4950 = vand.u32 %v4949, 4294901760
    %v4951 = vsub.f32 %v4949, %v4950
    %v4952 = vand.u32 %v4951, 4294901760
    %4953 = vmatmul.mubr.f32.gmra.mrb[0].mxu0 %v4952
    %v4954 = vpop.f32.mrb[0].mxu0
    %v4955 = vadd.f32 0.0, %v4954
    %v4956 = vpop.f32.mrb[0].mxu0
    %4957 = vmatprep.mubr.f32.mxu0 0.0
    %v4958 = vand.u32 %v1085, 4294901760
    %v4959 = vsub.f32 %v1085, %v4958
    %v4960 = vand.u32 %v4959, 4294901760
    %v4961 = vsub.f32 %v4959, %v4960
    %v4962 = vand.u32 %v4961, 4294901760
    %4963 = vmatmul.mubr.f32.gmra.mrb[0].mxu0 %v4962
    %v4964 = vpop.f32.mrb[0].mxu0
    %v4965 = vadd.f32 0.0, %v4964
    %v4966 = vpop.f32.mrb[0].mxu0
    %4967 = vdwg.mxu0
    %4968 = vmatprep.subr.mxu0 0.0
    %v4969 = vand.u32 %v4880, 4294901760
    %v4970 = vsub.f32 %v4880, %v4969
    %v4971 = vand.u32 %v4970, 4294901760
    %v4972 = vsub.f32 %v4970, %v4971
    %v4973 = vand.u32 %v4972, 4294901760
    %4974 = vmatpush1.msra.mxu0 %v4973
    %4975 = vmatprep.subr.mxu0 0.0
    %4976 = vmatpush1.msra.mxu0 0.0
    %4977 = vmatprep.subr.mxu0 0.0
    %4978 = vmatpush1.msra.mxu0 0.0
    %4979 = vmatprep.subr.mxu0 0.0
    %4980 = vmatpush1.msra.mxu0 0.0
    %4981 = vmatprep.subr.mxu0 0.0
    %4982 = vmatpush1.msra.mxu0 0.0
    %4983 = vmatprep.subr.mxu0 0.0
    %4984 = vmatpush1.msra.mxu0 0.0
    %4985 = vmatprep.subr.mxu0 0.0
    %4986 = vmatpush1.msra.mxu0 0.0
    %4987 = vmatprep.subr.mxu0 0.0
    %4988 = vmatpush1.msra.mxu0 0.0
    %4989 = vmatprep.subr.mxu0 0.0
    %4990 = vmatpush1.msra.mxu0 0.0
    %4991 = vmatprep.subr.mxu0 0.0
    %4992 = vmatpush1.msra.mxu0 0.0
    %4993 = vmatprep.subr.mxu0 0.0
    %4994 = vmatpush1.msra.mxu0 0.0
    %4995 = vmatprep.subr.mxu0 0.0
    %4996 = vmatpush1.msra.mxu0 0.0
    %4997 = vmatprep.subr.mxu0 0.0
    %4998 = vmatpush1.msra.mxu0 0.0
    %4999 = vmatprep.subr.mxu0 0.0
    %5000 = vmatpush1.msra.mxu0 0.0
    %5001 = vmatprep.subr.mxu0 0.0
    %5002 = vmatpush1.msra.mxu0 0.0
    %5003 = vmatprep.subr.mxu0 0.0
    %5004 = vmatpush1.msra.mxu0 0.0
    %5005 = vmatprep.subr.mxu0 0.0
    %5006 = vmatpush1.msra.mxu0 0.0
    %5007 = vmatprep.subr.mxu0 0.0
    %5008 = vmatpush1.msra.mxu0 0.0
    %5009 = vmatprep.subr.mxu0 0.0
    %5010 = vmatpush1.msra.mxu0 0.0
    %5011 = vmatprep.subr.mxu0 0.0
    %5012 = vmatpush1.msra.mxu0 0.0
    %5013 = vmatprep.subr.mxu0 0.0
    %5014 = vmatpush1.msra.mxu0 0.0
    %5015 = vmatprep.subr.mxu0 0.0
    %5016 = vmatpush1.msra.mxu0 0.0
    %5017 = vmatprep.subr.mxu0 0.0
    %5018 = vmatpush1.msra.mxu0 0.0
    %5019 = vmatprep.subr.mxu0 0.0
    %5020 = vmatpush1.msra.mxu0 0.0
    %5021 = vmatprep.subr.mxu0 0.0
    %5022 = vmatpush1.msra.mxu0 0.0
    %5023 = vmatprep.subr.mxu0 0.0
    %5024 = vmatpush1.msra.mxu0 0.0
    %5025 = vmatprep.subr.mxu0 0.0
    %5026 = vmatpush1.msra.mxu0 0.0
    %5027 = vmatprep.subr.mxu0 0.0
    %5028 = vmatpush1.msra.mxu0 0.0
    %5029 = vmatprep.subr.mxu0 0.0
    %5030 = vmatpush1.msra.mxu0 0.0
    %5031 = vmatprep.subr.mxu0 0.0
    %5032 = vmatpush1.msra.mxu0 0.0
    %5033 = vmatprep.subr.mxu0 0.0
    %5034 = vmatpush1.msra.mxu0 0.0
    %5035 = vmatprep.subr.mxu0 0.0
    %5036 = vmatpush1.msra.mxu0 0.0
    %5037 = vmatprep.mubr.f32.mxu0 0.0
    %v5038 = vand.u32 %v1082, 4294901760
    %5039 = vmatmul.mubr.f32.gmra.mrb[0].mxu0 %v5038
    %v5040 = vpop.f32.mrb[0].mxu0
    %v5041 = vadd.f32 %v4955, %v5040
    %v5042 = vpop.f32.mrb[0].mxu0
    %5043 = vmatprep.mubr.f32.mxu0 0.0
    %v5044 = vand.u32 %v1085, 4294901760
    %5045 = vmatmul.mubr.f32.gmra.mrb[0].mxu0 %v5044
    %v5046 = vpop.f32.mrb[0].mxu0
    %v5047 = vadd.f32 %v4965, %v5046
    %v5048 = vpop.f32.mrb[0].mxu0
    %5049 = vdwg.mxu0
    %5050 = vmatprep.subr.mxu0 0.0
    %v5051 = vand.u32 %v4880, 4294901760
    %v5052 = vsub.f32 %v4880, %v5051
    %5053 = vmatpush1.msra.mxu0 %v5052
    %5054 = vmatprep.subr.mxu0 0.0
    %5055 = vmatpush1.msra.mxu0 0.0
    %5056 = vmatprep.subr.mxu0 0.0
    %5057 = vmatpush1.msra.mxu0 0.0
    %5058 = vmatprep.subr.mxu0 0.0
    %5059 = vmatpush1.msra.mxu0 0.0
    %5060 = vmatprep.subr.mxu0 0.0
    %5061 = vmatpush1.msra.mxu0 0.0
    %5062 = vmatprep.subr.mxu0 0.0
    %5063 = vmatpush1.msra.mxu0 0.0
    %5064 = vmatprep.subr.mxu0 0.0
    %5065 = vmatpush1.msra.mxu0 0.0
    %5066 = vmatprep.subr.mxu0 0.0
    %5067 = vmatpush1.msra.mxu0 0.0
    %5068 = vmatprep.subr.mxu0 0.0
    %5069 = vmatpush1.msra.mxu0 0.0
    %5070 = vmatprep.subr.mxu0 0.0
    %5071 = vmatpush1.msra.mxu0 0.0
    %5072 = vmatprep.subr.mxu0 0.0
    %5073 = vmatpush1.msra.mxu0 0.0
    %5074 = vmatprep.subr.mxu0 0.0
    %5075 = vmatpush1.msra.mxu0 0.0
    %5076 = vmatprep.subr.mxu0 0.0
    %5077 = vmatpush1.msra.mxu0 0.0
    %5078 = vmatprep.subr.mxu0 0.0
    %5079 = vmatpush1.msra.mxu0 0.0
    %5080 = vmatprep.subr.mxu0 0.0
    %5081 = vmatpush1.msra.mxu0 0.0
    %5082 = vmatprep.subr.mxu0 0.0
    %5083 = vmatpush1.msra.mxu0 0.0
    %5084 = vmatprep.subr.mxu0 0.0
    %5085 = vmatpush1.msra.mxu0 0.0
    %5086 = vmatprep.subr.mxu0 0.0
    %5087 = vmatpush1.msra.mxu0 0.0
    %5088 = vmatprep.subr.mxu0 0.0
    %5089 = vmatpush1.msra.mxu0 0.0
    %5090 = vmatprep.subr.mxu0 0.0
    %5091 = vmatpush1.msra.mxu0 0.0
    %5092 = vmatprep.subr.mxu0 0.0
    %5093 = vmatpush1.msra.mxu0 0.0
    %5094 = vmatprep.subr.mxu0 0.0
    %5095 = vmatpush1.msra.mxu0 0.0
    %5096 = vmatprep.subr.mxu0 0.0
    %5097 = vmatpush1.msra.mxu0 0.0
    %5098 = vmatprep.subr.mxu0 0.0
    %5099 = vmatpush1.msra.mxu0 0.0
    %5100 = vmatprep.subr.mxu0 0.0
    %5101 = vmatpush1.msra.mxu0 0.0
    %5102 = vmatprep.subr.mxu0 0.0
    %5103 = vmatpush1.msra.mxu0 0.0
    %5104 = vmatprep.subr.mxu0 0.0
    %5105 = vmatpush1.msra.mxu0 0.0
    %5106 = vmatprep.subr.mxu0 0.0
    %5107 = vmatpush1.msra.mxu0 0.0
    %5108 = vmatprep.subr.mxu0 0.0
    %5109 = vmatpush1.msra.mxu0 0.0
    %5110 = vmatprep.subr.mxu0 0.0
    %5111 = vmatpush1.msra.mxu0 0.0
    %5112 = vmatprep.subr.mxu0 0.0
    %5113 = vmatpush1.msra.mxu0 0.0
    %5114 = vmatprep.subr.mxu0 0.0
    %5115 = vmatpush1.msra.mxu0 0.0
    %5116 = vmatprep.mubr.f32.mxu0 0.0
    %v5117 = vand.u32 %v1082, 4294901760
    %v5118 = vsub.f32 %v1082, %v5117
    %5119 = vmatmul.mubr.f32.gmra.mrb[0].mxu0 %v5118
    %v5120 = vpop.f32.mrb[0].mxu0
    %v5121 = vadd.f32 %v5041, %v5120
    %v5122 = vpop.f32.mrb[0].mxu0
    %5123 = vmatprep.mubr.f32.mxu0 0.0
    %v5124 = vand.u32 %v1085, 4294901760
    %v5125 = vsub.f32 %v1085, %v5124
    %5126 = vmatmul.mubr.f32.gmra.mrb[0].mxu0 %v5125
    %v5127 = vpop.f32.mrb[0].mxu0
    %v5128 = vadd.f32 %v5047, %v5127
    %v5129 = vpop.f32.mrb[0].mxu0
    %5130 = vdwg.mxu0
    %5131 = vmatprep.subr.mxu0 0.0
    %v5132 = vand.u32 %v4880, 4294901760
    %5133 = vmatpush1.msra.mxu0 %v5132
    %5134 = vmatprep.subr.mxu0 0.0
    %5135 = vmatpush1.msra.mxu0 0.0
    %5136 = vmatprep.subr.mxu0 0.0
    %5137 = vmatpush1.msra.mxu0 0.0
    %5138 = vmatprep.subr.mxu0 0.0
    %5139 = vmatpush1.msra.mxu0 0.0
    %5140 = vmatprep.subr.mxu0 0.0
    %5141 = vmatpush1.msra.mxu0 0.0
    %5142 = vmatprep.subr.mxu0 0.0
    %5143 = vmatpush1.msra.mxu0 0.0
    %5144 = vmatprep.subr.mxu0 0.0
    %5145 = vmatpush1.msra.mxu0 0.0
    %5146 = vmatprep.subr.mxu0 0.0
    %5147 = vmatpush1.msra.mxu0 0.0
    %5148 = vmatprep.subr.mxu0 0.0
    %5149 = vmatpush1.msra.mxu0 0.0
    %5150 = vmatprep.subr.mxu0 0.0
    %5151 = vmatpush1.msra.mxu0 0.0
    %5152 = vmatprep.subr.mxu0 0.0
    %5153 = vmatpush1.msra.mxu0 0.0
    %5154 = vmatprep.subr.mxu0 0.0
    %5155 = vmatpush1.msra.mxu0 0.0
    %5156 = vmatprep.subr.mxu0 0.0
    %5157 = vmatpush1.msra.mxu0 0.0
    %5158 = vmatprep.subr.mxu0 0.0
    %5159 = vmatpush1.msra.mxu0 0.0
    %5160 = vmatprep.subr.mxu0 0.0
    %5161 = vmatpush1.msra.mxu0 0.0
    %5162 = vmatprep.subr.mxu0 0.0
    %5163 = vmatpush1.msra.mxu0 0.0
    %5164 = vmatprep.subr.mxu0 0.0
    %5165 = vmatpush1.msra.mxu0 0.0
    %5166 = vmatprep.subr.mxu0 0.0
    %5167 = vmatpush1.msra.mxu0 0.0
    %5168 = vmatprep.subr.mxu0 0.0
    %5169 = vmatpush1.msra.mxu0 0.0
    %5170 = vmatprep.subr.mxu0 0.0
    %5171 = vmatpush1.msra.mxu0 0.0
    %5172 = vmatprep.subr.mxu0 0.0
    %5173 = vmatpush1.msra.mxu0 0.0
    %5174 = vmatprep.subr.mxu0 0.0
    %5175 = vmatpush1.msra.mxu0 0.0
    %5176 = vmatprep.subr.mxu0 0.0
    %5177 = vmatpush1.msra.mxu0 0.0
    %5178 = vmatprep.subr.mxu0 0.0
    %5179 = vmatpush1.msra.mxu0 0.0
    %5180 = vmatprep.subr.mxu0 0.0
    %5181 = vmatpush1.msra.mxu0 0.0
    %5182 = vmatprep.subr.mxu0 0.0
    %5183 = vmatpush1.msra.mxu0 0.0
    %5184 = vmatprep.subr.mxu0 0.0
    %5185 = vmatpush1.msra.mxu0 0.0
    %5186 = vmatprep.subr.mxu0 0.0
    %5187 = vmatpush1.msra.mxu0 0.0
    %5188 = vmatprep.subr.mxu0 0.0
    %5189 = vmatpush1.msra.mxu0 0.0
    %5190 = vmatprep.subr.mxu0 0.0
    %5191 = vmatpush1.msra.mxu0 0.0
    %5192 = vmatprep.subr.mxu0 0.0
    %5193 = vmatpush1.msra.mxu0 0.0
    %5194 = vmatprep.subr.mxu0 0.0
    %5195 = vmatpush1.msra.mxu0 0.0
    %5196 = vmatprep.mubr.f32.mxu0 0.0
    %v5197 = vand.u32 %v1082, 4294901760
    %v5198 = vsub.f32 %v1082, %v5197
    %v5199 = vand.u32 %v5198, 4294901760
    %5200 = vmatmul.mubr.f32.gmra.mrb[0].mxu0 %v5199
    %v5201 = vpop.f32.mrb[0].mxu0
    %v5202 = vadd.f32 %v5121, %v5201
    %v5203 = vpop.f32.mrb[0].mxu0
    %5204 = vmatprep.mubr.f32.mxu0 0.0
    %v5205 = vand.u32 %v1085, 4294901760
    %v5206 = vsub.f32 %v1085, %v5205
    %v5207 = vand.u32 %v5206, 4294901760
    %5208 = vmatmul.mubr.f32.gmra.mrb[0].mxu0 %v5207
    %v5209 = vpop.f32.mrb[0].mxu0
    %v5210 = vadd.f32 %v5128, %v5209
    %v5211 = vpop.f32.mrb[0].mxu0
    %5212 = vdwg.mxu0
    %5213 = vmatprep.subr.mxu0 0.0
    %v5214 = vand.u32 %v4880, 4294901760
    %v5215 = vsub.f32 %v4880, %v5214
    %v5216 = vand.u32 %v5215, 4294901760
    %5217 = vmatpush1.msra.mxu0 %v5216
    %5218 = vmatprep.subr.mxu0 0.0
    %5219 = vmatpush1.msra.mxu0 0.0
    %5220 = vmatprep.subr.mxu0 0.0
    %5221 = vmatpush1.msra.mxu0 0.0
    %5222 = vmatprep.subr.mxu0 0.0
    %5223 = vmatpush1.msra.mxu0 0.0
    %5224 = vmatprep.subr.mxu0 0.0
    %5225 = vmatpush1.msra.mxu0 0.0
    %5226 = vmatprep.subr.mxu0 0.0
    %5227 = vmatpush1.msra.mxu0 0.0
    %5228 = vmatprep.subr.mxu0 0.0
    %5229 = vmatpush1.msra.mxu0 0.0
    %5230 = vmatprep.subr.mxu0 0.0
    %5231 = vmatpush1.msra.mxu0 0.0
    %5232 = vmatprep.subr.mxu0 0.0
    %5233 = vmatpush1.msra.mxu0 0.0
    %5234 = vmatprep.subr.mxu0 0.0
    %5235 = vmatpush1.msra.mxu0 0.0
    %5236 = vmatprep.subr.mxu0 0.0
    %5237 = vmatpush1.msra.mxu0 0.0
    %5238 = vmatprep.subr.mxu0 0.0
    %5239 = vmatpush1.msra.mxu0 0.0
    %5240 = vmatprep.subr.mxu0 0.0
    %5241 = vmatpush1.msra.mxu0 0.0
    %5242 = vmatprep.subr.mxu0 0.0
    %5243 = vmatpush1.msra.mxu0 0.0
    %5244 = vmatprep.subr.mxu0 0.0
    %5245 = vmatpush1.msra.mxu0 0.0
    %5246 = vmatprep.subr.mxu0 0.0
    %5247 = vmatpush1.msra.mxu0 0.0
    %5248 = vmatprep.subr.mxu0 0.0
    %5249 = vmatpush1.msra.mxu0 0.0
    %5250 = vmatprep.subr.mxu0 0.0
    %5251 = vmatpush1.msra.mxu0 0.0
    %5252 = vmatprep.subr.mxu0 0.0
    %5253 = vmatpush1.msra.mxu0 0.0
    %5254 = vmatprep.subr.mxu0 0.0
    %5255 = vmatpush1.msra.mxu0 0.0
    %5256 = vmatprep.subr.mxu0 0.0
    %5257 = vmatpush1.msra.mxu0 0.0
    %5258 = vmatprep.subr.mxu0 0.0
    %5259 = vmatpush1.msra.mxu0 0.0
    %5260 = vmatprep.subr.mxu0 0.0
    %5261 = vmatpush1.msra.mxu0 0.0
    %5262 = vmatprep.subr.mxu0 0.0
    %5263 = vmatpush1.msra.mxu0 0.0
    %5264 = vmatprep.subr.mxu0 0.0
    %5265 = vmatpush1.msra.mxu0 0.0
    %5266 = vmatprep.subr.mxu0 0.0
    %5267 = vmatpush1.msra.mxu0 0.0
    %5268 = vmatprep.subr.mxu0 0.0
    %5269 = vmatpush1.msra.mxu0 0.0
    %5270 = vmatprep.subr.mxu0 0.0
    %5271 = vmatpush1.msra.mxu0 0.0
    %5272 = vmatprep.subr.mxu0 0.0
    %5273 = vmatpush1.msra.mxu0 0.0
    %5274 = vmatprep.subr.mxu0 0.0
    %5275 = vmatpush1.msra.mxu0 0.0
    %5276 = vmatprep.subr.mxu0 0.0
    %5277 = vmatpush1.msra.mxu0 0.0
    %5278 = vmatprep.subr.mxu0 0.0
    %5279 = vmatpush1.msra.mxu0 0.0
    %5280 = vmatprep.mubr.f32.mxu0 0.0
    %v5281 = vand.u32 %v1082, 4294901760
    %5282 = vmatmul.mubr.f32.gmra.mrb[0].mxu0 %v5281
    %v5283 = vpop.f32.mrb[0].mxu0
    %v5284 = vadd.f32 %v5202, %v5283
    %v5285 = vpop.f32.mrb[0].mxu0
    %5286 = vmatprep.mubr.f32.mxu0 0.0
    %v5287 = vand.u32 %v1085, 4294901760
    %5288 = vmatmul.mubr.f32.gmra.mrb[0].mxu0 %v5287
    %v5289 = vpop.f32.mrb[0].mxu0
    %v5290 = vadd.f32 %v5210, %v5289
    %v5291 = vpop.f32.mrb[0].mxu0
    %5292 = vdwg.mxu0
    %5293 = vmatprep.subr.mxu0 0.0
    %v5294 = vand.u32 %v4880, 4294901760
    %5295 = vmatpush1.msra.mxu0 %v5294
    %5296 = vmatprep.subr.mxu0 0.0
    %5297 = vmatpush1.msra.mxu0 0.0
    %5298 = vmatprep.subr.mxu0 0.0
    %5299 = vmatpush1.msra.mxu0 0.0
    %5300 = vmatprep.subr.mxu0 0.0
    %5301 = vmatpush1.msra.mxu0 0.0
    %5302 = vmatprep.subr.mxu0 0.0
    %5303 = vmatpush1.msra.mxu0 0.0
    %5304 = vmatprep.subr.mxu0 0.0
    %5305 = vmatpush1.msra.mxu0 0.0
    %5306 = vmatprep.subr.mxu0 0.0
    %5307 = vmatpush1.msra.mxu0 0.0
    %5308 = vmatprep.subr.mxu0 0.0
    %5309 = vmatpush1.msra.mxu0 0.0
    %5310 = vmatprep.subr.mxu0 0.0
    %5311 = vmatpush1.msra.mxu0 0.0
    %5312 = vmatprep.subr.mxu0 0.0
    %5313 = vmatpush1.msra.mxu0 0.0
    %5314 = vmatprep.subr.mxu0 0.0
    %5315 = vmatpush1.msra.mxu0 0.0
    %5316 = vmatprep.subr.mxu0 0.0
    %5317 = vmatpush1.msra.mxu0 0.0
    %5318 = vmatprep.subr.mxu0 0.0
    %5319 = vmatpush1.msra.mxu0 0.0
    %5320 = vmatprep.subr.mxu0 0.0
    %5321 = vmatpush1.msra.mxu0 0.0
    %5322 = vmatprep.subr.mxu0 0.0
    %5323 = vmatpush1.msra.mxu0 0.0
    %5324 = vmatprep.subr.mxu0 0.0
    %5325 = vmatpush1.msra.mxu0 0.0
    %5326 = vmatprep.subr.mxu0 0.0
    %5327 = vmatpush1.msra.mxu0 0.0
    %5328 = vmatprep.subr.mxu0 0.0
    %5329 = vmatpush1.msra.mxu0 0.0
    %5330 = vmatprep.subr.mxu0 0.0
    %5331 = vmatpush1.msra.mxu0 0.0
    %5332 = vmatprep.subr.mxu0 0.0
    %5333 = vmatpush1.msra.mxu0 0.0
    %5334 = vmatprep.subr.mxu0 0.0
    %5335 = vmatpush1.msra.mxu0 0.0
    %5336 = vmatprep.subr.mxu0 0.0
    %5337 = vmatpush1.msra.mxu0 0.0
    %5338 = vmatprep.subr.mxu0 0.0
    %5339 = vmatpush1.msra.mxu0 0.0
    %5340 = vmatprep.subr.mxu0 0.0
    %5341 = vmatpush1.msra.mxu0 0.0
    %5342 = vmatprep.subr.mxu0 0.0
    %5343 = vmatpush1.msra.mxu0 0.0
    %5344 = vmatprep.subr.mxu0 0.0
    %5345 = vmatpush1.msra.mxu0 0.0
    %5346 = vmatprep.subr.mxu0 0.0
    %5347 = vmatpush1.msra.mxu0 0.0
    %5348 = vmatprep.subr.mxu0 0.0
    %5349 = vmatpush1.msra.mxu0 0.0
    %5350 = vmatprep.subr.mxu0 0.0
    %5351 = vmatpush1.msra.mxu0 0.0
    %5352 = vmatprep.subr.mxu0 0.0
    %5353 = vmatpush1.msra.mxu0 0.0
    %5354 = vmatprep.subr.mxu0 0.0
    %5355 = vmatpush1.msra.mxu0 0.0
    %5356 = vmatprep.subr.mxu0 0.0
    %5357 = vmatpush1.msra.mxu0 0.0
    %5358 = vmatprep.mubr.f32.mxu0 0.0
    %v5359 = vand.u32 %v1082, 4294901760
    %5360 = vmatmul.mubr.f32.gmra.mrb[0].mxu0 %v5359
    %v5361 = vpop.f32.mrb[0].mxu0
    %v5362 = vadd.f32 %v5284, %v5361
    %v5363 = vpop.f32.mrb[0].mxu0
    %5364 = vmatprep.mubr.f32.mxu0 0.0
    %v5365 = vand.u32 %v1085, 4294901760
    %5366 = vmatmul.mubr.f32.gmra.mrb[0].mxu0 %v5365
    %v5367 = vpop.f32.mrb[0].mxu0
    %v5368 = vadd.f32 %v5290, %v5367
    %v5369 = vpop.f32.mrb[0].mxu0
    %5370 = vdwg.mxu0
    %v5371 = vadd.f32 %v4866, %v5362
    %v5372 = vadd.f32 %v4872, %v5368
    %v5373 = vadd.f32 %v5371, %v1584
    %v5374 = vadd.f32 %v5372, %v1589
    %v5375 = vxor.u32 %v5374, 2147483648
    %v5376 = vmul.f32 %v5375, 1.442695
    %v5377 = vpow.pop %v5376
    %v5378 = vadd.f32 %v5377, 1.0
    %v5379 = vrcp.pop %v5378
    %v5380 = vmul.f32 1.0, %v5379
    %v5381 = vmul.f32 %v5373, %v5380
    %v5382 = vrot.slane %v5381, 4
    %v5383 = vadd.f32 %v5381, %v5382
    %v5384 = vrot.slane %v5383, 2
    %v5385 = vadd.f32 %v5383, %v5384
    %v5386 = vrot.slane %v5385, 1
    %v5387 = vadd.f32 %v5385, %v5386
    %5388 = vmatprep.subr.mxu0 0.0
    %v5389 = vand.u32 %v56, 4294901760
    %5390 = vmatpush1.msra.mxu0 %v5389
    %5391 = vmatprep.subr.mxu0 0.0
    %v5392 = vand.u32 %v57, 4294901760
    %5393 = vmatpush1.msra.mxu0 %v5392
    %5394 = vmatprep.subr.mxu0 0.0
    %v5395 = vand.u32 %v58, 4294901760
    %5396 = vmatpush1.msra.mxu0 %v5395
    %5397 = vmatprep.subr.mxu0 0.0
    %v5398 = vand.u32 %v59, 4294901760
    %5399 = vmatpush1.msra.mxu0 %v5398
    %5400 = vmatprep.subr.mxu0 0.0
    %v5401 = vand.u32 %v60, 4294901760
    %5402 = vmatpush1.msra.mxu0 %v5401
    %5403 = vmatprep.subr.mxu0 0.0
    %v5404 = vand.u32 %v61, 4294901760
    %5405 = vmatpush1.msra.mxu0 %v5404
    %5406 = vmatprep.subr.mxu0 0.0
    %v5407 = vand.u32 %v62, 4294901760
    %5408 = vmatpush1.msra.mxu0 %v5407
    %5409 = vmatprep.subr.mxu0 0.0
    %v5410 = vand.u32 %v63, 4294901760
    %5411 = vmatpush1.msra.mxu0 %v5410
    %5412 = vmatprep.subr.mxu0 0.0
    %v5413 = vand.u32 %v64, 4294901760
    %5414 = vmatpush1.msra.mxu0 %v5413
    %5415 = vmatprep.subr.mxu0 0.0
    %v5416 = vand.u32 %v65, 4294901760
    %5417 = vmatpush1.msra.mxu0 %v5416
    %5418 = vmatprep.subr.mxu0 0.0
    %v5419 = vand.u32 %v66, 4294901760
    %5420 = vmatpush1.msra.mxu0 %v5419
    %5421 = vmatprep.subr.mxu0 0.0
    %v5422 = vand.u32 %v67, 4294901760
    %5423 = vmatpush1.msra.mxu0 %v5422
    %5424 = vmatprep.subr.mxu0 0.0
    %v5425 = vand.u32 %v68, 4294901760
    %5426 = vmatpush1.msra.mxu0 %v5425
    %5427 = vmatprep.subr.mxu0 0.0
    %v5428 = vand.u32 %v69, 4294901760
    %5429 = vmatpush1.msra.mxu0 %v5428
    %5430 = vmatprep.subr.mxu0 0.0
    %v5431 = vand.u32 %v70, 4294901760
    %5432 = vmatpush1.msra.mxu0 %v5431
    %5433 = vmatprep.subr.mxu0 0.0
    %v5434 = vand.u32 %v71, 4294901760
    %5435 = vmatpush1.msra.mxu0 %v5434
    %5436 = vmatprep.subr.mxu0 0.0
    %5437 = vmatpush1.msra.mxu0 0.0
    %5438 = vmatprep.subr.mxu0 0.0
    %5439 = vmatpush1.msra.mxu0 0.0
    %5440 = vmatprep.subr.mxu0 0.0
    %5441 = vmatpush1.msra.mxu0 0.0
    %5442 = vmatprep.subr.mxu0 0.0
    %5443 = vmatpush1.msra.mxu0 0.0
    %5444 = vmatprep.subr.mxu0 0.0
    %5445 = vmatpush1.msra.mxu0 0.0
    %5446 = vmatprep.subr.mxu0 0.0
    %5447 = vmatpush1.msra.mxu0 0.0
    %5448 = vmatprep.subr.mxu0 0.0
    %5449 = vmatpush1.msra.mxu0 0.0
    %5450 = vmatprep.subr.mxu0 0.0
    %5451 = vmatpush1.msra.mxu0 0.0
    %5452 = vmatprep.subr.mxu0 0.0
    %5453 = vmatpush1.msra.mxu0 0.0
    %5454 = vmatprep.subr.mxu0 0.0
    %5455 = vmatpush1.msra.mxu0 0.0
    %5456 = vmatprep.subr.mxu0 0.0
    %5457 = vmatpush1.msra.mxu0 0.0
    %5458 = vmatprep.subr.mxu0 0.0
    %5459 = vmatpush1.msra.mxu0 0.0
    %5460 = vmatprep.subr.mxu0 0.0
    %5461 = vmatpush1.msra.mxu0 0.0
    %5462 = vmatprep.subr.mxu0 0.0
    %5463 = vmatpush1.msra.mxu0 0.0
    %5464 = vmatprep.subr.mxu0 0.0
    %5465 = vmatpush1.msra.mxu0 0.0
    %5466 = vmatprep.subr.mxu0 0.0
    %5467 = vmatpush1.msra.mxu0 0.0
    %5468 = vmatprep.mubr.f32.mxu0 0.0
    %v5469 = vand.u32 %v5387, 4294901760
    %v5470 = vsub.f32 %v5387, %v5469
    %v5471 = vand.u32 %v5470, 4294901760
    %v5472 = vsub.f32 %v5470, %v5471
    %v5473 = vand.u32 %v5472, 4294901760
    %5474 = vmatmul.mubr.f32.gmra.mrb[0].mxu0 %v5473
    %v5475 = vpop.f32.mrb[0].mxu0
    %v5476 = vadd.f32 0.0, %v5475
    %v5477 = vpop.f32.mrb[0].mxu0
    %5478 = vdwg.mxu0
    %5479 = vmatprep.subr.mxu0 0.0
    %v5480 = vand.u32 %v56, 4294901760
    %v5481 = vsub.f32 %v56, %v5480
    %v5482 = vand.u32 %v5481, 4294901760
    %v5483 = vsub.f32 %v5481, %v5482
    %v5484 = vand.u32 %v5483, 4294901760
    %5485 = vmatpush1.msra.mxu0 %v5484
    %5486 = vmatprep.subr.mxu0 0.0
    %v5487 = vand.u32 %v57, 4294901760
    %v5488 = vsub.f32 %v57, %v5487
    %v5489 = vand.u32 %v5488, 4294901760
    %v5490 = vsub.f32 %v5488, %v5489
    %v5491 = vand.u32 %v5490, 4294901760
    %5492 = vmatpush1.msra.mxu0 %v5491
    %5493 = vmatprep.subr.mxu0 0.0
    %v5494 = vand.u32 %v58, 4294901760
    %v5495 = vsub.f32 %v58, %v5494
    %v5496 = vand.u32 %v5495, 4294901760
    %v5497 = vsub.f32 %v5495, %v5496
    %v5498 = vand.u32 %v5497, 4294901760
    %5499 = vmatpush1.msra.mxu0 %v5498
    %5500 = vmatprep.subr.mxu0 0.0
    %v5501 = vand.u32 %v59, 4294901760
    %v5502 = vsub.f32 %v59, %v5501
    %v5503 = vand.u32 %v5502, 4294901760
    %v5504 = vsub.f32 %v5502, %v5503
    %v5505 = vand.u32 %v5504, 4294901760
    %5506 = vmatpush1.msra.mxu0 %v5505
    %5507 = vmatprep.subr.mxu0 0.0
    %v5508 = vand.u32 %v60, 4294901760
    %v5509 = vsub.f32 %v60, %v5508
    %v5510 = vand.u32 %v5509, 4294901760
    %v5511 = vsub.f32 %v5509, %v5510
    %v5512 = vand.u32 %v5511, 4294901760
    %5513 = vmatpush1.msra.mxu0 %v5512
    %5514 = vmatprep.subr.mxu0 0.0
    %v5515 = vand.u32 %v61, 4294901760
    %v5516 = vsub.f32 %v61, %v5515
    %v5517 = vand.u32 %v5516, 4294901760
    %v5518 = vsub.f32 %v5516, %v5517
    %v5519 = vand.u32 %v5518, 4294901760
    %5520 = vmatpush1.msra.mxu0 %v5519
    %5521 = vmatprep.subr.mxu0 0.0
    %v5522 = vand.u32 %v62, 4294901760
    %v5523 = vsub.f32 %v62, %v5522
    %v5524 = vand.u32 %v5523, 4294901760
    %v5525 = vsub.f32 %v5523, %v5524
    %v5526 = vand.u32 %v5525, 4294901760
    %5527 = vmatpush1.msra.mxu0 %v5526
    %5528 = vmatprep.subr.mxu0 0.0
    %v5529 = vand.u32 %v63, 4294901760
    %v5530 = vsub.f32 %v63, %v5529
    %v5531 = vand.u32 %v5530, 4294901760
    %v5532 = vsub.f32 %v5530, %v5531
    %v5533 = vand.u32 %v5532, 4294901760
    %5534 = vmatpush1.msra.mxu0 %v5533
    %5535 = vmatprep.subr.mxu0 0.0
    %v5536 = vand.u32 %v64, 4294901760
    %v5537 = vsub.f32 %v64, %v5536
    %v5538 = vand.u32 %v5537, 4294901760
    %v5539 = vsub.f32 %v5537, %v5538
    %v5540 = vand.u32 %v5539, 4294901760
    %5541 = vmatpush1.msra.mxu0 %v5540
    %5542 = vmatprep.subr.mxu0 0.0
    %v5543 = vand.u32 %v65, 4294901760
    %v5544 = vsub.f32 %v65, %v5543
    %v5545 = vand.u32 %v5544, 4294901760
    %v5546 = vsub.f32 %v5544, %v5545
    %v5547 = vand.u32 %v5546, 4294901760
    %5548 = vmatpush1.msra.mxu0 %v5547
    %5549 = vmatprep.subr.mxu0 0.0
    %v5550 = vand.u32 %v66, 4294901760
    %v5551 = vsub.f32 %v66, %v5550
    %v5552 = vand.u32 %v5551, 4294901760
    %v5553 = vsub.f32 %v5551, %v5552
    %v5554 = vand.u32 %v5553, 4294901760
    %5555 = vmatpush1.msra.mxu0 %v5554
    %5556 = vmatprep.subr.mxu0 0.0
    %v5557 = vand.u32 %v67, 4294901760
    %v5558 = vsub.f32 %v67, %v5557
    %v5559 = vand.u32 %v5558, 4294901760
    %v5560 = vsub.f32 %v5558, %v5559
    %v5561 = vand.u32 %v5560, 4294901760
    %5562 = vmatpush1.msra.mxu0 %v5561
    %5563 = vmatprep.subr.mxu0 0.0
    %v5564 = vand.u32 %v68, 4294901760
    %v5565 = vsub.f32 %v68, %v5564
    %v5566 = vand.u32 %v5565, 4294901760
    %v5567 = vsub.f32 %v5565, %v5566
    %v5568 = vand.u32 %v5567, 4294901760
    %5569 = vmatpush1.msra.mxu0 %v5568
    %5570 = vmatprep.subr.mxu0 0.0
    %v5571 = vand.u32 %v69, 4294901760
    %v5572 = vsub.f32 %v69, %v5571
    %v5573 = vand.u32 %v5572, 4294901760
    %v5574 = vsub.f32 %v5572, %v5573
    %v5575 = vand.u32 %v5574, 4294901760
    %5576 = vmatpush1.msra.mxu0 %v5575
    %5577 = vmatprep.subr.mxu0 0.0
    %v5578 = vand.u32 %v70, 4294901760
    %v5579 = vsub.f32 %v70, %v5578
    %v5580 = vand.u32 %v5579, 4294901760
    %v5581 = vsub.f32 %v5579, %v5580
    %v5582 = vand.u32 %v5581, 4294901760
    %5583 = vmatpush1.msra.mxu0 %v5582
    %5584 = vmatprep.subr.mxu0 0.0
    %v5585 = vand.u32 %v71, 4294901760
    %v5586 = vsub.f32 %v71, %v5585
    %v5587 = vand.u32 %v5586, 4294901760
    %v5588 = vsub.f32 %v5586, %v5587
    %v5589 = vand.u32 %v5588, 4294901760
    %5590 = vmatpush1.msra.mxu0 %v5589
    %5591 = vmatprep.subr.mxu0 0.0
    %5592 = vmatpush1.msra.mxu0 0.0
    %5593 = vmatprep.subr.mxu0 0.0
    %5594 = vmatpush1.msra.mxu0 0.0
    %5595 = vmatprep.subr.mxu0 0.0
    %5596 = vmatpush1.msra.mxu0 0.0
    %5597 = vmatprep.subr.mxu0 0.0
    %5598 = vmatpush1.msra.mxu0 0.0
    %5599 = vmatprep.subr.mxu0 0.0
    %5600 = vmatpush1.msra.mxu0 0.0
    %5601 = vmatprep.subr.mxu0 0.0
    %5602 = vmatpush1.msra.mxu0 0.0
    %5603 = vmatprep.subr.mxu0 0.0
    %5604 = vmatpush1.msra.mxu0 0.0
    %5605 = vmatprep.subr.mxu0 0.0
    %5606 = vmatpush1.msra.mxu0 0.0
    %5607 = vmatprep.subr.mxu0 0.0
    %5608 = vmatpush1.msra.mxu0 0.0
    %5609 = vmatprep.subr.mxu0 0.0
    %5610 = vmatpush1.msra.mxu0 0.0
    %5611 = vmatprep.subr.mxu0 0.0
    %5612 = vmatpush1.msra.mxu0 0.0
    %5613 = vmatprep.subr.mxu0 0.0
    %5614 = vmatpush1.msra.mxu0 0.0
    %5615 = vmatprep.subr.mxu0 0.0
    %5616 = vmatpush1.msra.mxu0 0.0
    %5617 = vmatprep.subr.mxu0 0.0
    %5618 = vmatpush1.msra.mxu0 0.0
    %5619 = vmatprep.subr.mxu0 0.0
    %5620 = vmatpush1.msra.mxu0 0.0
    %5621 = vmatprep.subr.mxu0 0.0
    %5622 = vmatpush1.msra.mxu0 0.0
    %5623 = vmatprep.mubr.f32.mxu0 0.0
    %v5624 = vand.u32 %v5387, 4294901760
    %5625 = vmatmul.mubr.f32.gmra.mrb[0].mxu0 %v5624
    %v5626 = vpop.f32.mrb[0].mxu0
    %v5627 = vadd.f32 %v5476, %v5626
    %v5628 = vpop.f32.mrb[0].mxu0
    %5629 = vdwg.mxu0
    %5630 = vmatprep.subr.mxu0 0.0
    %v5631 = vand.u32 %v56, 4294901760
    %v5632 = vsub.f32 %v56, %v5631
    %5633 = vmatpush1.msra.mxu0 %v5632
    %5634 = vmatprep.subr.mxu0 0.0
    %v5635 = vand.u32 %v57, 4294901760
    %v5636 = vsub.f32 %v57, %v5635
    %5637 = vmatpush1.msra.mxu0 %v5636
    %5638 = vmatprep.subr.mxu0 0.0
    %v5639 = vand.u32 %v58, 4294901760
    %v5640 = vsub.f32 %v58, %v5639
    %5641 = vmatpush1.msra.mxu0 %v5640
    %5642 = vmatprep.subr.mxu0 0.0
    %v5643 = vand.u32 %v59, 4294901760
    %v5644 = vsub.f32 %v59, %v5643
    %5645 = vmatpush1.msra.mxu0 %v5644
    %5646 = vmatprep.subr.mxu0 0.0
    %v5647 = vand.u32 %v60, 4294901760
    %v5648 = vsub.f32 %v60, %v5647
    %5649 = vmatpush1.msra.mxu0 %v5648
    %5650 = vmatprep.subr.mxu0 0.0
    %v5651 = vand.u32 %v61, 4294901760
    %v5652 = vsub.f32 %v61, %v5651
    %5653 = vmatpush1.msra.mxu0 %v5652
    %5654 = vmatprep.subr.mxu0 0.0
    %v5655 = vand.u32 %v62, 4294901760
    %v5656 = vsub.f32 %v62, %v5655
    %5657 = vmatpush1.msra.mxu0 %v5656
    %5658 = vmatprep.subr.mxu0 0.0
    %v5659 = vand.u32 %v63, 4294901760
    %v5660 = vsub.f32 %v63, %v5659
    %5661 = vmatpush1.msra.mxu0 %v5660
    %5662 = vmatprep.subr.mxu0 0.0
    %v5663 = vand.u32 %v64, 4294901760
    %v5664 = vsub.f32 %v64, %v5663
    %5665 = vmatpush1.msra.mxu0 %v5664
    %5666 = vmatprep.subr.mxu0 0.0
    %v5667 = vand.u32 %v65, 4294901760
    %v5668 = vsub.f32 %v65, %v5667
    %5669 = vmatpush1.msra.mxu0 %v5668
    %5670 = vmatprep.subr.mxu0 0.0
    %v5671 = vand.u32 %v66, 4294901760
    %v5672 = vsub.f32 %v66, %v5671
    %5673 = vmatpush1.msra.mxu0 %v5672
    %5674 = vmatprep.subr.mxu0 0.0
    %v5675 = vand.u32 %v67, 4294901760
    %v5676 = vsub.f32 %v67, %v5675
    %5677 = vmatpush1.msra.mxu0 %v5676
    %5678 = vmatprep.subr.mxu0 0.0
    %v5679 = vand.u32 %v68, 4294901760
    %v5680 = vsub.f32 %v68, %v5679
    %5681 = vmatpush1.msra.mxu0 %v5680
    %5682 = vmatprep.subr.mxu0 0.0
    %v5683 = vand.u32 %v69, 4294901760
    %v5684 = vsub.f32 %v69, %v5683
    %5685 = vmatpush1.msra.mxu0 %v5684
    %5686 = vmatprep.subr.mxu0 0.0
    %v5687 = vand.u32 %v70, 4294901760
    %v5688 = vsub.f32 %v70, %v5687
    %5689 = vmatpush1.msra.mxu0 %v5688
    %5690 = vmatprep.subr.mxu0 0.0
    %v5691 = vand.u32 %v71, 4294901760
    %v5692 = vsub.f32 %v71, %v5691
    %5693 = vmatpush1.msra.mxu0 %v5692
    %5694 = vmatprep.subr.mxu0 0.0
    %5695 = vmatpush1.msra.mxu0 0.0
    %5696 = vmatprep.subr.mxu0 0.0
    %5697 = vmatpush1.msra.mxu0 0.0
    %5698 = vmatprep.subr.mxu0 0.0
    %5699 = vmatpush1.msra.mxu0 0.0
    %5700 = vmatprep.subr.mxu0 0.0
    %5701 = vmatpush1.msra.mxu0 0.0
    %5702 = vmatprep.subr.mxu0 0.0
    %5703 = vmatpush1.msra.mxu0 0.0
    %5704 = vmatprep.subr.mxu0 0.0
    %5705 = vmatpush1.msra.mxu0 0.0
    %5706 = vmatprep.subr.mxu0 0.0
    %5707 = vmatpush1.msra.mxu0 0.0
    %5708 = vmatprep.subr.mxu0 0.0
    %5709 = vmatpush1.msra.mxu0 0.0
    %5710 = vmatprep.subr.mxu0 0.0
    %5711 = vmatpush1.msra.mxu0 0.0
    %5712 = vmatprep.subr.mxu0 0.0
    %5713 = vmatpush1.msra.mxu0 0.0
    %5714 = vmatprep.subr.mxu0 0.0
    %5715 = vmatpush1.msra.mxu0 0.0
    %5716 = vmatprep.subr.mxu0 0.0
    %5717 = vmatpush1.msra.mxu0 0.0
    %5718 = vmatprep.subr.mxu0 0.0
    %5719 = vmatpush1.msra.mxu0 0.0
    %5720 = vmatprep.subr.mxu0 0.0
    %5721 = vmatpush1.msra.mxu0 0.0
    %5722 = vmatprep.subr.mxu0 0.0
    %5723 = vmatpush1.msra.mxu0 0.0
    %5724 = vmatprep.subr.mxu0 0.0
    %5725 = vmatpush1.msra.mxu0 0.0
    %5726 = vmatprep.mubr.f32.mxu0 0.0
    %v5727 = vand.u32 %v5387, 4294901760
    %v5728 = vsub.f32 %v5387, %v5727
    %5729 = vmatmul.mubr.f32.gmra.mrb[0].mxu0 %v5728
    %v5730 = vpop.f32.mrb[0].mxu0
    %v5731 = vadd.f32 %v5627, %v5730
    %v5732 = vpop.f32.mrb[0].mxu0
    %5733 = vdwg.mxu0
    %5734 = vmatprep.subr.mxu0 0.0
    %v5735 = vand.u32 %v56, 4294901760
    %5736 = vmatpush1.msra.mxu0 %v5735
    %5737 = vmatprep.subr.mxu0 0.0
    %v5738 = vand.u32 %v57, 4294901760
    %5739 = vmatpush1.msra.mxu0 %v5738
    %5740 = vmatprep.subr.mxu0 0.0
    %v5741 = vand.u32 %v58, 4294901760
    %5742 = vmatpush1.msra.mxu0 %v5741
    %5743 = vmatprep.subr.mxu0 0.0
    %v5744 = vand.u32 %v59, 4294901760
    %5745 = vmatpush1.msra.mxu0 %v5744
    %5746 = vmatprep.subr.mxu0 0.0
    %v5747 = vand.u32 %v60, 4294901760
    %5748 = vmatpush1.msra.mxu0 %v5747
    %5749 = vmatprep.subr.mxu0 0.0
    %v5750 = vand.u32 %v61, 4294901760
    %5751 = vmatpush1.msra.mxu0 %v5750
    %5752 = vmatprep.subr.mxu0 0.0
    %v5753 = vand.u32 %v62, 4294901760
    %5754 = vmatpush1.msra.mxu0 %v5753
    %5755 = vmatprep.subr.mxu0 0.0
    %v5756 = vand.u32 %v63, 4294901760
    %5757 = vmatpush1.msra.mxu0 %v5756
    %5758 = vmatprep.subr.mxu0 0.0
    %v5759 = vand.u32 %v64, 4294901760
    %5760 = vmatpush1.msra.mxu0 %v5759
    %5761 = vmatprep.subr.mxu0 0.0
    %v5762 = vand.u32 %v65, 4294901760
    %5763 = vmatpush1.msra.mxu0 %v5762
    %5764 = vmatprep.subr.mxu0 0.0
    %v5765 = vand.u32 %v66, 4294901760
    %5766 = vmatpush1.msra.mxu0 %v5765
    %5767 = vmatprep.subr.mxu0 0.0
    %v5768 = vand.u32 %v67, 4294901760
    %5769 = vmatpush1.msra.mxu0 %v5768
    %5770 = vmatprep.subr.mxu0 0.0
    %v5771 = vand.u32 %v68, 4294901760
    %5772 = vmatpush1.msra.mxu0 %v5771
    %5773 = vmatprep.subr.mxu0 0.0
    %v5774 = vand.u32 %v69, 4294901760
    %5775 = vmatpush1.msra.mxu0 %v5774
    %5776 = vmatprep.subr.mxu0 0.0
    %v5777 = vand.u32 %v70, 4294901760
    %5778 = vmatpush1.msra.mxu0 %v5777
    %5779 = vmatprep.subr.mxu0 0.0
    %v5780 = vand.u32 %v71, 4294901760
    %5781 = vmatpush1.msra.mxu0 %v5780
    %5782 = vmatprep.subr.mxu0 0.0
    %5783 = vmatpush1.msra.mxu0 0.0
    %5784 = vmatprep.subr.mxu0 0.0
    %5785 = vmatpush1.msra.mxu0 0.0
    %5786 = vmatprep.subr.mxu0 0.0
    %5787 = vmatpush1.msra.mxu0 0.0
    %5788 = vmatprep.subr.mxu0 0.0
    %5789 = vmatpush1.msra.mxu0 0.0
    %5790 = vmatprep.subr.mxu0 0.0
    %5791 = vmatpush1.msra.mxu0 0.0
    %5792 = vmatprep.subr.mxu0 0.0
    %5793 = vmatpush1.msra.mxu0 0.0
    %5794 = vmatprep.subr.mxu0 0.0
    %5795 = vmatpush1.msra.mxu0 0.0
    %5796 = vmatprep.subr.mxu0 0.0
    %5797 = vmatpush1.msra.mxu0 0.0
    %5798 = vmatprep.subr.mxu0 0.0
    %5799 = vmatpush1.msra.mxu0 0.0
    %5800 = vmatprep.subr.mxu0 0.0
    %5801 = vmatpush1.msra.mxu0 0.0
    %5802 = vmatprep.subr.mxu0 0.0
    %5803 = vmatpush1.msra.mxu0 0.0
    %5804 = vmatprep.subr.mxu0 0.0
    %5805 = vmatpush1.msra.mxu0 0.0
    %5806 = vmatprep.subr.mxu0 0.0
    %5807 = vmatpush1.msra.mxu0 0.0
    %5808 = vmatprep.subr.mxu0 0.0
    %5809 = vmatpush1.msra.mxu0 0.0
    %5810 = vmatprep.subr.mxu0 0.0
    %5811 = vmatpush1.msra.mxu0 0.0
    %5812 = vmatprep.subr.mxu0 0.0
    %5813 = vmatpush1.msra.mxu0 0.0
    %5814 = vmatprep.mubr.f32.mxu0 0.0
    %v5815 = vand.u32 %v5387, 4294901760
    %v5816 = vsub.f32 %v5387, %v5815
    %v5817 = vand.u32 %v5816, 4294901760
    %5818 = vmatmul.mubr.f32.gmra.mrb[0].mxu0 %v5817
    %v5819 = vpop.f32.mrb[0].mxu0
    %v5820 = vadd.f32 %v5731, %v5819
    %v5821 = vpop.f32.mrb[0].mxu0
    %5822 = vdwg.mxu0
    %5823 = vmatprep.subr.mxu0 0.0
    %v5824 = vand.u32 %v56, 4294901760
    %v5825 = vsub.f32 %v56, %v5824
    %v5826 = vand.u32 %v5825, 4294901760
    %5827 = vmatpush1.msra.mxu0 %v5826
    %5828 = vmatprep.subr.mxu0 0.0
    %v5829 = vand.u32 %v57, 4294901760
    %v5830 = vsub.f32 %v57, %v5829
    %v5831 = vand.u32 %v5830, 4294901760
    %5832 = vmatpush1.msra.mxu0 %v5831
    %5833 = vmatprep.subr.mxu0 0.0
    %v5834 = vand.u32 %v58, 4294901760
    %v5835 = vsub.f32 %v58, %v5834
    %v5836 = vand.u32 %v5835, 4294901760
    %5837 = vmatpush1.msra.mxu0 %v5836
    %5838 = vmatprep.subr.mxu0 0.0
    %v5839 = vand.u32 %v59, 4294901760
    %v5840 = vsub.f32 %v59, %v5839
    %v5841 = vand.u32 %v5840, 4294901760
    %5842 = vmatpush1.msra.mxu0 %v5841
    %5843 = vmatprep.subr.mxu0 0.0
    %v5844 = vand.u32 %v60, 4294901760
    %v5845 = vsub.f32 %v60, %v5844
    %v5846 = vand.u32 %v5845, 4294901760
    %5847 = vmatpush1.msra.mxu0 %v5846
    %5848 = vmatprep.subr.mxu0 0.0
    %v5849 = vand.u32 %v61, 4294901760
    %v5850 = vsub.f32 %v61, %v5849
    %v5851 = vand.u32 %v5850, 4294901760
    %5852 = vmatpush1.msra.mxu0 %v5851
    %5853 = vmatprep.subr.mxu0 0.0
    %v5854 = vand.u32 %v62, 4294901760
    %v5855 = vsub.f32 %v62, %v5854
    %v5856 = vand.u32 %v5855, 4294901760
    %5857 = vmatpush1.msra.mxu0 %v5856
    %5858 = vmatprep.subr.mxu0 0.0
    %v5859 = vand.u32 %v63, 4294901760
    %v5860 = vsub.f32 %v63, %v5859
    %v5861 = vand.u32 %v5860, 4294901760
    %5862 = vmatpush1.msra.mxu0 %v5861
    %5863 = vmatprep.subr.mxu0 0.0
    %v5864 = vand.u32 %v64, 4294901760
    %v5865 = vsub.f32 %v64, %v5864
    %v5866 = vand.u32 %v5865, 4294901760
    %5867 = vmatpush1.msra.mxu0 %v5866
    %5868 = vmatprep.subr.mxu0 0.0
    %v5869 = vand.u32 %v65, 4294901760
    %v5870 = vsub.f32 %v65, %v5869
    %v5871 = vand.u32 %v5870, 4294901760
    %5872 = vmatpush1.msra.mxu0 %v5871
    %5873 = vmatprep.subr.mxu0 0.0
    %v5874 = vand.u32 %v66, 4294901760
    %v5875 = vsub.f32 %v66, %v5874
    %v5876 = vand.u32 %v5875, 4294901760
    %5877 = vmatpush1.msra.mxu0 %v5876
    %5878 = vmatprep.subr.mxu0 0.0
    %v5879 = vand.u32 %v67, 4294901760
    %v5880 = vsub.f32 %v67, %v5879
    %v5881 = vand.u32 %v5880, 4294901760
    %5882 = vmatpush1.msra.mxu0 %v5881
    %5883 = vmatprep.subr.mxu0 0.0
    %v5884 = vand.u32 %v68, 4294901760
    %v5885 = vsub.f32 %v68, %v5884
    %v5886 = vand.u32 %v5885, 4294901760
    %5887 = vmatpush1.msra.mxu0 %v5886
    %5888 = vmatprep.subr.mxu0 0.0
    %v5889 = vand.u32 %v69, 4294901760
    %v5890 = vsub.f32 %v69, %v5889
    %v5891 = vand.u32 %v5890, 4294901760
    %5892 = vmatpush1.msra.mxu0 %v5891
    %5893 = vmatprep.subr.mxu0 0.0
    %v5894 = vand.u32 %v70, 4294901760
    %v5895 = vsub.f32 %v70, %v5894
    %v5896 = vand.u32 %v5895, 4294901760
    %5897 = vmatpush1.msra.mxu0 %v5896
    %5898 = vmatprep.subr.mxu0 0.0
    %v5899 = vand.u32 %v71, 4294901760
    %v5900 = vsub.f32 %v71, %v5899
    %v5901 = vand.u32 %v5900, 4294901760
    %5902 = vmatpush1.msra.mxu0 %v5901
    %5903 = vmatprep.subr.mxu0 0.0
    %5904 = vmatpush1.msra.mxu0 0.0
    %5905 = vmatprep.subr.mxu0 0.0
    %5906 = vmatpush1.msra.mxu0 0.0
    %5907 = vmatprep.subr.mxu0 0.0
    %5908 = vmatpush1.msra.mxu0 0.0
    %5909 = vmatprep.subr.mxu0 0.0
    %5910 = vmatpush1.msra.mxu0 0.0
    %5911 = vmatprep.subr.mxu0 0.0
    %5912 = vmatpush1.msra.mxu0 0.0
    %5913 = vmatprep.subr.mxu0 0.0
    %5914 = vmatpush1.msra.mxu0 0.0
    %5915 = vmatprep.subr.mxu0 0.0
    %5916 = vmatpush1.msra.mxu0 0.0
    %5917 = vmatprep.subr.mxu0 0.0
    %5918 = vmatpush1.msra.mxu0 0.0
    %5919 = vmatprep.subr.mxu0 0.0
    %5920 = vmatpush1.msra.mxu0 0.0
    %5921 = vmatprep.subr.mxu0 0.0
    %5922 = vmatpush1.msra.mxu0 0.0
    %5923 = vmatprep.subr.mxu0 0.0
    %5924 = vmatpush1.msra.mxu0 0.0
    %5925 = vmatprep.subr.mxu0 0.0
    %5926 = vmatpush1.msra.mxu0 0.0
    %5927 = vmatprep.subr.mxu0 0.0
    %5928 = vmatpush1.msra.mxu0 0.0
    %5929 = vmatprep.subr.mxu0 0.0
    %5930 = vmatpush1.msra.mxu0 0.0
    %5931 = vmatprep.subr.mxu0 0.0
    %5932 = vmatpush1.msra.mxu0 0.0
    %5933 = vmatprep.subr.mxu0 0.0
    %5934 = vmatpush1.msra.mxu0 0.0
    %5935 = vmatprep.mubr.f32.mxu0 0.0
    %v5936 = vand.u32 %v5387, 4294901760
    %5937 = vmatmul.mubr.f32.gmra.mrb[0].mxu0 %v5936
    %v5938 = vpop.f32.mrb[0].mxu0
    %v5939 = vadd.f32 %v5820, %v5938
    %v5940 = vpop.f32.mrb[0].mxu0
    %5941 = vdwg.mxu0
    %5942 = vmatprep.subr.mxu0 0.0
    %v5943 = vand.u32 %v56, 4294901760
    %5944 = vmatpush1.msra.mxu0 %v5943
    %5945 = vmatprep.subr.mxu0 0.0
    %v5946 = vand.u32 %v57, 4294901760
    %5947 = vmatpush1.msra.mxu0 %v5946
    %5948 = vmatprep.subr.mxu0 0.0
    %v5949 = vand.u32 %v58, 4294901760
    %5950 = vmatpush1.msra.mxu0 %v5949
    %5951 = vmatprep.subr.mxu0 0.0
    %v5952 = vand.u32 %v59, 4294901760
    %5953 = vmatpush1.msra.mxu0 %v5952
    %5954 = vmatprep.subr.mxu0 0.0
    %v5955 = vand.u32 %v60, 4294901760
    %5956 = vmatpush1.msra.mxu0 %v5955
    %5957 = vmatprep.subr.mxu0 0.0
    %v5958 = vand.u32 %v61, 4294901760
    %5959 = vmatpush1.msra.mxu0 %v5958
    %5960 = vmatprep.subr.mxu0 0.0
    %v5961 = vand.u32 %v62, 4294901760
    %5962 = vmatpush1.msra.mxu0 %v5961
    %5963 = vmatprep.subr.mxu0 0.0
    %v5964 = vand.u32 %v63, 4294901760
    %5965 = vmatpush1.msra.mxu0 %v5964
    %5966 = vmatprep.subr.mxu0 0.0
    %v5967 = vand.u32 %v64, 4294901760
    %5968 = vmatpush1.msra.mxu0 %v5967
    %5969 = vmatprep.subr.mxu0 0.0
    %v5970 = vand.u32 %v65, 4294901760
    %5971 = vmatpush1.msra.mxu0 %v5970
    %5972 = vmatprep.subr.mxu0 0.0
    %v5973 = vand.u32 %v66, 4294901760
    %5974 = vmatpush1.msra.mxu0 %v5973
    %5975 = vmatprep.subr.mxu0 0.0
    %v5976 = vand.u32 %v67, 4294901760
    %5977 = vmatpush1.msra.mxu0 %v5976
    %5978 = vmatprep.subr.mxu0 0.0
    %v5979 = vand.u32 %v68, 4294901760
    %5980 = vmatpush1.msra.mxu0 %v5979
    %5981 = vmatprep.subr.mxu0 0.0
    %v5982 = vand.u32 %v69, 4294901760
    %5983 = vmatpush1.msra.mxu0 %v5982
    %5984 = vmatprep.subr.mxu0 0.0
    %v5985 = vand.u32 %v70, 4294901760
    %5986 = vmatpush1.msra.mxu0 %v5985
    %5987 = vmatprep.subr.mxu0 0.0
    %v5988 = vand.u32 %v71, 4294901760
    %5989 = vmatpush1.msra.mxu0 %v5988
    %5990 = vmatprep.subr.mxu0 0.0
    %5991 = vmatpush1.msra.mxu0 0.0
    %5992 = vmatprep.subr.mxu0 0.0
    %5993 = vmatpush1.msra.mxu0 0.0
    %5994 = vmatprep.subr.mxu0 0.0
    %5995 = vmatpush1.msra.mxu0 0.0
    %5996 = vmatprep.subr.mxu0 0.0
    %5997 = vmatpush1.msra.mxu0 0.0
    %5998 = vmatprep.subr.mxu0 0.0
    %5999 = vmatpush1.msra.mxu0 0.0
    %6000 = vmatprep.subr.mxu0 0.0
    %6001 = vmatpush1.msra.mxu0 0.0
    %6002 = vmatprep.subr.mxu0 0.0
    %6003 = vmatpush1.msra.mxu0 0.0
    %6004 = vmatprep.subr.mxu0 0.0
    %6005 = vmatpush1.msra.mxu0 0.0
    %6006 = vmatprep.subr.mxu0 0.0
    %6007 = vmatpush1.msra.mxu0 0.0
    %6008 = vmatprep.subr.mxu0 0.0
    %6009 = vmatpush1.msra.mxu0 0.0
    %6010 = vmatprep.subr.mxu0 0.0
    %6011 = vmatpush1.msra.mxu0 0.0
    %6012 = vmatprep.subr.mxu0 0.0
    %6013 = vmatpush1.msra.mxu0 0.0
    %6014 = vmatprep.subr.mxu0 0.0
    %6015 = vmatpush1.msra.mxu0 0.0
    %6016 = vmatprep.subr.mxu0 0.0
    %6017 = vmatpush1.msra.mxu0 0.0
    %6018 = vmatprep.subr.mxu0 0.0
    %6019 = vmatpush1.msra.mxu0 0.0
    %6020 = vmatprep.subr.mxu0 0.0
    %6021 = vmatpush1.msra.mxu0 0.0
    %6022 = vmatprep.mubr.f32.mxu0 0.0
    %v6023 = vand.u32 %v5387, 4294901760
    %6024 = vmatmul.mubr.f32.gmra.mrb[0].mxu0 %v6023
    %v6025 = vpop.f32.mrb[0].mxu0
    %v6026 = vadd.f32 %v5939, %v6025
    %v6027 = vpop.f32.mrb[0].mxu0
    %6028 = vdwg.mxu0
    %v6029 = vlaneseq
    %v6030 = vshrl.u32 %v6029, 7
    %v6031 = vsub.s32 0, %v6030
    %v6032 = vrot.slane %v6026, %v6031
    %v6033 = vsub.f32 %v5381, %v6032
    %v6034 = vmul.f32 %v6033, %v6033
    %v6035 = vrot.slane %v6034, 4
    %v6036 = vadd.f32 %v6034, %v6035
    %v6037 = vrot.slane %v6036, 2
    %v6038 = vadd.f32 %v6036, %v6037
    %v6039 = vrot.slane %v6038, 1
    %v6040 = vadd.f32 %v6038, %v6039
    %6041 = vmatprep.subr.mxu0 0.0
    %v6042 = vand.u32 %v56, 4294901760
    %6043 = vmatpush1.msra.mxu0 %v6042
    %6044 = vmatprep.subr.mxu0 0.0
    %v6045 = vand.u32 %v57, 4294901760
    %6046 = vmatpush1.msra.mxu0 %v6045
    %6047 = vmatprep.subr.mxu0 0.0
    %v6048 = vand.u32 %v58, 4294901760
    %6049 = vmatpush1.msra.mxu0 %v6048
    %6050 = vmatprep.subr.mxu0 0.0
    %v6051 = vand.u32 %v59, 4294901760
    %6052 = vmatpush1.msra.mxu0 %v6051
    %6053 = vmatprep.subr.mxu0 0.0
    %v6054 = vand.u32 %v60, 4294901760
    %6055 = vmatpush1.msra.mxu0 %v6054
    %6056 = vmatprep.subr.mxu0 0.0
    %v6057 = vand.u32 %v61, 4294901760
    %6058 = vmatpush1.msra.mxu0 %v6057
    %6059 = vmatprep.subr.mxu0 0.0
    %v6060 = vand.u32 %v62, 4294901760
    %6061 = vmatpush1.msra.mxu0 %v6060
    %6062 = vmatprep.subr.mxu0 0.0
    %v6063 = vand.u32 %v63, 4294901760
    %6064 = vmatpush1.msra.mxu0 %v6063
    %6065 = vmatprep.subr.mxu0 0.0
    %v6066 = vand.u32 %v64, 4294901760
    %6067 = vmatpush1.msra.mxu0 %v6066
    %6068 = vmatprep.subr.mxu0 0.0
    %v6069 = vand.u32 %v65, 4294901760
    %6070 = vmatpush1.msra.mxu0 %v6069
    %6071 = vmatprep.subr.mxu0 0.0
    %v6072 = vand.u32 %v66, 4294901760
    %6073 = vmatpush1.msra.mxu0 %v6072
    %6074 = vmatprep.subr.mxu0 0.0
    %v6075 = vand.u32 %v67, 4294901760
    %6076 = vmatpush1.msra.mxu0 %v6075
    %6077 = vmatprep.subr.mxu0 0.0
    %v6078 = vand.u32 %v68, 4294901760
    %6079 = vmatpush1.msra.mxu0 %v6078
    %6080 = vmatprep.subr.mxu0 0.0
    %v6081 = vand.u32 %v69, 4294901760
    %6082 = vmatpush1.msra.mxu0 %v6081
    %6083 = vmatprep.subr.mxu0 0.0
    %v6084 = vand.u32 %v70, 4294901760
    %6085 = vmatpush1.msra.mxu0 %v6084
    %6086 = vmatprep.subr.mxu0 0.0
    %v6087 = vand.u32 %v71, 4294901760
    %6088 = vmatpush1.msra.mxu0 %v6087
    %6089 = vmatprep.subr.mxu0 0.0
    %6090 = vmatpush1.msra.mxu0 0.0
    %6091 = vmatprep.subr.mxu0 0.0
    %6092 = vmatpush1.msra.mxu0 0.0
    %6093 = vmatprep.subr.mxu0 0.0
    %6094 = vmatpush1.msra.mxu0 0.0
    %6095 = vmatprep.subr.mxu0 0.0
    %6096 = vmatpush1.msra.mxu0 0.0
    %6097 = vmatprep.subr.mxu0 0.0
    %6098 = vmatpush1.msra.mxu0 0.0
    %6099 = vmatprep.subr.mxu0 0.0
    %6100 = vmatpush1.msra.mxu0 0.0
    %6101 = vmatprep.subr.mxu0 0.0
    %6102 = vmatpush1.msra.mxu0 0.0
    %6103 = vmatprep.subr.mxu0 0.0
    %6104 = vmatpush1.msra.mxu0 0.0
    %6105 = vmatprep.subr.mxu0 0.0
    %6106 = vmatpush1.msra.mxu0 0.0
    %6107 = vmatprep.subr.mxu0 0.0
    %6108 = vmatpush1.msra.mxu0 0.0
    %6109 = vmatprep.subr.mxu0 0.0
    %6110 = vmatpush1.msra.mxu0 0.0
    %6111 = vmatprep.subr.mxu0 0.0
    %6112 = vmatpush1.msra.mxu0 0.0
    %6113 = vmatprep.subr.mxu0 0.0
    %6114 = vmatpush1.msra.mxu0 0.0
    %6115 = vmatprep.subr.mxu0 0.0
    %6116 = vmatpush1.msra.mxu0 0.0
    %6117 = vmatprep.subr.mxu0 0.0
    %6118 = vmatpush1.msra.mxu0 0.0
    %6119 = vmatprep.subr.mxu0 0.0
    %6120 = vmatpush1.msra.mxu0 0.0
    %6121 = vmatprep.mubr.f32.mxu0 0.0
    %v6122 = vand.u32 %v6040, 4294901760
    %v6123 = vsub.f32 %v6040, %v6122
    %v6124 = vand.u32 %v6123, 4294901760
    %v6125 = vsub.f32 %v6123, %v6124
    %v6126 = vand.u32 %v6125, 4294901760
    %6127 = vmatmul.mubr.f32.gmra.mrb[0].mxu0 %v6126
    %v6128 = vpop.f32.mrb[0].mxu0
    %v6129 = vadd.f32 1e-05, %v6128
    %v6130 = vpop.f32.mrb[0].mxu0
    %6131 = vdwg.mxu0
    %6132 = vmatprep.subr.mxu0 0.0
    %v6133 = vand.u32 %v56, 4294901760
    %v6134 = vsub.f32 %v56, %v6133
    %v6135 = vand.u32 %v6134, 4294901760
    %v6136 = vsub.f32 %v6134, %v6135
    %v6137 = vand.u32 %v6136, 4294901760
    %6138 = vmatpush1.msra.mxu0 %v6137
    %6139 = vmatprep.subr.mxu0 0.0
    %v6140 = vand.u32 %v57, 4294901760
    %v6141 = vsub.f32 %v57, %v6140
    %v6142 = vand.u32 %v6141, 4294901760
    %v6143 = vsub.f32 %v6141, %v6142
    %v6144 = vand.u32 %v6143, 4294901760
    %6145 = vmatpush1.msra.mxu0 %v6144
    %6146 = vmatprep.subr.mxu0 0.0
    %v6147 = vand.u32 %v58, 4294901760
    %v6148 = vsub.f32 %v58, %v6147
    %v6149 = vand.u32 %v6148, 4294901760
    %v6150 = vsub.f32 %v6148, %v6149
    %v6151 = vand.u32 %v6150, 4294901760
    %6152 = vmatpush1.msra.mxu0 %v6151
    %6153 = vmatprep.subr.mxu0 0.0
    %v6154 = vand.u32 %v59, 4294901760
    %v6155 = vsub.f32 %v59, %v6154
    %v6156 = vand.u32 %v6155, 4294901760
    %v6157 = vsub.f32 %v6155, %v6156
    %v6158 = vand.u32 %v6157, 4294901760
    %6159 = vmatpush1.msra.mxu0 %v6158
    %6160 = vmatprep.subr.mxu0 0.0
    %v6161 = vand.u32 %v60, 4294901760
    %v6162 = vsub.f32 %v60, %v6161
    %v6163 = vand.u32 %v6162, 4294901760
    %v6164 = vsub.f32 %v6162, %v6163
    %v6165 = vand.u32 %v6164, 4294901760
    %6166 = vmatpush1.msra.mxu0 %v6165
    %6167 = vmatprep.subr.mxu0 0.0
    %v6168 = vand.u32 %v61, 4294901760
    %v6169 = vsub.f32 %v61, %v6168
    %v6170 = vand.u32 %v6169, 4294901760
    %v6171 = vsub.f32 %v6169, %v6170
    %v6172 = vand.u32 %v6171, 4294901760
    %6173 = vmatpush1.msra.mxu0 %v6172
    %6174 = vmatprep.subr.mxu0 0.0
    %v6175 = vand.u32 %v62, 4294901760
    %v6176 = vsub.f32 %v62, %v6175
    %v6177 = vand.u32 %v6176, 4294901760
    %v6178 = vsub.f32 %v6176, %v6177
    %v6179 = vand.u32 %v6178, 4294901760
    %6180 = vmatpush1.msra.mxu0 %v6179
    %6181 = vmatprep.subr.mxu0 0.0
    %v6182 = vand.u32 %v63, 4294901760
    %v6183 = vsub.f32 %v63, %v6182
    %v6184 = vand.u32 %v6183, 4294901760
    %v6185 = vsub.f32 %v6183, %v6184
    %v6186 = vand.u32 %v6185, 4294901760
    %6187 = vmatpush1.msra.mxu0 %v6186
    %6188 = vmatprep.subr.mxu0 0.0
    %v6189 = vand.u32 %v64, 4294901760
    %v6190 = vsub.f32 %v64, %v6189
    %v6191 = vand.u32 %v6190, 4294901760
    %v6192 = vsub.f32 %v6190, %v6191
    %v6193 = vand.u32 %v6192, 4294901760
    %6194 = vmatpush1.msra.mxu0 %v6193
    %6195 = vmatprep.subr.mxu0 0.0
    %v6196 = vand.u32 %v65, 4294901760
    %v6197 = vsub.f32 %v65, %v6196
    %v6198 = vand.u32 %v6197, 4294901760
    %v6199 = vsub.f32 %v6197, %v6198
    %v6200 = vand.u32 %v6199, 4294901760
    %6201 = vmatpush1.msra.mxu0 %v6200
    %6202 = vmatprep.subr.mxu0 0.0
    %v6203 = vand.u32 %v66, 4294901760
    %v6204 = vsub.f32 %v66, %v6203
    %v6205 = vand.u32 %v6204, 4294901760
    %v6206 = vsub.f32 %v6204, %v6205
    %v6207 = vand.u32 %v6206, 4294901760
    %6208 = vmatpush1.msra.mxu0 %v6207
    %6209 = vmatprep.subr.mxu0 0.0
    %v6210 = vand.u32 %v67, 4294901760
    %v6211 = vsub.f32 %v67, %v6210
    %v6212 = vand.u32 %v6211, 4294901760
    %v6213 = vsub.f32 %v6211, %v6212
    %v6214 = vand.u32 %v6213, 4294901760
    %6215 = vmatpush1.msra.mxu0 %v6214
    %6216 = vmatprep.subr.mxu0 0.0
    %v6217 = vand.u32 %v68, 4294901760
    %v6218 = vsub.f32 %v68, %v6217
    %v6219 = vand.u32 %v6218, 4294901760
    %v6220 = vsub.f32 %v6218, %v6219
    %v6221 = vand.u32 %v6220, 4294901760
    %6222 = vmatpush1.msra.mxu0 %v6221
    %6223 = vmatprep.subr.mxu0 0.0
    %v6224 = vand.u32 %v69, 4294901760
    %v6225 = vsub.f32 %v69, %v6224
    %v6226 = vand.u32 %v6225, 4294901760
    %v6227 = vsub.f32 %v6225, %v6226
    %v6228 = vand.u32 %v6227, 4294901760
    %6229 = vmatpush1.msra.mxu0 %v6228
    %6230 = vmatprep.subr.mxu0 0.0
    %v6231 = vand.u32 %v70, 4294901760
    %v6232 = vsub.f32 %v70, %v6231
    %v6233 = vand.u32 %v6232, 4294901760
    %v6234 = vsub.f32 %v6232, %v6233
    %v6235 = vand.u32 %v6234, 4294901760
    %6236 = vmatpush1.msra.mxu0 %v6235
    %6237 = vmatprep.subr.mxu0 0.0
    %v6238 = vand.u32 %v71, 4294901760
    %v6239 = vsub.f32 %v71, %v6238
    %v6240 = vand.u32 %v6239, 4294901760
    %v6241 = vsub.f32 %v6239, %v6240
    %v6242 = vand.u32 %v6241, 4294901760
    %6243 = vmatpush1.msra.mxu0 %v6242
    %6244 = vmatprep.subr.mxu0 0.0
    %6245 = vmatpush1.msra.mxu0 0.0
    %6246 = vmatprep.subr.mxu0 0.0
    %6247 = vmatpush1.msra.mxu0 0.0
    %6248 = vmatprep.subr.mxu0 0.0
    %6249 = vmatpush1.msra.mxu0 0.0
    %6250 = vmatprep.subr.mxu0 0.0
    %6251 = vmatpush1.msra.mxu0 0.0
    %6252 = vmatprep.subr.mxu0 0.0
    %6253 = vmatpush1.msra.mxu0 0.0
    %6254 = vmatprep.subr.mxu0 0.0
    %6255 = vmatpush1.msra.mxu0 0.0
    %6256 = vmatprep.subr.mxu0 0.0
    %6257 = vmatpush1.msra.mxu0 0.0
    %6258 = vmatprep.subr.mxu0 0.0
    %6259 = vmatpush1.msra.mxu0 0.0
    %6260 = vmatprep.subr.mxu0 0.0
    %6261 = vmatpush1.msra.mxu0 0.0
    %6262 = vmatprep.subr.mxu0 0.0
    %6263 = vmatpush1.msra.mxu0 0.0
    %6264 = vmatprep.subr.mxu0 0.0
    %6265 = vmatpush1.msra.mxu0 0.0
    %6266 = vmatprep.subr.mxu0 0.0
    %6267 = vmatpush1.msra.mxu0 0.0
    %6268 = vmatprep.subr.mxu0 0.0
    %6269 = vmatpush1.msra.mxu0 0.0
    %6270 = vmatprep.subr.mxu0 0.0
    %6271 = vmatpush1.msra.mxu0 0.0
    %6272 = vmatprep.subr.mxu0 0.0
    %6273 = vmatpush1.msra.mxu0 0.0
    %6274 = vmatprep.subr.mxu0 0.0
    %6275 = vmatpush1.msra.mxu0 0.0
    %6276 = vmatprep.mubr.f32.mxu0 0.0
    %v6277 = vand.u32 %v6040, 4294901760
    %6278 = vmatmul.mubr.f32.gmra.mrb[0].mxu0 %v6277
    %v6279 = vpop.f32.mrb[0].mxu0
    %v6280 = vadd.f32 %v6129, %v6279
    %v6281 = vpop.f32.mrb[0].mxu0
    %6282 = vdwg.mxu0
    %6283 = vmatprep.subr.mxu0 0.0
    %v6284 = vand.u32 %v56, 4294901760
    %v6285 = vsub.f32 %v56, %v6284
    %6286 = vmatpush1.msra.mxu0 %v6285
    %6287 = vmatprep.subr.mxu0 0.0
    %v6288 = vand.u32 %v57, 4294901760
    %v6289 = vsub.f32 %v57, %v6288
    %6290 = vmatpush1.msra.mxu0 %v6289
    %6291 = vmatprep.subr.mxu0 0.0
    %v6292 = vand.u32 %v58, 4294901760
    %v6293 = vsub.f32 %v58, %v6292
    %6294 = vmatpush1.msra.mxu0 %v6293
    %6295 = vmatprep.subr.mxu0 0.0
    %v6296 = vand.u32 %v59, 4294901760
    %v6297 = vsub.f32 %v59, %v6296
    %6298 = vmatpush1.msra.mxu0 %v6297
    %6299 = vmatprep.subr.mxu0 0.0
    %v6300 = vand.u32 %v60, 4294901760
    %v6301 = vsub.f32 %v60, %v6300
    %6302 = vmatpush1.msra.mxu0 %v6301
    %6303 = vmatprep.subr.mxu0 0.0
    %v6304 = vand.u32 %v61, 4294901760
    %v6305 = vsub.f32 %v61, %v6304
    %6306 = vmatpush1.msra.mxu0 %v6305
    %6307 = vmatprep.subr.mxu0 0.0
    %v6308 = vand.u32 %v62, 4294901760
    %v6309 = vsub.f32 %v62, %v6308
    %6310 = vmatpush1.msra.mxu0 %v6309
    %6311 = vmatprep.subr.mxu0 0.0
    %v6312 = vand.u32 %v63, 4294901760
    %v6313 = vsub.f32 %v63, %v6312
    %6314 = vmatpush1.msra.mxu0 %v6313
    %6315 = vmatprep.subr.mxu0 0.0
    %v6316 = vand.u32 %v64, 4294901760
    %v6317 = vsub.f32 %v64, %v6316
    %6318 = vmatpush1.msra.mxu0 %v6317
    %6319 = vmatprep.subr.mxu0 0.0
    %v6320 = vand.u32 %v65, 4294901760
    %v6321 = vsub.f32 %v65, %v6320
    %6322 = vmatpush1.msra.mxu0 %v6321
    %6323 = vmatprep.subr.mxu0 0.0
    %v6324 = vand.u32 %v66, 4294901760
    %v6325 = vsub.f32 %v66, %v6324
    %6326 = vmatpush1.msra.mxu0 %v6325
    %6327 = vmatprep.subr.mxu0 0.0
    %v6328 = vand.u32 %v67, 4294901760
    %v6329 = vsub.f32 %v67, %v6328
    %6330 = vmatpush1.msra.mxu0 %v6329
    %6331 = vmatprep.subr.mxu0 0.0
    %v6332 = vand.u32 %v68, 4294901760
    %v6333 = vsub.f32 %v68, %v6332
    %6334 = vmatpush1.msra.mxu0 %v6333
    %6335 = vmatprep.subr.mxu0 0.0
    %v6336 = vand.u32 %v69, 4294901760
    %v6337 = vsub.f32 %v69, %v6336
    %6338 = vmatpush1.msra.mxu0 %v6337
    %6339 = vmatprep.subr.mxu0 0.0
    %v6340 = vand.u32 %v70, 4294901760
    %v6341 = vsub.f32 %v70, %v6340
    %6342 = vmatpush1.msra.mxu0 %v6341
    %6343 = vmatprep.subr.mxu0 0.0
    %v6344 = vand.u32 %v71, 4294901760
    %v6345 = vsub.f32 %v71, %v6344
    %6346 = vmatpush1.msra.mxu0 %v6345
    %6347 = vmatprep.subr.mxu0 0.0
    %6348 = vmatpush1.msra.mxu0 0.0
    %6349 = vmatprep.subr.mxu0 0.0
    %6350 = vmatpush1.msra.mxu0 0.0
    %6351 = vmatprep.subr.mxu0 0.0
    %6352 = vmatpush1.msra.mxu0 0.0
    %6353 = vmatprep.subr.mxu0 0.0
    %6354 = vmatpush1.msra.mxu0 0.0
    %6355 = vmatprep.subr.mxu0 0.0
    %6356 = vmatpush1.msra.mxu0 0.0
    %6357 = vmatprep.subr.mxu0 0.0
    %6358 = vmatpush1.msra.mxu0 0.0
    %6359 = vmatprep.subr.mxu0 0.0
    %6360 = vmatpush1.msra.mxu0 0.0
    %6361 = vmatprep.subr.mxu0 0.0
    %6362 = vmatpush1.msra.mxu0 0.0
    %6363 = vmatprep.subr.mxu0 0.0
    %6364 = vmatpush1.msra.mxu0 0.0
    %6365 = vmatprep.subr.mxu0 0.0
    %6366 = vmatpush1.msra.mxu0 0.0
    %6367 = vmatprep.subr.mxu0 0.0
    %6368 = vmatpush1.msra.mxu0 0.0
    %6369 = vmatprep.subr.mxu0 0.0
    %6370 = vmatpush1.msra.mxu0 0.0
    %6371 = vmatprep.subr.mxu0 0.0
    %6372 = vmatpush1.msra.mxu0 0.0
    %6373 = vmatprep.subr.mxu0 0.0
    %6374 = vmatpush1.msra.mxu0 0.0
    %6375 = vmatprep.subr.mxu0 0.0
    %6376 = vmatpush1.msra.mxu0 0.0
    %6377 = vmatprep.subr.mxu0 0.0
    %6378 = vmatpush1.msra.mxu0 0.0
    %6379 = vmatprep.mubr.f32.mxu0 0.0
    %v6380 = vand.u32 %v6040, 4294901760
    %v6381 = vsub.f32 %v6040, %v6380
    %6382 = vmatmul.mubr.f32.gmra.mrb[0].mxu0 %v6381
    %v6383 = vpop.f32.mrb[0].mxu0
    %v6384 = vadd.f32 %v6280, %v6383
    %v6385 = vpop.f32.mrb[0].mxu0
    %6386 = vdwg.mxu0
    %6387 = vmatprep.subr.mxu0 0.0
    %v6388 = vand.u32 %v56, 4294901760
    %6389 = vmatpush1.msra.mxu0 %v6388
    %6390 = vmatprep.subr.mxu0 0.0
    %v6391 = vand.u32 %v57, 4294901760
    %6392 = vmatpush1.msra.mxu0 %v6391
    %6393 = vmatprep.subr.mxu0 0.0
    %v6394 = vand.u32 %v58, 4294901760
    %6395 = vmatpush1.msra.mxu0 %v6394
    %6396 = vmatprep.subr.mxu0 0.0
    %v6397 = vand.u32 %v59, 4294901760
    %6398 = vmatpush1.msra.mxu0 %v6397
    %6399 = vmatprep.subr.mxu0 0.0
    %v6400 = vand.u32 %v60, 4294901760
    %6401 = vmatpush1.msra.mxu0 %v6400
    %6402 = vmatprep.subr.mxu0 0.0
    %v6403 = vand.u32 %v61, 4294901760
    %6404 = vmatpush1.msra.mxu0 %v6403
    %6405 = vmatprep.subr.mxu0 0.0
    %v6406 = vand.u32 %v62, 4294901760
    %6407 = vmatpush1.msra.mxu0 %v6406
    %6408 = vmatprep.subr.mxu0 0.0
    %v6409 = vand.u32 %v63, 4294901760
    %6410 = vmatpush1.msra.mxu0 %v6409
    %6411 = vmatprep.subr.mxu0 0.0
    %v6412 = vand.u32 %v64, 4294901760
    %6413 = vmatpush1.msra.mxu0 %v6412
    %6414 = vmatprep.subr.mxu0 0.0
    %v6415 = vand.u32 %v65, 4294901760
    %6416 = vmatpush1.msra.mxu0 %v6415
    %6417 = vmatprep.subr.mxu0 0.0
    %v6418 = vand.u32 %v66, 4294901760
    %6419 = vmatpush1.msra.mxu0 %v6418
    %6420 = vmatprep.subr.mxu0 0.0
    %v6421 = vand.u32 %v67, 4294901760
    %6422 = vmatpush1.msra.mxu0 %v6421
    %6423 = vmatprep.subr.mxu0 0.0
    %v6424 = vand.u32 %v68, 4294901760
    %6425 = vmatpush1.msra.mxu0 %v6424
    %6426 = vmatprep.subr.mxu0 0.0
    %v6427 = vand.u32 %v69, 4294901760
    %6428 = vmatpush1.msra.mxu0 %v6427
    %6429 = vmatprep.subr.mxu0 0.0
    %v6430 = vand.u32 %v70, 4294901760
    %6431 = vmatpush1.msra.mxu0 %v6430
    %6432 = vmatprep.subr.mxu0 0.0
    %v6433 = vand.u32 %v71, 4294901760
    %6434 = vmatpush1.msra.mxu0 %v6433
    %6435 = vmatprep.subr.mxu0 0.0
    %6436 = vmatpush1.msra.mxu0 0.0
    %6437 = vmatprep.subr.mxu0 0.0
    %6438 = vmatpush1.msra.mxu0 0.0
    %6439 = vmatprep.subr.mxu0 0.0
    %6440 = vmatpush1.msra.mxu0 0.0
    %6441 = vmatprep.subr.mxu0 0.0
    %6442 = vmatpush1.msra.mxu0 0.0
    %6443 = vmatprep.subr.mxu0 0.0
    %6444 = vmatpush1.msra.mxu0 0.0
    %6445 = vmatprep.subr.mxu0 0.0
    %6446 = vmatpush1.msra.mxu0 0.0
    %6447 = vmatprep.subr.mxu0 0.0
    %6448 = vmatpush1.msra.mxu0 0.0
    %6449 = vmatprep.subr.mxu0 0.0
    %6450 = vmatpush1.msra.mxu0 0.0
    %6451 = vmatprep.subr.mxu0 0.0
    %6452 = vmatpush1.msra.mxu0 0.0
    %6453 = vmatprep.subr.mxu0 0.0
    %6454 = vmatpush1.msra.mxu0 0.0
    %6455 = vmatprep.subr.mxu0 0.0
    %6456 = vmatpush1.msra.mxu0 0.0
    %6457 = vmatprep.subr.mxu0 0.0
    %6458 = vmatpush1.msra.mxu0 0.0
    %6459 = vmatprep.subr.mxu0 0.0
    %6460 = vmatpush1.msra.mxu0 0.0
    %6461 = vmatprep.subr.mxu0 0.0
    %6462 = vmatpush1.msra.mxu0 0.0
    %6463 = vmatprep.subr.mxu0 0.0
    %6464 = vmatpush1.msra.mxu0 0.0
    %6465 = vmatprep.subr.mxu0 0.0
    %6466 = vmatpush1.msra.mxu0 0.0
    %6467 = vmatprep.mubr.f32.mxu0 0.0
    %v6468 = vand.u32 %v6040, 4294901760
    %v6469 = vsub.f32 %v6040, %v6468
    %v6470 = vand.u32 %v6469, 4294901760
    %6471 = vmatmul.mubr.f32.gmra.mrb[0].mxu0 %v6470
    %v6472 = vpop.f32.mrb[0].mxu0
    %v6473 = vadd.f32 %v6384, %v6472
    %v6474 = vpop.f32.mrb[0].mxu0
    %6475 = vdwg.mxu0
    %6476 = vmatprep.subr.mxu0 0.0
    %v6477 = vand.u32 %v56, 4294901760
    %v6478 = vsub.f32 %v56, %v6477
    %v6479 = vand.u32 %v6478, 4294901760
    %6480 = vmatpush1.msra.mxu0 %v6479
    %6481 = vmatprep.subr.mxu0 0.0
    %v6482 = vand.u32 %v57, 4294901760
    %v6483 = vsub.f32 %v57, %v6482
    %v6484 = vand.u32 %v6483, 4294901760
    %6485 = vmatpush1.msra.mxu0 %v6484
    %6486 = vmatprep.subr.mxu0 0.0
    %v6487 = vand.u32 %v58, 4294901760
    %v6488 = vsub.f32 %v58, %v6487
    %v6489 = vand.u32 %v6488, 4294901760
    %6490 = vmatpush1.msra.mxu0 %v6489
    %6491 = vmatprep.subr.mxu0 0.0
    %v6492 = vand.u32 %v59, 4294901760
    %v6493 = vsub.f32 %v59, %v6492
    %v6494 = vand.u32 %v6493, 4294901760
    %6495 = vmatpush1.msra.mxu0 %v6494
    %6496 = vmatprep.subr.mxu0 0.0
    %v6497 = vand.u32 %v60, 4294901760
    %v6498 = vsub.f32 %v60, %v6497
    %v6499 = vand.u32 %v6498, 4294901760
    %6500 = vmatpush1.msra.mxu0 %v6499
    %6501 = vmatprep.subr.mxu0 0.0
    %v6502 = vand.u32 %v61, 4294901760
    %v6503 = vsub.f32 %v61, %v6502
    %v6504 = vand.u32 %v6503, 4294901760
    %6505 = vmatpush1.msra.mxu0 %v6504
    %6506 = vmatprep.subr.mxu0 0.0
    %v6507 = vand.u32 %v62, 4294901760
    %v6508 = vsub.f32 %v62, %v6507
    %v6509 = vand.u32 %v6508, 4294901760
    %6510 = vmatpush1.msra.mxu0 %v6509
    %6511 = vmatprep.subr.mxu0 0.0
    %v6512 = vand.u32 %v63, 4294901760
    %v6513 = vsub.f32 %v63, %v6512
    %v6514 = vand.u32 %v6513, 4294901760
    %6515 = vmatpush1.msra.mxu0 %v6514
    %6516 = vmatprep.subr.mxu0 0.0
    %v6517 = vand.u32 %v64, 4294901760
    %v6518 = vsub.f32 %v64, %v6517
    %v6519 = vand.u32 %v6518, 4294901760
    %6520 = vmatpush1.msra.mxu0 %v6519
    %6521 = vmatprep.subr.mxu0 0.0
    %v6522 = vand.u32 %v65, 4294901760
    %v6523 = vsub.f32 %v65, %v6522
    %v6524 = vand.u32 %v6523, 4294901760
    %6525 = vmatpush1.msra.mxu0 %v6524
    %6526 = vmatprep.subr.mxu0 0.0
    %v6527 = vand.u32 %v66, 4294901760
    %v6528 = vsub.f32 %v66, %v6527
    %v6529 = vand.u32 %v6528, 4294901760
    %6530 = vmatpush1.msra.mxu0 %v6529
    %6531 = vmatprep.subr.mxu0 0.0
    %v6532 = vand.u32 %v67, 4294901760
    %v6533 = vsub.f32 %v67, %v6532
    %v6534 = vand.u32 %v6533, 4294901760
    %6535 = vmatpush1.msra.mxu0 %v6534
    %6536 = vmatprep.subr.mxu0 0.0
    %v6537 = vand.u32 %v68, 4294901760
    %v6538 = vsub.f32 %v68, %v6537
    %v6539 = vand.u32 %v6538, 4294901760
    %6540 = vmatpush1.msra.mxu0 %v6539
    %6541 = vmatprep.subr.mxu0 0.0
    %v6542 = vand.u32 %v69, 4294901760
    %v6543 = vsub.f32 %v69, %v6542
    %v6544 = vand.u32 %v6543, 4294901760
    %6545 = vmatpush1.msra.mxu0 %v6544
    %6546 = vmatprep.subr.mxu0 0.0
    %v6547 = vand.u32 %v70, 4294901760
    %v6548 = vsub.f32 %v70, %v6547
    %v6549 = vand.u32 %v6548, 4294901760
    %6550 = vmatpush1.msra.mxu0 %v6549
    %6551 = vmatprep.subr.mxu0 0.0
    %v6552 = vand.u32 %v71, 4294901760
    %v6553 = vsub.f32 %v71, %v6552
    %v6554 = vand.u32 %v6553, 4294901760
    %6555 = vmatpush1.msra.mxu0 %v6554
    %6556 = vmatprep.subr.mxu0 0.0
    %6557 = vmatpush1.msra.mxu0 0.0
    %6558 = vmatprep.subr.mxu0 0.0
    %6559 = vmatpush1.msra.mxu0 0.0
    %6560 = vmatprep.subr.mxu0 0.0
    %6561 = vmatpush1.msra.mxu0 0.0
    %6562 = vmatprep.subr.mxu0 0.0
    %6563 = vmatpush1.msra.mxu0 0.0
    %6564 = vmatprep.subr.mxu0 0.0
    %6565 = vmatpush1.msra.mxu0 0.0
    %6566 = vmatprep.subr.mxu0 0.0
    %6567 = vmatpush1.msra.mxu0 0.0
    %6568 = vmatprep.subr.mxu0 0.0
    %6569 = vmatpush1.msra.mxu0 0.0
    %6570 = vmatprep.subr.mxu0 0.0
    %6571 = vmatpush1.msra.mxu0 0.0
    %6572 = vmatprep.subr.mxu0 0.0
    %6573 = vmatpush1.msra.mxu0 0.0
    %6574 = vmatprep.subr.mxu0 0.0
    %6575 = vmatpush1.msra.mxu0 0.0
    %6576 = vmatprep.subr.mxu0 0.0
    %6577 = vmatpush1.msra.mxu0 0.0
    %6578 = vmatprep.subr.mxu0 0.0
    %6579 = vmatpush1.msra.mxu0 0.0
    %6580 = vmatprep.subr.mxu0 0.0
    %6581 = vmatpush1.msra.mxu0 0.0
    %6582 = vmatprep.subr.mxu0 0.0
    %6583 = vmatpush1.msra.mxu0 0.0
    %6584 = vmatprep.subr.mxu0 0.0
    %6585 = vmatpush1.msra.mxu0 0.0
    %6586 = vmatprep.subr.mxu0 0.0
    %6587 = vmatpush1.msra.mxu0 0.0
    %6588 = vmatprep.mubr.f32.mxu0 0.0
    %v6589 = vand.u32 %v6040, 4294901760
    %6590 = vmatmul.mubr.f32.gmra.mrb[0].mxu0 %v6589
    %v6591 = vpop.f32.mrb[0].mxu0
    %v6592 = vadd.f32 %v6473, %v6591
    %v6593 = vpop.f32.mrb[0].mxu0
    %6594 = vdwg.mxu0
    %6595 = vmatprep.subr.mxu0 0.0
    %v6596 = vand.u32 %v56, 4294901760
    %6597 = vmatpush1.msra.mxu0 %v6596
    %6598 = vmatprep.subr.mxu0 0.0
    %v6599 = vand.u32 %v57, 4294901760
    %6600 = vmatpush1.msra.mxu0 %v6599
    %6601 = vmatprep.subr.mxu0 0.0
    %v6602 = vand.u32 %v58, 4294901760
    %6603 = vmatpush1.msra.mxu0 %v6602
    %6604 = vmatprep.subr.mxu0 0.0
    %v6605 = vand.u32 %v59, 4294901760
    %6606 = vmatpush1.msra.mxu0 %v6605
    %6607 = vmatprep.subr.mxu0 0.0
    %v6608 = vand.u32 %v60, 4294901760
    %6609 = vmatpush1.msra.mxu0 %v6608
    %6610 = vmatprep.subr.mxu0 0.0
    %v6611 = vand.u32 %v61, 4294901760
    %6612 = vmatpush1.msra.mxu0 %v6611
    %6613 = vmatprep.subr.mxu0 0.0
    %v6614 = vand.u32 %v62, 4294901760
    %6615 = vmatpush1.msra.mxu0 %v6614
    %6616 = vmatprep.subr.mxu0 0.0
    %v6617 = vand.u32 %v63, 4294901760
    %6618 = vmatpush1.msra.mxu0 %v6617
    %6619 = vmatprep.subr.mxu0 0.0
    %v6620 = vand.u32 %v64, 4294901760
    %6621 = vmatpush1.msra.mxu0 %v6620
    %6622 = vmatprep.subr.mxu0 0.0
    %v6623 = vand.u32 %v65, 4294901760
    %6624 = vmatpush1.msra.mxu0 %v6623
    %6625 = vmatprep.subr.mxu0 0.0
    %v6626 = vand.u32 %v66, 4294901760
    %6627 = vmatpush1.msra.mxu0 %v6626
    %6628 = vmatprep.subr.mxu0 0.0
    %v6629 = vand.u32 %v67, 4294901760
    %6630 = vmatpush1.msra.mxu0 %v6629
    %6631 = vmatprep.subr.mxu0 0.0
    %v6632 = vand.u32 %v68, 4294901760
    %6633 = vmatpush1.msra.mxu0 %v6632
    %6634 = vmatprep.subr.mxu0 0.0
    %v6635 = vand.u32 %v69, 4294901760
    %6636 = vmatpush1.msra.mxu0 %v6635
    %6637 = vmatprep.subr.mxu0 0.0
    %v6638 = vand.u32 %v70, 4294901760
    %6639 = vmatpush1.msra.mxu0 %v6638
    %6640 = vmatprep.subr.mxu0 0.0
    %v6641 = vand.u32 %v71, 4294901760
    %6642 = vmatpush1.msra.mxu0 %v6641
    %6643 = vmatprep.subr.mxu0 0.0
    %6644 = vmatpush1.msra.mxu0 0.0
    %6645 = vmatprep.subr.mxu0 0.0
    %6646 = vmatpush1.msra.mxu0 0.0
    %6647 = vmatprep.subr.mxu0 0.0
    %6648 = vmatpush1.msra.mxu0 0.0
    %6649 = vmatprep.subr.mxu0 0.0
    %6650 = vmatpush1.msra.mxu0 0.0
    %6651 = vmatprep.subr.mxu0 0.0
    %6652 = vmatpush1.msra.mxu0 0.0
    %6653 = vmatprep.subr.mxu0 0.0
    %6654 = vmatpush1.msra.mxu0 0.0
    %6655 = vmatprep.subr.mxu0 0.0
    %6656 = vmatpush1.msra.mxu0 0.0
    %6657 = vmatprep.subr.mxu0 0.0
    %6658 = vmatpush1.msra.mxu0 0.0
    %6659 = vmatprep.subr.mxu0 0.0
    %6660 = vmatpush1.msra.mxu0 0.0
    %6661 = vmatprep.subr.mxu0 0.0
    %6662 = vmatpush1.msra.mxu0 0.0
    %6663 = vmatprep.subr.mxu0 0.0
    %6664 = vmatpush1.msra.mxu0 0.0
    %6665 = vmatprep.subr.mxu0 0.0
    %6666 = vmatpush1.msra.mxu0 0.0
    %6667 = vmatprep.subr.mxu0 0.0
    %6668 = vmatpush1.msra.mxu0 0.0
    %6669 = vmatprep.subr.mxu0 0.0
    %6670 = vmatpush1.msra.mxu0 0.0
    %6671 = vmatprep.subr.mxu0 0.0
    %6672 = vmatpush1.msra.mxu0 0.0
    %6673 = vmatprep.subr.mxu0 0.0
    %6674 = vmatpush1.msra.mxu0 0.0
    %6675 = vmatprep.mubr.f32.mxu0 0.0
    %v6676 = vand.u32 %v6040, 4294901760
    %6677 = vmatmul.mubr.f32.gmra.mrb[0].mxu0 %v6676
    %v6678 = vpop.f32.mrb[0].mxu0
    %v6679 = vadd.f32 %v6592, %v6678
    %v6680 = vpop.f32.mrb[0].mxu0
    %6681 = vdwg.mxu0
    %v6682 = vrsqrt.pop %v6679
    %v6683 = vlaneseq
    %v6684 = vshrl.u32 %v6683, 7
    %v6685 = vsub.s32 0, %v6684
    %v6686 = vrot.slane %v6682, %v6685
    %v6687 = vmul.f32 %v6033, %v6686
    %v6688 = vmul.f32 %v6687, %v48
    %v6689 = vadd.f32 %v6688, %v49
    %6690 = vmatprep.subr.mxu0 0.0
    %v6691 = vand.u32 %v6689, 4294901760
    %6692 = vmatpush1.msra.mxu0 %v6691
    %6693 = vmatprep.subr.mxu0 0.0
    %6694 = vmatpush1.msra.mxu0 0.0
    %6695 = vmatprep.subr.mxu0 0.0
    %6696 = vmatpush1.msra.mxu0 0.0
    %6697 = vmatprep.subr.mxu0 0.0
    %6698 = vmatpush1.msra.mxu0 0.0
    %6699 = vmatprep.subr.mxu0 0.0
    %6700 = vmatpush1.msra.mxu0 0.0
    %6701 = vmatprep.subr.mxu0 0.0
    %6702 = vmatpush1.msra.mxu0 0.0
    %6703 = vmatprep.subr.mxu0 0.0
    %6704 = vmatpush1.msra.mxu0 0.0
    %6705 = vmatprep.subr.mxu0 0.0
    %6706 = vmatpush1.msra.mxu0 0.0
    %6707 = vmatprep.subr.mxu0 0.0
    %6708 = vmatpush1.msra.mxu0 0.0
    %6709 = vmatprep.subr.mxu0 0.0
    %6710 = vmatpush1.msra.mxu0 0.0
    %6711 = vmatprep.subr.mxu0 0.0
    %6712 = vmatpush1.msra.mxu0 0.0
    %6713 = vmatprep.subr.mxu0 0.0
    %6714 = vmatpush1.msra.mxu0 0.0
    %6715 = vmatprep.subr.mxu0 0.0
    %6716 = vmatpush1.msra.mxu0 0.0
    %6717 = vmatprep.subr.mxu0 0.0
    %6718 = vmatpush1.msra.mxu0 0.0
    %6719 = vmatprep.subr.mxu0 0.0
    %6720 = vmatpush1.msra.mxu0 0.0
    %6721 = vmatprep.subr.mxu0 0.0
    %6722 = vmatpush1.msra.mxu0 0.0
    %6723 = vmatprep.subr.mxu0 0.0
    %6724 = vmatpush1.msra.mxu0 0.0
    %6725 = vmatprep.subr.mxu0 0.0
    %6726 = vmatpush1.msra.mxu0 0.0
    %6727 = vmatprep.subr.mxu0 0.0
    %6728 = vmatpush1.msra.mxu0 0.0
    %6729 = vmatprep.subr.mxu0 0.0
    %6730 = vmatpush1.msra.mxu0 0.0
    %6731 = vmatprep.subr.mxu0 0.0
    %6732 = vmatpush1.msra.mxu0 0.0
    %6733 = vmatprep.subr.mxu0 0.0
    %6734 = vmatpush1.msra.mxu0 0.0
    %6735 = vmatprep.subr.mxu0 0.0
    %6736 = vmatpush1.msra.mxu0 0.0
    %6737 = vmatprep.subr.mxu0 0.0
    %6738 = vmatpush1.msra.mxu0 0.0
    %6739 = vmatprep.subr.mxu0 0.0
    %6740 = vmatpush1.msra.mxu0 0.0
    %6741 = vmatprep.subr.mxu0 0.0
    %6742 = vmatpush1.msra.mxu0 0.0
    %6743 = vmatprep.subr.mxu0 0.0
    %6744 = vmatpush1.msra.mxu0 0.0
    %6745 = vmatprep.subr.mxu0 0.0
    %6746 = vmatpush1.msra.mxu0 0.0
    %6747 = vmatprep.subr.mxu0 0.0
    %6748 = vmatpush1.msra.mxu0 0.0
    %6749 = vmatprep.subr.mxu0 0.0
    %6750 = vmatpush1.msra.mxu0 0.0
    %6751 = vmatprep.subr.mxu0 0.0
    %6752 = vmatpush1.msra.mxu0 0.0
    %6753 = vmatprep.subr.mxu0 0.0
    %6754 = vmatpush1.msra.mxu0 0.0
    %6755 = vmatprep.mubr.f32.mxu0 0.0
    %v6756 = vand.u32 %v2920, 4294901760
    %v6757 = vsub.f32 %v2920, %v6756
    %v6758 = vand.u32 %v6757, 4294901760
    %v6759 = vsub.f32 %v6757, %v6758
    %v6760 = vand.u32 %v6759, 4294901760
    %6761 = vmatmul.mubr.f32.gmra.mrb[0].mxu0 %v6760
    %v6762 = vpop.f32.mrb[0].mxu0
    %v6763 = vadd.f32 %v2911, %v6762
    %v6764 = vpop.f32.mrb[0].mxu0
    %6765 = vmatprep.mubr.f32.mxu0 0.0
    %v6766 = vand.u32 %v2923, 4294901760
    %v6767 = vsub.f32 %v2923, %v6766
    %v6768 = vand.u32 %v6767, 4294901760
    %v6769 = vsub.f32 %v6767, %v6768
    %v6770 = vand.u32 %v6769, 4294901760
    %6771 = vmatmul.mubr.f32.gmra.mrb[0].mxu0 %v6770
    %v6772 = vpop.f32.mrb[0].mxu0
    %v6773 = vadd.f32 %v2916, %v6772
    %v6774 = vpop.f32.mrb[0].mxu0
    %6775 = vdwg.mxu0
    %6776 = vmatprep.subr.mxu0 0.0
    %v6777 = vand.u32 %v6689, 4294901760
    %v6778 = vsub.f32 %v6689, %v6777
    %v6779 = vand.u32 %v6778, 4294901760
    %v6780 = vsub.f32 %v6778, %v6779
    %v6781 = vand.u32 %v6780, 4294901760
    %6782 = vmatpush1.msra.mxu0 %v6781
    %6783 = vmatprep.subr.mxu0 0.0
    %6784 = vmatpush1.msra.mxu0 0.0
    %6785 = vmatprep.subr.mxu0 0.0
    %6786 = vmatpush1.msra.mxu0 0.0
    %6787 = vmatprep.subr.mxu0 0.0
    %6788 = vmatpush1.msra.mxu0 0.0
    %6789 = vmatprep.subr.mxu0 0.0
    %6790 = vmatpush1.msra.mxu0 0.0
    %6791 = vmatprep.subr.mxu0 0.0
    %6792 = vmatpush1.msra.mxu0 0.0
    %6793 = vmatprep.subr.mxu0 0.0
    %6794 = vmatpush1.msra.mxu0 0.0
    %6795 = vmatprep.subr.mxu0 0.0
    %6796 = vmatpush1.msra.mxu0 0.0
    %6797 = vmatprep.subr.mxu0 0.0
    %6798 = vmatpush1.msra.mxu0 0.0
    %6799 = vmatprep.subr.mxu0 0.0
    %6800 = vmatpush1.msra.mxu0 0.0
    %6801 = vmatprep.subr.mxu0 0.0
    %6802 = vmatpush1.msra.mxu0 0.0
    %6803 = vmatprep.subr.mxu0 0.0
    %6804 = vmatpush1.msra.mxu0 0.0
    %6805 = vmatprep.subr.mxu0 0.0
    %6806 = vmatpush1.msra.mxu0 0.0
    %6807 = vmatprep.subr.mxu0 0.0
    %6808 = vmatpush1.msra.mxu0 0.0
    %6809 = vmatprep.subr.mxu0 0.0
    %6810 = vmatpush1.msra.mxu0 0.0
    %6811 = vmatprep.subr.mxu0 0.0
    %6812 = vmatpush1.msra.mxu0 0.0
    %6813 = vmatprep.subr.mxu0 0.0
    %6814 = vmatpush1.msra.mxu0 0.0
    %6815 = vmatprep.subr.mxu0 0.0
    %6816 = vmatpush1.msra.mxu0 0.0
    %6817 = vmatprep.subr.mxu0 0.0
    %6818 = vmatpush1.msra.mxu0 0.0
    %6819 = vmatprep.subr.mxu0 0.0
    %6820 = vmatpush1.msra.mxu0 0.0
    %6821 = vmatprep.subr.mxu0 0.0
    %6822 = vmatpush1.msra.mxu0 0.0
    %6823 = vmatprep.subr.mxu0 0.0
    %6824 = vmatpush1.msra.mxu0 0.0
    %6825 = vmatprep.subr.mxu0 0.0
    %6826 = vmatpush1.msra.mxu0 0.0
    %6827 = vmatprep.subr.mxu0 0.0
    %6828 = vmatpush1.msra.mxu0 0.0
    %6829 = vmatprep.subr.mxu0 0.0
    %6830 = vmatpush1.msra.mxu0 0.0
    %6831 = vmatprep.subr.mxu0 0.0
    %6832 = vmatpush1.msra.mxu0 0.0
    %6833 = vmatprep.subr.mxu0 0.0
    %6834 = vmatpush1.msra.mxu0 0.0
    %6835 = vmatprep.subr.mxu0 0.0
    %6836 = vmatpush1.msra.mxu0 0.0
    %6837 = vmatprep.subr.mxu0 0.0
    %6838 = vmatpush1.msra.mxu0 0.0
    %6839 = vmatprep.subr.mxu0 0.0
    %6840 = vmatpush1.msra.mxu0 0.0
    %6841 = vmatprep.subr.mxu0 0.0
    %6842 = vmatpush1.msra.mxu0 0.0
    %6843 = vmatprep.subr.mxu0 0.0
    %6844 = vmatpush1.msra.mxu0 0.0
    %6845 = vmatprep.mubr.f32.mxu0 0.0
    %v6846 = vand.u32 %v2920, 4294901760
    %6847 = vmatmul.mubr.f32.gmra.mrb[0].mxu0 %v6846
    %v6848 = vpop.f32.mrb[0].mxu0
    %v6849 = vadd.f32 %v6763, %v6848
    %v6850 = vpop.f32.mrb[0].mxu0
    %6851 = vmatprep.mubr.f32.mxu0 0.0
    %v6852 = vand.u32 %v2923, 4294901760
    %6853 = vmatmul.mubr.f32.gmra.mrb[0].mxu0 %v6852
    %v6854 = vpop.f32.mrb[0].mxu0
    %v6855 = vadd.f32 %v6773, %v6854
    %v6856 = vpop.f32.mrb[0].mxu0
    %6857 = vdwg.mxu0
    %6858 = vmatprep.subr.mxu0 0.0
    %v6859 = vand.u32 %v6689, 4294901760
    %v6860 = vsub.f32 %v6689, %v6859
    %6861 = vmatpush1.msra.mxu0 %v6860
    %6862 = vmatprep.subr.mxu0 0.0
    %6863 = vmatpush1.msra.mxu0 0.0
    %6864 = vmatprep.subr.mxu0 0.0
    %6865 = vmatpush1.msra.mxu0 0.0
    %6866 = vmatprep.subr.mxu0 0.0
    %6867 = vmatpush1.msra.mxu0 0.0
    %6868 = vmatprep.subr.mxu0 0.0
    %6869 = vmatpush1.msra.mxu0 0.0
    %6870 = vmatprep.subr.mxu0 0.0
    %6871 = vmatpush1.msra.mxu0 0.0
    %6872 = vmatprep.subr.mxu0 0.0
    %6873 = vmatpush1.msra.mxu0 0.0
    %6874 = vmatprep.subr.mxu0 0.0
    %6875 = vmatpush1.msra.mxu0 0.0
    %6876 = vmatprep.subr.mxu0 0.0
    %6877 = vmatpush1.msra.mxu0 0.0
    %6878 = vmatprep.subr.mxu0 0.0
    %6879 = vmatpush1.msra.mxu0 0.0
    %6880 = vmatprep.subr.mxu0 0.0
    %6881 = vmatpush1.msra.mxu0 0.0
    %6882 = vmatprep.subr.mxu0 0.0
    %6883 = vmatpush1.msra.mxu0 0.0
    %6884 = vmatprep.subr.mxu0 0.0
    %6885 = vmatpush1.msra.mxu0 0.0
    %6886 = vmatprep.subr.mxu0 0.0
    %6887 = vmatpush1.msra.mxu0 0.0
    %6888 = vmatprep.subr.mxu0 0.0
    %6889 = vmatpush1.msra.mxu0 0.0
    %6890 = vmatprep.subr.mxu0 0.0
    %6891 = vmatpush1.msra.mxu0 0.0
    %6892 = vmatprep.subr.mxu0 0.0
    %6893 = vmatpush1.msra.mxu0 0.0
    %6894 = vmatprep.subr.mxu0 0.0
    %6895 = vmatpush1.msra.mxu0 0.0
    %6896 = vmatprep.subr.mxu0 0.0
    %6897 = vmatpush1.msra.mxu0 0.0
    %6898 = vmatprep.subr.mxu0 0.0
    %6899 = vmatpush1.msra.mxu0 0.0
    %6900 = vmatprep.subr.mxu0 0.0
    %6901 = vmatpush1.msra.mxu0 0.0
    %6902 = vmatprep.subr.mxu0 0.0
    %6903 = vmatpush1.msra.mxu0 0.0
    %6904 = vmatprep.subr.mxu0 0.0
    %6905 = vmatpush1.msra.mxu0 0.0
    %6906 = vmatprep.subr.mxu0 0.0
    %6907 = vmatpush1.msra.mxu0 0.0
    %6908 = vmatprep.subr.mxu0 0.0
    %6909 = vmatpush1.msra.mxu0 0.0
    %6910 = vmatprep.subr.mxu0 0.0
    %6911 = vmatpush1.msra.mxu0 0.0
    %6912 = vmatprep.subr.mxu0 0.0
    %6913 = vmatpush1.msra.mxu0 0.0
    %6914 = vmatprep.subr.mxu0 0.0
    %6915 = vmatpush1.msra.mxu0 0.0
    %6916 = vmatprep.subr.mxu0 0.0
    %6917 = vmatpush1.msra.mxu0 0.0
    %6918 = vmatprep.subr.mxu0 0.0
    %6919 = vmatpush1.msra.mxu0 0.0
    %6920 = vmatprep.subr.mxu0 0.0
    %6921 = vmatpush1.msra.mxu0 0.0
    %6922 = vmatprep.subr.mxu0 0.0
    %6923 = vmatpush1.msra.mxu0 0.0
    %6924 = vmatprep.mubr.f32.mxu0 0.0
    %v6925 = vand.u32 %v2920, 4294901760
    %v6926 = vsub.f32 %v2920, %v6925
    %6927 = vmatmul.mubr.f32.gmra.mrb[0].mxu0 %v6926
    %v6928 = vpop.f32.mrb[0].mxu0
    %v6929 = vadd.f32 %v6849, %v6928
    %v6930 = vpop.f32.mrb[0].mxu0
    %6931 = vmatprep.mubr.f32.mxu0 0.0
    %v6932 = vand.u32 %v2923, 4294901760
    %v6933 = vsub.f32 %v2923, %v6932
    %6934 = vmatmul.mubr.f32.gmra.mrb[0].mxu0 %v6933
    %v6935 = vpop.f32.mrb[0].mxu0
    %v6936 = vadd.f32 %v6855, %v6935
    %v6937 = vpop.f32.mrb[0].mxu0
    %6938 = vdwg.mxu0
    %6939 = vmatprep.subr.mxu0 0.0
    %v6940 = vand.u32 %v6689, 4294901760
    %6941 = vmatpush1.msra.mxu0 %v6940
    %6942 = vmatprep.subr.mxu0 0.0
    %6943 = vmatpush1.msra.mxu0 0.0
    %6944 = vmatprep.subr.mxu0 0.0
    %6945 = vmatpush1.msra.mxu0 0.0
    %6946 = vmatprep.subr.mxu0 0.0
    %6947 = vmatpush1.msra.mxu0 0.0
    %6948 = vmatprep.subr.mxu0 0.0
    %6949 = vmatpush1.msra.mxu0 0.0
    %6950 = vmatprep.subr.mxu0 0.0
    %6951 = vmatpush1.msra.mxu0 0.0
    %6952 = vmatprep.subr.mxu0 0.0
    %6953 = vmatpush1.msra.mxu0 0.0
    %6954 = vmatprep.subr.mxu0 0.0
    %6955 = vmatpush1.msra.mxu0 0.0
    %6956 = vmatprep.subr.mxu0 0.0
    %6957 = vmatpush1.msra.mxu0 0.0
    %6958 = vmatprep.subr.mxu0 0.0
    %6959 = vmatpush1.msra.mxu0 0.0
    %6960 = vmatprep.subr.mxu0 0.0
    %6961 = vmatpush1.msra.mxu0 0.0
    %6962 = vmatprep.subr.mxu0 0.0
    %6963 = vmatpush1.msra.mxu0 0.0
    %6964 = vmatprep.subr.mxu0 0.0
    %6965 = vmatpush1.msra.mxu0 0.0
    %6966 = vmatprep.subr.mxu0 0.0
    %6967 = vmatpush1.msra.mxu0 0.0
    %6968 = vmatprep.subr.mxu0 0.0
    %6969 = vmatpush1.msra.mxu0 0.0
    %6970 = vmatprep.subr.mxu0 0.0
    %6971 = vmatpush1.msra.mxu0 0.0
    %6972 = vmatprep.subr.mxu0 0.0
    %6973 = vmatpush1.msra.mxu0 0.0
    %6974 = vmatprep.subr.mxu0 0.0
    %6975 = vmatpush1.msra.mxu0 0.0
    %6976 = vmatprep.subr.mxu0 0.0
    %6977 = vmatpush1.msra.mxu0 0.0
    %6978 = vmatprep.subr.mxu0 0.0
    %6979 = vmatpush1.msra.mxu0 0.0
    %6980 = vmatprep.subr.mxu0 0.0
    %6981 = vmatpush1.msra.mxu0 0.0
    %6982 = vmatprep.subr.mxu0 0.0
    %6983 = vmatpush1.msra.mxu0 0.0
    %6984 = vmatprep.subr.mxu0 0.0
    %6985 = vmatpush1.msra.mxu0 0.0
    %6986 = vmatprep.subr.mxu0 0.0
    %6987 = vmatpush1.msra.mxu0 0.0
    %6988 = vmatprep.subr.mxu0 0.0
    %6989 = vmatpush1.msra.mxu0 0.0
    %6990 = vmatprep.subr.mxu0 0.0
    %6991 = vmatpush1.msra.mxu0 0.0
    %6992 = vmatprep.subr.mxu0 0.0
    %6993 = vmatpush1.msra.mxu0 0.0
    %6994 = vmatprep.subr.mxu0 0.0
    %6995 = vmatpush1.msra.mxu0 0.0
    %6996 = vmatprep.subr.mxu0 0.0
    %6997 = vmatpush1.msra.mxu0 0.0
    %6998 = vmatprep.subr.mxu0 0.0
    %6999 = vmatpush1.msra.mxu0 0.0
    %7000 = vmatprep.subr.mxu0 0.0
    %7001 = vmatpush1.msra.mxu0 0.0
    %7002 = vmatprep.subr.mxu0 0.0
    %7003 = vmatpush1.msra.mxu0 0.0
    %7004 = vmatprep.mubr.f32.mxu0 0.0
    %v7005 = vand.u32 %v2920, 4294901760
    %v7006 = vsub.f32 %v2920, %v7005
    %v7007 = vand.u32 %v7006, 4294901760
    %7008 = vmatmul.mubr.f32.gmra.mrb[0].mxu0 %v7007
    %v7009 = vpop.f32.mrb[0].mxu0
    %v7010 = vadd.f32 %v6929, %v7009
    %v7011 = vpop.f32.mrb[0].mxu0
    %7012 = vmatprep.mubr.f32.mxu0 0.0
    %v7013 = vand.u32 %v2923, 4294901760
    %v7014 = vsub.f32 %v2923, %v7013
    %v7015 = vand.u32 %v7014, 4294901760
    %7016 = vmatmul.mubr.f32.gmra.mrb[0].mxu0 %v7015
    %v7017 = vpop.f32.mrb[0].mxu0
    %v7018 = vadd.f32 %v6936, %v7017
    %v7019 = vpop.f32.mrb[0].mxu0
    %7020 = vdwg.mxu0
    %7021 = vmatprep.subr.mxu0 0.0
    %v7022 = vand.u32 %v6689, 4294901760
    %v7023 = vsub.f32 %v6689, %v7022
    %v7024 = vand.u32 %v7023, 4294901760
    %7025 = vmatpush1.msra.mxu0 %v7024
    %7026 = vmatprep.subr.mxu0 0.0
    %7027 = vmatpush1.msra.mxu0 0.0
    %7028 = vmatprep.subr.mxu0 0.0
    %7029 = vmatpush1.msra.mxu0 0.0
    %7030 = vmatprep.subr.mxu0 0.0
    %7031 = vmatpush1.msra.mxu0 0.0
    %7032 = vmatprep.subr.mxu0 0.0
    %7033 = vmatpush1.msra.mxu0 0.0
    %7034 = vmatprep.subr.mxu0 0.0
    %7035 = vmatpush1.msra.mxu0 0.0
    %7036 = vmatprep.subr.mxu0 0.0
    %7037 = vmatpush1.msra.mxu0 0.0
    %7038 = vmatprep.subr.mxu0 0.0
    %7039 = vmatpush1.msra.mxu0 0.0
    %7040 = vmatprep.subr.mxu0 0.0
    %7041 = vmatpush1.msra.mxu0 0.0
    %7042 = vmatprep.subr.mxu0 0.0
    %7043 = vmatpush1.msra.mxu0 0.0
    %7044 = vmatprep.subr.mxu0 0.0
    %7045 = vmatpush1.msra.mxu0 0.0
    %7046 = vmatprep.subr.mxu0 0.0
    %7047 = vmatpush1.msra.mxu0 0.0
    %7048 = vmatprep.subr.mxu0 0.0
    %7049 = vmatpush1.msra.mxu0 0.0
    %7050 = vmatprep.subr.mxu0 0.0
    %7051 = vmatpush1.msra.mxu0 0.0
    %7052 = vmatprep.subr.mxu0 0.0
    %7053 = vmatpush1.msra.mxu0 0.0
    %7054 = vmatprep.subr.mxu0 0.0
    %7055 = vmatpush1.msra.mxu0 0.0
    %7056 = vmatprep.subr.mxu0 0.0
    %7057 = vmatpush1.msra.mxu0 0.0
    %7058 = vmatprep.subr.mxu0 0.0
    %7059 = vmatpush1.msra.mxu0 0.0
    %7060 = vmatprep.subr.mxu0 0.0
    %7061 = vmatpush1.msra.mxu0 0.0
    %7062 = vmatprep.subr.mxu0 0.0
    %7063 = vmatpush1.msra.mxu0 0.0
    %7064 = vmatprep.subr.mxu0 0.0
    %7065 = vmatpush1.msra.mxu0 0.0
    %7066 = vmatprep.subr.mxu0 0.0
    %7067 = vmatpush1.msra.mxu0 0.0
    %7068 = vmatprep.subr.mxu0 0.0
    %7069 = vmatpush1.msra.mxu0 0.0
    %7070 = vmatprep.subr.mxu0 0.0
    %7071 = vmatpush1.msra.mxu0 0.0
    %7072 = vmatprep.subr.mxu0 0.0
    %7073 = vmatpush1.msra.mxu0 0.0
    %7074 = vmatprep.subr.mxu0 0.0
    %7075 = vmatpush1.msra.mxu0 0.0
    %7076 = vmatprep.subr.mxu0 0.0
    %7077 = vmatpush1.msra.mxu0 0.0
    %7078 = vmatprep.subr.mxu0 0.0
    %7079 = vmatpush1.msra.mxu0 0.0
    %7080 = vmatprep.subr.mxu0 0.0
    %7081 = vmatpush1.msra.mxu0 0.0
    %7082 = vmatprep.subr.mxu0 0.0
    %7083 = vmatpush1.msra.mxu0 0.0
    %7084 = vmatprep.subr.mxu0 0.0
    %7085 = vmatpush1.msra.mxu0 0.0
    %7086 = vmatprep.subr.mxu0 0.0
    %7087 = vmatpush1.msra.mxu0 0.0
    %7088 = vmatprep.mubr.f32.mxu0 0.0
    %v7089 = vand.u32 %v2920, 4294901760
    %7090 = vmatmul.mubr.f32.gmra.mrb[0].mxu0 %v7089
    %v7091 = vpop.f32.mrb[0].mxu0
    %v7092 = vadd.f32 %v7010, %v7091
    %v7093 = vpop.f32.mrb[0].mxu0
    %7094 = vmatprep.mubr.f32.mxu0 0.0
    %v7095 = vand.u32 %v2923, 4294901760
    %7096 = vmatmul.mubr.f32.gmra.mrb[0].mxu0 %v7095
    %v7097 = vpop.f32.mrb[0].mxu0
    %v7098 = vadd.f32 %v7018, %v7097
    %v7099 = vpop.f32.mrb[0].mxu0
    %7100 = vdwg.mxu0
    %7101 = vmatprep.subr.mxu0 0.0
    %v7102 = vand.u32 %v6689, 4294901760
    %7103 = vmatpush1.msra.mxu0 %v7102
    %7104 = vmatprep.subr.mxu0 0.0
    %7105 = vmatpush1.msra.mxu0 0.0
    %7106 = vmatprep.subr.mxu0 0.0
    %7107 = vmatpush1.msra.mxu0 0.0
    %7108 = vmatprep.subr.mxu0 0.0
    %7109 = vmatpush1.msra.mxu0 0.0
    %7110 = vmatprep.subr.mxu0 0.0
    %7111 = vmatpush1.msra.mxu0 0.0
    %7112 = vmatprep.subr.mxu0 0.0
    %7113 = vmatpush1.msra.mxu0 0.0
    %7114 = vmatprep.subr.mxu0 0.0
    %7115 = vmatpush1.msra.mxu0 0.0
    %7116 = vmatprep.subr.mxu0 0.0
    %7117 = vmatpush1.msra.mxu0 0.0
    %7118 = vmatprep.subr.mxu0 0.0
    %7119 = vmatpush1.msra.mxu0 0.0
    %7120 = vmatprep.subr.mxu0 0.0
    %7121 = vmatpush1.msra.mxu0 0.0
    %7122 = vmatprep.subr.mxu0 0.0
    %7123 = vmatpush1.msra.mxu0 0.0
    %7124 = vmatprep.subr.mxu0 0.0
    %7125 = vmatpush1.msra.mxu0 0.0
    %7126 = vmatprep.subr.mxu0 0.0
    %7127 = vmatpush1.msra.mxu0 0.0
    %7128 = vmatprep.subr.mxu0 0.0
    %7129 = vmatpush1.msra.mxu0 0.0
    %7130 = vmatprep.subr.mxu0 0.0
    %7131 = vmatpush1.msra.mxu0 0.0
    %7132 = vmatprep.subr.mxu0 0.0
    %7133 = vmatpush1.msra.mxu0 0.0
    %7134 = vmatprep.subr.mxu0 0.0
    %7135 = vmatpush1.msra.mxu0 0.0
    %7136 = vmatprep.subr.mxu0 0.0
    %7137 = vmatpush1.msra.mxu0 0.0
    %7138 = vmatprep.subr.mxu0 0.0
    %7139 = vmatpush1.msra.mxu0 0.0
    %7140 = vmatprep.subr.mxu0 0.0
    %7141 = vmatpush1.msra.mxu0 0.0
    %7142 = vmatprep.subr.mxu0 0.0
    %7143 = vmatpush1.msra.mxu0 0.0
    %7144 = vmatprep.subr.mxu0 0.0
    %7145 = vmatpush1.msra.mxu0 0.0
    %7146 = vmatprep.subr.mxu0 0.0
    %7147 = vmatpush1.msra.mxu0 0.0
    %7148 = vmatprep.subr.mxu0 0.0
    %7149 = vmatpush1.msra.mxu0 0.0
    %7150 = vmatprep.subr.mxu0 0.0
    %7151 = vmatpush1.msra.mxu0 0.0
    %7152 = vmatprep.subr.mxu0 0.0
    %7153 = vmatpush1.msra.mxu0 0.0
    %7154 = vmatprep.subr.mxu0 0.0
    %7155 = vmatpush1.msra.mxu0 0.0
    %7156 = vmatprep.subr.mxu0 0.0
    %7157 = vmatpush1.msra.mxu0 0.0
    %7158 = vmatprep.subr.mxu0 0.0
    %7159 = vmatpush1.msra.mxu0 0.0
    %7160 = vmatprep.subr.mxu0 0.0
    %7161 = vmatpush1.msra.mxu0 0.0
    %7162 = vmatprep.subr.mxu0 0.0
    %7163 = vmatpush1.msra.mxu0 0.0
    %7164 = vmatprep.subr.mxu0 0.0
    %7165 = vmatpush1.msra.mxu0 0.0
    %7166 = vmatprep.mubr.f32.mxu0 0.0
    %v7167 = vand.u32 %v2920, 4294901760
    %7168 = vmatmul.mubr.f32.gmra.mrb[0].mxu0 %v7167
    %v7169 = vpop.f32.mrb[0].mxu0
    %v7170 = vadd.f32 %v7092, %v7169
    %v7171 = vpop.f32.mrb[0].mxu0
    %7172 = vmatprep.mubr.f32.mxu0 0.0
    %v7173 = vand.u32 %v2923, 4294901760
    %7174 = vmatmul.mubr.f32.gmra.mrb[0].mxu0 %v7173
    %v7175 = vpop.f32.mrb[0].mxu0
    %v7176 = vadd.f32 %v7098, %v7175
    %v7177 = vpop.f32.mrb[0].mxu0
    %7178 = vdwg.mxu0
    %v7179 = vmax.f32 %v7170, 0.0
    %v7180 = vmax.f32 %v7176, 0.0
    %7181 = vmatprep.subr.mxu0 0.0
    %v7182 = vand.u32 %v7179, 4294901760
    %7183 = vmatpush1.msra.mxu0 %v7182
    %7184 = vmatprep.subr.mxu0 0.0
    %v7185 = vand.u32 %v7180, 4294901760
    %7186 = vmatpush1.msra.mxu0 %v7185
    %7187 = vmatprep.subr.mxu0 0.0
    %7188 = vmatpush1.msra.mxu0 0.0
    %7189 = vmatprep.subr.mxu0 0.0
    %7190 = vmatpush1.msra.mxu0 0.0
    %7191 = vmatprep.subr.mxu0 0.0
    %7192 = vmatpush1.msra.mxu0 0.0
    %7193 = vmatprep.subr.mxu0 0.0
    %7194 = vmatpush1.msra.mxu0 0.0
    %7195 = vmatprep.subr.mxu0 0.0
    %7196 = vmatpush1.msra.mxu0 0.0
    %7197 = vmatprep.subr.mxu0 0.0
    %7198 = vmatpush1.msra.mxu0 0.0
    %7199 = vmatprep.subr.mxu0 0.0
    %7200 = vmatpush1.msra.mxu0 0.0
    %7201 = vmatprep.subr.mxu0 0.0
    %7202 = vmatpush1.msra.mxu0 0.0
    %7203 = vmatprep.subr.mxu0 0.0
    %7204 = vmatpush1.msra.mxu0 0.0
    %7205 = vmatprep.subr.mxu0 0.0
    %7206 = vmatpush1.msra.mxu0 0.0
    %7207 = vmatprep.subr.mxu0 0.0
    %7208 = vmatpush1.msra.mxu0 0.0
    %7209 = vmatprep.subr.mxu0 0.0
    %7210 = vmatpush1.msra.mxu0 0.0
    %7211 = vmatprep.subr.mxu0 0.0
    %7212 = vmatpush1.msra.mxu0 0.0
    %7213 = vmatprep.subr.mxu0 0.0
    %7214 = vmatpush1.msra.mxu0 0.0
    %7215 = vmatprep.subr.mxu0 0.0
    %7216 = vmatpush1.msra.mxu0 0.0
    %7217 = vmatprep.subr.mxu0 0.0
    %7218 = vmatpush1.msra.mxu0 0.0
    %7219 = vmatprep.subr.mxu0 0.0
    %7220 = vmatpush1.msra.mxu0 0.0
    %7221 = vmatprep.subr.mxu0 0.0
    %7222 = vmatpush1.msra.mxu0 0.0
    %7223 = vmatprep.subr.mxu0 0.0
    %7224 = vmatpush1.msra.mxu0 0.0
    %7225 = vmatprep.subr.mxu0 0.0
    %7226 = vmatpush1.msra.mxu0 0.0
    %7227 = vmatprep.subr.mxu0 0.0
    %7228 = vmatpush1.msra.mxu0 0.0
    %7229 = vmatprep.subr.mxu0 0.0
    %7230 = vmatpush1.msra.mxu0 0.0
    %7231 = vmatprep.subr.mxu0 0.0
    %7232 = vmatpush1.msra.mxu0 0.0
    %7233 = vmatprep.subr.mxu0 0.0
    %7234 = vmatpush1.msra.mxu0 0.0
    %7235 = vmatprep.subr.mxu0 0.0
    %7236 = vmatpush1.msra.mxu0 0.0
    %7237 = vmatprep.subr.mxu0 0.0
    %7238 = vmatpush1.msra.mxu0 0.0
    %7239 = vmatprep.subr.mxu0 0.0
    %7240 = vmatpush1.msra.mxu0 0.0
    %7241 = vmatprep.subr.mxu0 0.0
    %7242 = vmatpush1.msra.mxu0 0.0
    %7243 = vmatprep.subr.mxu0 0.0
    %7244 = vmatpush1.msra.mxu0 0.0
    %7245 = vmatprep.subr.mxu0 0.0
    %7246 = vmatpush1.msra.mxu0 0.0
    %7247 = vmatprep.mubr.f32.mxu0 0.0
    %v7248 = vand.u32 %v3423, 4294901760
    %v7249 = vsub.f32 %v3423, %v7248
    %v7250 = vand.u32 %v7249, 4294901760
    %v7251 = vsub.f32 %v7249, %v7250
    %v7252 = vand.u32 %v7251, 4294901760
    %7253 = vmatmul.mubr.f32.gmra.mrb[0].mxu0 %v7252
    %v7254 = vpop.f32.mrb[0].mxu0
    %v7255 = vadd.f32 %v3419, %v7254
    %v7256 = vpop.f32.mrb[0].mxu0
    %7257 = vdwg.mxu0
    %7258 = vmatprep.subr.mxu0 0.0
    %v7259 = vand.u32 %v7179, 4294901760
    %v7260 = vsub.f32 %v7179, %v7259
    %v7261 = vand.u32 %v7260, 4294901760
    %v7262 = vsub.f32 %v7260, %v7261
    %v7263 = vand.u32 %v7262, 4294901760
    %7264 = vmatpush1.msra.mxu0 %v7263
    %7265 = vmatprep.subr.mxu0 0.0
    %v7266 = vand.u32 %v7180, 4294901760
    %v7267 = vsub.f32 %v7180, %v7266
    %v7268 = vand.u32 %v7267, 4294901760
    %v7269 = vsub.f32 %v7267, %v7268
    %v7270 = vand.u32 %v7269, 4294901760
    %7271 = vmatpush1.msra.mxu0 %v7270
    %7272 = vmatprep.subr.mxu0 0.0
    %7273 = vmatpush1.msra.mxu0 0.0
    %7274 = vmatprep.subr.mxu0 0.0
    %7275 = vmatpush1.msra.mxu0 0.0
    %7276 = vmatprep.subr.mxu0 0.0
    %7277 = vmatpush1.msra.mxu0 0.0
    %7278 = vmatprep.subr.mxu0 0.0
    %7279 = vmatpush1.msra.mxu0 0.0
    %7280 = vmatprep.subr.mxu0 0.0
    %7281 = vmatpush1.msra.mxu0 0.0
    %7282 = vmatprep.subr.mxu0 0.0
    %7283 = vmatpush1.msra.mxu0 0.0
    %7284 = vmatprep.subr.mxu0 0.0
    %7285 = vmatpush1.msra.mxu0 0.0
    %7286 = vmatprep.subr.mxu0 0.0
    %7287 = vmatpush1.msra.mxu0 0.0
    %7288 = vmatprep.subr.mxu0 0.0
    %7289 = vmatpush1.msra.mxu0 0.0
    %7290 = vmatprep.subr.mxu0 0.0
    %7291 = vmatpush1.msra.mxu0 0.0
    %7292 = vmatprep.subr.mxu0 0.0
    %7293 = vmatpush1.msra.mxu0 0.0
    %7294 = vmatprep.subr.mxu0 0.0
    %7295 = vmatpush1.msra.mxu0 0.0
    %7296 = vmatprep.subr.mxu0 0.0
    %7297 = vmatpush1.msra.mxu0 0.0
    %7298 = vmatprep.subr.mxu0 0.0
    %7299 = vmatpush1.msra.mxu0 0.0
    %7300 = vmatprep.subr.mxu0 0.0
    %7301 = vmatpush1.msra.mxu0 0.0
    %7302 = vmatprep.subr.mxu0 0.0
    %7303 = vmatpush1.msra.mxu0 0.0
    %7304 = vmatprep.subr.mxu0 0.0
    %7305 = vmatpush1.msra.mxu0 0.0
    %7306 = vmatprep.subr.mxu0 0.0
    %7307 = vmatpush1.msra.mxu0 0.0
    %7308 = vmatprep.subr.mxu0 0.0
    %7309 = vmatpush1.msra.mxu0 0.0
    %7310 = vmatprep.subr.mxu0 0.0
    %7311 = vmatpush1.msra.mxu0 0.0
    %7312 = vmatprep.subr.mxu0 0.0
    %7313 = vmatpush1.msra.mxu0 0.0
    %7314 = vmatprep.subr.mxu0 0.0
    %7315 = vmatpush1.msra.mxu0 0.0
    %7316 = vmatprep.subr.mxu0 0.0
    %7317 = vmatpush1.msra.mxu0 0.0
    %7318 = vmatprep.subr.mxu0 0.0
    %7319 = vmatpush1.msra.mxu0 0.0
    %7320 = vmatprep.subr.mxu0 0.0
    %7321 = vmatpush1.msra.mxu0 0.0
    %7322 = vmatprep.subr.mxu0 0.0
    %7323 = vmatpush1.msra.mxu0 0.0
    %7324 = vmatprep.subr.mxu0 0.0
    %7325 = vmatpush1.msra.mxu0 0.0
    %7326 = vmatprep.subr.mxu0 0.0
    %7327 = vmatpush1.msra.mxu0 0.0
    %7328 = vmatprep.subr.mxu0 0.0
    %7329 = vmatpush1.msra.mxu0 0.0
    %7330 = vmatprep.subr.mxu0 0.0
    %7331 = vmatpush1.msra.mxu0 0.0
    %7332 = vmatprep.mubr.f32.mxu0 0.0
    %v7333 = vand.u32 %v3423, 4294901760
    %7334 = vmatmul.mubr.f32.gmra.mrb[0].mxu0 %v7333
    %v7335 = vpop.f32.mrb[0].mxu0
    %v7336 = vadd.f32 %v7255, %v7335
    %v7337 = vpop.f32.mrb[0].mxu0
    %7338 = vdwg.mxu0
    %7339 = vmatprep.subr.mxu0 0.0
    %v7340 = vand.u32 %v7179, 4294901760
    %v7341 = vsub.f32 %v7179, %v7340
    %7342 = vmatpush1.msra.mxu0 %v7341
    %7343 = vmatprep.subr.mxu0 0.0
    %v7344 = vand.u32 %v7180, 4294901760
    %v7345 = vsub.f32 %v7180, %v7344
    %7346 = vmatpush1.msra.mxu0 %v7345
    %7347 = vmatprep.subr.mxu0 0.0
    %7348 = vmatpush1.msra.mxu0 0.0
    %7349 = vmatprep.subr.mxu0 0.0
    %7350 = vmatpush1.msra.mxu0 0.0
    %7351 = vmatprep.subr.mxu0 0.0
    %7352 = vmatpush1.msra.mxu0 0.0
    %7353 = vmatprep.subr.mxu0 0.0
    %7354 = vmatpush1.msra.mxu0 0.0
    %7355 = vmatprep.subr.mxu0 0.0
    %7356 = vmatpush1.msra.mxu0 0.0
    %7357 = vmatprep.subr.mxu0 0.0
    %7358 = vmatpush1.msra.mxu0 0.0
    %7359 = vmatprep.subr.mxu0 0.0
    %7360 = vmatpush1.msra.mxu0 0.0
    %7361 = vmatprep.subr.mxu0 0.0
    %7362 = vmatpush1.msra.mxu0 0.0
    %7363 = vmatprep.subr.mxu0 0.0
    %7364 = vmatpush1.msra.mxu0 0.0
    %7365 = vmatprep.subr.mxu0 0.0
    %7366 = vmatpush1.msra.mxu0 0.0
    %7367 = vmatprep.subr.mxu0 0.0
    %7368 = vmatpush1.msra.mxu0 0.0
    %7369 = vmatprep.subr.mxu0 0.0
    %7370 = vmatpush1.msra.mxu0 0.0
    %7371 = vmatprep.subr.mxu0 0.0
    %7372 = vmatpush1.msra.mxu0 0.0
    %7373 = vmatprep.subr.mxu0 0.0
    %7374 = vmatpush1.msra.mxu0 0.0
    %7375 = vmatprep.subr.mxu0 0.0
    %7376 = vmatpush1.msra.mxu0 0.0
    %7377 = vmatprep.subr.mxu0 0.0
    %7378 = vmatpush1.msra.mxu0 0.0
    %7379 = vmatprep.subr.mxu0 0.0
    %7380 = vmatpush1.msra.mxu0 0.0
    %7381 = vmatprep.subr.mxu0 0.0
    %7382 = vmatpush1.msra.mxu0 0.0
    %7383 = vmatprep.subr.mxu0 0.0
    %7384 = vmatpush1.msra.mxu0 0.0
    %7385 = vmatprep.subr.mxu0 0.0
    %7386 = vmatpush1.msra.mxu0 0.0
    %7387 = vmatprep.subr.mxu0 0.0
    %7388 = vmatpush1.msra.mxu0 0.0
    %7389 = vmatprep.subr.mxu0 0.0
    %7390 = vmatpush1.msra.mxu0 0.0
    %7391 = vmatprep.subr.mxu0 0.0
    %7392 = vmatpush1.msra.mxu0 0.0
    %7393 = vmatprep.subr.mxu0 0.0
    %7394 = vmatpush1.msra.mxu0 0.0
    %7395 = vmatprep.subr.mxu0 0.0
    %7396 = vmatpush1.msra.mxu0 0.0
    %7397 = vmatprep.subr.mxu0 0.0
    %7398 = vmatpush1.msra.mxu0 0.0
    %7399 = vmatprep.subr.mxu0 0.0
    %7400 = vmatpush1.msra.mxu0 0.0
    %7401 = vmatprep.subr.mxu0 0.0
    %7402 = vmatpush1.msra.mxu0 0.0
    %7403 = vmatprep.subr.mxu0 0.0
    %7404 = vmatpush1.msra.mxu0 0.0
    %7405 = vmatprep.subr.mxu0 0.0
    %7406 = vmatpush1.msra.mxu0 0.0
    %7407 = vmatprep.mubr.f32.mxu0 0.0
    %v7408 = vand.u32 %v3423, 4294901760
    %v7409 = vsub.f32 %v3423, %v7408
    %7410 = vmatmul.mubr.f32.gmra.mrb[0].mxu0 %v7409
    %v7411 = vpop.f32.mrb[0].mxu0
    %v7412 = vadd.f32 %v7336, %v7411
    %v7413 = vpop.f32.mrb[0].mxu0
    %7414 = vdwg.mxu0
    %7415 = vmatprep.subr.mxu0 0.0
    %v7416 = vand.u32 %v7179, 4294901760
    %7417 = vmatpush1.msra.mxu0 %v7416
    %7418 = vmatprep.subr.mxu0 0.0
    %v7419 = vand.u32 %v7180, 4294901760
    %7420 = vmatpush1.msra.mxu0 %v7419
    %7421 = vmatprep.subr.mxu0 0.0
    %7422 = vmatpush1.msra.mxu0 0.0
    %7423 = vmatprep.subr.mxu0 0.0
    %7424 = vmatpush1.msra.mxu0 0.0
    %7425 = vmatprep.subr.mxu0 0.0
    %7426 = vmatpush1.msra.mxu0 0.0
    %7427 = vmatprep.subr.mxu0 0.0
    %7428 = vmatpush1.msra.mxu0 0.0
    %7429 = vmatprep.subr.mxu0 0.0
    %7430 = vmatpush1.msra.mxu0 0.0
    %7431 = vmatprep.subr.mxu0 0.0
    %7432 = vmatpush1.msra.mxu0 0.0
    %7433 = vmatprep.subr.mxu0 0.0
    %7434 = vmatpush1.msra.mxu0 0.0
    %7435 = vmatprep.subr.mxu0 0.0
    %7436 = vmatpush1.msra.mxu0 0.0
    %7437 = vmatprep.subr.mxu0 0.0
    %7438 = vmatpush1.msra.mxu0 0.0
    %7439 = vmatprep.subr.mxu0 0.0
    %7440 = vmatpush1.msra.mxu0 0.0
    %7441 = vmatprep.subr.mxu0 0.0
    %7442 = vmatpush1.msra.mxu0 0.0
    %7443 = vmatprep.subr.mxu0 0.0
    %7444 = vmatpush1.msra.mxu0 0.0
    %7445 = vmatprep.subr.mxu0 0.0
    %7446 = vmatpush1.msra.mxu0 0.0
    %7447 = vmatprep.subr.mxu0 0.0
    %7448 = vmatpush1.msra.mxu0 0.0
    %7449 = vmatprep.subr.mxu0 0.0
    %7450 = vmatpush1.msra.mxu0 0.0
    %7451 = vmatprep.subr.mxu0 0.0
    %7452 = vmatpush1.msra.mxu0 0.0
    %7453 = vmatprep.subr.mxu0 0.0
    %7454 = vmatpush1.msra.mxu0 0.0
    %7455 = vmatprep.subr.mxu0 0.0
    %7456 = vmatpush1.msra.mxu0 0.0
    %7457 = vmatprep.subr.mxu0 0.0
    %7458 = vmatpush1.msra.mxu0 0.0
    %7459 = vmatprep.subr.mxu0 0.0
    %7460 = vmatpush1.msra.mxu0 0.0
    %7461 = vmatprep.subr.mxu0 0.0
    %7462 = vmatpush1.msra.mxu0 0.0
    %7463 = vmatprep.subr.mxu0 0.0
    %7464 = vmatpush1.msra.mxu0 0.0
    %7465 = vmatprep.subr.mxu0 0.0
    %7466 = vmatpush1.msra.mxu0 0.0
    %7467 = vmatprep.subr.mxu0 0.0
    %7468 = vmatpush1.msra.mxu0 0.0
    %7469 = vmatprep.subr.mxu0 0.0
    %7470 = vmatpush1.msra.mxu0 0.0
    %7471 = vmatprep.subr.mxu0 0.0
    %7472 = vmatpush1.msra.mxu0 0.0
    %7473 = vmatprep.subr.mxu0 0.0
    %7474 = vmatpush1.msra.mxu0 0.0
    %7475 = vmatprep.subr.mxu0 0.0
    %7476 = vmatpush1.msra.mxu0 0.0
    %7477 = vmatprep.subr.mxu0 0.0
    %7478 = vmatpush1.msra.mxu0 0.0
    %7479 = vmatprep.subr.mxu0 0.0
    %7480 = vmatpush1.msra.mxu0 0.0
    %7481 = vmatprep.mubr.f32.mxu0 0.0
    %v7482 = vand.u32 %v3423, 4294901760
    %v7483 = vsub.f32 %v3423, %v7482
    %v7484 = vand.u32 %v7483, 4294901760
    %7485 = vmatmul.mubr.f32.gmra.mrb[0].mxu0 %v7484
    %v7486 = vpop.f32.mrb[0].mxu0
    %v7487 = vadd.f32 %v7412, %v7486
    %v7488 = vpop.f32.mrb[0].mxu0
    %7489 = vdwg.mxu0
    %7490 = vmatprep.subr.mxu0 0.0
    %v7491 = vand.u32 %v7179, 4294901760
    %v7492 = vsub.f32 %v7179, %v7491
    %v7493 = vand.u32 %v7492, 4294901760
    %7494 = vmatpush1.msra.mxu0 %v7493
    %7495 = vmatprep.subr.mxu0 0.0
    %v7496 = vand.u32 %v7180, 4294901760
    %v7497 = vsub.f32 %v7180, %v7496
    %v7498 = vand.u32 %v7497, 4294901760
    %7499 = vmatpush1.msra.mxu0 %v7498
    %7500 = vmatprep.subr.mxu0 0.0
    %7501 = vmatpush1.msra.mxu0 0.0
    %7502 = vmatprep.subr.mxu0 0.0
    %7503 = vmatpush1.msra.mxu0 0.0
    %7504 = vmatprep.subr.mxu0 0.0
    %7505 = vmatpush1.msra.mxu0 0.0
    %7506 = vmatprep.subr.mxu0 0.0
    %7507 = vmatpush1.msra.mxu0 0.0
    %7508 = vmatprep.subr.mxu0 0.0
    %7509 = vmatpush1.msra.mxu0 0.0
    %7510 = vmatprep.subr.mxu0 0.0
    %7511 = vmatpush1.msra.mxu0 0.0
    %7512 = vmatprep.subr.mxu0 0.0
    %7513 = vmatpush1.msra.mxu0 0.0
    %7514 = vmatprep.subr.mxu0 0.0
    %7515 = vmatpush1.msra.mxu0 0.0
    %7516 = vmatprep.subr.mxu0 0.0
    %7517 = vmatpush1.msra.mxu0 0.0
    %7518 = vmatprep.subr.mxu0 0.0
    %7519 = vmatpush1.msra.mxu0 0.0
    %7520 = vmatprep.subr.mxu0 0.0
    %7521 = vmatpush1.msra.mxu0 0.0
    %7522 = vmatprep.subr.mxu0 0.0
    %7523 = vmatpush1.msra.mxu0 0.0
    %7524 = vmatprep.subr.mxu0 0.0
    %7525 = vmatpush1.msra.mxu0 0.0
    %7526 = vmatprep.subr.mxu0 0.0
    %7527 = vmatpush1.msra.mxu0 0.0
    %7528 = vmatprep.subr.mxu0 0.0
    %7529 = vmatpush1.msra.mxu0 0.0
    %7530 = vmatprep.subr.mxu0 0.0
    %7531 = vmatpush1.msra.mxu0 0.0
    %7532 = vmatprep.subr.mxu0 0.0
    %7533 = vmatpush1.msra.mxu0 0.0
    %7534 = vmatprep.subr.mxu0 0.0
    %7535 = vmatpush1.msra.mxu0 0.0
    %7536 = vmatprep.subr.mxu0 0.0
    %7537 = vmatpush1.msra.mxu0 0.0
    %7538 = vmatprep.subr.mxu0 0.0
    %7539 = vmatpush1.msra.mxu0 0.0
    %7540 = vmatprep.subr.mxu0 0.0
    %7541 = vmatpush1.msra.mxu0 0.0
    %7542 = vmatprep.subr.mxu0 0.0
    %7543 = vmatpush1.msra.mxu0 0.0
    %7544 = vmatprep.subr.mxu0 0.0
    %7545 = vmatpush1.msra.mxu0 0.0
    %7546 = vmatprep.subr.mxu0 0.0
    %7547 = vmatpush1.msra.mxu0 0.0
    %7548 = vmatprep.subr.mxu0 0.0
    %7549 = vmatpush1.msra.mxu0 0.0
    %7550 = vmatprep.subr.mxu0 0.0
    %7551 = vmatpush1.msra.mxu0 0.0
    %7552 = vmatprep.subr.mxu0 0.0
    %7553 = vmatpush1.msra.mxu0 0.0
    %7554 = vmatprep.subr.mxu0 0.0
    %7555 = vmatpush1.msra.mxu0 0.0
    %7556 = vmatprep.subr.mxu0 0.0
    %7557 = vmatpush1.msra.mxu0 0.0
    %7558 = vmatprep.subr.mxu0 0.0
    %7559 = vmatpush1.msra.mxu0 0.0
    %7560 = vmatprep.mubr.f32.mxu0 0.0
    %v7561 = vand.u32 %v3423, 4294901760
    %7562 = vmatmul.mubr.f32.gmra.mrb[0].mxu0 %v7561
    %v7563 = vpop.f32.mrb[0].mxu0
    %v7564 = vadd.f32 %v7487, %v7563
    %v7565 = vpop.f32.mrb[0].mxu0
    %7566 = vdwg.mxu0
    %7567 = vmatprep.subr.mxu0 0.0
    %v7568 = vand.u32 %v7179, 4294901760
    %7569 = vmatpush1.msra.mxu0 %v7568
    %7570 = vmatprep.subr.mxu0 0.0
    %v7571 = vand.u32 %v7180, 4294901760
    %7572 = vmatpush1.msra.mxu0 %v7571
    %7573 = vmatprep.subr.mxu0 0.0
    %7574 = vmatpush1.msra.mxu0 0.0
    %7575 = vmatprep.subr.mxu0 0.0
    %7576 = vmatpush1.msra.mxu0 0.0
    %7577 = vmatprep.subr.mxu0 0.0
    %7578 = vmatpush1.msra.mxu0 0.0
    %7579 = vmatprep.subr.mxu0 0.0
    %7580 = vmatpush1.msra.mxu0 0.0
    %7581 = vmatprep.subr.mxu0 0.0
    %7582 = vmatpush1.msra.mxu0 0.0
    %7583 = vmatprep.subr.mxu0 0.0
    %7584 = vmatpush1.msra.mxu0 0.0
    %7585 = vmatprep.subr.mxu0 0.0
    %7586 = vmatpush1.msra.mxu0 0.0
    %7587 = vmatprep.subr.mxu0 0.0
    %7588 = vmatpush1.msra.mxu0 0.0
    %7589 = vmatprep.subr.mxu0 0.0
    %7590 = vmatpush1.msra.mxu0 0.0
    %7591 = vmatprep.subr.mxu0 0.0
    %7592 = vmatpush1.msra.mxu0 0.0
    %7593 = vmatprep.subr.mxu0 0.0
    %7594 = vmatpush1.msra.mxu0 0.0
    %7595 = vmatprep.subr.mxu0 0.0
    %7596 = vmatpush1.msra.mxu0 0.0
    %7597 = vmatprep.subr.mxu0 0.0
    %7598 = vmatpush1.msra.mxu0 0.0
    %7599 = vmatprep.subr.mxu0 0.0
    %7600 = vmatpush1.msra.mxu0 0.0
    %7601 = vmatprep.subr.mxu0 0.0
    %7602 = vmatpush1.msra.mxu0 0.0
    %7603 = vmatprep.subr.mxu0 0.0
    %7604 = vmatpush1.msra.mxu0 0.0
    %7605 = vmatprep.subr.mxu0 0.0
    %7606 = vmatpush1.msra.mxu0 0.0
    %7607 = vmatprep.subr.mxu0 0.0
    %7608 = vmatpush1.msra.mxu0 0.0
    %7609 = vmatprep.subr.mxu0 0.0
    %7610 = vmatpush1.msra.mxu0 0.0
    %7611 = vmatprep.subr.mxu0 0.0
    %7612 = vmatpush1.msra.mxu0 0.0
    %7613 = vmatprep.subr.mxu0 0.0
    %7614 = vmatpush1.msra.mxu0 0.0
    %7615 = vmatprep.subr.mxu0 0.0
    %7616 = vmatpush1.msra.mxu0 0.0
    %7617 = vmatprep.subr.mxu0 0.0
    %7618 = vmatpush1.msra.mxu0 0.0
    %7619 = vmatprep.subr.mxu0 0.0
    %7620 = vmatpush1.msra.mxu0 0.0
    %7621 = vmatprep.subr.mxu0 0.0
    %7622 = vmatpush1.msra.mxu0 0.0
    %7623 = vmatprep.subr.mxu0 0.0
    %7624 = vmatpush1.msra.mxu0 0.0
    %7625 = vmatprep.subr.mxu0 0.0
    %7626 = vmatpush1.msra.mxu0 0.0
    %7627 = vmatprep.subr.mxu0 0.0
    %7628 = vmatpush1.msra.mxu0 0.0
    %7629 = vmatprep.subr.mxu0 0.0
    %7630 = vmatpush1.msra.mxu0 0.0
    %7631 = vmatprep.subr.mxu0 0.0
    %7632 = vmatpush1.msra.mxu0 0.0
    %7633 = vmatprep.mubr.f32.mxu0 0.0
    %v7634 = vand.u32 %v3423, 4294901760
    %7635 = vmatmul.mubr.f32.gmra.mrb[0].mxu0 %v7634
    %v7636 = vpop.f32.mrb[0].mxu0
    %v7637 = vadd.f32 %v7564, %v7636
    %v7638 = vpop.f32.mrb[0].mxu0
    %7639 = vdwg.mxu0
    %s7640 = scalar_lea.vmem [#allocation7], 2
    %7641 = vst [vmem:[%s7640] sm:$0x3] %v7637
    // Predicated region
    $region18: #{tpu_custom_call.1} parent=1 // pred_check
      _
    $region19: #{tpu_custom_call.1} parent=1 // pred_check_branch
      %7643 = sbr.rel (0) target = $region21
    $region20: #{tpu_custom_call.1} parent=1 // pred_region
      %s7645 = ssub.s32 64, 64
      %7646 = vsyncadd [#allocation4], %s7645
      %s7647 = sshll.u32 [#allocation7], 4
      %s7648 = int_to_ptr.vmem [resolvable:$true] %s7647
      %7653 = dma.vmem_to_hbm [thread:$0]  %s7648, 64, %s2, [#allocation4], 32, 32, 2
    $region21: #{tpu_custom_call.1} parent=1 // pred_fallthru
      _
    // Predicated region
    $region22: #{tpu_custom_call.1} parent=1 // pred_check
      _
    $region23: #{tpu_custom_call.1} parent=1 // pred_check_branch
      %7655 = sbr.rel (0) target = $region25
    $region24: #{tpu_custom_call.1} parent=1 // pred_region
      %7656 = dma.done [#allocation4], 64
    $region25: #{tpu_custom_call.1} parent=1 // pred_fallthru
      _
    %7657 = vsyncpa [#allocation3], 1
    %7658 = vsyncpa [#allocation6], 1
    %7659 = vsyncpa [#allocation4], 1

</llo_original>
